<compile_context>
chip_gen: v6e
topology: v6e:2x2x1
jax: 0.10.0
libtpu: 0.0.40
codegen_flags: <defaults>
</compile_context>

<pallas_src>
import math
import numpy as np
import jax
import jax.numpy as jnp
from jax import lax
from jax.experimental import pallas as pl
from jax.experimental.pallas import tpu as pltpu

# ------------------------- config (module-consistent) ------------------------
D_MODEL = 32
D_STATE = 16
D_CONV = 4
EXPAND = 2
D_INNER = EXPAND * D_MODEL            # 64
DT_RANK = math.ceil(D_MODEL / 16)     # 2
TOKEN_H, TOKEN_W = 4, 4
SEQ_L = TOKEN_H * TOKEN_W             # 16
BATCH = 2
DIRECTIONS = ("h", "h_flip", "v", "v_flip")
N_DIR = len(DIRECTIONS)
DP = N_DIR * D_INNER                  # 256 = lane-packed width (dir-major, channel-minor)
NS_ALL = N_DIR * D_STATE              # 64
ACT_RATIO = 0.125
RC = int(D_INNER * ACT_RATIO)         # 8 (BiAttn reduce channels)
DT_MIN, DT_MAX, DT_INIT_FLOOR = 1e-3, 0.1, 1e-4
LN_EPS = 1e-5


# --------------------------- multi-scan permutations -------------------------
def _scan_perm(direction, h, w):
    l = h * w
    idx = np.arange(l)
    if direction == "h":
        return idx
    if direction == "h_flip":
        return idx[::-1].copy()
    if direction == "v":                       # 'b (h w) d -> b (w h) d'
        return idx.reshape(h, w).T.reshape(-1).copy()
    if direction == "v_flip":
        return idx.reshape(h, w).T.reshape(-1)[::-1].copy()
    # TODO(synk): local-window scan directions ('w2', 'w7', ...) not in this config.
    raise NotImplementedError(direction)


PERMS = [_scan_perm(d, TOKEN_H, TOKEN_W) for d in DIRECTIONS]
INV_PERMS = [np.argsort(p) for p in PERMS]

# 0/1 matrices so the tiny L-axis gathers run on the MXU inside the kernel:
#   PERM_MATS[d]  @ x == x[PERMS[d]]                        (multi_scan)
#   IPERM_MATS[d] @ x == x[INV_PERMS[d]]                    (multi_reverse)
#   SPM_MATS[d,k] @ x == shift_down_{K-1-k}(x[PERMS[d]])    (causal conv tap k)
PERM_MATS = np.stack([np.eye(SEQ_L)[p] for p in PERMS]).astype(np.float32)
IPERM_MATS = np.transpose(PERM_MATS, (0, 2, 1)).copy()
_SHIFTS = np.stack([np.eye(SEQ_L, k=-(D_CONV - 1 - k)) for k in range(D_CONV)])
SPM_MATS = np.einsum("kij,djm->dkim", _SHIFTS, PERM_MATS).astype(np.float32)
# Stacked (dir, tap, row) form for the single conv-tap matmul.
SPM_STACK = SPM_MATS.reshape(N_DIR * D_CONV * SEQ_L, SEQ_L)


# ------------------------------- small helpers -------------------------------
def _erf(x):
    # Abramowitz & Stegun 7.1.26, max abs error ~1.5e-7.  Mosaic has no guaranteed erf
    # primitive, so the exact (erf-based) GELU of nn.GELU is built from exp / VPU ops only.
    a1, a2, a3, a4, a5 = 0.254829592, -0.284496736, 1.421413741, -1.453152027, 1.061405429
    p = 0.3275911
    ax = jnp.abs(x)
    t = 1.0 / (1.0 + p * ax)
    poly = ((((a5 * t + a4) * t + a3) * t + a2) * t + a1) * t
    y = 1.0 - poly * jnp.exp(-ax * ax)
    return jnp.where(x >= 0, y, -y)


def _gelu_erf(x):
    return 0.5 * x * (1.0 + _erf(x * (1.0 / math.sqrt(2.0))))


# ------------------------------- fused kernel --------------------------------
def _multi_mamba_kernel(hs_ref, inw_ref, spm_ref, cwexp_ref, convb_ref,
                        wd_ref, wbc_ref, dtb_ref, at_ref, dpk_ref, iperm_ref,
                        lnw_ref, lnb_ref, grw_ref, grb_ref, csw_ref, csb_ref,
                        outw_ref, out_ref,
                        da_scr, dbu_scr, cexp_scr):
    """One batch element of the full MultiMamba forward (all 4 directions lane-packed)."""
    lq, di, ns, nd = SEQ_L, D_INNER, D_STATE, N_DIR

    # in_proj (Linear, bias=False) -> (L, 2*D_INNER)
    xz = jnp.dot(hs_ref[...], inw_ref[...], preferred_element_type=jnp.float32)
    x = xz[:, :di]                               # pre-scan features (original order)
    z = xz[:, di:]                               # gate branch (kept unpermuted, see below)

    # Depthwise causal conv1d for all 4 directions & 4 taps in ONE stacked matmul
    # (shift o perm matrices stacked on sublanes), then conv-weighted tap sum on the VPU.
    taps = jnp.dot(spm_ref[...], x, preferred_element_type=jnp.float32)   # (nd*K*L, di)
    wtaps = taps * cwexp_ref[...]                                          # per-channel weights
    u_parts = []
    for d in range(nd):
        base = d * D_CONV * lq
        acc = wtaps[base:base + lq, :]
        for k in range(1, D_CONV):
            acc = acc + wtaps[base + k * lq:base + (k + 1) * lq, :]
        u_parts.append(acc)                                                # (L, di) per dir
    u_pre = jnp.concatenate(u_parts, axis=-1) + convb_ref[...]             # (L, 256) lane-packed
    u_all = u_pre * jax.nn.sigmoid(u_pre)                                  # SiLU

    # x_proj / dt_proj for all directions: block-diagonal weights -> 2 MXU matmuls
    # (dt path pre-folded on host: W_delta = x_proj_dt @ dt_proj_w).
    delta_all = jax.nn.softplus(
        jnp.dot(u_all, wd_ref[...], preferred_element_type=jnp.float32) + dtb_ref[...])
    bc_all = jnp.dot(u_all, wbc_ref[...], preferred_element_type=jnp.float32)  # (L, 2*nd*ns)
    du_all = delta_all * u_all

    # Stage scan operands (state rows = n, lanes = (dir, channel)); exp hoisted out of the
    # recurrence.  da is one full-lane store; B/C blocks broadcast per direction.
    da_scr[...] = jnp.exp(delta_all[:, None, :] * at_ref[...][None, :, :])      # (L, ns, 256)
    for d in range(nd):
        sl = slice(d * di, (d + 1) * di)
        b_d = bc_all[:, d * ns:(d + 1) * ns]                                     # (L, ns)
        c_d = bc_all[:, nd * ns + d * ns: nd * ns + (d + 1) * ns]                # (L, ns)
        dbu_scr[:, :, sl] = du_all[:, None, sl] * b_d[:, :, None]
        cexp_scr[:, :, sl] = jnp.broadcast_to(c_d[:, :, None], (lq, ns, di))

    # Selective scan: all 4 directions share one (ns, 256) full-lane state; y extraction is
    # an elementwise C multiply + sublane (XLU) reduction, accumulated in registers.
    state = jnp.zeros((ns, nd * di), jnp.float32)
    ys = []
    for step in range(lq):
        state = da_scr[step] * state + dbu_scr[step]                             # (16, 256)
        ys.append(jnp.sum(cexp_scr[step] * state, axis=0, keepdims=True))        # (1, 256)
    y_all = jnp.concatenate(ys, axis=0)                                           # (L, 256)

    # D skip (lane-packed).  The silu(z) gate, the per-channel BiAttn gate and multi_reverse
    # all commute (row permutation vs. elementwise / L-broadcast ops), so the z branch is
    # applied once in original token order:
    #   out_rev_d = IPERM_d @ [(y_d + u_d*D_d) * PERM_d silu(z)] = (IPERM_d (y_d+u_d*D_d)) * silu(z)
    w_all = y_all + u_all * dpk_ref[...]
    s = z * jax.nn.sigmoid(z)                                                     # silu(z), (L, di)

    o_list, gm_list = [], []
    for d in range(nd):
        o_d = jnp.dot(iperm_ref[d], w_all[:, d * di:(d + 1) * di],
                      preferred_element_type=jnp.float32) * s                     # (L, di)
        mu = jnp.mean(o_d, axis=-1, keepdims=True)
        var = jnp.mean(jnp.square(o_d - mu), axis=-1, keepdims=True)
        xn = (o_d - mu) * lax.rsqrt(var + LN_EPS) * lnw_ref[...] + lnb_ref[...]
        gm_list.append(jnp.mean(xn, axis=0, keepdims=True))                       # (1, di)
        o_list.append(o_d)

    # BiAttn channel gate, batched over the 4 directions (2 small matmuls total).
    gm = jnp.concatenate(gm_list, axis=0)                                          # (nd, di)
    g1 = _gelu_erf(jnp.dot(gm, grw_ref[...], preferred_element_type=jnp.float32)
                   + grb_ref[...])                                                 # (nd, RC)
    gates = jax.nn.sigmoid(jnp.dot(g1, csw_ref[...], preferred_element_type=jnp.float32)
                           + csb_ref[...])                                         # (nd, di)

    total = o_list[0] * gates[0:1, :]
    for d in range(1, nd):
        total = total + o_list[d] * gates[d:d + 1, :]

    # out_proj (Linear, bias=False)
    out_ref[...] = jnp.dot(total, outw_ref[...], preferred_element_type=jnp.float32)


def multi_mamba_forward(params, hidden_states):
    b, l, dm = hidden_states.shape
    assert (l, dm) == (SEQ_L, D_MODEL)

    def full2():
        return lambda i: (0, 0)

    def full3():
        return lambda i: (0, 0, 0)

    in_specs = [
        pl.BlockSpec((None, SEQ_L, D_MODEL), lambda i: (i, 0, 0)),          # hidden_states
        pl.BlockSpec((D_MODEL, 2 * D_INNER), full2()),                      # in_proj^T
        pl.BlockSpec((N_DIR * D_CONV * SEQ_L, SEQ_L), full2()),             # stacked shift o perm
        pl.BlockSpec((N_DIR * D_CONV * SEQ_L, D_INNER), full2()),           # conv tap weights (expanded)
        pl.BlockSpec((1, DP), full2()),                                     # conv bias (lane-packed)
        pl.BlockSpec((DP, DP), full2()),                                    # block-diag W_delta
        pl.BlockSpec((DP, 2 * NS_ALL), full2()),                            # block-diag [W_B | W_C]
        pl.BlockSpec((1, DP), full2()),                                     # dt bias (lane-packed)
        pl.BlockSpec((D_STATE, DP), full2()),                               # A^T (lane-packed)
        pl.BlockSpec((1, DP), full2()),                                     # D skip (lane-packed)
        pl.BlockSpec((N_DIR, SEQ_L, SEQ_L), full3()),                       # inverse perms
        pl.BlockSpec((1, D_INNER), full2()),                                # BiAttn LN w
        pl.BlockSpec((1, D_INNER), full2()),                                # BiAttn LN b
        pl.BlockSpec((D_INNER, RC), full2()),                               # global_reduce^T
        pl.BlockSpec((1, RC), full2()),                                     # global_reduce b
        pl.BlockSpec((RC, D_INNER), full2()),                               # channel_select^T
        pl.BlockSpec((1, D_INNER), full2()),                                # channel_select b
        pl.BlockSpec((D_INNER, D_MODEL), full2()),                          # out_proj^T
    ]

    return pl.pallas_call(
        _multi_mamba_kernel,
        out_shape=jax.ShapeDtypeStruct((b, SEQ_L, D_MODEL), jnp.float32),
        grid=(b,),
        in_specs=in_specs,
        out_specs=pl.BlockSpec((None, SEQ_L, D_MODEL), lambda i: (i, 0, 0)),
        scratch_shapes=[
            pltpu.VMEM((SEQ_L, D_STATE, DP), jnp.float32),   # exp(delta*A)   (lane-packed dirs)
            pltpu.VMEM((SEQ_L, D_STATE, DP), jnp.float32),   # delta*u*B
            pltpu.VMEM((SEQ_L, D_STATE, DP), jnp.float32),   # C (broadcast over channels)
        ],
        compiler_params=pltpu.CompilerParams(
            dimension_semantics=("parallel",)),   # batch axis -> both TCs on v7x
    )(hidden_states, params["in_w"], params["spm_stack"], params["cwexp"],
      params["convb_pack"], params["wd_blk"], params["wbc_blk"], params["dtb_pack"],
      params["at_pack"], params["d_pack"], params["iperm"],
      params["ln_w"], params["ln_b"], params["gr_w"], params["gr_b"],
      params["cs_w"], params["cs_b"], params["out_w"])


# ------------------------------ parameter init -------------------------------
def init_params(key):
    ks = iter(jax.random.split(key, 16))
    # canonical (PyTorch-layout) parameters
    in_proj_w = 0.05 * jax.random.normal(next(ks), (2 * D_INNER, D_MODEL), jnp.float32)
    conv_w = 0.3 * jax.random.normal(next(ks), (N_DIR, D_CONV, D_INNER), jnp.float32)
    conv_b = 0.1 * jax.random.normal(next(ks), (N_DIR, 1, D_INNER), jnp.float32)
    xp_dt = 0.1 * jax.random.normal(next(ks), (N_DIR, D_INNER, DT_RANK), jnp.float32)
    xp_B = 0.1 * jax.random.normal(next(ks), (N_DIR, D_INNER, D_STATE), jnp.float32)
    xp_C = 0.1 * jax.random.normal(next(ks), (N_DIR, D_INNER, D_STATE), jnp.float32)
    dt_std = DT_RANK ** -0.5
    dt_w = jax.random.uniform(next(ks), (N_DIR, DT_RANK, D_INNER), jnp.float32,
                              -dt_std, dt_std)
    dt = jnp.exp(jax.random.uniform(next(ks), (N_DIR, 1, D_INNER), jnp.float32)
                 * (math.log(DT_MAX) - math.log(DT_MIN)) + math.log(DT_MIN))
    dt = jnp.maximum(dt, DT_INIT_FLOOR)
    dt_b = dt + jnp.log(-jnp.expm1(-dt))                       # inverse-softplus init
    a_row = jnp.arange(1, D_STATE + 1, dtype=jnp.float32)
    A = -jnp.tile(a_row[None, None, :], (N_DIR, D_INNER, 1))   # A = -exp(A_log), (nd, di, ns)
    D_skip = jnp.ones((N_DIR, 1, D_INNER), jnp.float32)
    gr_w = 0.1 * jax.random.normal(next(ks), (RC, D_INNER), jnp.float32)
    gr_b = 0.05 * jax.random.normal(next(ks), (RC,), jnp.float32)
    cs_w = 0.1 * jax.random.normal(next(ks), (D_INNER, RC), jnp.float32)
    cs_b = 0.05 * jax.random.normal(next(ks), (D_INNER,), jnp.float32)
    out_proj_w = 0.05 * jax.random.normal(next(ks), (D_MODEL, D_INNER), jnp.float32)

    # folded / per-direction forms (reference + building blocks)
    w_delta = jnp.einsum("dik,dkj->dij", xp_dt, dt_w)          # x_proj_dt @ dt_proj_w
    w_bc = jnp.concatenate([xp_B, xp_C], axis=-1)              # (nd, di, 2*ns)

    # kernel-ready packed layouts (prepared once, outside the jitted forward)
    wd_blk = jnp.zeros((DP, DP), jnp.float32)
    wb_blk = jnp.zeros((DP, NS_ALL), jnp.float32)
    wc_blk = jnp.zeros((DP, NS_ALL), jnp.float32)
    for d in range(N_DIR):
        wd_blk = wd_blk.at[d * D_INNER:(d + 1) * D_INNER,
                           d * D_INNER:(d + 1) * D_INNER].set(w_delta[d])
        wb_blk = wb_blk.at[d * D_INNER:(d + 1) * D_INNER,
                           d * D_STATE:(d + 1) * D_STATE].set(xp_B[d])
        wc_blk = wc_blk.at[d * D_INNER:(d + 1) * D_INNER,
                           d * D_STATE:(d + 1) * D_STATE].set(xp_C[d])
    wbc_blk = jnp.concatenate([wb_blk, wc_blk], axis=-1)       # (256, 128)

    cwexp = jnp.broadcast_to(conv_w[:, :, None, :],
                             (N_DIR, D_CONV, SEQ_L, D_INNER)).reshape(
                                 N_DIR * D_CONV * SEQ_L, D_INNER)

    return {
        # canonical / per-direction (used by the pure-JAX reference)
        "in_w": in_proj_w.T,
        "conv_w": conv_w, "conv_b": conv_b,
        "w_delta": w_delta, "w_bc": w_bc, "dt_b": dt_b,
        "A_t": jnp.transpose(A, (0, 2, 1)), "D": D_skip,
        "ln_w": jnp.ones((1, D_INNER), jnp.float32),
        "ln_b": jnp.zeros((1, D_INNER), jnp.float32),
        "gr_w": gr_w.T, "gr_b": gr_b.reshape(1, RC),
        "cs_w": cs_w.T, "cs_b": cs_b.reshape(1, D_INNER),
        "out_w": out_proj_w.T,
        # kernel-packed (lane-packed dirs / block-diagonal / stacked)
        "spm_stack": jnp.asarray(SPM_STACK),
        "cwexp": cwexp,
        "convb_pack": conv_b.reshape(1, DP),
        "wd_blk": wd_blk,
        "wbc_blk": wbc_blk,
        "dtb_pack": dt_b.reshape(1, DP),
        "at_pack": jnp.transpose(A, (2, 0, 1)).reshape(D_STATE, DP),
        "d_pack": D_skip.reshape(1, DP),
        "iperm": jnp.asarray(IPERM_MATS),
    }


# ------------------------ pure-JAX reference (validation) --------------------
def multi_mamba_reference(params, hidden_states):
    hp = lax.Precision.HIGHEST
    b, l, _ = hidden_states.shape
    xz = jnp.dot(hidden_states, params["in_w"], precision=hp)
    total = jnp.zeros((b, l, D_INNER), jnp.float32)
    for d in range(N_DIR):
        xz_p = xz[:, PERMS[d], :]
        x = xz_p[..., :D_INNER]
        z = xz_p[..., D_INNER:]
        xpad = jnp.pad(x, ((0, 0), (D_CONV - 1, 0), (0, 0)))
        acc = params["conv_b"][d]
        for k in range(D_CONV):
            acc = acc + xpad[:, k:k + l, :] * params["conv_w"][d, k]
        u = acc * jax.nn.sigmoid(acc)
        delta = jax.nn.softplus(jnp.dot(u, params["w_delta"][d], precision=hp)
                                + params["dt_b"][d])
        bc = jnp.dot(u, params["w_bc"][d], precision=hp)
        Bm, Cm = bc[..., :D_STATE], bc[..., D_STATE:]
        A = params["A_t"][d].T

        def step(state, inp):
            dlt, uu, Bt, Ct = inp
            state = jnp.exp(dlt[..., None] * A) * state + (dlt * uu)[..., None] * Bt[:, None, :]
            return state, jnp.sum(state * Ct[:, None, :], axis=-1)

        _, ys = lax.scan(step, jnp.zeros((b, D_INNER, D_STATE), jnp.float32),
                         (jnp.swapaxes(delta, 0, 1), jnp.swapaxes(u, 0, 1),
                          jnp.swapaxes(Bm, 0, 1), jnp.swapaxes(Cm, 0, 1)))
        y = jnp.swapaxes(ys, 0, 1)
        out = (y + u * params["D"][d]) * (z * jax.nn.sigmoid(z))
        out = out[:, INV_PERMS[d], :]                                   # multi_reverse
        mu = out.mean(-1, keepdims=True)
        var = jnp.square(out - mu).mean(-1, keepdims=True)
        xn = (out - mu) * lax.rsqrt(var + LN_EPS) * params["ln_w"] + params["ln_b"]
        gm = xn.mean(1, keepdims=True)
        g1 = jax.nn.gelu(jnp.dot(gm, params["gr_w"], precision=hp) + params["gr_b"],
                         approximate=False)
        gate = jax.nn.sigmoid(jnp.dot(g1, params["cs_w"], precision=hp) + params["cs_b"])
        total = total + out * gate
    return jnp.dot(total, params["out_w"], precision=hp)


# ----------------------------------- main -------------------------------------
if __name__ == "__main__":
    key = jax.random.PRNGKey(0)
    pkey, xkey = jax.random.split(key)
    params = init_params(pkey)
    x = jax.random.normal(xkey, (BATCH, SEQ_L, D_MODEL), jnp.float32)

    out = jax.block_until_ready(jax.jit(multi_mamba_forward)(params, x))
    assert out.shape == (BATCH, SEQ_L, D_MODEL)
    assert bool(jnp.all(jnp.isfinite(out)))

    ref = jax.block_until_ready(jax.jit(multi_mamba_reference)(params, x))
    rel_err = float(jnp.max(jnp.abs(out - ref)) / (jnp.max(jnp.abs(ref)) + 1e-8))
    assert rel_err < 2e-2, f"kernel/reference mismatch: rel_err={rel_err}"

    print("KERNEL_OK")
</pallas_src>

<mosaic_0001>
module attributes {stable_mosaic.version = 11 : i64} {
  func.func @_multi_mamba_kernel(%arg0: i32, %arg1: memref<1x16x32xf32, #tpu.memory_space<vmem>>, %arg2: memref<32x128xf32, #tpu.memory_space<vmem>>, %arg3: memref<256x16xf32, #tpu.memory_space<vmem>>, %arg4: memref<256x64xf32, #tpu.memory_space<vmem>>, %arg5: memref<1x256xf32, #tpu.memory_space<vmem>>, %arg6: memref<256x256xf32, #tpu.memory_space<vmem>>, %arg7: memref<256x128xf32, #tpu.memory_space<vmem>>, %arg8: memref<1x256xf32, #tpu.memory_space<vmem>>, %arg9: memref<16x256xf32, #tpu.memory_space<vmem>>, %arg10: memref<1x256xf32, #tpu.memory_space<vmem>>, %arg11: memref<4x16x16xf32, #tpu.memory_space<vmem>>, %arg12: memref<1x64xf32, #tpu.memory_space<vmem>>, %arg13: memref<1x64xf32, #tpu.memory_space<vmem>>, %arg14: memref<64x8xf32, #tpu.memory_space<vmem>>, %arg15: memref<1x8xf32, #tpu.memory_space<vmem>>, %arg16: memref<8x64xf32, #tpu.memory_space<vmem>>, %arg17: memref<1x64xf32, #tpu.memory_space<vmem>>, %arg18: memref<64x32xf32, #tpu.memory_space<vmem>>, %arg19: memref<1x16x32xf32, #tpu.memory_space<vmem>>, %arg20: memref<16x16x256xf32, #tpu.memory_space<vmem>>, %arg21: memref<16x16x256xf32, #tpu.memory_space<vmem>>, %arg22: memref<16x16x256xf32, #tpu.memory_space<vmem>>) attributes {dimension_semantics = [#tpu.dimension_semantics<parallel>], iteration_bounds = array<i64: 2>, scalar_prefetch = 0 : i64, scratch_operands = 3 : i64, tpu.core_type = #tpu.core_type<tc>, window_params = [{transform_indices = @transform_0, window_bounds = array<i64: 1, 16, 32>}, {pipeline_mode = #tpu.pipeline_mode<synchronous>, transform_indices = @transform_1, window_bounds = array<i64: 32, 128>}, {pipeline_mode = #tpu.pipeline_mode<synchronous>, transform_indices = @transform_2, window_bounds = array<i64: 256, 16>}, {pipeline_mode = #tpu.pipeline_mode<synchronous>, transform_indices = @transform_3, window_bounds = array<i64: 256, 64>}, {pipeline_mode = #tpu.pipeline_mode<synchronous>, transform_indices = @transform_4, window_bounds = array<i64: 1, 256>}, {pipeline_mode = #tpu.pipeline_mode<synchronous>, transform_indices = @transform_5, window_bounds = array<i64: 256, 256>}, {pipeline_mode = #tpu.pipeline_mode<synchronous>, transform_indices = @transform_6, window_bounds = array<i64: 256, 128>}, {pipeline_mode = #tpu.pipeline_mode<synchronous>, transform_indices = @transform_7, window_bounds = array<i64: 1, 256>}, {pipeline_mode = #tpu.pipeline_mode<synchronous>, transform_indices = @transform_8, window_bounds = array<i64: 16, 256>}, {pipeline_mode = #tpu.pipeline_mode<synchronous>, transform_indices = @transform_9, window_bounds = array<i64: 1, 256>}, {pipeline_mode = #tpu.pipeline_mode<synchronous>, transform_indices = @transform_10, window_bounds = array<i64: 4, 16, 16>}, {pipeline_mode = #tpu.pipeline_mode<synchronous>, transform_indices = @transform_11, window_bounds = array<i64: 1, 64>}, {pipeline_mode = #tpu.pipeline_mode<synchronous>, transform_indices = @transform_12, window_bounds = array<i64: 1, 64>}, {pipeline_mode = #tpu.pipeline_mode<synchronous>, transform_indices = @transform_13, window_bounds = array<i64: 64, 8>}, {pipeline_mode = #tpu.pipeline_mode<synchronous>, transform_indices = @transform_14, window_bounds = array<i64: 1, 8>}, {pipeline_mode = #tpu.pipeline_mode<synchronous>, transform_indices = @transform_15, window_bounds = array<i64: 8, 64>}, {pipeline_mode = #tpu.pipeline_mode<synchronous>, transform_indices = @transform_16, window_bounds = array<i64: 1, 64>}, {pipeline_mode = #tpu.pipeline_mode<synchronous>, transform_indices = @transform_17, window_bounds = array<i64: 64, 32>}, {transform_indices = @transform_18, window_bounds = array<i64: 1, 16, 32>}]} {
    %c0 = arith.constant 0 : index
    %c0_0 = arith.constant 0 : index
    %c0_1 = arith.constant 0 : index
    %0 = vector.load %arg1[%c0, %c0_0, %c0_1] : memref<1x16x32xf32, #tpu.memory_space<vmem>>, vector<1x16x32xf32>
    %1 = vector.shape_cast %0 : vector<1x16x32xf32> to vector<16x32xf32>
    %c0_2 = arith.constant 0 : index
    %c0_3 = arith.constant 0 : index
    %2 = vector.load %arg2[%c0_2, %c0_3] : memref<32x128xf32, #tpu.memory_space<vmem>>, vector<32x128xf32>
    %cst = arith.constant dense<0.000000e+00> : vector<16x128xf32>
    %3 = tpu.matmul %1, %2, %cst {dimension_numbers = #tpu.dot_dimension_numbers<[1], [0], [0], [1], [0, 0, 1, 1], [], []>} : vector<16x32xf32>, vector<32x128xf32>, vector<16x128xf32> -> vector<16x128xf32>
    %4 = vector.extract_strided_slice %3 {offsets = [0, 0], sizes = [16, 64], strides = [1, 1]} : vector<16x128xf32> to vector<16x64xf32>
    %5 = vector.extract_strided_slice %3 {offsets = [0, 64], sizes = [16, 64], strides = [1, 1]} : vector<16x128xf32> to vector<16x64xf32>
    %c0_4 = arith.constant 0 : index
    %c0_5 = arith.constant 0 : index
    %6 = vector.load %arg3[%c0_4, %c0_5] : memref<256x16xf32, #tpu.memory_space<vmem>>, vector<256x16xf32>
    %cst_6 = arith.constant dense<0.000000e+00> : vector<256x64xf32>
    %7 = tpu.matmul %6, %4, %cst_6 {dimension_numbers = #tpu.dot_dimension_numbers<[1], [0], [0], [1], [0, 0, 1, 1], [], []>} : vector<256x16xf32>, vector<16x64xf32>, vector<256x64xf32> -> vector<256x64xf32>
    %c0_7 = arith.constant 0 : index
    %c0_8 = arith.constant 0 : index
    %8 = vector.load %arg4[%c0_7, %c0_8] : memref<256x64xf32, #tpu.memory_space<vmem>>, vector<256x64xf32>
    %9 = arith.mulf %7, %8 : vector<256x64xf32>
    %10 = vector.extract_strided_slice %9 {offsets = [0, 0], sizes = [16, 64], strides = [1, 1]} : vector<256x64xf32> to vector<16x64xf32>
    %11 = vector.extract_strided_slice %9 {offsets = [16, 0], sizes = [16, 64], strides = [1, 1]} : vector<256x64xf32> to vector<16x64xf32>
    %12 = arith.addf %10, %11 : vector<16x64xf32>
    %13 = vector.extract_strided_slice %9 {offsets = [32, 0], sizes = [16, 64], strides = [1, 1]} : vector<256x64xf32> to vector<16x64xf32>
    %14 = arith.addf %12, %13 : vector<16x64xf32>
    %15 = vector.extract_strided_slice %9 {offsets = [48, 0], sizes = [16, 64], strides = [1, 1]} : vector<256x64xf32> to vector<16x64xf32>
    %16 = arith.addf %14, %15 : vector<16x64xf32>
    %17 = vector.extract_strided_slice %9 {offsets = [64, 0], sizes = [16, 64], strides = [1, 1]} : vector<256x64xf32> to vector<16x64xf32>
    %18 = vector.extract_strided_slice %9 {offsets = [80, 0], sizes = [16, 64], strides = [1, 1]} : vector<256x64xf32> to vector<16x64xf32>
    %19 = arith.addf %17, %18 : vector<16x64xf32>
    %20 = vector.extract_strided_slice %9 {offsets = [96, 0], sizes = [16, 64], strides = [1, 1]} : vector<256x64xf32> to vector<16x64xf32>
    %21 = arith.addf %19, %20 : vector<16x64xf32>
    %22 = vector.extract_strided_slice %9 {offsets = [112, 0], sizes = [16, 64], strides = [1, 1]} : vector<256x64xf32> to vector<16x64xf32>
    %23 = arith.addf %21, %22 : vector<16x64xf32>
    %24 = vector.extract_strided_slice %9 {offsets = [128, 0], sizes = [16, 64], strides = [1, 1]} : vector<256x64xf32> to vector<16x64xf32>
    %25 = vector.extract_strided_slice %9 {offsets = [144, 0], sizes = [16, 64], strides = [1, 1]} : vector<256x64xf32> to vector<16x64xf32>
    %26 = arith.addf %24, %25 : vector<16x64xf32>
    %27 = vector.extract_strided_slice %9 {offsets = [160, 0], sizes = [16, 64], strides = [1, 1]} : vector<256x64xf32> to vector<16x64xf32>
    %28 = arith.addf %26, %27 : vector<16x64xf32>
    %29 = vector.extract_strided_slice %9 {offsets = [176, 0], sizes = [16, 64], strides = [1, 1]} : vector<256x64xf32> to vector<16x64xf32>
    %30 = arith.addf %28, %29 : vector<16x64xf32>
    %31 = vector.extract_strided_slice %9 {offsets = [192, 0], sizes = [16, 64], strides = [1, 1]} : vector<256x64xf32> to vector<16x64xf32>
    %32 = vector.extract_strided_slice %9 {offsets = [208, 0], sizes = [16, 64], strides = [1, 1]} : vector<256x64xf32> to vector<16x64xf32>
    %33 = arith.addf %31, %32 : vector<16x64xf32>
    %34 = vector.extract_strided_slice %9 {offsets = [224, 0], sizes = [16, 64], strides = [1, 1]} : vector<256x64xf32> to vector<16x64xf32>
    %35 = arith.addf %33, %34 : vector<16x64xf32>
    %36 = vector.extract_strided_slice %9 {offsets = [240, 0], sizes = [16, 64], strides = [1, 1]} : vector<256x64xf32> to vector<16x64xf32>
    %37 = arith.addf %35, %36 : vector<16x64xf32>
    %38 = tpu.concatenate %16, %23, %30, %37 in 1 : vector<16x64xf32>, vector<16x64xf32>, vector<16x64xf32>, vector<16x64xf32> -> vector<16x256xf32>
    %c0_9 = arith.constant 0 : index
    %c0_10 = arith.constant 0 : index
    %39 = vector.load %arg5[%c0_9, %c0_10] : memref<1x256xf32, #tpu.memory_space<vmem>>, vector<1x256xf32>
    %40 = vector.broadcast %39 : vector<1x256xf32> to vector<16x256xf32>
    %41 = arith.addf %38, %40 : vector<16x256xf32>
    %42 = arith.negf %41 : vector<16x256xf32>
    %43 = math.exp %42 : vector<16x256xf32>
    %cst_11 = arith.constant 1.000000e+00 : f32
    %44 = vector.broadcast %cst_11 : f32 to vector<16x256xf32>
    %45 = arith.addf %44, %43 : vector<16x256xf32>
    %46 = arith.divf %44, %45 : vector<16x256xf32>
    %47 = arith.mulf %41, %46 : vector<16x256xf32>
    %c0_12 = arith.constant 0 : index
    %c0_13 = arith.constant 0 : index
    %48 = vector.load %arg6[%c0_12, %c0_13] : memref<256x256xf32, #tpu.memory_space<vmem>>, vector<256x256xf32>
    %cst_14 = arith.constant dense<0.000000e+00> : vector<16x256xf32>
    %49 = tpu.matmul %47, %48, %cst_14 {dimension_numbers = #tpu.dot_dimension_numbers<[1], [0], [0], [1], [0, 0, 1, 1], [], []>} : vector<16x256xf32>, vector<256x256xf32>, vector<16x256xf32> -> vector<16x256xf32>
    %c0_15 = arith.constant 0 : index
    %c0_16 = arith.constant 0 : index
    %50 = vector.load %arg8[%c0_15, %c0_16] : memref<1x256xf32, #tpu.memory_space<vmem>>, vector<1x256xf32>
    %51 = vector.broadcast %50 : vector<1x256xf32> to vector<16x256xf32>
    %52 = arith.addf %49, %51 : vector<16x256xf32>
    %cst_17 = arith.constant 0.000000e+00 : f32
    %53 = vector.broadcast %cst_17 : f32 to vector<16x256xf32>
    %54 = arith.maximumf %52, %53 : vector<16x256xf32>
    %55 = vector.broadcast %cst_17 : f32 to vector<16x256xf32>
    %56 = arith.subf %52, %55 : vector<16x256xf32>
    %57 = arith.cmpf one, %56, %56 : vector<16x256xf32>
    %58 = vector.broadcast %cst_17 : f32 to vector<16x256xf32>
    %59 = arith.addf %52, %58 : vector<16x256xf32>
    %60 = math.absf %56 : vector<16x256xf32>
    %cst_18 = arith.constant 0.000000e+00 : f32
    %61 = vector.broadcast %cst_18 : f32 to vector<16x256xf32>
    %62 = arith.subf %61, %60 : vector<16x256xf32>
    %63 = math.exp %62 : vector<16x256xf32>
    %64 = math.log1p %63 : vector<16x256xf32>
    %65 = arith.addf %54, %64 : vector<16x256xf32>
    %66 = arith.select %57, %59, %65 : vector<16x256xi1>, vector<16x256xf32>
    %c0_19 = arith.constant 0 : index
    %c0_20 = arith.constant 0 : index
    %67 = vector.load %arg7[%c0_19, %c0_20] : memref<256x128xf32, #tpu.memory_space<vmem>>, vector<256x128xf32>
    %cst_21 = arith.constant dense<0.000000e+00> : vector<16x128xf32>
    %68 = tpu.matmul %47, %67, %cst_21 {dimension_numbers = #tpu.dot_dimension_numbers<[1], [0], [0], [1], [0, 0, 1, 1], [], []>} : vector<16x256xf32>, vector<256x128xf32>, vector<16x128xf32> -> vector<16x128xf32>
    %69 = arith.mulf %66, %47 : vector<16x256xf32>
    %70 = vector.shape_cast %66 : vector<16x256xf32> to vector<16x1x256xf32>
    %c0_22 = arith.constant 0 : index
    %c0_23 = arith.constant 0 : index
    %71 = vector.load %arg9[%c0_22, %c0_23] : memref<16x256xf32, #tpu.memory_space<vmem>>, vector<16x256xf32>
    %72 = vector.shape_cast %71 : vector<16x256xf32> to vector<1x16x256xf32>
    %73 = vector.broadcast %70 : vector<16x1x256xf32> to vector<16x16x256xf32>
    %74 = vector.broadcast %72 : vector<1x16x256xf32> to vector<16x16x256xf32>
    %75 = arith.mulf %73, %74 : vector<16x16x256xf32>
    %76 = math.exp %75 : vector<16x16x256xf32>
    %c0_24 = arith.constant 0 : index
    %c0_25 = arith.constant 0 : index
    %c0_26 = arith.constant 0 : index
    %77 = vector.load %arg20[%c0_24, %c0_25, %c0_26] : memref<16x16x256xf32, #tpu.memory_space<vmem>>, vector<16x16x256xf32>
    tpu.vector_store %arg20[%c0_24, %c0_25, %c0_26], %76 {strides = array<i32>} : memref<16x16x256xf32, #tpu.memory_space<vmem>>, vector<16x16x256xf32>,
    %78 = vector.extract_strided_slice %68 {offsets = [0, 0], sizes = [16, 16], strides = [1, 1]} : vector<16x128xf32> to vector<16x16xf32>
    %79 = vector.extract_strided_slice %68 {offsets = [0, 64], sizes = [16, 16], strides = [1, 1]} : vector<16x128xf32> to vector<16x16xf32>
    %80 = vector.extract_strided_slice %69 {offsets = [0, 0], sizes = [16, 64], strides = [1, 1]} : vector<16x256xf32> to vector<16x64xf32>
    %81 = vector.shape_cast %80 : vector<16x64xf32> to vector<16x1x64xf32>
    %82 = vector.shape_cast %78 : vector<16x16xf32> to vector<16x16x1xf32>
    %83 = vector.broadcast %81 : vector<16x1x64xf32> to vector<16x16x64xf32>
    %84 = vector.broadcast %82 : vector<16x16x1xf32> to vector<16x16x64xf32>
    %85 = arith.mulf %83, %84 : vector<16x16x64xf32>
    %c0_27 = arith.constant 0 : index
    %c0_28 = arith.constant 0 : index
    %c0_29 = arith.constant 0 : index
    %86 = vector.load %arg21[%c0_27, %c0_28, %c0_29] : memref<16x16x256xf32, #tpu.memory_space<vmem>>, vector<16x16x64xf32>
    tpu.vector_store %arg21[%c0_27, %c0_28, %c0_29], %85 {strides = array<i32>} : memref<16x16x256xf32, #tpu.memory_space<vmem>>, vector<16x16x64xf32>,
    %87 = vector.shape_cast %79 : vector<16x16xf32> to vector<16x16x1xf32>
    %88 = vector.shape_cast %87 : vector<16x16x1xf32> to vector<16x16x1xf32>
    %89 = vector.broadcast %88 : vector<16x16x1xf32> to vector<16x16x64xf32>
    %c0_30 = arith.constant 0 : index
    %c0_31 = arith.constant 0 : index
    %c0_32 = arith.constant 0 : index
    %90 = vector.load %arg22[%c0_30, %c0_31, %c0_32] : memref<16x16x256xf32, #tpu.memory_space<vmem>>, vector<16x16x64xf32>
    tpu.vector_store %arg22[%c0_30, %c0_31, %c0_32], %89 {strides = array<i32>} : memref<16x16x256xf32, #tpu.memory_space<vmem>>, vector<16x16x64xf32>,
    %91 = vector.extract_strided_slice %68 {offsets = [0, 16], sizes = [16, 16], strides = [1, 1]} : vector<16x128xf32> to vector<16x16xf32>
    %92 = vector.extract_strided_slice %68 {offsets = [0, 80], sizes = [16, 16], strides = [1, 1]} : vector<16x128xf32> to vector<16x16xf32>
    %93 = vector.extract_strided_slice %69 {offsets = [0, 64], sizes = [16, 64], strides = [1, 1]} : vector<16x256xf32> to vector<16x64xf32>
    %94 = vector.shape_cast %93 : vector<16x64xf32> to vector<16x1x64xf32>
    %95 = vector.shape_cast %91 : vector<16x16xf32> to vector<16x16x1xf32>
    %96 = vector.broadcast %94 : vector<16x1x64xf32> to vector<16x16x64xf32>
    %97 = vector.broadcast %95 : vector<16x16x1xf32> to vector<16x16x64xf32>
    %98 = arith.mulf %96, %97 : vector<16x16x64xf32>
    %c0_33 = arith.constant 0 : index
    %c0_34 = arith.constant 0 : index
    %c64 = arith.constant 64 : index
    %99 = vector.load %arg21[%c0_33, %c0_34, %c64] : memref<16x16x256xf32, #tpu.memory_space<vmem>>, vector<16x16x64xf32>
    tpu.vector_store %arg21[%c0_33, %c0_34, %c64], %98 {strides = array<i32>} : memref<16x16x256xf32, #tpu.memory_space<vmem>>, vector<16x16x64xf32>,
    %100 = vector.shape_cast %92 : vector<16x16xf32> to vector<16x16x1xf32>
    %101 = vector.shape_cast %100 : vector<16x16x1xf32> to vector<16x16x1xf32>
    %102 = vector.broadcast %101 : vector<16x16x1xf32> to vector<16x16x64xf32>
    %c0_35 = arith.constant 0 : index
    %c0_36 = arith.constant 0 : index
    %c64_37 = arith.constant 64 : index
    %103 = vector.load %arg22[%c0_35, %c0_36, %c64_37] : memref<16x16x256xf32, #tpu.memory_space<vmem>>, vector<16x16x64xf32>
    tpu.vector_store %arg22[%c0_35, %c0_36, %c64_37], %102 {strides = array<i32>} : memref<16x16x256xf32, #tpu.memory_space<vmem>>, vector<16x16x64xf32>,
    %104 = vector.extract_strided_slice %68 {offsets = [0, 32], sizes = [16, 16], strides = [1, 1]} : vector<16x128xf32> to vector<16x16xf32>
    %105 = vector.extract_strided_slice %68 {offsets = [0, 96], sizes = [16, 16], strides = [1, 1]} : vector<16x128xf32> to vector<16x16xf32>
    %106 = vector.extract_strided_slice %69 {offsets = [0, 128], sizes = [16, 64], strides = [1, 1]} : vector<16x256xf32> to vector<16x64xf32>
    %107 = vector.shape_cast %106 : vector<16x64xf32> to vector<16x1x64xf32>
    %108 = vector.shape_cast %104 : vector<16x16xf32> to vector<16x16x1xf32>
    %109 = vector.broadcast %107 : vector<16x1x64xf32> to vector<16x16x64xf32>
    %110 = vector.broadcast %108 : vector<16x16x1xf32> to vector<16x16x64xf32>
    %111 = arith.mulf %109, %110 : vector<16x16x64xf32>
    %c0_38 = arith.constant 0 : index
    %c0_39 = arith.constant 0 : index
    %c128 = arith.constant 128 : index
    %112 = vector.load %arg21[%c0_38, %c0_39, %c128] : memref<16x16x256xf32, #tpu.memory_space<vmem>>, vector<16x16x64xf32>
    tpu.vector_store %arg21[%c0_38, %c0_39, %c128], %111 {strides = array<i32>} : memref<16x16x256xf32, #tpu.memory_space<vmem>>, vector<16x16x64xf32>,
    %113 = vector.shape_cast %105 : vector<16x16xf32> to vector<16x16x1xf32>
    %114 = vector.shape_cast %113 : vector<16x16x1xf32> to vector<16x16x1xf32>
    %115 = vector.broadcast %114 : vector<16x16x1xf32> to vector<16x16x64xf32>
    %c0_40 = arith.constant 0 : index
    %c0_41 = arith.constant 0 : index
    %c128_42 = arith.constant 128 : index
    %116 = vector.load %arg22[%c0_40, %c0_41, %c128_42] : memref<16x16x256xf32, #tpu.memory_space<vmem>>, vector<16x16x64xf32>
    tpu.vector_store %arg22[%c0_40, %c0_41, %c128_42], %115 {strides = array<i32>} : memref<16x16x256xf32, #tpu.memory_space<vmem>>, vector<16x16x64xf32>,
    %117 = vector.extract_strided_slice %68 {offsets = [0, 48], sizes = [16, 16], strides = [1, 1]} : vector<16x128xf32> to vector<16x16xf32>
    %118 = vector.extract_strided_slice %68 {offsets = [0, 112], sizes = [16, 16], strides = [1, 1]} : vector<16x128xf32> to vector<16x16xf32>
    %119 = vector.extract_strided_slice %69 {offsets = [0, 192], sizes = [16, 64], strides = [1, 1]} : vector<16x256xf32> to vector<16x64xf32>
    %120 = vector.shape_cast %119 : vector<16x64xf32> to vector<16x1x64xf32>
    %121 = vector.shape_cast %117 : vector<16x16xf32> to vector<16x16x1xf32>
    %122 = vector.broadcast %120 : vector<16x1x64xf32> to vector<16x16x64xf32>
    %123 = vector.broadcast %121 : vector<16x16x1xf32> to vector<16x16x64xf32>
    %124 = arith.mulf %122, %123 : vector<16x16x64xf32>
    %c0_43 = arith.constant 0 : index
    %c0_44 = arith.constant 0 : index
    %c192 = arith.constant 192 : index
    %125 = vector.load %arg21[%c0_43, %c0_44, %c192] : memref<16x16x256xf32, #tpu.memory_space<vmem>>, vector<16x16x64xf32>
    tpu.vector_store %arg21[%c0_43, %c0_44, %c192], %124 {strides = array<i32>} : memref<16x16x256xf32, #tpu.memory_space<vmem>>, vector<16x16x64xf32>,
    %126 = vector.shape_cast %118 : vector<16x16xf32> to vector<16x16x1xf32>
    %127 = vector.shape_cast %126 : vector<16x16x1xf32> to vector<16x16x1xf32>
    %128 = vector.broadcast %127 : vector<16x16x1xf32> to vector<16x16x64xf32>
    %c0_45 = arith.constant 0 : index
    %c0_46 = arith.constant 0 : index
    %c192_47 = arith.constant 192 : index
    %129 = vector.load %arg22[%c0_45, %c0_46, %c192_47] : memref<16x16x256xf32, #tpu.memory_space<vmem>>, vector<16x16x64xf32>
    tpu.vector_store %arg22[%c0_45, %c0_46, %c192_47], %128 {strides = array<i32>} : memref<16x16x256xf32, #tpu.memory_space<vmem>>, vector<16x16x64xf32>,
    %cst_48 = arith.constant 0.000000e+00 : f32
    %130 = vector.broadcast %cst_48 : f32 to vector<16x256xf32>
    %c0_49 = arith.constant 0 : index
    %c0_50 = arith.constant 0 : index
    %c0_51 = arith.constant 0 : index
    %131 = vector.load %arg20[%c0_49, %c0_50, %c0_51] : memref<16x16x256xf32, #tpu.memory_space<vmem>>, vector<1x16x256xf32>
    %132 = vector.shape_cast %131 : vector<1x16x256xf32> to vector<16x256xf32>
    %133 = arith.mulf %132, %130 : vector<16x256xf32>
    %c0_52 = arith.constant 0 : index
    %c0_53 = arith.constant 0 : index
    %c0_54 = arith.constant 0 : index
    %134 = vector.load %arg21[%c0_52, %c0_53, %c0_54] : memref<16x16x256xf32, #tpu.memory_space<vmem>>, vector<1x16x256xf32>
    %135 = vector.shape_cast %134 : vector<1x16x256xf32> to vector<16x256xf32>
    %136 = arith.addf %133, %135 : vector<16x256xf32>
    %c0_55 = arith.constant 0 : index
    %c0_56 = arith.constant 0 : index
    %c0_57 = arith.constant 0 : index
    %137 = vector.load %arg22[%c0_55, %c0_56, %c0_57] : memref<16x16x256xf32, #tpu.memory_space<vmem>>, vector<1x16x256xf32>
    %138 = vector.shape_cast %137 : vector<1x16x256xf32> to vector<16x256xf32>
    %139 = arith.mulf %138, %136 : vector<16x256xf32>
    %cst_58 = arith.constant dense<0.000000e+00> : vector<256xf32>
    %140 = vector.multi_reduction <add>, %139, %cst_58 [0] : vector<16x256xf32> to vector<256xf32>
    %141 = vector.shape_cast %140 : vector<256xf32> to vector<1x256xf32>
    %c1 = arith.constant 1 : index
    %c0_59 = arith.constant 0 : index
    %c0_60 = arith.constant 0 : index
    %142 = vector.load %arg20[%c1, %c0_59, %c0_60] : memref<16x16x256xf32, #tpu.memory_space<vmem>>, vector<1x16x256xf32>
    %143 = vector.shape_cast %142 : vector<1x16x256xf32> to vector<16x256xf32>
    %144 = arith.mulf %143, %136 : vector<16x256xf32>
    %c1_61 = arith.constant 1 : index
    %c0_62 = arith.constant 0 : index
    %c0_63 = arith.constant 0 : index
    %145 = vector.load %arg21[%c1_61, %c0_62, %c0_63] : memref<16x16x256xf32, #tpu.memory_space<vmem>>, vector<1x16x256xf32>
    %146 = vector.shape_cast %145 : vector<1x16x256xf32> to vector<16x256xf32>
    %147 = arith.addf %144, %146 : vector<16x256xf32>
    %c1_64 = arith.constant 1 : index
    %c0_65 = arith.constant 0 : index
    %c0_66 = arith.constant 0 : index
    %148 = vector.load %arg22[%c1_64, %c0_65, %c0_66] : memref<16x16x256xf32, #tpu.memory_space<vmem>>, vector<1x16x256xf32>
    %149 = vector.shape_cast %148 : vector<1x16x256xf32> to vector<16x256xf32>
    %150 = arith.mulf %149, %147 : vector<16x256xf32>
    %cst_67 = arith.constant dense<0.000000e+00> : vector<256xf32>
    %151 = vector.multi_reduction <add>, %150, %cst_67 [0] : vector<16x256xf32> to vector<256xf32>
    %152 = vector.shape_cast %151 : vector<256xf32> to vector<1x256xf32>
    %c2 = arith.constant 2 : index
    %c0_68 = arith.constant 0 : index
    %c0_69 = arith.constant 0 : index
    %153 = vector.load %arg20[%c2, %c0_68, %c0_69] : memref<16x16x256xf32, #tpu.memory_space<vmem>>, vector<1x16x256xf32>
    %154 = vector.shape_cast %153 : vector<1x16x256xf32> to vector<16x256xf32>
    %155 = arith.mulf %154, %147 : vector<16x256xf32>
    %c2_70 = arith.constant 2 : index
    %c0_71 = arith.constant 0 : index
    %c0_72 = arith.constant 0 : index
    %156 = vector.load %arg21[%c2_70, %c0_71, %c0_72] : memref<16x16x256xf32, #tpu.memory_space<vmem>>, vector<1x16x256xf32>
    %157 = vector.shape_cast %156 : vector<1x16x256xf32> to vector<16x256xf32>
    %158 = arith.addf %155, %157 : vector<16x256xf32>
    %c2_73 = arith.constant 2 : index
    %c0_74 = arith.constant 0 : index
    %c0_75 = arith.constant 0 : index
    %159 = vector.load %arg22[%c2_73, %c0_74, %c0_75] : memref<16x16x256xf32, #tpu.memory_space<vmem>>, vector<1x16x256xf32>
    %160 = vector.shape_cast %159 : vector<1x16x256xf32> to vector<16x256xf32>
    %161 = arith.mulf %160, %158 : vector<16x256xf32>
    %cst_76 = arith.constant dense<0.000000e+00> : vector<256xf32>
    %162 = vector.multi_reduction <add>, %161, %cst_76 [0] : vector<16x256xf32> to vector<256xf32>
    %163 = vector.shape_cast %162 : vector<256xf32> to vector<1x256xf32>
    %c3 = arith.constant 3 : index
    %c0_77 = arith.constant 0 : index
    %c0_78 = arith.constant 0 : index
    %164 = vector.load %arg20[%c3, %c0_77, %c0_78] : memref<16x16x256xf32, #tpu.memory_space<vmem>>, vector<1x16x256xf32>
    %165 = vector.shape_cast %164 : vector<1x16x256xf32> to vector<16x256xf32>
    %166 = arith.mulf %165, %158 : vector<16x256xf32>
    %c3_79 = arith.constant 3 : index
    %c0_80 = arith.constant 0 : index
    %c0_81 = arith.constant 0 : index
    %167 = vector.load %arg21[%c3_79, %c0_80, %c0_81] : memref<16x16x256xf32, #tpu.memory_space<vmem>>, vector<1x16x256xf32>
    %168 = vector.shape_cast %167 : vector<1x16x256xf32> to vector<16x256xf32>
    %169 = arith.addf %166, %168 : vector<16x256xf32>
    %c3_82 = arith.constant 3 : index
    %c0_83 = arith.constant 0 : index
    %c0_84 = arith.constant 0 : index
    %170 = vector.load %arg22[%c3_82, %c0_83, %c0_84] : memref<16x16x256xf32, #tpu.memory_space<vmem>>, vector<1x16x256xf32>
    %171 = vector.shape_cast %170 : vector<1x16x256xf32> to vector<16x256xf32>
    %172 = arith.mulf %171, %169 : vector<16x256xf32>
    %cst_85 = arith.constant dense<0.000000e+00> : vector<256xf32>
    %173 = vector.multi_reduction <add>, %172, %cst_85 [0] : vector<16x256xf32> to vector<256xf32>
    %174 = vector.shape_cast %173 : vector<256xf32> to vector<1x256xf32>
    %c4 = arith.constant 4 : index
    %c0_86 = arith.constant 0 : index
    %c0_87 = arith.constant 0 : index
    %175 = vector.load %arg20[%c4, %c0_86, %c0_87] : memref<16x16x256xf32, #tpu.memory_space<vmem>>, vector<1x16x256xf32>
    %176 = vector.shape_cast %175 : vector<1x16x256xf32> to vector<16x256xf32>
    %177 = arith.mulf %176, %169 : vector<16x256xf32>
    %c4_88 = arith.constant 4 : index
    %c0_89 = arith.constant 0 : index
    %c0_90 = arith.constant 0 : index
    %178 = vector.load %arg21[%c4_88, %c0_89, %c0_90] : memref<16x16x256xf32, #tpu.memory_space<vmem>>, vector<1x16x256xf32>
    %179 = vector.shape_cast %178 : vector<1x16x256xf32> to vector<16x256xf32>
    %180 = arith.addf %177, %179 : vector<16x256xf32>
    %c4_91 = arith.constant 4 : index
    %c0_92 = arith.constant 0 : index
    %c0_93 = arith.constant 0 : index
    %181 = vector.load %arg22[%c4_91, %c0_92, %c0_93] : memref<16x16x256xf32, #tpu.memory_space<vmem>>, vector<1x16x256xf32>
    %182 = vector.shape_cast %181 : vector<1x16x256xf32> to vector<16x256xf32>
    %183 = arith.mulf %182, %180 : vector<16x256xf32>
    %cst_94 = arith.constant dense<0.000000e+00> : vector<256xf32>
    %184 = vector.multi_reduction <add>, %183, %cst_94 [0] : vector<16x256xf32> to vector<256xf32>
    %185 = vector.shape_cast %184 : vector<256xf32> to vector<1x256xf32>
    %c5 = arith.constant 5 : index
    %c0_95 = arith.constant 0 : index
    %c0_96 = arith.constant 0 : index
    %186 = vector.load %arg20[%c5, %c0_95, %c0_96] : memref<16x16x256xf32, #tpu.memory_space<vmem>>, vector<1x16x256xf32>
    %187 = vector.shape_cast %186 : vector<1x16x256xf32> to vector<16x256xf32>
    %188 = arith.mulf %187, %180 : vector<16x256xf32>
    %c5_97 = arith.constant 5 : index
    %c0_98 = arith.constant 0 : index
    %c0_99 = arith.constant 0 : index
    %189 = vector.load %arg21[%c5_97, %c0_98, %c0_99] : memref<16x16x256xf32, #tpu.memory_space<vmem>>, vector<1x16x256xf32>
    %190 = vector.shape_cast %189 : vector<1x16x256xf32> to vector<16x256xf32>
    %191 = arith.addf %188, %190 : vector<16x256xf32>
    %c5_100 = arith.constant 5 : index
    %c0_101 = arith.constant 0 : index
    %c0_102 = arith.constant 0 : index
    %192 = vector.load %arg22[%c5_100, %c0_101, %c0_102] : memref<16x16x256xf32, #tpu.memory_space<vmem>>, vector<1x16x256xf32>
    %193 = vector.shape_cast %192 : vector<1x16x256xf32> to vector<16x256xf32>
    %194 = arith.mulf %193, %191 : vector<16x256xf32>
    %cst_103 = arith.constant dense<0.000000e+00> : vector<256xf32>
    %195 = vector.multi_reduction <add>, %194, %cst_103 [0] : vector<16x256xf32> to vector<256xf32>
    %196 = vector.shape_cast %195 : vector<256xf32> to vector<1x256xf32>
    %c6 = arith.constant 6 : index
    %c0_104 = arith.constant 0 : index
    %c0_105 = arith.constant 0 : index
    %197 = vector.load %arg20[%c6, %c0_104, %c0_105] : memref<16x16x256xf32, #tpu.memory_space<vmem>>, vector<1x16x256xf32>
    %198 = vector.shape_cast %197 : vector<1x16x256xf32> to vector<16x256xf32>
    %199 = arith.mulf %198, %191 : vector<16x256xf32>
    %c6_106 = arith.constant 6 : index
    %c0_107 = arith.constant 0 : index
    %c0_108 = arith.constant 0 : index
    %200 = vector.load %arg21[%c6_106, %c0_107, %c0_108] : memref<16x16x256xf32, #tpu.memory_space<vmem>>, vector<1x16x256xf32>
    %201 = vector.shape_cast %200 : vector<1x16x256xf32> to vector<16x256xf32>
    %202 = arith.addf %199, %201 : vector<16x256xf32>
    %c6_109 = arith.constant 6 : index
    %c0_110 = arith.constant 0 : index
    %c0_111 = arith.constant 0 : index
    %203 = vector.load %arg22[%c6_109, %c0_110, %c0_111] : memref<16x16x256xf32, #tpu.memory_space<vmem>>, vector<1x16x256xf32>
    %204 = vector.shape_cast %203 : vector<1x16x256xf32> to vector<16x256xf32>
    %205 = arith.mulf %204, %202 : vector<16x256xf32>
    %cst_112 = arith.constant dense<0.000000e+00> : vector<256xf32>
    %206 = vector.multi_reduction <add>, %205, %cst_112 [0] : vector<16x256xf32> to vector<256xf32>
    %207 = vector.shape_cast %206 : vector<256xf32> to vector<1x256xf32>
    %c7 = arith.constant 7 : index
    %c0_113 = arith.constant 0 : index
    %c0_114 = arith.constant 0 : index
    %208 = vector.load %arg20[%c7, %c0_113, %c0_114] : memref<16x16x256xf32, #tpu.memory_space<vmem>>, vector<1x16x256xf32>
    %209 = vector.shape_cast %208 : vector<1x16x256xf32> to vector<16x256xf32>
    %210 = arith.mulf %209, %202 : vector<16x256xf32>
    %c7_115 = arith.constant 7 : index
    %c0_116 = arith.constant 0 : index
    %c0_117 = arith.constant 0 : index
    %211 = vector.load %arg21[%c7_115, %c0_116, %c0_117] : memref<16x16x256xf32, #tpu.memory_space<vmem>>, vector<1x16x256xf32>
    %212 = vector.shape_cast %211 : vector<1x16x256xf32> to vector<16x256xf32>
    %213 = arith.addf %210, %212 : vector<16x256xf32>
    %c7_118 = arith.constant 7 : index
    %c0_119 = arith.constant 0 : index
    %c0_120 = arith.constant 0 : index
    %214 = vector.load %arg22[%c7_118, %c0_119, %c0_120] : memref<16x16x256xf32, #tpu.memory_space<vmem>>, vector<1x16x256xf32>
    %215 = vector.shape_cast %214 : vector<1x16x256xf32> to vector<16x256xf32>
    %216 = arith.mulf %215, %213 : vector<16x256xf32>
    %cst_121 = arith.constant dense<0.000000e+00> : vector<256xf32>
    %217 = vector.multi_reduction <add>, %216, %cst_121 [0] : vector<16x256xf32> to vector<256xf32>
    %218 = vector.shape_cast %217 : vector<256xf32> to vector<1x256xf32>
    %c8 = arith.constant 8 : index
    %c0_122 = arith.constant 0 : index
    %c0_123 = arith.constant 0 : index
    %219 = vector.load %arg20[%c8, %c0_122, %c0_123] : memref<16x16x256xf32, #tpu.memory_space<vmem>>, vector<1x16x256xf32>
    %220 = vector.shape_cast %219 : vector<1x16x256xf32> to vector<16x256xf32>
    %221 = arith.mulf %220, %213 : vector<16x256xf32>
    %c8_124 = arith.constant 8 : index
    %c0_125 = arith.constant 0 : index
    %c0_126 = arith.constant 0 : index
    %222 = vector.load %arg21[%c8_124, %c0_125, %c0_126] : memref<16x16x256xf32, #tpu.memory_space<vmem>>, vector<1x16x256xf32>
    %223 = vector.shape_cast %222 : vector<1x16x256xf32> to vector<16x256xf32>
    %224 = arith.addf %221, %223 : vector<16x256xf32>
    %c8_127 = arith.constant 8 : index
    %c0_128 = arith.constant 0 : index
    %c0_129 = arith.constant 0 : index
    %225 = vector.load %arg22[%c8_127, %c0_128, %c0_129] : memref<16x16x256xf32, #tpu.memory_space<vmem>>, vector<1x16x256xf32>
    %226 = vector.shape_cast %225 : vector<1x16x256xf32> to vector<16x256xf32>
    %227 = arith.mulf %226, %224 : vector<16x256xf32>
    %cst_130 = arith.constant dense<0.000000e+00> : vector<256xf32>
    %228 = vector.multi_reduction <add>, %227, %cst_130 [0] : vector<16x256xf32> to vector<256xf32>
    %229 = vector.shape_cast %228 : vector<256xf32> to vector<1x256xf32>
    %c9 = arith.constant 9 : index
    %c0_131 = arith.constant 0 : index
    %c0_132 = arith.constant 0 : index
    %230 = vector.load %arg20[%c9, %c0_131, %c0_132] : memref<16x16x256xf32, #tpu.memory_space<vmem>>, vector<1x16x256xf32>
    %231 = vector.shape_cast %230 : vector<1x16x256xf32> to vector<16x256xf32>
    %232 = arith.mulf %231, %224 : vector<16x256xf32>
    %c9_133 = arith.constant 9 : index
    %c0_134 = arith.constant 0 : index
    %c0_135 = arith.constant 0 : index
    %233 = vector.load %arg21[%c9_133, %c0_134, %c0_135] : memref<16x16x256xf32, #tpu.memory_space<vmem>>, vector<1x16x256xf32>
    %234 = vector.shape_cast %233 : vector<1x16x256xf32> to vector<16x256xf32>
    %235 = arith.addf %232, %234 : vector<16x256xf32>
    %c9_136 = arith.constant 9 : index
    %c0_137 = arith.constant 0 : index
    %c0_138 = arith.constant 0 : index
    %236 = vector.load %arg22[%c9_136, %c0_137, %c0_138] : memref<16x16x256xf32, #tpu.memory_space<vmem>>, vector<1x16x256xf32>
    %237 = vector.shape_cast %236 : vector<1x16x256xf32> to vector<16x256xf32>
    %238 = arith.mulf %237, %235 : vector<16x256xf32>
    %cst_139 = arith.constant dense<0.000000e+00> : vector<256xf32>
    %239 = vector.multi_reduction <add>, %238, %cst_139 [0] : vector<16x256xf32> to vector<256xf32>
    %240 = vector.shape_cast %239 : vector<256xf32> to vector<1x256xf32>
    %c10 = arith.constant 10 : index
    %c0_140 = arith.constant 0 : index
    %c0_141 = arith.constant 0 : index
    %241 = vector.load %arg20[%c10, %c0_140, %c0_141] : memref<16x16x256xf32, #tpu.memory_space<vmem>>, vector<1x16x256xf32>
    %242 = vector.shape_cast %241 : vector<1x16x256xf32> to vector<16x256xf32>
    %243 = arith.mulf %242, %235 : vector<16x256xf32>
    %c10_142 = arith.constant 10 : index
    %c0_143 = arith.constant 0 : index
    %c0_144 = arith.constant 0 : index
    %244 = vector.load %arg21[%c10_142, %c0_143, %c0_144] : memref<16x16x256xf32, #tpu.memory_space<vmem>>, vector<1x16x256xf32>
    %245 = vector.shape_cast %244 : vector<1x16x256xf32> to vector<16x256xf32>
    %246 = arith.addf %243, %245 : vector<16x256xf32>
    %c10_145 = arith.constant 10 : index
    %c0_146 = arith.constant 0 : index
    %c0_147 = arith.constant 0 : index
    %247 = vector.load %arg22[%c10_145, %c0_146, %c0_147] : memref<16x16x256xf32, #tpu.memory_space<vmem>>, vector<1x16x256xf32>
    %248 = vector.shape_cast %247 : vector<1x16x256xf32> to vector<16x256xf32>
    %249 = arith.mulf %248, %246 : vector<16x256xf32>
    %cst_148 = arith.constant dense<0.000000e+00> : vector<256xf32>
    %250 = vector.multi_reduction <add>, %249, %cst_148 [0] : vector<16x256xf32> to vector<256xf32>
    %251 = vector.shape_cast %250 : vector<256xf32> to vector<1x256xf32>
    %c11 = arith.constant 11 : index
    %c0_149 = arith.constant 0 : index
    %c0_150 = arith.constant 0 : index
    %252 = vector.load %arg20[%c11, %c0_149, %c0_150] : memref<16x16x256xf32, #tpu.memory_space<vmem>>, vector<1x16x256xf32>
    %253 = vector.shape_cast %252 : vector<1x16x256xf32> to vector<16x256xf32>
    %254 = arith.mulf %253, %246 : vector<16x256xf32>
    %c11_151 = arith.constant 11 : index
    %c0_152 = arith.constant 0 : index
    %c0_153 = arith.constant 0 : index
    %255 = vector.load %arg21[%c11_151, %c0_152, %c0_153] : memref<16x16x256xf32, #tpu.memory_space<vmem>>, vector<1x16x256xf32>
    %256 = vector.shape_cast %255 : vector<1x16x256xf32> to vector<16x256xf32>
    %257 = arith.addf %254, %256 : vector<16x256xf32>
    %c11_154 = arith.constant 11 : index
    %c0_155 = arith.constant 0 : index
    %c0_156 = arith.constant 0 : index
    %258 = vector.load %arg22[%c11_154, %c0_155, %c0_156] : memref<16x16x256xf32, #tpu.memory_space<vmem>>, vector<1x16x256xf32>
    %259 = vector.shape_cast %258 : vector<1x16x256xf32> to vector<16x256xf32>
    %260 = arith.mulf %259, %257 : vector<16x256xf32>
    %cst_157 = arith.constant dense<0.000000e+00> : vector<256xf32>
    %261 = vector.multi_reduction <add>, %260, %cst_157 [0] : vector<16x256xf32> to vector<256xf32>
    %262 = vector.shape_cast %261 : vector<256xf32> to vector<1x256xf32>
    %c12 = arith.constant 12 : index
    %c0_158 = arith.constant 0 : index
    %c0_159 = arith.constant 0 : index
    %263 = vector.load %arg20[%c12, %c0_158, %c0_159] : memref<16x16x256xf32, #tpu.memory_space<vmem>>, vector<1x16x256xf32>
    %264 = vector.shape_cast %263 : vector<1x16x256xf32> to vector<16x256xf32>
    %265 = arith.mulf %264, %257 : vector<16x256xf32>
    %c12_160 = arith.constant 12 : index
    %c0_161 = arith.constant 0 : index
    %c0_162 = arith.constant 0 : index
    %266 = vector.load %arg21[%c12_160, %c0_161, %c0_162] : memref<16x16x256xf32, #tpu.memory_space<vmem>>, vector<1x16x256xf32>
    %267 = vector.shape_cast %266 : vector<1x16x256xf32> to vector<16x256xf32>
    %268 = arith.addf %265, %267 : vector<16x256xf32>
    %c12_163 = arith.constant 12 : index
    %c0_164 = arith.constant 0 : index
    %c0_165 = arith.constant 0 : index
    %269 = vector.load %arg22[%c12_163, %c0_164, %c0_165] : memref<16x16x256xf32, #tpu.memory_space<vmem>>, vector<1x16x256xf32>
    %270 = vector.shape_cast %269 : vector<1x16x256xf32> to vector<16x256xf32>
    %271 = arith.mulf %270, %268 : vector<16x256xf32>
    %cst_166 = arith.constant dense<0.000000e+00> : vector<256xf32>
    %272 = vector.multi_reduction <add>, %271, %cst_166 [0] : vector<16x256xf32> to vector<256xf32>
    %273 = vector.shape_cast %272 : vector<256xf32> to vector<1x256xf32>
    %c13 = arith.constant 13 : index
    %c0_167 = arith.constant 0 : index
    %c0_168 = arith.constant 0 : index
    %274 = vector.load %arg20[%c13, %c0_167, %c0_168] : memref<16x16x256xf32, #tpu.memory_space<vmem>>, vector<1x16x256xf32>
    %275 = vector.shape_cast %274 : vector<1x16x256xf32> to vector<16x256xf32>
    %276 = arith.mulf %275, %268 : vector<16x256xf32>
    %c13_169 = arith.constant 13 : index
    %c0_170 = arith.constant 0 : index
    %c0_171 = arith.constant 0 : index
    %277 = vector.load %arg21[%c13_169, %c0_170, %c0_171] : memref<16x16x256xf32, #tpu.memory_space<vmem>>, vector<1x16x256xf32>
    %278 = vector.shape_cast %277 : vector<1x16x256xf32> to vector<16x256xf32>
    %279 = arith.addf %276, %278 : vector<16x256xf32>
    %c13_172 = arith.constant 13 : index
    %c0_173 = arith.constant 0 : index
    %c0_174 = arith.constant 0 : index
    %280 = vector.load %arg22[%c13_172, %c0_173, %c0_174] : memref<16x16x256xf32, #tpu.memory_space<vmem>>, vector<1x16x256xf32>
    %281 = vector.shape_cast %280 : vector<1x16x256xf32> to vector<16x256xf32>
    %282 = arith.mulf %281, %279 : vector<16x256xf32>
    %cst_175 = arith.constant dense<0.000000e+00> : vector<256xf32>
    %283 = vector.multi_reduction <add>, %282, %cst_175 [0] : vector<16x256xf32> to vector<256xf32>
    %284 = vector.shape_cast %283 : vector<256xf32> to vector<1x256xf32>
    %c14 = arith.constant 14 : index
    %c0_176 = arith.constant 0 : index
    %c0_177 = arith.constant 0 : index
    %285 = vector.load %arg20[%c14, %c0_176, %c0_177] : memref<16x16x256xf32, #tpu.memory_space<vmem>>, vector<1x16x256xf32>
    %286 = vector.shape_cast %285 : vector<1x16x256xf32> to vector<16x256xf32>
    %287 = arith.mulf %286, %279 : vector<16x256xf32>
    %c14_178 = arith.constant 14 : index
    %c0_179 = arith.constant 0 : index
    %c0_180 = arith.constant 0 : index
    %288 = vector.load %arg21[%c14_178, %c0_179, %c0_180] : memref<16x16x256xf32, #tpu.memory_space<vmem>>, vector<1x16x256xf32>
    %289 = vector.shape_cast %288 : vector<1x16x256xf32> to vector<16x256xf32>
    %290 = arith.addf %287, %289 : vector<16x256xf32>
    %c14_181 = arith.constant 14 : index
    %c0_182 = arith.constant 0 : index
    %c0_183 = arith.constant 0 : index
    %291 = vector.load %arg22[%c14_181, %c0_182, %c0_183] : memref<16x16x256xf32, #tpu.memory_space<vmem>>, vector<1x16x256xf32>
    %292 = vector.shape_cast %291 : vector<1x16x256xf32> to vector<16x256xf32>
    %293 = arith.mulf %292, %290 : vector<16x256xf32>
    %cst_184 = arith.constant dense<0.000000e+00> : vector<256xf32>
    %294 = vector.multi_reduction <add>, %293, %cst_184 [0] : vector<16x256xf32> to vector<256xf32>
    %295 = vector.shape_cast %294 : vector<256xf32> to vector<1x256xf32>
    %c15 = arith.constant 15 : index
    %c0_185 = arith.constant 0 : index
    %c0_186 = arith.constant 0 : index
    %296 = vector.load %arg20[%c15, %c0_185, %c0_186] : memref<16x16x256xf32, #tpu.memory_space<vmem>>, vector<1x16x256xf32>
    %297 = vector.shape_cast %296 : vector<1x16x256xf32> to vector<16x256xf32>
    %298 = arith.mulf %297, %290 : vector<16x256xf32>
    %c15_187 = arith.constant 15 : index
    %c0_188 = arith.constant 0 : index
    %c0_189 = arith.constant 0 : index
    %299 = vector.load %arg21[%c15_187, %c0_188, %c0_189] : memref<16x16x256xf32, #tpu.memory_space<vmem>>, vector<1x16x256xf32>
    %300 = vector.shape_cast %299 : vector<1x16x256xf32> to vector<16x256xf32>
    %301 = arith.addf %298, %300 : vector<16x256xf32>
    %c15_190 = arith.constant 15 : index
    %c0_191 = arith.constant 0 : index
    %c0_192 = arith.constant 0 : index
    %302 = vector.load %arg22[%c15_190, %c0_191, %c0_192] : memref<16x16x256xf32, #tpu.memory_space<vmem>>, vector<1x16x256xf32>
    %303 = vector.shape_cast %302 : vector<1x16x256xf32> to vector<16x256xf32>
    %304 = arith.mulf %303, %301 : vector<16x256xf32>
    %cst_193 = arith.constant dense<0.000000e+00> : vector<256xf32>
    %305 = vector.multi_reduction <add>, %304, %cst_193 [0] : vector<16x256xf32> to vector<256xf32>
    %306 = vector.shape_cast %305 : vector<256xf32> to vector<1x256xf32>
    %307 = tpu.concatenate %141, %152, %163, %174, %185, %196, %207, %218, %229, %240, %251, %262, %273, %284, %295, %306 in 0 : vector<1x256xf32>, vector<1x256xf32>, vector<1x256xf32>, vector<1x256xf32>, vector<1x256xf32>, vector<1x256xf32>, vector<1x256xf32>, vector<1x256xf32>, vector<1x256xf32>, vector<1x256xf32>, vector<1x256xf32>, vector<1x256xf32>, vector<1x256xf32>, vector<1x256xf32>, vector<1x256xf32>, vector<1x256xf32> -> vector<16x256xf32>
    %c0_194 = arith.constant 0 : index
    %c0_195 = arith.constant 0 : index
    %308 = vector.load %arg10[%c0_194, %c0_195] : memref<1x256xf32, #tpu.memory_space<vmem>>, vector<1x256xf32>
    %309 = vector.broadcast %308 : vector<1x256xf32> to vector<16x256xf32>
    %310 = arith.mulf %47, %309 : vector<16x256xf32>
    %311 = arith.addf %307, %310 : vector<16x256xf32>
    %312 = arith.negf %5 : vector<16x64xf32>
    %313 = math.exp %312 : vector<16x64xf32>
    %cst_196 = arith.constant 1.000000e+00 : f32
    %314 = vector.broadcast %cst_196 : f32 to vector<16x64xf32>
    %315 = arith.addf %314, %313 : vector<16x64xf32>
    %316 = arith.divf %314, %315 : vector<16x64xf32>
    %317 = arith.mulf %5, %316 : vector<16x64xf32>
    %c0_197 = arith.constant 0 : index
    %c0_198 = arith.constant 0 : index
    %c0_199 = arith.constant 0 : index
    %318 = vector.load %arg11[%c0_197, %c0_198, %c0_199] : memref<4x16x16xf32, #tpu.memory_space<vmem>>, vector<1x16x16xf32>
    %319 = vector.shape_cast %318 : vector<1x16x16xf32> to vector<16x16xf32>
    %320 = vector.extract_strided_slice %311 {offsets = [0, 0], sizes = [16, 64], strides = [1, 1]} : vector<16x256xf32> to vector<16x64xf32>
    %cst_200 = arith.constant dense<0.000000e+00> : vector<16x64xf32>
    %321 = tpu.matmul %319, %320, %cst_200 {dimension_numbers = #tpu.dot_dimension_numbers<[1], [0], [0], [1], [0, 0, 1, 1], [], []>} : vector<16x16xf32>, vector<16x64xf32>, vector<16x64xf32> -> vector<16x64xf32>
    %322 = arith.mulf %321, %317 : vector<16x64xf32>
    %cst_201 = arith.constant dense<0.000000e+00> : vector<16xf32>
    %323 = vector.multi_reduction <add>, %322, %cst_201 [1] : vector<16x64xf32> to vector<16xf32>
    %324 = vector.shape_cast %323 : vector<16xf32> to vector<16x1xf32>
    %cst_202 = arith.constant 6.400000e+01 : f32
    %325 = vector.broadcast %cst_202 : f32 to vector<16x1xf32>
    %326 = arith.divf %324, %325 : vector<16x1xf32>
    %327 = vector.broadcast %326 : vector<16x1xf32> to vector<16x64xf32>
    %328 = arith.subf %322, %327 : vector<16x64xf32>
    %329 = arith.mulf %328, %328 : vector<16x64xf32>
    %cst_203 = arith.constant dense<0.000000e+00> : vector<16xf32>
    %330 = vector.multi_reduction <add>, %329, %cst_203 [1] : vector<16x64xf32> to vector<16xf32>
    %331 = vector.shape_cast %330 : vector<16xf32> to vector<16x1xf32>
    %cst_204 = arith.constant 6.400000e+01 : f32
    %332 = vector.broadcast %cst_204 : f32 to vector<16x1xf32>
    %333 = arith.divf %331, %332 : vector<16x1xf32>
    %334 = vector.broadcast %326 : vector<16x1xf32> to vector<16x64xf32>
    %335 = arith.subf %322, %334 : vector<16x64xf32>
    %cst_205 = arith.constant 9.99999974E-6 : f32
    %336 = vector.broadcast %cst_205 : f32 to vector<16x1xf32>
    %337 = arith.addf %333, %336 : vector<16x1xf32>
    %338 = math.rsqrt %337 : vector<16x1xf32>
    %339 = vector.broadcast %338 : vector<16x1xf32> to vector<16x64xf32>
    %340 = arith.mulf %335, %339 : vector<16x64xf32>
    %c0_206 = arith.constant 0 : index
    %c0_207 = arith.constant 0 : index
    %341 = vector.load %arg12[%c0_206, %c0_207] : memref<1x64xf32, #tpu.memory_space<vmem>>, vector<1x64xf32>
    %342 = vector.broadcast %341 : vector<1x64xf32> to vector<16x64xf32>
    %343 = arith.mulf %340, %342 : vector<16x64xf32>
    %c0_208 = arith.constant 0 : index
    %c0_209 = arith.constant 0 : index
    %344 = vector.load %arg13[%c0_208, %c0_209] : memref<1x64xf32, #tpu.memory_space<vmem>>, vector<1x64xf32>
    %345 = vector.broadcast %344 : vector<1x64xf32> to vector<16x64xf32>
    %346 = arith.addf %343, %345 : vector<16x64xf32>
    %cst_210 = arith.constant dense<0.000000e+00> : vector<64xf32>
    %347 = vector.multi_reduction <add>, %346, %cst_210 [0] : vector<16x64xf32> to vector<64xf32>
    %348 = vector.shape_cast %347 : vector<64xf32> to vector<1x64xf32>
    %cst_211 = arith.constant 1.600000e+01 : f32
    %349 = vector.broadcast %cst_211 : f32 to vector<1x64xf32>
    %350 = arith.divf %348, %349 : vector<1x64xf32>
    %c1_212 = arith.constant 1 : index
    %c0_213 = arith.constant 0 : index
    %c0_214 = arith.constant 0 : index
    %351 = vector.load %arg11[%c1_212, %c0_213, %c0_214] : memref<4x16x16xf32, #tpu.memory_space<vmem>>, vector<1x16x16xf32>
    %352 = vector.shape_cast %351 : vector<1x16x16xf32> to vector<16x16xf32>
    %353 = vector.extract_strided_slice %311 {offsets = [0, 64], sizes = [16, 64], strides = [1, 1]} : vector<16x256xf32> to vector<16x64xf32>
    %cst_215 = arith.constant dense<0.000000e+00> : vector<16x64xf32>
    %354 = tpu.matmul %352, %353, %cst_215 {dimension_numbers = #tpu.dot_dimension_numbers<[1], [0], [0], [1], [0, 0, 1, 1], [], []>} : vector<16x16xf32>, vector<16x64xf32>, vector<16x64xf32> -> vector<16x64xf32>
    %355 = arith.mulf %354, %317 : vector<16x64xf32>
    %cst_216 = arith.constant dense<0.000000e+00> : vector<16xf32>
    %356 = vector.multi_reduction <add>, %355, %cst_216 [1] : vector<16x64xf32> to vector<16xf32>
    %357 = vector.shape_cast %356 : vector<16xf32> to vector<16x1xf32>
    %cst_217 = arith.constant 6.400000e+01 : f32
    %358 = vector.broadcast %cst_217 : f32 to vector<16x1xf32>
    %359 = arith.divf %357, %358 : vector<16x1xf32>
    %360 = vector.broadcast %359 : vector<16x1xf32> to vector<16x64xf32>
    %361 = arith.subf %355, %360 : vector<16x64xf32>
    %362 = arith.mulf %361, %361 : vector<16x64xf32>
    %cst_218 = arith.constant dense<0.000000e+00> : vector<16xf32>
    %363 = vector.multi_reduction <add>, %362, %cst_218 [1] : vector<16x64xf32> to vector<16xf32>
    %364 = vector.shape_cast %363 : vector<16xf32> to vector<16x1xf32>
    %cst_219 = arith.constant 6.400000e+01 : f32
    %365 = vector.broadcast %cst_219 : f32 to vector<16x1xf32>
    %366 = arith.divf %364, %365 : vector<16x1xf32>
    %367 = vector.broadcast %359 : vector<16x1xf32> to vector<16x64xf32>
    %368 = arith.subf %355, %367 : vector<16x64xf32>
    %cst_220 = arith.constant 9.99999974E-6 : f32
    %369 = vector.broadcast %cst_220 : f32 to vector<16x1xf32>
    %370 = arith.addf %366, %369 : vector<16x1xf32>
    %371 = math.rsqrt %370 : vector<16x1xf32>
    %372 = vector.broadcast %371 : vector<16x1xf32> to vector<16x64xf32>
    %373 = arith.mulf %368, %372 : vector<16x64xf32>
    %c0_221 = arith.constant 0 : index
    %c0_222 = arith.constant 0 : index
    %374 = vector.load %arg12[%c0_221, %c0_222] : memref<1x64xf32, #tpu.memory_space<vmem>>, vector<1x64xf32>
    %375 = vector.broadcast %374 : vector<1x64xf32> to vector<16x64xf32>
    %376 = arith.mulf %373, %375 : vector<16x64xf32>
    %c0_223 = arith.constant 0 : index
    %c0_224 = arith.constant 0 : index
    %377 = vector.load %arg13[%c0_223, %c0_224] : memref<1x64xf32, #tpu.memory_space<vmem>>, vector<1x64xf32>
    %378 = vector.broadcast %377 : vector<1x64xf32> to vector<16x64xf32>
    %379 = arith.addf %376, %378 : vector<16x64xf32>
    %cst_225 = arith.constant dense<0.000000e+00> : vector<64xf32>
    %380 = vector.multi_reduction <add>, %379, %cst_225 [0] : vector<16x64xf32> to vector<64xf32>
    %381 = vector.shape_cast %380 : vector<64xf32> to vector<1x64xf32>
    %cst_226 = arith.constant 1.600000e+01 : f32
    %382 = vector.broadcast %cst_226 : f32 to vector<1x64xf32>
    %383 = arith.divf %381, %382 : vector<1x64xf32>
    %c2_227 = arith.constant 2 : index
    %c0_228 = arith.constant 0 : index
    %c0_229 = arith.constant 0 : index
    %384 = vector.load %arg11[%c2_227, %c0_228, %c0_229] : memref<4x16x16xf32, #tpu.memory_space<vmem>>, vector<1x16x16xf32>
    %385 = vector.shape_cast %384 : vector<1x16x16xf32> to vector<16x16xf32>
    %386 = vector.extract_strided_slice %311 {offsets = [0, 128], sizes = [16, 64], strides = [1, 1]} : vector<16x256xf32> to vector<16x64xf32>
    %cst_230 = arith.constant dense<0.000000e+00> : vector<16x64xf32>
    %387 = tpu.matmul %385, %386, %cst_230 {dimension_numbers = #tpu.dot_dimension_numbers<[1], [0], [0], [1], [0, 0, 1, 1], [], []>} : vector<16x16xf32>, vector<16x64xf32>, vector<16x64xf32> -> vector<16x64xf32>
    %388 = arith.mulf %387, %317 : vector<16x64xf32>
    %cst_231 = arith.constant dense<0.000000e+00> : vector<16xf32>
    %389 = vector.multi_reduction <add>, %388, %cst_231 [1] : vector<16x64xf32> to vector<16xf32>
    %390 = vector.shape_cast %389 : vector<16xf32> to vector<16x1xf32>
    %cst_232 = arith.constant 6.400000e+01 : f32
    %391 = vector.broadcast %cst_232 : f32 to vector<16x1xf32>
    %392 = arith.divf %390, %391 : vector<16x1xf32>
    %393 = vector.broadcast %392 : vector<16x1xf32> to vector<16x64xf32>
    %394 = arith.subf %388, %393 : vector<16x64xf32>
    %395 = arith.mulf %394, %394 : vector<16x64xf32>
    %cst_233 = arith.constant dense<0.000000e+00> : vector<16xf32>
    %396 = vector.multi_reduction <add>, %395, %cst_233 [1] : vector<16x64xf32> to vector<16xf32>
    %397 = vector.shape_cast %396 : vector<16xf32> to vector<16x1xf32>
    %cst_234 = arith.constant 6.400000e+01 : f32
    %398 = vector.broadcast %cst_234 : f32 to vector<16x1xf32>
    %399 = arith.divf %397, %398 : vector<16x1xf32>
    %400 = vector.broadcast %392 : vector<16x1xf32> to vector<16x64xf32>
    %401 = arith.subf %388, %400 : vector<16x64xf32>
    %cst_235 = arith.constant 9.99999974E-6 : f32
    %402 = vector.broadcast %cst_235 : f32 to vector<16x1xf32>
    %403 = arith.addf %399, %402 : vector<16x1xf32>
    %404 = math.rsqrt %403 : vector<16x1xf32>
    %405 = vector.broadcast %404 : vector<16x1xf32> to vector<16x64xf32>
    %406 = arith.mulf %401, %405 : vector<16x64xf32>
    %c0_236 = arith.constant 0 : index
    %c0_237 = arith.constant 0 : index
    %407 = vector.load %arg12[%c0_236, %c0_237] : memref<1x64xf32, #tpu.memory_space<vmem>>, vector<1x64xf32>
    %408 = vector.broadcast %407 : vector<1x64xf32> to vector<16x64xf32>
    %409 = arith.mulf %406, %408 : vector<16x64xf32>
    %c0_238 = arith.constant 0 : index
    %c0_239 = arith.constant 0 : index
    %410 = vector.load %arg13[%c0_238, %c0_239] : memref<1x64xf32, #tpu.memory_space<vmem>>, vector<1x64xf32>
    %411 = vector.broadcast %410 : vector<1x64xf32> to vector<16x64xf32>
    %412 = arith.addf %409, %411 : vector<16x64xf32>
    %cst_240 = arith.constant dense<0.000000e+00> : vector<64xf32>
    %413 = vector.multi_reduction <add>, %412, %cst_240 [0] : vector<16x64xf32> to vector<64xf32>
    %414 = vector.shape_cast %413 : vector<64xf32> to vector<1x64xf32>
    %cst_241 = arith.constant 1.600000e+01 : f32
    %415 = vector.broadcast %cst_241 : f32 to vector<1x64xf32>
    %416 = arith.divf %414, %415 : vector<1x64xf32>
    %c3_242 = arith.constant 3 : index
    %c0_243 = arith.constant 0 : index
    %c0_244 = arith.constant 0 : index
    %417 = vector.load %arg11[%c3_242, %c0_243, %c0_244] : memref<4x16x16xf32, #tpu.memory_space<vmem>>, vector<1x16x16xf32>
    %418 = vector.shape_cast %417 : vector<1x16x16xf32> to vector<16x16xf32>
    %419 = vector.extract_strided_slice %311 {offsets = [0, 192], sizes = [16, 64], strides = [1, 1]} : vector<16x256xf32> to vector<16x64xf32>
    %cst_245 = arith.constant dense<0.000000e+00> : vector<16x64xf32>
    %420 = tpu.matmul %418, %419, %cst_245 {dimension_numbers = #tpu.dot_dimension_numbers<[1], [0], [0], [1], [0, 0, 1, 1], [], []>} : vector<16x16xf32>, vector<16x64xf32>, vector<16x64xf32> -> vector<16x64xf32>
    %421 = arith.mulf %420, %317 : vector<16x64xf32>
    %cst_246 = arith.constant dense<0.000000e+00> : vector<16xf32>
    %422 = vector.multi_reduction <add>, %421, %cst_246 [1] : vector<16x64xf32> to vector<16xf32>
    %423 = vector.shape_cast %422 : vector<16xf32> to vector<16x1xf32>
    %cst_247 = arith.constant 6.400000e+01 : f32
    %424 = vector.broadcast %cst_247 : f32 to vector<16x1xf32>
    %425 = arith.divf %423, %424 : vector<16x1xf32>
    %426 = vector.broadcast %425 : vector<16x1xf32> to vector<16x64xf32>
    %427 = arith.subf %421, %426 : vector<16x64xf32>
    %428 = arith.mulf %427, %427 : vector<16x64xf32>
    %cst_248 = arith.constant dense<0.000000e+00> : vector<16xf32>
    %429 = vector.multi_reduction <add>, %428, %cst_248 [1] : vector<16x64xf32> to vector<16xf32>
    %430 = vector.shape_cast %429 : vector<16xf32> to vector<16x1xf32>
    %cst_249 = arith.constant 6.400000e+01 : f32
    %431 = vector.broadcast %cst_249 : f32 to vector<16x1xf32>
    %432 = arith.divf %430, %431 : vector<16x1xf32>
    %433 = vector.broadcast %425 : vector<16x1xf32> to vector<16x64xf32>
    %434 = arith.subf %421, %433 : vector<16x64xf32>
    %cst_250 = arith.constant 9.99999974E-6 : f32
    %435 = vector.broadcast %cst_250 : f32 to vector<16x1xf32>
    %436 = arith.addf %432, %435 : vector<16x1xf32>
    %437 = math.rsqrt %436 : vector<16x1xf32>
    %438 = vector.broadcast %437 : vector<16x1xf32> to vector<16x64xf32>
    %439 = arith.mulf %434, %438 : vector<16x64xf32>
    %c0_251 = arith.constant 0 : index
    %c0_252 = arith.constant 0 : index
    %440 = vector.load %arg12[%c0_251, %c0_252] : memref<1x64xf32, #tpu.memory_space<vmem>>, vector<1x64xf32>
    %441 = vector.broadcast %440 : vector<1x64xf32> to vector<16x64xf32>
    %442 = arith.mulf %439, %441 : vector<16x64xf32>
    %c0_253 = arith.constant 0 : index
    %c0_254 = arith.constant 0 : index
    %443 = vector.load %arg13[%c0_253, %c0_254] : memref<1x64xf32, #tpu.memory_space<vmem>>, vector<1x64xf32>
    %444 = vector.broadcast %443 : vector<1x64xf32> to vector<16x64xf32>
    %445 = arith.addf %442, %444 : vector<16x64xf32>
    %cst_255 = arith.constant dense<0.000000e+00> : vector<64xf32>
    %446 = vector.multi_reduction <add>, %445, %cst_255 [0] : vector<16x64xf32> to vector<64xf32>
    %447 = vector.shape_cast %446 : vector<64xf32> to vector<1x64xf32>
    %cst_256 = arith.constant 1.600000e+01 : f32
    %448 = vector.broadcast %cst_256 : f32 to vector<1x64xf32>
    %449 = arith.divf %447, %448 : vector<1x64xf32>
    %450 = tpu.concatenate %350, %383, %416, %449 in 0 : vector<1x64xf32>, vector<1x64xf32>, vector<1x64xf32>, vector<1x64xf32> -> vector<4x64xf32>
    %c0_257 = arith.constant 0 : index
    %c0_258 = arith.constant 0 : index
    %451 = vector.load %arg14[%c0_257, %c0_258] : memref<64x8xf32, #tpu.memory_space<vmem>>, vector<64x8xf32>
    %cst_259 = arith.constant dense<0.000000e+00> : vector<4x8xf32>
    %452 = tpu.matmul %450, %451, %cst_259 {dimension_numbers = #tpu.dot_dimension_numbers<[1], [0], [0], [1], [0, 0, 1, 1], [], []>} : vector<4x64xf32>, vector<64x8xf32>, vector<4x8xf32> -> vector<4x8xf32>
    %c0_260 = arith.constant 0 : index
    %c0_261 = arith.constant 0 : index
    %453 = vector.load %arg15[%c0_260, %c0_261] : memref<1x8xf32, #tpu.memory_space<vmem>>, vector<1x8xf32>
    %454 = vector.broadcast %453 : vector<1x8xf32> to vector<4x8xf32>
    %455 = arith.addf %452, %454 : vector<4x8xf32>
    %cst_262 = arith.constant 5.000000e-01 : f32
    %456 = vector.broadcast %cst_262 : f32 to vector<4x8xf32>
    %457 = arith.mulf %456, %455 : vector<4x8xf32>
    %cst_263 = arith.constant 0.707106769 : f32
    %458 = vector.broadcast %cst_263 : f32 to vector<4x8xf32>
    %459 = arith.mulf %455, %458 : vector<4x8xf32>
    %460 = math.absf %459 : vector<4x8xf32>
    %cst_264 = arith.constant 0.327591091 : f32
    %461 = vector.broadcast %cst_264 : f32 to vector<4x8xf32>
    %462 = arith.mulf %461, %460 : vector<4x8xf32>
    %cst_265 = arith.constant 1.000000e+00 : f32
    %463 = vector.broadcast %cst_265 : f32 to vector<4x8xf32>
    %464 = arith.addf %463, %462 : vector<4x8xf32>
    %cst_266 = arith.constant 1.000000e+00 : f32
    %465 = vector.broadcast %cst_266 : f32 to vector<4x8xf32>
    %466 = arith.divf %465, %464 : vector<4x8xf32>
    %cst_267 = arith.constant 1.06140542 : f32
    %467 = vector.broadcast %cst_267 : f32 to vector<4x8xf32>
    %468 = arith.mulf %467, %466 : vector<4x8xf32>
    %cst_268 = arith.constant -1.45315206 : f32
    %469 = vector.broadcast %cst_268 : f32 to vector<4x8xf32>
    %470 = arith.addf %468, %469 : vector<4x8xf32>
    %471 = arith.mulf %470, %466 : vector<4x8xf32>
    %cst_269 = arith.constant 1.42141378 : f32
    %472 = vector.broadcast %cst_269 : f32 to vector<4x8xf32>
    %473 = arith.addf %471, %472 : vector<4x8xf32>
    %474 = arith.mulf %473, %466 : vector<4x8xf32>
    %cst_270 = arith.constant -0.284496725 : f32
    %475 = vector.broadcast %cst_270 : f32 to vector<4x8xf32>
    %476 = arith.addf %474, %475 : vector<4x8xf32>
    %477 = arith.mulf %476, %466 : vector<4x8xf32>
    %cst_271 = arith.constant 0.254829586 : f32
    %478 = vector.broadcast %cst_271 : f32 to vector<4x8xf32>
    %479 = arith.addf %477, %478 : vector<4x8xf32>
    %480 = arith.mulf %479, %466 : vector<4x8xf32>
    %cst_272 = arith.constant 0.000000e+00 : f32
    %481 = vector.broadcast %cst_272 : f32 to vector<4x8xf32>
    %482 = arith.subf %481, %460 : vector<4x8xf32>
    %483 = arith.mulf %482, %460 : vector<4x8xf32>
    %484 = math.exp %483 : vector<4x8xf32>
    %485 = arith.mulf %480, %484 : vector<4x8xf32>
    %cst_273 = arith.constant 1.000000e+00 : f32
    %486 = vector.broadcast %cst_273 : f32 to vector<4x8xf32>
    %487 = arith.subf %486, %485 : vector<4x8xf32>
    %cst_274 = arith.constant 0.000000e+00 : f32
    %488 = vector.broadcast %cst_274 : f32 to vector<4x8xf32>
    %489 = arith.cmpf oge, %459, %488 : vector<4x8xf32>
    %cst_275 = arith.constant 0.000000e+00 : f32
    %490 = vector.broadcast %cst_275 : f32 to vector<4x8xf32>
    %491 = arith.subf %490, %487 : vector<4x8xf32>
    %492 = arith.select %489, %487, %491 : vector<4x8xi1>, vector<4x8xf32>
    %cst_276 = arith.constant 1.000000e+00 : f32
    %493 = vector.broadcast %cst_276 : f32 to vector<4x8xf32>
    %494 = arith.addf %493, %492 : vector<4x8xf32>
    %495 = arith.mulf %457, %494 : vector<4x8xf32>
    %c0_277 = arith.constant 0 : index
    %c0_278 = arith.constant 0 : index
    %496 = vector.load %arg16[%c0_277, %c0_278] : memref<8x64xf32, #tpu.memory_space<vmem>>, vector<8x64xf32>
    %cst_279 = arith.constant dense<0.000000e+00> : vector<4x64xf32>
    %497 = tpu.matmul %495, %496, %cst_279 {dimension_numbers = #tpu.dot_dimension_numbers<[1], [0], [0], [1], [0, 0, 1, 1], [], []>} : vector<4x8xf32>, vector<8x64xf32>, vector<4x64xf32> -> vector<4x64xf32>
    %c0_280 = arith.constant 0 : index
    %c0_281 = arith.constant 0 : index
    %498 = vector.load %arg17[%c0_280, %c0_281] : memref<1x64xf32, #tpu.memory_space<vmem>>, vector<1x64xf32>
    %499 = vector.broadcast %498 : vector<1x64xf32> to vector<4x64xf32>
    %500 = arith.addf %497, %499 : vector<4x64xf32>
    %501 = arith.negf %500 : vector<4x64xf32>
    %502 = math.exp %501 : vector<4x64xf32>
    %cst_282 = arith.constant 1.000000e+00 : f32
    %503 = vector.broadcast %cst_282 : f32 to vector<4x64xf32>
    %504 = arith.addf %503, %502 : vector<4x64xf32>
    %505 = arith.divf %503, %504 : vector<4x64xf32>
    %506 = vector.extract_strided_slice %505 {offsets = [0, 0], sizes = [1, 64], strides = [1, 1]} : vector<4x64xf32> to vector<1x64xf32>
    %507 = vector.broadcast %506 : vector<1x64xf32> to vector<16x64xf32>
    %508 = arith.mulf %322, %507 : vector<16x64xf32>
    %509 = vector.extract_strided_slice %505 {offsets = [1, 0], sizes = [1, 64], strides = [1, 1]} : vector<4x64xf32> to vector<1x64xf32>
    %510 = vector.broadcast %509 : vector<1x64xf32> to vector<16x64xf32>
    %511 = arith.mulf %355, %510 : vector<16x64xf32>
    %512 = arith.addf %508, %511 : vector<16x64xf32>
    %513 = vector.extract_strided_slice %505 {offsets = [2, 0], sizes = [1, 64], strides = [1, 1]} : vector<4x64xf32> to vector<1x64xf32>
    %514 = vector.broadcast %513 : vector<1x64xf32> to vector<16x64xf32>
    %515 = arith.mulf %388, %514 : vector<16x64xf32>
    %516 = arith.addf %512, %515 : vector<16x64xf32>
    %517 = vector.extract_strided_slice %505 {offsets = [3, 0], sizes = [1, 64], strides = [1, 1]} : vector<4x64xf32> to vector<1x64xf32>
    %518 = vector.broadcast %517 : vector<1x64xf32> to vector<16x64xf32>
    %519 = arith.mulf %421, %518 : vector<16x64xf32>
    %520 = arith.addf %516, %519 : vector<16x64xf32>
    %c0_283 = arith.constant 0 : index
    %c0_284 = arith.constant 0 : index
    %521 = vector.load %arg18[%c0_283, %c0_284] : memref<64x32xf32, #tpu.memory_space<vmem>>, vector<64x32xf32>
    %cst_285 = arith.constant dense<0.000000e+00> : vector<16x32xf32>
    %522 = tpu.matmul %520, %521, %cst_285 {dimension_numbers = #tpu.dot_dimension_numbers<[1], [0], [0], [1], [0, 0, 1, 1], [], []>} : vector<16x64xf32>, vector<64x32xf32>, vector<16x32xf32> -> vector<16x32xf32>
    %c0_286 = arith.constant 0 : index
    %c0_287 = arith.constant 0 : index
    %c0_288 = arith.constant 0 : index
    %523 = vector.load %arg19[%c0_286, %c0_287, %c0_288] : memref<1x16x32xf32, #tpu.memory_space<vmem>>, vector<1x16x32xf32>
    %524 = vector.shape_cast %523 : vector<1x16x32xf32> to vector<16x32xf32>
    %525 = vector.shape_cast %522 : vector<16x32xf32> to vector<1x16x32xf32>
    tpu.vector_store %arg19[%c0_286, %c0_287, %c0_288], %525 {strides = array<i32>} : memref<1x16x32xf32, #tpu.memory_space<vmem>>, vector<1x16x32xf32>,
    return
  }
  func.func @transform_0(%arg0: i32) -> (i32, i32, i32) {
    %c0_i32 = arith.constant 0 : i32
    %c0_i32_0 = arith.constant 0 : i32
    %c0_i32_1 = arith.constant 0 : i32
    return %arg0, %c0_i32, %c0_i32_0 : i32, i32, i32
  }
  func.func @transform_1(%arg0: i32) -> (i32, i32) {
    %c0_i32 = arith.constant 0 : i32
    %c0_i32_0 = arith.constant 0 : i32
    %c0_i32_1 = arith.constant 0 : i32
    return %c0_i32, %c0_i32_0 : i32, i32
  }
  func.func @transform_2(%arg0: i32) -> (i32, i32) {
    %c0_i32 = arith.constant 0 : i32
    %c0_i32_0 = arith.constant 0 : i32
    %c0_i32_1 = arith.constant 0 : i32
    return %c0_i32, %c0_i32_0 : i32, i32
  }
  func.func @transform_3(%arg0: i32) -> (i32, i32) {
    %c0_i32 = arith.constant 0 : i32
    %c0_i32_0 = arith.constant 0 : i32
    %c0_i32_1 = arith.constant 0 : i32
    return %c0_i32, %c0_i32_0 : i32, i32
  }
  func.func @transform_4(%arg0: i32) -> (i32, i32) {
    %c0_i32 = arith.constant 0 : i32
    %c0_i32_0 = arith.constant 0 : i32
    %c0_i32_1 = arith.constant 0 : i32
    return %c0_i32, %c0_i32_0 : i32, i32
  }
  func.func @transform_5(%arg0: i32) -> (i32, i32) {
    %c0_i32 = arith.constant 0 : i32
    %c0_i32_0 = arith.constant 0 : i32
    %c0_i32_1 = arith.constant 0 : i32
    return %c0_i32, %c0_i32_0 : i32, i32
  }
  func.func @transform_6(%arg0: i32) -> (i32, i32) {
    %c0_i32 = arith.constant 0 : i32
    %c0_i32_0 = arith.constant 0 : i32
    %c0_i32_1 = arith.constant 0 : i32
    return %c0_i32, %c0_i32_0 : i32, i32
  }
  func.func @transform_7(%arg0: i32) -> (i32, i32) {
    %c0_i32 = arith.constant 0 : i32
    %c0_i32_0 = arith.constant 0 : i32
    %c0_i32_1 = arith.constant 0 : i32
    return %c0_i32, %c0_i32_0 : i32, i32
  }
  func.func @transform_8(%arg0: i32) -> (i32, i32) {
    %c0_i32 = arith.constant 0 : i32
    %c0_i32_0 = arith.constant 0 : i32
    %c0_i32_1 = arith.constant 0 : i32
    return %c0_i32, %c0_i32_0 : i32, i32
  }
  func.func @transform_9(%arg0: i32) -> (i32, i32) {
    %c0_i32 = arith.constant 0 : i32
    %c0_i32_0 = arith.constant 0 : i32
    %c0_i32_1 = arith.constant 0 : i32
    return %c0_i32, %c0_i32_0 : i32, i32
  }
  func.func @transform_10(%arg0: i32) -> (i32, i32, i32) {
    %c0_i32 = arith.constant 0 : i32
    %c0_i32_0 = arith.constant 0 : i32
    %c0_i32_1 = arith.constant 0 : i32
    %c0_i32_2 = arith.constant 0 : i32
    return %c0_i32, %c0_i32_0, %c0_i32_1 : i32, i32, i32
  }
  func.func @transform_11(%arg0: i32) -> (i32, i32) {
    %c0_i32 = arith.constant 0 : i32
    %c0_i32_0 = arith.constant 0 : i32
    %c0_i32_1 = arith.constant 0 : i32
    return %c0_i32, %c0_i32_0 : i32, i32
  }
  func.func @transform_12(%arg0: i32) -> (i32, i32) {
    %c0_i32 = arith.constant 0 : i32
    %c0_i32_0 = arith.constant 0 : i32
    %c0_i32_1 = arith.constant 0 : i32
    return %c0_i32, %c0_i32_0 : i32, i32
  }
  func.func @transform_13(%arg0: i32) -> (i32, i32) {
    %c0_i32 = arith.constant 0 : i32
    %c0_i32_0 = arith.constant 0 : i32
    %c0_i32_1 = arith.constant 0 : i32
    return %c0_i32, %c0_i32_0 : i32, i32
  }
  func.func @transform_14(%arg0: i32) -> (i32, i32) {
    %c0_i32 = arith.constant 0 : i32
    %c0_i32_0 = arith.constant 0 : i32
    %c0_i32_1 = arith.constant 0 : i32
    return %c0_i32, %c0_i32_0 : i32, i32
  }
  func.func @transform_15(%arg0: i32) -> (i32, i32) {
    %c0_i32 = arith.constant 0 : i32
    %c0_i32_0 = arith.constant 0 : i32
    %c0_i32_1 = arith.constant 0 : i32
    return %c0_i32, %c0_i32_0 : i32, i32
  }
  func.func @transform_16(%arg0: i32) -> (i32, i32) {
    %c0_i32 = arith.constant 0 : i32
    %c0_i32_0 = arith.constant 0 : i32
    %c0_i32_1 = arith.constant 0 : i32
    return %c0_i32, %c0_i32_0 : i32, i32
  }
  func.func @transform_17(%arg0: i32) -> (i32, i32) {
    %c0_i32 = arith.constant 0 : i32
    %c0_i32_0 = arith.constant 0 : i32
    %c0_i32_1 = arith.constant 0 : i32
    return %c0_i32, %c0_i32_0 : i32, i32
  }
  func.func @transform_18(%arg0: i32) -> (i32, i32, i32) {
    %c0_i32 = arith.constant 0 : i32
    %c0_i32_0 = arith.constant 0 : i32
    %c0_i32_1 = arith.constant 0 : i32
    return %arg0, %c0_i32, %c0_i32_0 : i32, i32, i32
  }
}

</mosaic_0001>

<llo_original>
// kernel: multi_mamba_forward.1
$region0: #{multi_mamba_forward.1}
  #allocation0 [shape = 'u32[]', space=smem, size = 0x4, offset = 0x4, fixed_abs, tag = 'smem constant byte address 0x4 - core index']
  #allocation1 [shape = 'u32[144,128]{1,0:T(1,128)}', space=vmem, size = 0x12000, scoped, tag = 'internal scratch']
  #allocation2 [shape = 'f32[16,16,256]{2,1,0:T(8,128)}', space=vmem, size = 0x40000, scoped, tag = 'scratch operand']
  #allocation3 [shape = 'f32[16,16,256]{2,1,0:T(8,128)}', space=vmem, size = 0x40000, scoped, tag = 'scratch operand']
  #allocation4 [shape = 'f32[16,16,256]{2,1,0:T(8,128)}', space=vmem, size = 0x40000, scoped, tag = 'scratch operand']
  %s0 = inlined_call_operand.hbm [shape: f32[2,16,32], index: 0, kind: input, shape index: {}]
  %s1 = inlined_call_operand.hbm [shape: f32[32,128], index: 1, kind: input, shape index: {}]
  %s2 = inlined_call_operand.vmem [shape: f32[256,16], index: 2, kind: input, shape index: {}]
  %s3 = inlined_call_operand.vmem [shape: f32[256,64], index: 3, kind: input, shape index: {}]
  %s4 = inlined_call_operand.vmem [shape: f32[1,256], index: 4, kind: input, shape index: {}]
  %s5 = inlined_call_operand.vmem [shape: f32[256,256], index: 5, kind: input, shape index: {}]
  %s6 = inlined_call_operand.vmem [shape: f32[256,128], index: 6, kind: input, shape index: {}]
  %s7 = inlined_call_operand.vmem [shape: f32[1,256], index: 7, kind: input, shape index: {}]
  %s8 = inlined_call_operand.hbm [shape: f32[16,256], index: 8, kind: input, shape index: {}]
  %s9 = inlined_call_operand.hbm [shape: f32[1,256], index: 9, kind: input, shape index: {}]
  %s10 = inlined_call_operand.vmem [shape: f32[4,16,16], index: 10, kind: input, shape index: {}]
  %s11 = inlined_call_operand.vmem [shape: f32[1,64], index: 11, kind: input, shape index: {}]
  %s12 = inlined_call_operand.hbm [shape: f32[1,64], index: 12, kind: input, shape index: {}]
  %s13 = inlined_call_operand.vmem [shape: f32[64,8], index: 13, kind: input, shape index: {}]
  %s14 = inlined_call_operand.hbm [shape: f32[1,8], index: 14, kind: input, shape index: {}]
  %s15 = inlined_call_operand.hbm [shape: f32[8,64], index: 15, kind: input, shape index: {}]
  %s16 = inlined_call_operand.hbm [shape: f32[1,64], index: 16, kind: input, shape index: {}]
  %s17 = inlined_call_operand.vmem [shape: f32[64,32], index: 17, kind: input, shape index: {}]
  %s18 = inlined_call_operand.hbm [shape: f32[2,16,32], index: 18, kind: output, shape index: {}]
  %s19 = sld [smem:[#allocation0]]
  $region137: #{multi_mamba_forward.1} parent=0
    _
  %s21 = ssub.s32 1, %s19
  %s22 = scalar_select 0, %s21, %s19
  $region1: #{multi_mamba_forward.1} parent=0
    #allocation5 [shape = 'u8[16384]{0}', space=vmem, size = 0x4000, scoped, tag = 'input window, operand 0']
    #allocation6 [shape = 's32[2]{0}', space=sflag, size = 0x8, scoped, tag = 'scoped memory for multi_mamba_forward.1']
    #allocation7 [shape = 's32[2]{0}', space=sflag, size = 0x8, scoped, tag = 'scoped memory for multi_mamba_forward.1']
    #allocation8 [shape = 'u8[16384]{0}', space=vmem, size = 0x4000, scoped, tag = 'input window, operand 1, single buffered']
    #allocation9 [shape = 's32[1]{0}', space=sflag, size = 0x4, scoped, tag = 'scoped memory for multi_mamba_forward.1']
    #allocation10 [shape = 'u8[16384]{0}', space=vmem, size = 0x4000, scoped, tag = 'input window, operand 8, single buffered']
    #allocation11 [shape = 'u8[1024]{0}', space=vmem, size = 0x400, scoped, tag = 'input window, operand 9, single buffered']
    #allocation12 [shape = 's32[1]{0}', space=sflag, size = 0x4, scoped, tag = 'scoped memory for multi_mamba_forward.1']
    #allocation13 [shape = 'u8[512]{0}', space=vmem, size = 0x400, scoped, tag = 'input window, operand 12, single buffered']
    #allocation14 [shape = 'u8[512]{0}', space=vmem, size = 0x400, scoped, tag = 'input window, operand 14, single buffered']
    #allocation15 [shape = 's32[1]{0}', space=sflag, size = 0x4, scoped, tag = 'scoped memory for multi_mamba_forward.1']
    #allocation16 [shape = 'u8[4096]{0}', space=vmem, size = 0x1000, scoped, tag = 'input window, operand 15, single buffered']
    #allocation17 [shape = 'u8[512]{0}', space=vmem, size = 0x400, scoped, tag = 'input window, operand 16, single buffered']
    #allocation18 [shape = 's32[1]{0}', space=sflag, size = 0x4, scoped, tag = 'scoped memory for multi_mamba_forward.1']
    #allocation19 [shape = 'u8[16384]{0}', space=vmem, size = 0x4000, scoped, tag = 'output window, operand 0']
    %23 = vsyncpa [#allocation6], 0
    %s24 = scalar_lea.sflag [#allocation6], 1
    %25 = vsyncpa %s24, 0
    %26 = vsyncpa [#allocation9], 0
    %27 = vsyncpa [#allocation12], 0
    %28 = vsyncpa [#allocation15], 0
    %29 = vsyncpa [#allocation18], 0
    %30 = vsyncpa [#allocation7], 0
    %s31 = scalar_lea.sflag [#allocation7], 1
    %32 = vsyncpa %s31, 0
    loop: start=0, step=1, limit=4
    $region2: #{multi_mamba_forward.1} parent=1 // loop_pre_header
      _
    $region3: #{multi_mamba_forward.1} parent=1 // loop_header
      %s34 = sphi 0, %s38
      %p35 = scmp.ge.s32.totalorder %s34, 4
      %s44 = sphi 0, %s46
      %s47 = sphi 0, %s44
      %s48 = sphi 0, %s47
      %s64 = sphi 0, %s48
      %s68 = sphi 0, %s68
      %s70 = sphi 0, %s68
      %s71 = sphi 0, %s70
      %s85 = sphi 0, %s71
      %s89 = sphi 0, %s89
      %s91 = sphi 0, %s89
      %s92 = sphi 0, %s91
      %s106 = sphi 0, %s92
      %s110 = sphi 0, %s110
      %s112 = sphi 0, %s110
      %s113 = sphi 0, %s112
      %s127 = sphi 0, %s113
      %s131 = sphi 0, %s131
      %s133 = sphi 0, %s131
      %s134 = sphi 0, %s133
      %s148 = sphi 0, %s134
      %s152 = sphi 0, %s152
      %s154 = sphi 0, %s152
      %s155 = sphi 0, %s154
      %s169 = sphi 0, %s155
      %s173 = sphi 0, %s173
      %s175 = sphi 0, %s173
      %s176 = sphi 0, %s175
      %s190 = sphi 0, %s176
      %s194 = sphi 0, %s194
      %s196 = sphi 0, %s194
      %s197 = sphi 0, %s196
      %s211 = sphi 0, %s197
      %s215 = sphi 0, %s215
      %s217 = sphi 0, %s215
      %s218 = sphi 0, %s217
      %s232 = sphi 0, %s218
      %s236 = sphi 0, %s236
      %s238 = sphi 0, %s236
      %s239 = sphi 0, %s238
      %s253 = sphi 0, %s239
      %s257 = sphi 0, %s257
      %s259 = sphi 0, %s257
      %s260 = sphi 0, %s259
      %s274 = sphi 0, %s260
      %s278 = sphi 0, %s278
      %s280 = sphi 0, %s278
      %s281 = sphi 0, %s280
      %s295 = sphi 0, %s281
      %s299 = sphi 0, %s299
      %s301 = sphi 0, %s299
      %s302 = sphi 0, %s301
      %s316 = sphi 0, %s302
      %s320 = sphi 0, %s320
      %s322 = sphi 0, %s320
      %s323 = sphi 0, %s322
      %s337 = sphi 0, %s323
      %s341 = sphi 0, %s341
      %s343 = sphi 0, %s341
      %s344 = sphi 0, %s343
      %s358 = sphi 0, %s344
      %s362 = sphi 0, %s362
      %s364 = sphi 0, %s362
      %s365 = sphi 0, %s364
      %s379 = sphi 0, %s365
      %s383 = sphi 0, %s383
      %s385 = sphi 0, %s383
      %s386 = sphi 0, %s385
      %s400 = sphi 0, %s386
      %s404 = sphi 0, %s404
      %s406 = sphi 0, %s404
      %s407 = sphi 0, %s406
      %s421 = sphi 0, %s407
      %s427 = sphi 0, %s429
      %s430 = sphi 0, %s427
      %s431 = sphi 0, %s430
      %s447 = sphi 0, %s431
    $region4: #{multi_mamba_forward.1} parent=1 // loop_header_branch
      %37 = sbr.rel (%p35) target = $region8
    $region5: #{multi_mamba_forward.1} parent=1 // loop_body
      %s39 = ssub.s32 %s34, 1
      %s40 = ssub.s32 %s34, 2
      %s41 = sadd.s32 %s34, 1
      %s42 = ssub.s32 %s34, %s41
      %p43 = scmp.eq.s32.totalorder %s42, 0
      %s45 = sadd.s32 %s44, 1
      %s46 = scalar_select %p43, %s44, %s45
      %p49 = pneg %p43
      %p50 = scmp.eq.s32.totalorder %s34, 1
      %p51 = por %p49, %p50
      %p52 = scmp.ne.s32.totalorder %s44, %s47
      %p53 = scmp.eq.s32.totalorder %s34, 0
      %p54 = por %p52, %p53
      %p55 = scmp.ne.s32.totalorder %s44, %s47
      %p56 = scmp.eq.s32.totalorder %s39, 1
      %p57 = por %p55, %p56
      %p58 = scmp.ne.s32.totalorder %s47, %s48
      %p59 = scmp.eq.s32.totalorder %s39, 0
      %p60 = por %p58, %p59
      %p61 = scmp.ne.s32.totalorder %s47, %s48
      %p62 = scmp.eq.s32.totalorder %s40, 1
      %p63 = por %p61, %p62
      %p65 = scmp.ne.s32.totalorder %s48, %s64
      %p66 = scmp.eq.s32.totalorder %s40, 0
      %p67 = por %p65, %p66
      %s69 = sadd.s32 %s68, 1
      %p72 = scmp.eq.s32.totalorder %s34, 1
      %p73 = scmp.ne.s32.totalorder %s68, %s70
      %p74 = scmp.eq.s32.totalorder %s34, 0
      %p75 = por %p73, %p74
      %p76 = scmp.ne.s32.totalorder %s68, %s70
      %p77 = scmp.eq.s32.totalorder %s39, 1
      %p78 = por %p76, %p77
      %p79 = scmp.ne.s32.totalorder %s70, %s71
      %p80 = scmp.eq.s32.totalorder %s39, 0
      %p81 = por %p79, %p80
      %p82 = scmp.ne.s32.totalorder %s70, %s71
      %p83 = scmp.eq.s32.totalorder %s40, 1
      %p84 = por %p82, %p83
      %p86 = scmp.ne.s32.totalorder %s71, %s85
      %p87 = scmp.eq.s32.totalorder %s40, 0
      %p88 = por %p86, %p87
      %s90 = sadd.s32 %s89, 1
      %p93 = scmp.eq.s32.totalorder %s34, 1
      %p94 = scmp.ne.s32.totalorder %s89, %s91
      %p95 = scmp.eq.s32.totalorder %s34, 0
      %p96 = por %p94, %p95
      %p97 = scmp.ne.s32.totalorder %s89, %s91
      %p98 = scmp.eq.s32.totalorder %s39, 1
      %p99 = por %p97, %p98
      %p100 = scmp.ne.s32.totalorder %s91, %s92
      %p101 = scmp.eq.s32.totalorder %s39, 0
      %p102 = por %p100, %p101
      %p103 = scmp.ne.s32.totalorder %s91, %s92
      %p104 = scmp.eq.s32.totalorder %s40, 1
      %p105 = por %p103, %p104
      %p107 = scmp.ne.s32.totalorder %s92, %s106
      %p108 = scmp.eq.s32.totalorder %s40, 0
      %p109 = por %p107, %p108
      %s111 = sadd.s32 %s110, 1
      %p114 = scmp.eq.s32.totalorder %s34, 1
      %p115 = scmp.ne.s32.totalorder %s110, %s112
      %p116 = scmp.eq.s32.totalorder %s34, 0
      %p117 = por %p115, %p116
      %p118 = scmp.ne.s32.totalorder %s110, %s112
      %p119 = scmp.eq.s32.totalorder %s39, 1
      %p120 = por %p118, %p119
      %p121 = scmp.ne.s32.totalorder %s112, %s113
      %p122 = scmp.eq.s32.totalorder %s39, 0
      %p123 = por %p121, %p122
      %p124 = scmp.ne.s32.totalorder %s112, %s113
      %p125 = scmp.eq.s32.totalorder %s40, 1
      %p126 = por %p124, %p125
      %p128 = scmp.ne.s32.totalorder %s113, %s127
      %p129 = scmp.eq.s32.totalorder %s40, 0
      %p130 = por %p128, %p129
      %s132 = sadd.s32 %s131, 1
      %p135 = scmp.eq.s32.totalorder %s34, 1
      %p136 = scmp.ne.s32.totalorder %s131, %s133
      %p137 = scmp.eq.s32.totalorder %s34, 0
      %p138 = por %p136, %p137
      %p139 = scmp.ne.s32.totalorder %s131, %s133
      %p140 = scmp.eq.s32.totalorder %s39, 1
      %p141 = por %p139, %p140
      %p142 = scmp.ne.s32.totalorder %s133, %s134
      %p143 = scmp.eq.s32.totalorder %s39, 0
      %p144 = por %p142, %p143
      %p145 = scmp.ne.s32.totalorder %s133, %s134
      %p146 = scmp.eq.s32.totalorder %s40, 1
      %p147 = por %p145, %p146
      %p149 = scmp.ne.s32.totalorder %s134, %s148
      %p150 = scmp.eq.s32.totalorder %s40, 0
      %p151 = por %p149, %p150
      %s153 = sadd.s32 %s152, 1
      %p156 = scmp.eq.s32.totalorder %s34, 1
      %p157 = scmp.ne.s32.totalorder %s152, %s154
      %p158 = scmp.eq.s32.totalorder %s34, 0
      %p159 = por %p157, %p158
      %p160 = scmp.ne.s32.totalorder %s152, %s154
      %p161 = scmp.eq.s32.totalorder %s39, 1
      %p162 = por %p160, %p161
      %p163 = scmp.ne.s32.totalorder %s154, %s155
      %p164 = scmp.eq.s32.totalorder %s39, 0
      %p165 = por %p163, %p164
      %p166 = scmp.ne.s32.totalorder %s154, %s155
      %p167 = scmp.eq.s32.totalorder %s40, 1
      %p168 = por %p166, %p167
      %p170 = scmp.ne.s32.totalorder %s155, %s169
      %p171 = scmp.eq.s32.totalorder %s40, 0
      %p172 = por %p170, %p171
      %s174 = sadd.s32 %s173, 1
      %p177 = scmp.eq.s32.totalorder %s34, 1
      %p178 = scmp.ne.s32.totalorder %s173, %s175
      %p179 = scmp.eq.s32.totalorder %s34, 0
      %p180 = por %p178, %p179
      %p181 = scmp.ne.s32.totalorder %s173, %s175
      %p182 = scmp.eq.s32.totalorder %s39, 1
      %p183 = por %p181, %p182
      %p184 = scmp.ne.s32.totalorder %s175, %s176
      %p185 = scmp.eq.s32.totalorder %s39, 0
      %p186 = por %p184, %p185
      %p187 = scmp.ne.s32.totalorder %s175, %s176
      %p188 = scmp.eq.s32.totalorder %s40, 1
      %p189 = por %p187, %p188
      %p191 = scmp.ne.s32.totalorder %s176, %s190
      %p192 = scmp.eq.s32.totalorder %s40, 0
      %p193 = por %p191, %p192
      %s195 = sadd.s32 %s194, 1
      %p198 = scmp.eq.s32.totalorder %s34, 1
      %p199 = scmp.ne.s32.totalorder %s194, %s196
      %p200 = scmp.eq.s32.totalorder %s34, 0
      %p201 = por %p199, %p200
      %p202 = scmp.ne.s32.totalorder %s194, %s196
      %p203 = scmp.eq.s32.totalorder %s39, 1
      %p204 = por %p202, %p203
      %p205 = scmp.ne.s32.totalorder %s196, %s197
      %p206 = scmp.eq.s32.totalorder %s39, 0
      %p207 = por %p205, %p206
      %p208 = scmp.ne.s32.totalorder %s196, %s197
      %p209 = scmp.eq.s32.totalorder %s40, 1
      %p210 = por %p208, %p209
      %p212 = scmp.ne.s32.totalorder %s197, %s211
      %p213 = scmp.eq.s32.totalorder %s40, 0
      %p214 = por %p212, %p213
      %s216 = sadd.s32 %s215, 1
      %p219 = scmp.eq.s32.totalorder %s34, 1
      %p220 = scmp.ne.s32.totalorder %s215, %s217
      %p221 = scmp.eq.s32.totalorder %s34, 0
      %p222 = por %p220, %p221
      %p223 = scmp.ne.s32.totalorder %s215, %s217
      %p224 = scmp.eq.s32.totalorder %s39, 1
      %p225 = por %p223, %p224
      %p226 = scmp.ne.s32.totalorder %s217, %s218
      %p227 = scmp.eq.s32.totalorder %s39, 0
      %p228 = por %p226, %p227
      %p229 = scmp.ne.s32.totalorder %s217, %s218
      %p230 = scmp.eq.s32.totalorder %s40, 1
      %p231 = por %p229, %p230
      %p233 = scmp.ne.s32.totalorder %s218, %s232
      %p234 = scmp.eq.s32.totalorder %s40, 0
      %p235 = por %p233, %p234
      %s237 = sadd.s32 %s236, 1
      %p240 = scmp.eq.s32.totalorder %s34, 1
      %p241 = scmp.ne.s32.totalorder %s236, %s238
      %p242 = scmp.eq.s32.totalorder %s34, 0
      %p243 = por %p241, %p242
      %p244 = scmp.ne.s32.totalorder %s236, %s238
      %p245 = scmp.eq.s32.totalorder %s39, 1
      %p246 = por %p244, %p245
      %p247 = scmp.ne.s32.totalorder %s238, %s239
      %p248 = scmp.eq.s32.totalorder %s39, 0
      %p249 = por %p247, %p248
      %p250 = scmp.ne.s32.totalorder %s238, %s239
      %p251 = scmp.eq.s32.totalorder %s40, 1
      %p252 = por %p250, %p251
      %p254 = scmp.ne.s32.totalorder %s239, %s253
      %p255 = scmp.eq.s32.totalorder %s40, 0
      %p256 = por %p254, %p255
      %s258 = sadd.s32 %s257, 1
      %p261 = scmp.eq.s32.totalorder %s34, 1
      %p262 = scmp.ne.s32.totalorder %s257, %s259
      %p263 = scmp.eq.s32.totalorder %s34, 0
      %p264 = por %p262, %p263
      %p265 = scmp.ne.s32.totalorder %s257, %s259
      %p266 = scmp.eq.s32.totalorder %s39, 1
      %p267 = por %p265, %p266
      %p268 = scmp.ne.s32.totalorder %s259, %s260
      %p269 = scmp.eq.s32.totalorder %s39, 0
      %p270 = por %p268, %p269
      %p271 = scmp.ne.s32.totalorder %s259, %s260
      %p272 = scmp.eq.s32.totalorder %s40, 1
      %p273 = por %p271, %p272
      %p275 = scmp.ne.s32.totalorder %s260, %s274
      %p276 = scmp.eq.s32.totalorder %s40, 0
      %p277 = por %p275, %p276
      %s279 = sadd.s32 %s278, 1
      %p282 = scmp.eq.s32.totalorder %s34, 1
      %p283 = scmp.ne.s32.totalorder %s278, %s280
      %p284 = scmp.eq.s32.totalorder %s34, 0
      %p285 = por %p283, %p284
      %p286 = scmp.ne.s32.totalorder %s278, %s280
      %p287 = scmp.eq.s32.totalorder %s39, 1
      %p288 = por %p286, %p287
      %p289 = scmp.ne.s32.totalorder %s280, %s281
      %p290 = scmp.eq.s32.totalorder %s39, 0
      %p291 = por %p289, %p290
      %p292 = scmp.ne.s32.totalorder %s280, %s281
      %p293 = scmp.eq.s32.totalorder %s40, 1
      %p294 = por %p292, %p293
      %p296 = scmp.ne.s32.totalorder %s281, %s295
      %p297 = scmp.eq.s32.totalorder %s40, 0
      %p298 = por %p296, %p297
      %s300 = sadd.s32 %s299, 1
      %p303 = scmp.eq.s32.totalorder %s34, 1
      %p304 = scmp.ne.s32.totalorder %s299, %s301
      %p305 = scmp.eq.s32.totalorder %s34, 0
      %p306 = por %p304, %p305
      %p307 = scmp.ne.s32.totalorder %s299, %s301
      %p308 = scmp.eq.s32.totalorder %s39, 1
      %p309 = por %p307, %p308
      %p310 = scmp.ne.s32.totalorder %s301, %s302
      %p311 = scmp.eq.s32.totalorder %s39, 0
      %p312 = por %p310, %p311
      %p313 = scmp.ne.s32.totalorder %s301, %s302
      %p314 = scmp.eq.s32.totalorder %s40, 1
      %p315 = por %p313, %p314
      %p317 = scmp.ne.s32.totalorder %s302, %s316
      %p318 = scmp.eq.s32.totalorder %s40, 0
      %p319 = por %p317, %p318
      %s321 = sadd.s32 %s320, 1
      %p324 = scmp.eq.s32.totalorder %s34, 1
      %p325 = scmp.ne.s32.totalorder %s320, %s322
      %p326 = scmp.eq.s32.totalorder %s34, 0
      %p327 = por %p325, %p326
      %p328 = scmp.ne.s32.totalorder %s320, %s322
      %p329 = scmp.eq.s32.totalorder %s39, 1
      %p330 = por %p328, %p329
      %p331 = scmp.ne.s32.totalorder %s322, %s323
      %p332 = scmp.eq.s32.totalorder %s39, 0
      %p333 = por %p331, %p332
      %p334 = scmp.ne.s32.totalorder %s322, %s323
      %p335 = scmp.eq.s32.totalorder %s40, 1
      %p336 = por %p334, %p335
      %p338 = scmp.ne.s32.totalorder %s323, %s337
      %p339 = scmp.eq.s32.totalorder %s40, 0
      %p340 = por %p338, %p339
      %s342 = sadd.s32 %s341, 1
      %p345 = scmp.eq.s32.totalorder %s34, 1
      %p346 = scmp.ne.s32.totalorder %s341, %s343
      %p347 = scmp.eq.s32.totalorder %s34, 0
      %p348 = por %p346, %p347
      %p349 = scmp.ne.s32.totalorder %s341, %s343
      %p350 = scmp.eq.s32.totalorder %s39, 1
      %p351 = por %p349, %p350
      %p352 = scmp.ne.s32.totalorder %s343, %s344
      %p353 = scmp.eq.s32.totalorder %s39, 0
      %p354 = por %p352, %p353
      %p355 = scmp.ne.s32.totalorder %s343, %s344
      %p356 = scmp.eq.s32.totalorder %s40, 1
      %p357 = por %p355, %p356
      %p359 = scmp.ne.s32.totalorder %s344, %s358
      %p360 = scmp.eq.s32.totalorder %s40, 0
      %p361 = por %p359, %p360
      %s363 = sadd.s32 %s362, 1
      %p366 = scmp.eq.s32.totalorder %s34, 1
      %p367 = scmp.ne.s32.totalorder %s362, %s364
      %p368 = scmp.eq.s32.totalorder %s34, 0
      %p369 = por %p367, %p368
      %p370 = scmp.ne.s32.totalorder %s362, %s364
      %p371 = scmp.eq.s32.totalorder %s39, 1
      %p372 = por %p370, %p371
      %p373 = scmp.ne.s32.totalorder %s364, %s365
      %p374 = scmp.eq.s32.totalorder %s39, 0
      %p375 = por %p373, %p374
      %p376 = scmp.ne.s32.totalorder %s364, %s365
      %p377 = scmp.eq.s32.totalorder %s40, 1
      %p378 = por %p376, %p377
      %p380 = scmp.ne.s32.totalorder %s365, %s379
      %p381 = scmp.eq.s32.totalorder %s40, 0
      %p382 = por %p380, %p381
      %s384 = sadd.s32 %s383, 1
      %p387 = scmp.eq.s32.totalorder %s34, 1
      %p388 = scmp.ne.s32.totalorder %s383, %s385
      %p389 = scmp.eq.s32.totalorder %s34, 0
      %p390 = por %p388, %p389
      %p391 = scmp.ne.s32.totalorder %s383, %s385
      %p392 = scmp.eq.s32.totalorder %s39, 1
      %p393 = por %p391, %p392
      %p394 = scmp.ne.s32.totalorder %s385, %s386
      %p395 = scmp.eq.s32.totalorder %s39, 0
      %p396 = por %p394, %p395
      %p397 = scmp.ne.s32.totalorder %s385, %s386
      %p398 = scmp.eq.s32.totalorder %s40, 1
      %p399 = por %p397, %p398
      %p401 = scmp.ne.s32.totalorder %s386, %s400
      %p402 = scmp.eq.s32.totalorder %s40, 0
      %p403 = por %p401, %p402
      %s405 = sadd.s32 %s404, 1
      %p408 = scmp.eq.s32.totalorder %s34, 1
      %p409 = scmp.ne.s32.totalorder %s404, %s406
      %p410 = scmp.eq.s32.totalorder %s34, 0
      %p411 = por %p409, %p410
      %p412 = scmp.ne.s32.totalorder %s404, %s406
      %p413 = scmp.eq.s32.totalorder %s39, 1
      %p414 = por %p412, %p413
      %p415 = scmp.ne.s32.totalorder %s406, %s407
      %p416 = scmp.eq.s32.totalorder %s39, 0
      %p417 = por %p415, %p416
      %p418 = scmp.ne.s32.totalorder %s406, %s407
      %p419 = scmp.eq.s32.totalorder %s40, 1
      %p420 = por %p418, %p419
      %p422 = scmp.ne.s32.totalorder %s407, %s421
      %p423 = scmp.eq.s32.totalorder %s40, 0
      %p424 = por %p422, %p423
      %s425 = ssub.s32 %s34, %s41
      %p426 = scmp.eq.s32.totalorder %s425, 0
      %s428 = sadd.s32 %s427, 1
      %s429 = scalar_select %p426, %s427, %s428
      %p432 = pneg %p426
      %p433 = scmp.eq.s32.totalorder %s34, 1
      %p434 = por %p432, %p433
      %p435 = scmp.ne.s32.totalorder %s427, %s430
      %p436 = scmp.eq.s32.totalorder %s34, 0
      %p437 = por %p435, %p436
      %p438 = scmp.ne.s32.totalorder %s427, %s430
      %p439 = scmp.eq.s32.totalorder %s39, 1
      %p440 = por %p438, %p439
      %p441 = scmp.ne.s32.totalorder %s430, %s431
      %p442 = scmp.eq.s32.totalorder %s39, 0
      %p443 = por %p441, %p442
      %p444 = scmp.ne.s32.totalorder %s430, %s431
      %p445 = scmp.eq.s32.totalorder %s40, 1
      %p446 = por %p444, %p445
      %p448 = scmp.ne.s32.totalorder %s431, %s447
      %p449 = scmp.eq.s32.totalorder %s40, 0
      %p450 = por %p448, %p449
      %p451 = scmp.le.s32.totalorder 1, %s34
      %p452 = scmp.lt.s32.totalorder %s34, 3
      %p453 = pnand %p451, %p452
      %p454 = pneg %p453
      // Predicated region
      $region9: #{multi_mamba_forward.1} parent=5 // pred_check
        _
      $region10: #{multi_mamba_forward.1} parent=5 // pred_check_branch
        %456 = sbr.rel (%p453) target = $region12
      $region11: #{multi_mamba_forward.1} parent=5 // pred_region
        %s457 = ssub.s32 %s34, 1
        // Predicated region
        $region13: #{multi_mamba_forward.1} parent=11 // pred_check
          %p458 = pneg %p81
        $region14: #{multi_mamba_forward.1} parent=11 // pred_check_branch
          %460 = sbr.rel (%p458) target = $region16
        $region15: #{multi_mamba_forward.1} parent=11 // pred_region
          %s462 = ssub.s32 512, 512
          %463 = vsyncadd [#allocation9], %s462
          %s464 = sshll.u32 [#allocation8], 4
          %s465 = int_to_ptr.vmem [resolvable:$true] %s464
          %470 = dma.hbm_to_vmem [thread:$0]  %s1, 512, %s465, [#allocation9], 128, 128, 8
        $region16: #{multi_mamba_forward.1} parent=11 // pred_fallthru
          _
        // Predicated region
        $region17: #{multi_mamba_forward.1} parent=11 // pred_check
          %p471 = pneg %p102
        $region18: #{multi_mamba_forward.1} parent=11 // pred_check_branch
          %473 = sbr.rel (%p471) target = $region20
        $region19: #{multi_mamba_forward.1} parent=11 // pred_region
          _
        $region20: #{multi_mamba_forward.1} parent=11 // pred_fallthru
          _
        // Predicated region
        $region21: #{multi_mamba_forward.1} parent=11 // pred_check
          %p474 = pneg %p123
        $region22: #{multi_mamba_forward.1} parent=11 // pred_check_branch
          %476 = sbr.rel (%p474) target = $region24
        $region23: #{multi_mamba_forward.1} parent=11 // pred_region
          _
        $region24: #{multi_mamba_forward.1} parent=11 // pred_fallthru
          _
        // Predicated region
        $region25: #{multi_mamba_forward.1} parent=11 // pred_check
          %p477 = pneg %p144
        $region26: #{multi_mamba_forward.1} parent=11 // pred_check_branch
          %479 = sbr.rel (%p477) target = $region28
        $region27: #{multi_mamba_forward.1} parent=11 // pred_region
          _
        $region28: #{multi_mamba_forward.1} parent=11 // pred_fallthru
          _
        // Predicated region
        $region29: #{multi_mamba_forward.1} parent=11 // pred_check
          %p480 = pneg %p165
        $region30: #{multi_mamba_forward.1} parent=11 // pred_check_branch
          %482 = sbr.rel (%p480) target = $region32
        $region31: #{multi_mamba_forward.1} parent=11 // pred_region
          _
        $region32: #{multi_mamba_forward.1} parent=11 // pred_fallthru
          _
        // Predicated region
        $region33: #{multi_mamba_forward.1} parent=11 // pred_check
          %p483 = pneg %p186
        $region34: #{multi_mamba_forward.1} parent=11 // pred_check_branch
          %485 = sbr.rel (%p483) target = $region36
        $region35: #{multi_mamba_forward.1} parent=11 // pred_region
          _
        $region36: #{multi_mamba_forward.1} parent=11 // pred_fallthru
          _
        // Predicated region
        $region37: #{multi_mamba_forward.1} parent=11 // pred_check
          %p486 = pneg %p207
        $region38: #{multi_mamba_forward.1} parent=11 // pred_check_branch
          %488 = sbr.rel (%p486) target = $region40
        $region39: #{multi_mamba_forward.1} parent=11 // pred_region
          _
        $region40: #{multi_mamba_forward.1} parent=11 // pred_fallthru
          _
        // Predicated region
        $region41: #{multi_mamba_forward.1} parent=11 // pred_check
          %p489 = pneg %p228
        $region42: #{multi_mamba_forward.1} parent=11 // pred_check_branch
          %491 = sbr.rel (%p489) target = $region44
        $region43: #{multi_mamba_forward.1} parent=11 // pred_region
          %s493 = ssub.s32 512, 512
          %494 = vsyncadd [#allocation9], %s493
          %s495 = sshll.u32 [#allocation10], 4
          %s496 = int_to_ptr.vmem [resolvable:$true] %s495
          %501 = dma.hbm_to_vmem [thread:$0]  %s8, 512, %s496, [#allocation9], 256, 256, 16
        $region44: #{multi_mamba_forward.1} parent=11 // pred_fallthru
          _
        // Predicated region
        $region45: #{multi_mamba_forward.1} parent=11 // pred_check
          %p502 = pneg %p249
        $region46: #{multi_mamba_forward.1} parent=11 // pred_check_branch
          %504 = sbr.rel (%p502) target = $region48
        $region47: #{multi_mamba_forward.1} parent=11 // pred_region
          %s506 = ssub.s32 32, 32
          %507 = vsyncadd [#allocation12], %s506
          %s509 = sshll.u32 [#allocation11], 4
          %s510 = int_to_ptr.vmem [resolvable:$true] %s509
          %512 = dma.hbm_to_vmem [thread:$0]  %s9, 32, %s510, [#allocation12]
        $region48: #{multi_mamba_forward.1} parent=11 // pred_fallthru
          _
        // Predicated region
        $region49: #{multi_mamba_forward.1} parent=11 // pred_check
          %p513 = pneg %p270
        $region50: #{multi_mamba_forward.1} parent=11 // pred_check_branch
          %515 = sbr.rel (%p513) target = $region52
        $region51: #{multi_mamba_forward.1} parent=11 // pred_region
          _
        $region52: #{multi_mamba_forward.1} parent=11 // pred_fallthru
          _
        // Predicated region
        $region53: #{multi_mamba_forward.1} parent=11 // pred_check
          %p516 = pneg %p291
        $region54: #{multi_mamba_forward.1} parent=11 // pred_check_branch
          %518 = sbr.rel (%p516) target = $region56
        $region55: #{multi_mamba_forward.1} parent=11 // pred_region
          _
        $region56: #{multi_mamba_forward.1} parent=11 // pred_fallthru
          _
        // Predicated region
        $region57: #{multi_mamba_forward.1} parent=11 // pred_check
          %p519 = pneg %p312
        $region58: #{multi_mamba_forward.1} parent=11 // pred_check_branch
          %521 = sbr.rel (%p519) target = $region60
        $region59: #{multi_mamba_forward.1} parent=11 // pred_region
          %s523 = ssub.s32 16, 16
          %524 = vsyncadd [#allocation12], %s523
          %s526 = sshll.u32 [#allocation13], 4
          %s527 = int_to_ptr.vmem [resolvable:$true] %s526
          %529 = dma.hbm_to_vmem [thread:$0]  %s12, 16, %s527, [#allocation12]
        $region60: #{multi_mamba_forward.1} parent=11 // pred_fallthru
          _
        // Predicated region
        $region61: #{multi_mamba_forward.1} parent=11 // pred_check
          %p530 = pneg %p333
        $region62: #{multi_mamba_forward.1} parent=11 // pred_check_branch
          %532 = sbr.rel (%p530) target = $region64
        $region63: #{multi_mamba_forward.1} parent=11 // pred_region
          _
        $region64: #{multi_mamba_forward.1} parent=11 // pred_fallthru
          _
        // Predicated region
        $region65: #{multi_mamba_forward.1} parent=11 // pred_check
          %p533 = pneg %p354
        $region66: #{multi_mamba_forward.1} parent=11 // pred_check_branch
          %535 = sbr.rel (%p533) target = $region68
        $region67: #{multi_mamba_forward.1} parent=11 // pred_region
          %s537 = ssub.s32 16, 16
          %538 = vsyncadd [#allocation15], %s537
          %s540 = sshll.u32 [#allocation14], 4
          %s541 = int_to_ptr.vmem [resolvable:$true] %s540
          %543 = dma.hbm_to_vmem [thread:$0]  %s14, 16, %s541, [#allocation15]
        $region68: #{multi_mamba_forward.1} parent=11 // pred_fallthru
          _
        // Predicated region
        $region69: #{multi_mamba_forward.1} parent=11 // pred_check
          %p544 = pneg %p375
        $region70: #{multi_mamba_forward.1} parent=11 // pred_check_branch
          %546 = sbr.rel (%p544) target = $region72
        $region71: #{multi_mamba_forward.1} parent=11 // pred_region
          %s548 = ssub.s32 128, 128
          %549 = vsyncadd [#allocation15], %s548
          %s551 = sshll.u32 [#allocation16], 4
          %s552 = int_to_ptr.vmem [resolvable:$true] %s551
          %554 = dma.hbm_to_vmem [thread:$0]  %s15, 128, %s552, [#allocation15]
        $region72: #{multi_mamba_forward.1} parent=11 // pred_fallthru
          _
        // Predicated region
        $region73: #{multi_mamba_forward.1} parent=11 // pred_check
          %p555 = pneg %p396
        $region74: #{multi_mamba_forward.1} parent=11 // pred_check_branch
          %557 = sbr.rel (%p555) target = $region76
        $region75: #{multi_mamba_forward.1} parent=11 // pred_region
          %s559 = ssub.s32 16, 16
          %560 = vsyncadd [#allocation18], %s559
          %s562 = sshll.u32 [#allocation17], 4
          %s563 = int_to_ptr.vmem [resolvable:$true] %s562
          %565 = dma.hbm_to_vmem [thread:$0]  %s16, 16, %s563, [#allocation18]
        $region76: #{multi_mamba_forward.1} parent=11 // pred_fallthru
          _
        // Predicated region
        $region77: #{multi_mamba_forward.1} parent=11 // pred_check
          %p566 = pneg %p417
        $region78: #{multi_mamba_forward.1} parent=11 // pred_check_branch
          %568 = sbr.rel (%p566) target = $region80
        $region79: #{multi_mamba_forward.1} parent=11 // pred_region
          _
        $region80: #{multi_mamba_forward.1} parent=11 // pred_fallthru
          _
      $region12: #{multi_mamba_forward.1} parent=5 // pred_fallthru
        _
      %p569 = scmp.lt.s32.totalorder %s34, 2
      // Predicated region
      $region81: #{multi_mamba_forward.1} parent=5 // pred_check
        %p570 = pneg %p569
      $region82: #{multi_mamba_forward.1} parent=5 // pred_check_branch
        %572 = sbr.rel (%p570) target = $region84
      $region83: #{multi_mamba_forward.1} parent=5 // pred_region
        // Predicated region
        $region85: #{multi_mamba_forward.1} parent=83 // pred_check
          %p573 = pneg %p54
        $region86: #{multi_mamba_forward.1} parent=83 // pred_check_branch
          %575 = sbr.rel (%p573) target = $region88
        $region87: #{multi_mamba_forward.1} parent=83 // pred_region
          %s576 = sand.u32 %s44, 1
          %s577 = scalar_lea.sflag [#allocation6], %s576
          %s578 = sand.u32 %s44, 1
          %s579 = smul.addr %s578, 16
          %s580 = scalar_lea.vmem [#allocation5], %s579
          %s582 = ssub.s32 256, 256
          %583 = vsyncadd %s577, %s582
          %s584 = smul.addr %s34, 2
          %s585 = smul.addr %s584, 128
          %s586 = scalar_lea.hbm %s0, %s585
          %s587 = sshll.u32 %s580, 4
          %s588 = int_to_ptr.vmem [resolvable:$true] %s587
          %593 = dma.hbm_to_vmem [thread:$0]  %s586, 256, %s588, %s577, 128, 128, 8
        $region88: #{multi_mamba_forward.1} parent=83 // pred_fallthru
          _
      $region84: #{multi_mamba_forward.1} parent=5 // pred_fallthru
        _
      %p594 = scmp.le.s32.totalorder 1, %s34
      %p595 = scmp.lt.s32.totalorder %s34, 3
      %p596 = pnand %p594, %p595
      %p597 = pneg %p596
      // Predicated region
      $region89: #{multi_mamba_forward.1} parent=5 // pred_check
        _
      $region90: #{multi_mamba_forward.1} parent=5 // pred_check_branch
        %599 = sbr.rel (%p596) target = $region92
      $region91: #{multi_mamba_forward.1} parent=5 // pred_region
        %s600 = ssub.s32 %s34, 1
        %s601 = sand.u32 %s47, 1
        %s602 = scalar_lea.sflag [#allocation6], %s601
        %s603 = sand.u32 %s47, 1
        %s604 = smul.addr %s603, 16
        %s605 = scalar_lea.vmem [#allocation5], %s604
        // Predicated region
        $region93: #{multi_mamba_forward.1} parent=91 // pred_check
          %p606 = pneg %p60
        $region94: #{multi_mamba_forward.1} parent=91 // pred_check_branch
          %608 = sbr.rel (%p606) target = $region96
        $region95: #{multi_mamba_forward.1} parent=91 // pred_region
          %609 = dma.done %s602, 256
        $region96: #{multi_mamba_forward.1} parent=91 // pred_fallthru
          _
        // Predicated region
        $region97: #{multi_mamba_forward.1} parent=91 // pred_check
          %p610 = pneg %p81
        $region98: #{multi_mamba_forward.1} parent=91 // pred_check_branch
          %612 = sbr.rel (%p610) target = $region100
        $region99: #{multi_mamba_forward.1} parent=91 // pred_region
          %613 = dma.done [#allocation9], 512
        $region100: #{multi_mamba_forward.1} parent=91 // pred_fallthru
          _
        // Predicated region
        $region101: #{multi_mamba_forward.1} parent=91 // pred_check
          %p614 = pneg %p228
        $region102: #{multi_mamba_forward.1} parent=91 // pred_check_branch
          %616 = sbr.rel (%p614) target = $region104
        $region103: #{multi_mamba_forward.1} parent=91 // pred_region
          %617 = dma.done [#allocation9], 512
        $region104: #{multi_mamba_forward.1} parent=91 // pred_fallthru
          _
        // Predicated region
        $region105: #{multi_mamba_forward.1} parent=91 // pred_check
          %p618 = pneg %p249
        $region106: #{multi_mamba_forward.1} parent=91 // pred_check_branch
          %620 = sbr.rel (%p618) target = $region108
        $region107: #{multi_mamba_forward.1} parent=91 // pred_region
          %621 = dma.done [#allocation12], 32
        $region108: #{multi_mamba_forward.1} parent=91 // pred_fallthru
          _
        // Predicated region
        $region109: #{multi_mamba_forward.1} parent=91 // pred_check
          %p622 = pneg %p312
        $region110: #{multi_mamba_forward.1} parent=91 // pred_check_branch
          %624 = sbr.rel (%p622) target = $region112
        $region111: #{multi_mamba_forward.1} parent=91 // pred_region
          %625 = dma.done [#allocation12], 16
        $region112: #{multi_mamba_forward.1} parent=91 // pred_fallthru
          _
        // Predicated region
        $region113: #{multi_mamba_forward.1} parent=91 // pred_check
          %p626 = pneg %p354
        $region114: #{multi_mamba_forward.1} parent=91 // pred_check_branch
          %628 = sbr.rel (%p626) target = $region116
        $region115: #{multi_mamba_forward.1} parent=91 // pred_region
          %629 = dma.done [#allocation15], 16
        $region116: #{multi_mamba_forward.1} parent=91 // pred_fallthru
          _
        // Predicated region
        $region117: #{multi_mamba_forward.1} parent=91 // pred_check
          %p630 = pneg %p375
        $region118: #{multi_mamba_forward.1} parent=91 // pred_check_branch
          %632 = sbr.rel (%p630) target = $region120
        $region119: #{multi_mamba_forward.1} parent=91 // pred_region
          %633 = dma.done [#allocation15], 128
        $region120: #{multi_mamba_forward.1} parent=91 // pred_fallthru
          _
        // Predicated region
        $region121: #{multi_mamba_forward.1} parent=91 // pred_check
          %p634 = pneg %p396
        $region122: #{multi_mamba_forward.1} parent=91 // pred_check_branch
          %636 = sbr.rel (%p634) target = $region124
        $region123: #{multi_mamba_forward.1} parent=91 // pred_region
          %637 = dma.done [#allocation18], 16
        $region124: #{multi_mamba_forward.1} parent=91 // pred_fallthru
          _
        %s638 = sand.u32 %s47, 1
        %s639 = scalar_lea.sflag [#allocation6], %s638
        %s640 = sand.u32 %s47, 1
        %s641 = smul.addr %s640, 16
        %s642 = scalar_lea.vmem [#allocation5], %s641
        %p643 = pneg %p60
        %p644 = pneg %p57
        %p645 = pneg %p81
        %p646 = pneg %p78
        %p647 = pneg %p102
        %p648 = pneg %p99
        %p649 = pneg %p123
        %p650 = pneg %p120
        %p651 = pneg %p144
        %p652 = pneg %p141
        %p653 = pneg %p165
        %p654 = pneg %p162
        %p655 = pneg %p186
        %p656 = pneg %p183
        %p657 = pneg %p207
        %p658 = pneg %p204
        %p659 = pneg %p228
        %p660 = pneg %p225
        %p661 = pneg %p249
        %p662 = pneg %p246
        %p663 = pneg %p270
        %p664 = pneg %p267
        %p665 = pneg %p291
        %p666 = pneg %p288
        %p667 = pneg %p312
        %p668 = pneg %p309
        %p669 = pneg %p333
        %p670 = pneg %p330
        %p671 = pneg %p354
        %p672 = pneg %p351
        %p673 = pneg %p375
        %p674 = pneg %p372
        %p675 = pneg %p396
        %p676 = pneg %p393
        %p677 = pneg %p417
        %p678 = pneg %p414
        %p679 = pneg %p443
        %p680 = pneg %p440
        %s681 = sand.u32 %s430, 1
        %s682 = scalar_lea.sflag [#allocation7], %s681
        %s683 = sand.u32 %s430, 1
        %s684 = smul.addr %s683, 16
        %s685 = scalar_lea.vmem [#allocation19], %s684
        %v686 = vld [vmem:[%s605] sm:$0xff]
        %v687 = vld [vmem:[%s605 + $0x8] sm:$0xff]
        %v688 = vld [vmem:[#allocation8] sm:$0xff]
        %v689 = vld [vmem:[#allocation8 + $0x8] sm:$0xff]
        %v690 = vld [vmem:[#allocation8 + $0x10] sm:$0xff]
        %v691 = vld [vmem:[#allocation8 + $0x18] sm:$0xff]
        %vm692 = vcmask 261120
        %v694 = vsel %vm692, %v686, 0
        %v697 = vsel %vm692, %v687, 0
        %699 = vmatprep.subr.mxu0 0.0
        %700 = vmatpush1.msra.mxu0 0.0
        %701 = vmatprep.subr.mxu0 0.0
        %702 = vmatpush1.msra.mxu0 0.0
        %703 = vmatprep.subr.mxu0 0.0
        %704 = vmatpush1.msra.mxu0 0.0
        %705 = vmatprep.subr.mxu0 0.0
        %706 = vmatpush1.msra.mxu0 0.0
        %707 = vmatprep.subr.mxu0 0.0
        %708 = vmatpush1.msra.mxu0 0.0
        %709 = vmatprep.subr.mxu0 0.0
        %710 = vmatpush1.msra.mxu0 0.0
        %711 = vmatprep.subr.mxu0 0.0
        %712 = vmatpush1.msra.mxu0 0.0
        %713 = vmatprep.subr.mxu0 0.0
        %714 = vmatpush1.msra.mxu0 0.0
        %715 = vmatprep.subr.mxu0 0.0
        %716 = vmatpush1.msra.mxu0 0.0
        %717 = vmatprep.subr.mxu0 0.0
        %718 = vmatpush1.msra.mxu0 0.0
        %719 = vmatprep.subr.mxu0 0.0
        %720 = vmatpush1.msra.mxu0 0.0
        %721 = vmatprep.subr.mxu0 0.0
        %722 = vmatpush1.msra.mxu0 0.0
        %723 = vmatprep.subr.mxu0 0.0
        %724 = vmatpush1.msra.mxu0 %v691
        %725 = vmatprep.subr.mxu0 0.0
        %726 = vmatpush1.msra.mxu0 %v690
        %727 = vmatprep.subr.mxu0 0.0
        %728 = vmatpush1.msra.mxu0 %v689
        %729 = vmatprep.subr.mxu0 0.0
        %730 = vmatpush1.msra.mxu0 %v688
        %731 = vmatprep.subr.mxu0 0.0
        %732 = vmatpush2.msra.mxu0 0.0
        %733 = vmatprep.subr.mxu0 0.0
        %734 = vmatpush2.msra.mxu0 0.0
        %735 = vmatprep.subr.mxu0 0.0
        %736 = vmatpush2.msra.mxu0 0.0
        %737 = vmatprep.subr.mxu0 0.0
        %738 = vmatpush2.msra.mxu0 0.0
        %739 = vmatprep.subr.mxu0 0.0
        %740 = vmatpush2.msra.mxu0 0.0
        %741 = vmatprep.subr.mxu0 0.0
        %742 = vmatpush2.msra.mxu0 0.0
        %743 = vmatprep.subr.mxu0 0.0
        %744 = vmatpush2.msra.mxu0 0.0
        %745 = vmatprep.subr.mxu0 0.0
        %746 = vmatpush2.msra.mxu0 0.0
        %747 = vmatprep.subr.mxu0 0.0
        %748 = vmatpush2.msra.mxu0 0.0
        %749 = vmatprep.subr.mxu0 0.0
        %750 = vmatpush2.msra.mxu0 0.0
        %751 = vmatprep.subr.mxu0 0.0
        %752 = vmatpush2.msra.mxu0 0.0
        %753 = vmatprep.subr.mxu0 0.0
        %754 = vmatpush2.msra.mxu0 0.0
        %755 = vmatprep.subr.mxu0 0.0
        %756 = vmatpush2.msra.mxu0 0.0
        %757 = vmatprep.subr.mxu0 0.0
        %758 = vmatpush2.msra.mxu0 0.0
        %759 = vmatprep.subr.mxu0 0.0
        %760 = vmatpush2.msra.mxu0 0.0
        %761 = vmatprep.subr.mxu0 0.0
        %762 = vmatpush2.msra.mxu0 0.0
        %763 = vmatprep.mubr.f32.mxu0 0.0
        %764 = vmatmul.mubr.f32.gmra.mxu0 %v694
        %v765 = vpop.f32.mrf.mxu0
        %v766 = vadd.f32 0.0, %v765
        %v767 = vpop.f32.mrf.mxu0
        %768 = vmatprep.mubr.f32.mxu0 0.0
        %769 = vmatmul.mubr.f32.gmra.mxu0 %v697
        %v770 = vpop.f32.mrf.mxu0
        %v771 = vadd.f32 0.0, %v770
        %v772 = vpop.f32.mrf.mxu0
        %773 = vdwg.mxu0
        %v774 = vld [vmem:[%s2] sm:$0xff]
        %v775 = vld [vmem:[%s2 + $0x8] sm:$0xff]
        %v776 = vld [vmem:[%s2 + $0x10] sm:$0xff]
        %v777 = vld [vmem:[%s2 + $0x18] sm:$0xff]
        %v778 = vld [vmem:[%s2 + $0x20] sm:$0xff]
        %v779 = vld [vmem:[%s2 + $0x28] sm:$0xff]
        %v780 = vld [vmem:[%s2 + $0x30] sm:$0xff]
        %v781 = vld [vmem:[%s2 + $0x38] sm:$0xff]
        %v782 = vld [vmem:[%s2 + $0x40] sm:$0xff]
        %v783 = vld [vmem:[%s2 + $0x48] sm:$0xff]
        %v784 = vld [vmem:[%s2 + $0x50] sm:$0xff]
        %v785 = vld [vmem:[%s2 + $0x58] sm:$0xff]
        %v786 = vld [vmem:[%s2 + $0x60] sm:$0xff]
        %v787 = vld [vmem:[%s2 + $0x68] sm:$0xff]
        %v788 = vld [vmem:[%s2 + $0x70] sm:$0xff]
        %v789 = vld [vmem:[%s2 + $0x78] sm:$0xff]
        %v790 = vld [vmem:[%s2 + $0x80] sm:$0xff]
        %v791 = vld [vmem:[%s2 + $0x88] sm:$0xff]
        %v792 = vld [vmem:[%s2 + $0x90] sm:$0xff]
        %v793 = vld [vmem:[%s2 + $0x98] sm:$0xff]
        %v794 = vld [vmem:[%s2 + $0xa0] sm:$0xff]
        %v795 = vld [vmem:[%s2 + $0xa8] sm:$0xff]
        %v796 = vld [vmem:[%s2 + $0xb0] sm:$0xff]
        %v797 = vld [vmem:[%s2 + $0xb8] sm:$0xff]
        %v798 = vld [vmem:[%s2 + $0xc0] sm:$0xff]
        %v799 = vld [vmem:[%s2 + $0xc8] sm:$0xff]
        %v800 = vld [vmem:[%s2 + $0xd0] sm:$0xff]
        %v801 = vld [vmem:[%s2 + $0xd8] sm:$0xff]
        %v802 = vld [vmem:[%s2 + $0xe0] sm:$0xff]
        %v803 = vld [vmem:[%s2 + $0xe8] sm:$0xff]
        %v804 = vld [vmem:[%s2 + $0xf0] sm:$0xff]
        %v805 = vld [vmem:[%s2 + $0xf8] sm:$0xff]
        %vm806 = vcmask 130048
        %v808 = vsel %vm806, %v774, 0
        %v811 = vsel %vm806, %v775, 0
        %v814 = vsel %vm806, %v776, 0
        %v817 = vsel %vm806, %v777, 0
        %v820 = vsel %vm806, %v778, 0
        %v823 = vsel %vm806, %v779, 0
        %v826 = vsel %vm806, %v780, 0
        %v829 = vsel %vm806, %v781, 0
        %v832 = vsel %vm806, %v782, 0
        %v835 = vsel %vm806, %v783, 0
        %v838 = vsel %vm806, %v784, 0
        %v841 = vsel %vm806, %v785, 0
        %v844 = vsel %vm806, %v786, 0
        %v847 = vsel %vm806, %v787, 0
        %v850 = vsel %vm806, %v788, 0
        %v853 = vsel %vm806, %v789, 0
        %v856 = vsel %vm806, %v790, 0
        %v859 = vsel %vm806, %v791, 0
        %v862 = vsel %vm806, %v792, 0
        %v865 = vsel %vm806, %v793, 0
        %v868 = vsel %vm806, %v794, 0
        %v871 = vsel %vm806, %v795, 0
        %v874 = vsel %vm806, %v796, 0
        %v877 = vsel %vm806, %v797, 0
        %v880 = vsel %vm806, %v798, 0
        %v883 = vsel %vm806, %v799, 0
        %v886 = vsel %vm806, %v800, 0
        %v889 = vsel %vm806, %v801, 0
        %v892 = vsel %vm806, %v802, 0
        %v895 = vsel %vm806, %v803, 0
        %v898 = vsel %vm806, %v804, 0
        %v901 = vsel %vm806, %v805, 0
        %903 = vmatprep.subr.mxu0 0.0
        %904 = vmatpush1.msra.mxu0 0.0
        %905 = vmatprep.subr.mxu0 0.0
        %906 = vmatpush1.msra.mxu0 0.0
        %907 = vmatprep.subr.mxu0 0.0
        %908 = vmatpush1.msra.mxu0 0.0
        %909 = vmatprep.subr.mxu0 0.0
        %910 = vmatpush1.msra.mxu0 0.0
        %911 = vmatprep.subr.mxu0 0.0
        %912 = vmatpush1.msra.mxu0 0.0
        %913 = vmatprep.subr.mxu0 0.0
        %914 = vmatpush1.msra.mxu0 0.0
        %915 = vmatprep.subr.mxu0 0.0
        %916 = vmatpush1.msra.mxu0 0.0
        %917 = vmatprep.subr.mxu0 0.0
        %918 = vmatpush1.msra.mxu0 0.0
        %919 = vmatprep.subr.mxu0 0.0
        %920 = vmatpush1.msra.mxu0 0.0
        %921 = vmatprep.subr.mxu0 0.0
        %922 = vmatpush1.msra.mxu0 0.0
        %923 = vmatprep.subr.mxu0 0.0
        %924 = vmatpush1.msra.mxu0 0.0
        %925 = vmatprep.subr.mxu0 0.0
        %926 = vmatpush1.msra.mxu0 0.0
        %927 = vmatprep.subr.mxu0 0.0
        %928 = vmatpush1.msra.mxu0 0.0
        %929 = vmatprep.subr.mxu0 0.0
        %930 = vmatpush1.msra.mxu0 0.0
        %931 = vmatprep.subr.mxu0 0.0
        %932 = vmatpush1.msra.mxu0 %v771
        %933 = vmatprep.subr.mxu0 0.0
        %934 = vmatpush1.msra.mxu0 %v766
        %935 = vmatprep.subr.mxu0 0.0
        %936 = vmatpush2.msra.mxu0 0.0
        %937 = vmatprep.subr.mxu0 0.0
        %938 = vmatpush2.msra.mxu0 0.0
        %939 = vmatprep.subr.mxu0 0.0
        %940 = vmatpush2.msra.mxu0 0.0
        %941 = vmatprep.subr.mxu0 0.0
        %942 = vmatpush2.msra.mxu0 0.0
        %943 = vmatprep.subr.mxu0 0.0
        %944 = vmatpush2.msra.mxu0 0.0
        %945 = vmatprep.subr.mxu0 0.0
        %946 = vmatpush2.msra.mxu0 0.0
        %947 = vmatprep.subr.mxu0 0.0
        %948 = vmatpush2.msra.mxu0 0.0
        %949 = vmatprep.subr.mxu0 0.0
        %950 = vmatpush2.msra.mxu0 0.0
        %951 = vmatprep.subr.mxu0 0.0
        %952 = vmatpush2.msra.mxu0 0.0
        %953 = vmatprep.subr.mxu0 0.0
        %954 = vmatpush2.msra.mxu0 0.0
        %955 = vmatprep.subr.mxu0 0.0
        %956 = vmatpush2.msra.mxu0 0.0
        %957 = vmatprep.subr.mxu0 0.0
        %958 = vmatpush2.msra.mxu0 0.0
        %959 = vmatprep.subr.mxu0 0.0
        %960 = vmatpush2.msra.mxu0 0.0
        %961 = vmatprep.subr.mxu0 0.0
        %962 = vmatpush2.msra.mxu0 0.0
        %963 = vmatprep.subr.mxu0 0.0
        %964 = vmatpush2.msra.mxu0 0.0
        %965 = vmatprep.subr.mxu0 0.0
        %966 = vmatpush2.msra.mxu0 0.0
        %967 = vmatprep.mubr.f32.mxu0 0.0
        %968 = vmatmul.mubr.f32.gmra.mxu0 %v808
        %v969 = vpop.f32.mrf.mxu0
        %v970 = vadd.f32 0.0, %v969
        %v971 = vpop.f32.mrf.mxu0
        %972 = vmatprep.mubr.f32.mxu0 0.0
        %973 = vmatmul.mubr.f32.gmra.mxu0 %v811
        %v974 = vpop.f32.mrf.mxu0
        %v975 = vadd.f32 0.0, %v974
        %v976 = vpop.f32.mrf.mxu0
        %977 = vmatprep.mubr.f32.mxu0 0.0
        %978 = vmatmul.mubr.f32.gmra.mxu0 %v814
        %v979 = vpop.f32.mrf.mxu0
        %v980 = vadd.f32 0.0, %v979
        %v981 = vpop.f32.mrf.mxu0
        %982 = vmatprep.mubr.f32.mxu0 0.0
        %983 = vmatmul.mubr.f32.gmra.mxu0 %v817
        %v984 = vpop.f32.mrf.mxu0
        %v985 = vadd.f32 0.0, %v984
        %v986 = vpop.f32.mrf.mxu0
        %987 = vmatprep.mubr.f32.mxu0 0.0
        %988 = vmatmul.mubr.f32.gmra.mxu0 %v820
        %v989 = vpop.f32.mrf.mxu0
        %v990 = vadd.f32 0.0, %v989
        %v991 = vpop.f32.mrf.mxu0
        %992 = vmatprep.mubr.f32.mxu0 0.0
        %993 = vmatmul.mubr.f32.gmra.mxu0 %v823
        %v994 = vpop.f32.mrf.mxu0
        %v995 = vadd.f32 0.0, %v994
        %v996 = vpop.f32.mrf.mxu0
        %997 = vmatprep.mubr.f32.mxu0 0.0
        %998 = vmatmul.mubr.f32.gmra.mxu0 %v826
        %v999 = vpop.f32.mrf.mxu0
        %v1000 = vadd.f32 0.0, %v999
        %v1001 = vpop.f32.mrf.mxu0
        %1002 = vmatprep.mubr.f32.mxu0 0.0
        %1003 = vmatmul.mubr.f32.gmra.mxu0 %v829
        %v1004 = vpop.f32.mrf.mxu0
        %v1005 = vadd.f32 0.0, %v1004
        %v1006 = vpop.f32.mrf.mxu0
        %1007 = vmatprep.mubr.f32.mxu0 0.0
        %1008 = vmatmul.mubr.f32.gmra.mxu0 %v832
        %v1009 = vpop.f32.mrf.mxu0
        %v1010 = vadd.f32 0.0, %v1009
        %v1011 = vpop.f32.mrf.mxu0
        %1012 = vmatprep.mubr.f32.mxu0 0.0
        %1013 = vmatmul.mubr.f32.gmra.mxu0 %v835
        %v1014 = vpop.f32.mrf.mxu0
        %v1015 = vadd.f32 0.0, %v1014
        %v1016 = vpop.f32.mrf.mxu0
        %1017 = vmatprep.mubr.f32.mxu0 0.0
        %1018 = vmatmul.mubr.f32.gmra.mxu0 %v838
        %v1019 = vpop.f32.mrf.mxu0
        %v1020 = vadd.f32 0.0, %v1019
        %v1021 = vpop.f32.mrf.mxu0
        %1022 = vmatprep.mubr.f32.mxu0 0.0
        %1023 = vmatmul.mubr.f32.gmra.mxu0 %v841
        %v1024 = vpop.f32.mrf.mxu0
        %v1025 = vadd.f32 0.0, %v1024
        %v1026 = vpop.f32.mrf.mxu0
        %1027 = vmatprep.mubr.f32.mxu0 0.0
        %1028 = vmatmul.mubr.f32.gmra.mxu0 %v844
        %v1029 = vpop.f32.mrf.mxu0
        %v1030 = vadd.f32 0.0, %v1029
        %v1031 = vpop.f32.mrf.mxu0
        %1032 = vmatprep.mubr.f32.mxu0 0.0
        %1033 = vmatmul.mubr.f32.gmra.mxu0 %v847
        %v1034 = vpop.f32.mrf.mxu0
        %v1035 = vadd.f32 0.0, %v1034
        %v1036 = vpop.f32.mrf.mxu0
        %1037 = vmatprep.mubr.f32.mxu0 0.0
        %1038 = vmatmul.mubr.f32.gmra.mxu0 %v850
        %v1039 = vpop.f32.mrf.mxu0
        %v1040 = vadd.f32 0.0, %v1039
        %v1041 = vpop.f32.mrf.mxu0
        %1042 = vmatprep.mubr.f32.mxu0 0.0
        %1043 = vmatmul.mubr.f32.gmra.mxu0 %v853
        %v1044 = vpop.f32.mrf.mxu0
        %v1045 = vadd.f32 0.0, %v1044
        %v1046 = vpop.f32.mrf.mxu0
        %1047 = vmatprep.mubr.f32.mxu0 0.0
        %1048 = vmatmul.mubr.f32.gmra.mxu0 %v856
        %v1049 = vpop.f32.mrf.mxu0
        %v1050 = vadd.f32 0.0, %v1049
        %v1051 = vpop.f32.mrf.mxu0
        %1052 = vmatprep.mubr.f32.mxu0 0.0
        %1053 = vmatmul.mubr.f32.gmra.mxu0 %v859
        %v1054 = vpop.f32.mrf.mxu0
        %v1055 = vadd.f32 0.0, %v1054
        %v1056 = vpop.f32.mrf.mxu0
        %1057 = vmatprep.mubr.f32.mxu0 0.0
        %1058 = vmatmul.mubr.f32.gmra.mxu0 %v862
        %v1059 = vpop.f32.mrf.mxu0
        %v1060 = vadd.f32 0.0, %v1059
        %v1061 = vpop.f32.mrf.mxu0
        %1062 = vmatprep.mubr.f32.mxu0 0.0
        %1063 = vmatmul.mubr.f32.gmra.mxu0 %v865
        %v1064 = vpop.f32.mrf.mxu0
        %v1065 = vadd.f32 0.0, %v1064
        %v1066 = vpop.f32.mrf.mxu0
        %1067 = vmatprep.mubr.f32.mxu0 0.0
        %1068 = vmatmul.mubr.f32.gmra.mxu0 %v868
        %v1069 = vpop.f32.mrf.mxu0
        %v1070 = vadd.f32 0.0, %v1069
        %v1071 = vpop.f32.mrf.mxu0
        %1072 = vmatprep.mubr.f32.mxu0 0.0
        %1073 = vmatmul.mubr.f32.gmra.mxu0 %v871
        %v1074 = vpop.f32.mrf.mxu0
        %v1075 = vadd.f32 0.0, %v1074
        %v1076 = vpop.f32.mrf.mxu0
        %1077 = vmatprep.mubr.f32.mxu0 0.0
        %1078 = vmatmul.mubr.f32.gmra.mxu0 %v874
        %v1079 = vpop.f32.mrf.mxu0
        %v1080 = vadd.f32 0.0, %v1079
        %v1081 = vpop.f32.mrf.mxu0
        %1082 = vmatprep.mubr.f32.mxu0 0.0
        %1083 = vmatmul.mubr.f32.gmra.mxu0 %v877
        %v1084 = vpop.f32.mrf.mxu0
        %v1085 = vadd.f32 0.0, %v1084
        %v1086 = vpop.f32.mrf.mxu0
        %1087 = vmatprep.mubr.f32.mxu0 0.0
        %1088 = vmatmul.mubr.f32.gmra.mxu0 %v880
        %v1089 = vpop.f32.mrf.mxu0
        %v1090 = vadd.f32 0.0, %v1089
        %v1091 = vpop.f32.mrf.mxu0
        %1092 = vmatprep.mubr.f32.mxu0 0.0
        %1093 = vmatmul.mubr.f32.gmra.mxu0 %v883
        %v1094 = vpop.f32.mrf.mxu0
        %v1095 = vadd.f32 0.0, %v1094
        %v1096 = vpop.f32.mrf.mxu0
        %1097 = vmatprep.mubr.f32.mxu0 0.0
        %1098 = vmatmul.mubr.f32.gmra.mxu0 %v886
        %v1099 = vpop.f32.mrf.mxu0
        %v1100 = vadd.f32 0.0, %v1099
        %v1101 = vpop.f32.mrf.mxu0
        %1102 = vmatprep.mubr.f32.mxu0 0.0
        %1103 = vmatmul.mubr.f32.gmra.mxu0 %v889
        %v1104 = vpop.f32.mrf.mxu0
        %v1105 = vadd.f32 0.0, %v1104
        %v1106 = vpop.f32.mrf.mxu0
        %1107 = vmatprep.mubr.f32.mxu0 0.0
        %1108 = vmatmul.mubr.f32.gmra.mxu0 %v892
        %v1109 = vpop.f32.mrf.mxu0
        %v1110 = vadd.f32 0.0, %v1109
        %v1111 = vpop.f32.mrf.mxu0
        %1112 = vmatprep.mubr.f32.mxu0 0.0
        %1113 = vmatmul.mubr.f32.gmra.mxu0 %v895
        %v1114 = vpop.f32.mrf.mxu0
        %v1115 = vadd.f32 0.0, %v1114
        %v1116 = vpop.f32.mrf.mxu0
        %1117 = vmatprep.mubr.f32.mxu0 0.0
        %1118 = vmatmul.mubr.f32.gmra.mxu0 %v898
        %v1119 = vpop.f32.mrf.mxu0
        %v1120 = vadd.f32 0.0, %v1119
        %v1121 = vpop.f32.mrf.mxu0
        %1122 = vmatprep.mubr.f32.mxu0 0.0
        %1123 = vmatmul.mubr.f32.gmra.mxu0 %v901
        %v1124 = vpop.f32.mrf.mxu0
        %v1125 = vadd.f32 0.0, %v1124
        %v1126 = vpop.f32.mrf.mxu0
        %1127 = vdwg.mxu0
        %v1128 = vld [vmem:[%s3] sm:$0xff]
        %v1129 = vld [vmem:[%s3 + $0x8] sm:$0xff]
        %v1130 = vld [vmem:[%s3 + $0x10] sm:$0xff]
        %v1131 = vld [vmem:[%s3 + $0x18] sm:$0xff]
        %v1132 = vld [vmem:[%s3 + $0x20] sm:$0xff]
        %v1133 = vld [vmem:[%s3 + $0x28] sm:$0xff]
        %v1134 = vld [vmem:[%s3 + $0x30] sm:$0xff]
        %v1135 = vld [vmem:[%s3 + $0x38] sm:$0xff]
        %v1136 = vld [vmem:[%s3 + $0x40] sm:$0xff]
        %v1137 = vld [vmem:[%s3 + $0x48] sm:$0xff]
        %v1138 = vld [vmem:[%s3 + $0x50] sm:$0xff]
        %v1139 = vld [vmem:[%s3 + $0x58] sm:$0xff]
        %v1140 = vld [vmem:[%s3 + $0x60] sm:$0xff]
        %v1141 = vld [vmem:[%s3 + $0x68] sm:$0xff]
        %v1142 = vld [vmem:[%s3 + $0x70] sm:$0xff]
        %v1143 = vld [vmem:[%s3 + $0x78] sm:$0xff]
        %v1144 = vld [vmem:[%s3 + $0x80] sm:$0xff]
        %v1145 = vld [vmem:[%s3 + $0x88] sm:$0xff]
        %v1146 = vld [vmem:[%s3 + $0x90] sm:$0xff]
        %v1147 = vld [vmem:[%s3 + $0x98] sm:$0xff]
        %v1148 = vld [vmem:[%s3 + $0xa0] sm:$0xff]
        %v1149 = vld [vmem:[%s3 + $0xa8] sm:$0xff]
        %v1150 = vld [vmem:[%s3 + $0xb0] sm:$0xff]
        %v1151 = vld [vmem:[%s3 + $0xb8] sm:$0xff]
        %v1152 = vld [vmem:[%s3 + $0xc0] sm:$0xff]
        %v1153 = vld [vmem:[%s3 + $0xc8] sm:$0xff]
        %v1154 = vld [vmem:[%s3 + $0xd0] sm:$0xff]
        %v1155 = vld [vmem:[%s3 + $0xd8] sm:$0xff]
        %v1156 = vld [vmem:[%s3 + $0xe0] sm:$0xff]
        %v1157 = vld [vmem:[%s3 + $0xe8] sm:$0xff]
        %v1158 = vld [vmem:[%s3 + $0xf0] sm:$0xff]
        %v1159 = vld [vmem:[%s3 + $0xf8] sm:$0xff]
        %v1160 = vmul.f32 %v970, %v1128
        %v1161 = vmul.f32 %v975, %v1129
        %v1162 = vmul.f32 %v980, %v1130
        %v1163 = vmul.f32 %v985, %v1131
        %v1164 = vmul.f32 %v990, %v1132
        %v1165 = vmul.f32 %v995, %v1133
        %v1166 = vmul.f32 %v1000, %v1134
        %v1167 = vmul.f32 %v1005, %v1135
        %v1168 = vmul.f32 %v1010, %v1136
        %v1169 = vmul.f32 %v1015, %v1137
        %v1170 = vmul.f32 %v1020, %v1138
        %v1171 = vmul.f32 %v1025, %v1139
        %v1172 = vmul.f32 %v1030, %v1140
        %v1173 = vmul.f32 %v1035, %v1141
        %v1174 = vmul.f32 %v1040, %v1142
        %v1175 = vmul.f32 %v1045, %v1143
        %v1176 = vmul.f32 %v1050, %v1144
        %v1177 = vmul.f32 %v1055, %v1145
        %v1178 = vmul.f32 %v1060, %v1146
        %v1179 = vmul.f32 %v1065, %v1147
        %v1180 = vmul.f32 %v1070, %v1148
        %v1181 = vmul.f32 %v1075, %v1149
        %v1182 = vmul.f32 %v1080, %v1150
        %v1183 = vmul.f32 %v1085, %v1151
        %v1184 = vmul.f32 %v1090, %v1152
        %v1185 = vmul.f32 %v1095, %v1153
        %v1186 = vmul.f32 %v1100, %v1154
        %v1187 = vmul.f32 %v1105, %v1155
        %v1188 = vmul.f32 %v1110, %v1156
        %v1189 = vmul.f32 %v1115, %v1157
        %v1190 = vmul.f32 %v1120, %v1158
        %v1191 = vmul.f32 %v1125, %v1159
        %v1192 = vadd.f32 %v1160, %v1162
        %v1193 = vadd.f32 %v1161, %v1163
        %v1194 = vadd.f32 %v1192, %v1164
        %v1195 = vadd.f32 %v1193, %v1165
        %v1196 = vadd.f32 %v1194, %v1166
        %v1197 = vadd.f32 %v1195, %v1167
        %v1198 = vadd.f32 %v1168, %v1170
        %v1199 = vadd.f32 %v1169, %v1171
        %v1200 = vadd.f32 %v1198, %v1172
        %v1201 = vadd.f32 %v1199, %v1173
        %v1202 = vadd.f32 %v1200, %v1174
        %v1203 = vadd.f32 %v1201, %v1175
        %v1204 = vadd.f32 %v1176, %v1178
        %v1205 = vadd.f32 %v1177, %v1179
        %v1206 = vadd.f32 %v1204, %v1180
        %v1207 = vadd.f32 %v1205, %v1181
        %v1208 = vadd.f32 %v1206, %v1182
        %v1209 = vadd.f32 %v1207, %v1183
        %v1210 = vadd.f32 %v1184, %v1186
        %v1211 = vadd.f32 %v1185, %v1187
        %v1212 = vadd.f32 %v1210, %v1188
        %v1213 = vadd.f32 %v1211, %v1189
        %v1214 = vadd.f32 %v1212, %v1190
        %v1215 = vadd.f32 %v1213, %v1191
        %1218 = vrot.lane.b32.xlu0 %v1202, 64
        %v1219 = vpop.permute.xlu0 %1218
        %1220 = vrot.lane.b32.xlu0 %v1203, 64
        %v1221 = vpop.permute.xlu0 %1220
        %1226 = vrot.lane.b32.xlu0 %v1214, 64
        %v1227 = vpop.permute.xlu0 %1226
        %1228 = vrot.lane.b32.xlu0 %v1215, 64
        %v1229 = vpop.permute.xlu0 %1228
        %vm1232 = vcmask 523264
        %v1233 = vsel %vm1232, %v1196, %v1219
        %v1234 = vsel %vm1232, %v1197, %v1221
        %v1235 = vsel %vm1232, %v1208, %v1227
        %v1236 = vsel %vm1232, %v1209, %v1229
        %v1237 = vld [vmem:[%s4] sm:$0x3]
        %v1239 = vlaneseq
        %v1240 = vshrl.u32 %v1239, 7
        %v1241 = vsub.s32 0, %v1240
        %v1242 = vrot.slane %v1237, %v1241
        %v1243 = vlaneseq
        %v1244 = vshrl.u32 %v1243, 7
        %v1245 = vsub.s32 1, %v1244
        %v1246 = vrot.slane %v1237, %v1245
        %v1249 = vadd.f32 %v1233, %v1242
        %v1250 = vadd.f32 %v1235, %v1246
        %v1251 = vadd.f32 %v1234, %v1242
        %v1252 = vadd.f32 %v1236, %v1246
        %v1253 = vxor.u32 %v1249, 2147483648
        %v1254 = vxor.u32 %v1250, 2147483648
        %v1255 = vxor.u32 %v1251, 2147483648
        %v1256 = vxor.u32 %v1252, 2147483648
        %v1257 = vmul.f32 %v1253, 1.442695
        %v1258 = vpow.pop %v1257
        %v1259 = vmul.f32 %v1254, 1.442695
        %v1260 = vpow.pop %v1259
        %v1261 = vmul.f32 %v1255, 1.442695
        %v1262 = vpow.pop %v1261
        %v1263 = vmul.f32 %v1256, 1.442695
        %v1264 = vpow.pop %v1263
        %v1265 = vadd.f32 %v1258, 1.0
        %v1266 = vadd.f32 %v1260, 1.0
        %v1267 = vadd.f32 %v1262, 1.0
        %v1268 = vadd.f32 %v1264, 1.0
        %v1269 = vrcp.pop %v1265
        %v1270 = vmul.f32 1.0, %v1269
        %v1271 = vrcp.pop %v1266
        %v1272 = vmul.f32 1.0, %v1271
        %v1273 = vrcp.pop %v1267
        %v1274 = vmul.f32 1.0, %v1273
        %v1275 = vrcp.pop %v1268
        %v1276 = vmul.f32 1.0, %v1275
        %v1277 = vmul.f32 %v1249, %v1270
        %v1278 = vmul.f32 %v1250, %v1272
        %v1279 = vmul.f32 %v1251, %v1274
        %v1280 = vmul.f32 %v1252, %v1276
        %v1281 = vld [vmem:[%s5] sm:$0xff]
        %v1282 = vld [vmem:[%s5 + $0x8] sm:$0xff]
        %v1283 = vld [vmem:[%s5 + $0x10] sm:$0xff]
        %v1284 = vld [vmem:[%s5 + $0x18] sm:$0xff]
        %v1285 = vld [vmem:[%s5 + $0x20] sm:$0xff]
        %v1286 = vld [vmem:[%s5 + $0x28] sm:$0xff]
        %v1287 = vld [vmem:[%s5 + $0x30] sm:$0xff]
        %v1288 = vld [vmem:[%s5 + $0x38] sm:$0xff]
        %v1289 = vld [vmem:[%s5 + $0x40] sm:$0xff]
        %v1290 = vld [vmem:[%s5 + $0x48] sm:$0xff]
        %v1291 = vld [vmem:[%s5 + $0x50] sm:$0xff]
        %v1292 = vld [vmem:[%s5 + $0x58] sm:$0xff]
        %v1293 = vld [vmem:[%s5 + $0x60] sm:$0xff]
        %v1294 = vld [vmem:[%s5 + $0x68] sm:$0xff]
        %v1295 = vld [vmem:[%s5 + $0x70] sm:$0xff]
        %v1296 = vld [vmem:[%s5 + $0x78] sm:$0xff]
        %v1297 = vld [vmem:[%s5 + $0x80] sm:$0xff]
        %v1298 = vld [vmem:[%s5 + $0x88] sm:$0xff]
        %v1299 = vld [vmem:[%s5 + $0x90] sm:$0xff]
        %v1300 = vld [vmem:[%s5 + $0x98] sm:$0xff]
        %v1301 = vld [vmem:[%s5 + $0xa0] sm:$0xff]
        %v1302 = vld [vmem:[%s5 + $0xa8] sm:$0xff]
        %v1303 = vld [vmem:[%s5 + $0xb0] sm:$0xff]
        %v1304 = vld [vmem:[%s5 + $0xb8] sm:$0xff]
        %v1305 = vld [vmem:[%s5 + $0xc0] sm:$0xff]
        %v1306 = vld [vmem:[%s5 + $0xc8] sm:$0xff]
        %v1307 = vld [vmem:[%s5 + $0xd0] sm:$0xff]
        %v1308 = vld [vmem:[%s5 + $0xd8] sm:$0xff]
        %v1309 = vld [vmem:[%s5 + $0xe0] sm:$0xff]
        %v1310 = vld [vmem:[%s5 + $0xe8] sm:$0xff]
        %v1311 = vld [vmem:[%s5 + $0xf0] sm:$0xff]
        %v1312 = vld [vmem:[%s5 + $0xf8] sm:$0xff]
        %v1313 = vld [vmem:[%s5 + $0x100] sm:$0xff]
        %v1314 = vld [vmem:[%s5 + $0x108] sm:$0xff]
        %v1315 = vld [vmem:[%s5 + $0x110] sm:$0xff]
        %v1316 = vld [vmem:[%s5 + $0x118] sm:$0xff]
        %v1317 = vld [vmem:[%s5 + $0x120] sm:$0xff]
        %v1318 = vld [vmem:[%s5 + $0x128] sm:$0xff]
        %v1319 = vld [vmem:[%s5 + $0x130] sm:$0xff]
        %v1320 = vld [vmem:[%s5 + $0x138] sm:$0xff]
        %v1321 = vld [vmem:[%s5 + $0x140] sm:$0xff]
        %v1322 = vld [vmem:[%s5 + $0x148] sm:$0xff]
        %v1323 = vld [vmem:[%s5 + $0x150] sm:$0xff]
        %v1324 = vld [vmem:[%s5 + $0x158] sm:$0xff]
        %v1325 = vld [vmem:[%s5 + $0x160] sm:$0xff]
        %v1326 = vld [vmem:[%s5 + $0x168] sm:$0xff]
        %v1327 = vld [vmem:[%s5 + $0x170] sm:$0xff]
        %v1328 = vld [vmem:[%s5 + $0x178] sm:$0xff]
        %v1329 = vld [vmem:[%s5 + $0x180] sm:$0xff]
        %v1330 = vld [vmem:[%s5 + $0x188] sm:$0xff]
        %v1331 = vld [vmem:[%s5 + $0x190] sm:$0xff]
        %v1332 = vld [vmem:[%s5 + $0x198] sm:$0xff]
        %v1333 = vld [vmem:[%s5 + $0x1a0] sm:$0xff]
        %v1334 = vld [vmem:[%s5 + $0x1a8] sm:$0xff]
        %v1335 = vld [vmem:[%s5 + $0x1b0] sm:$0xff]
        %v1336 = vld [vmem:[%s5 + $0x1b8] sm:$0xff]
        %v1337 = vld [vmem:[%s5 + $0x1c0] sm:$0xff]
        %v1338 = vld [vmem:[%s5 + $0x1c8] sm:$0xff]
        %v1339 = vld [vmem:[%s5 + $0x1d0] sm:$0xff]
        %v1340 = vld [vmem:[%s5 + $0x1d8] sm:$0xff]
        %v1341 = vld [vmem:[%s5 + $0x1e0] sm:$0xff]
        %v1342 = vld [vmem:[%s5 + $0x1e8] sm:$0xff]
        %v1343 = vld [vmem:[%s5 + $0x1f0] sm:$0xff]
        %v1344 = vld [vmem:[%s5 + $0x1f8] sm:$0xff]
        %v1345 = vld [vmem:[%s7] sm:$0x3]
        %v1347 = vlaneseq
        %v1348 = vshrl.u32 %v1347, 7
        %v1349 = vsub.s32 0, %v1348
        %v1350 = vrot.slane %v1345, %v1349
        %v1351 = vlaneseq
        %v1352 = vshrl.u32 %v1351, 7
        %v1353 = vsub.s32 1, %v1352
        %v1354 = vrot.slane %v1345, %v1353
        %1357 = vmatprep.subr.mxu0 %v1312
        %1358 = vmatpush1.msra.mxu0 %v1311
        %1359 = vmatprep.subr.mxu0 %v1310
        %1360 = vmatpush1.msra.mxu0 %v1309
        %1361 = vmatprep.subr.mxu0 %v1308
        %1362 = vmatpush1.msra.mxu0 %v1307
        %1363 = vmatprep.subr.mxu0 %v1306
        %1364 = vmatpush1.msra.mxu0 %v1305
        %1365 = vmatprep.subr.mxu0 %v1304
        %1366 = vmatpush1.msra.mxu0 %v1303
        %1367 = vmatprep.subr.mxu0 %v1302
        %1368 = vmatpush1.msra.mxu0 %v1301
        %1369 = vmatprep.subr.mxu0 %v1300
        %1370 = vmatpush1.msra.mxu0 %v1299
        %1371 = vmatprep.subr.mxu0 %v1298
        %1372 = vmatpush1.msra.mxu0 %v1297
        %1373 = vmatprep.subr.mxu0 %v1296
        %1374 = vmatpush1.msra.mxu0 %v1295
        %1375 = vmatprep.subr.mxu0 %v1294
        %1376 = vmatpush1.msra.mxu0 %v1293
        %1377 = vmatprep.subr.mxu0 %v1292
        %1378 = vmatpush1.msra.mxu0 %v1291
        %1379 = vmatprep.subr.mxu0 %v1290
        %1380 = vmatpush1.msra.mxu0 %v1289
        %1381 = vmatprep.subr.mxu0 %v1288
        %1382 = vmatpush1.msra.mxu0 %v1287
        %1383 = vmatprep.subr.mxu0 %v1286
        %1384 = vmatpush1.msra.mxu0 %v1285
        %1385 = vmatprep.subr.mxu0 %v1284
        %1386 = vmatpush1.msra.mxu0 %v1283
        %1387 = vmatprep.subr.mxu0 %v1282
        %1388 = vmatpush1.msra.mxu0 %v1281
        %1389 = vmatprep.subr.mxu0 %v1344
        %1390 = vmatpush2.msra.mxu0 %v1343
        %1391 = vmatprep.subr.mxu0 %v1342
        %1392 = vmatpush2.msra.mxu0 %v1341
        %1393 = vmatprep.subr.mxu0 %v1340
        %1394 = vmatpush2.msra.mxu0 %v1339
        %1395 = vmatprep.subr.mxu0 %v1338
        %1396 = vmatpush2.msra.mxu0 %v1337
        %1397 = vmatprep.subr.mxu0 %v1336
        %1398 = vmatpush2.msra.mxu0 %v1335
        %1399 = vmatprep.subr.mxu0 %v1334
        %1400 = vmatpush2.msra.mxu0 %v1333
        %1401 = vmatprep.subr.mxu0 %v1332
        %1402 = vmatpush2.msra.mxu0 %v1331
        %1403 = vmatprep.subr.mxu0 %v1330
        %1404 = vmatpush2.msra.mxu0 %v1329
        %1405 = vmatprep.subr.mxu0 %v1328
        %1406 = vmatpush2.msra.mxu0 %v1327
        %1407 = vmatprep.subr.mxu0 %v1326
        %1408 = vmatpush2.msra.mxu0 %v1325
        %1409 = vmatprep.subr.mxu0 %v1324
        %1410 = vmatpush2.msra.mxu0 %v1323
        %1411 = vmatprep.subr.mxu0 %v1322
        %1412 = vmatpush2.msra.mxu0 %v1321
        %1413 = vmatprep.subr.mxu0 %v1320
        %1414 = vmatpush2.msra.mxu0 %v1319
        %1415 = vmatprep.subr.mxu0 %v1318
        %1416 = vmatpush2.msra.mxu0 %v1317
        %1417 = vmatprep.subr.mxu0 %v1316
        %1418 = vmatpush2.msra.mxu0 %v1315
        %1419 = vmatprep.subr.mxu0 %v1314
        %1420 = vmatpush2.msra.mxu0 %v1313
        %1421 = vmatprep.mubr.f32.mxu0 %v1278
        %1422 = vmatmul.mubr.f32.gmra.mxu0 %v1277
        %v1423 = vpop.f32.mrf.mxu0
        %v1424 = vadd.f32 %v1350, %v1423
        %v1425 = vpop.f32.mrf.mxu0
        %v1426 = vadd.f32 %v1354, %v1425
        %1427 = vmatprep.mubr.f32.mxu0 %v1280
        %1428 = vmatmul.mubr.f32.gmra.mxu0 %v1279
        %v1429 = vpop.f32.mrf.mxu0
        %v1430 = vadd.f32 %v1350, %v1429
        %v1431 = vpop.f32.mrf.mxu0
        %v1432 = vadd.f32 %v1354, %v1431
        %1433 = vdwg.mxu0
        %v1434 = vmax.f32 %v1424, 0.0
        %v1435 = vmax.f32 %v1426, 0.0
        %v1436 = vmax.f32 %v1430, 0.0
        %v1437 = vmax.f32 %v1432, 0.0
        %vm1438 = vcmp.ne.f32.partialorder %v1424, %v1424
        %vm1439 = vcmp.ne.f32.partialorder %v1426, %v1426
        %vm1440 = vcmp.ne.f32.partialorder %v1430, %v1430
        %vm1441 = vcmp.ne.f32.partialorder %v1432, %v1432
        %v1442 = vadd.f32 %v1424, 0.0
        %v1443 = vadd.f32 %v1426, 0.0
        %v1444 = vadd.f32 %v1430, 0.0
        %v1445 = vadd.f32 %v1432, 0.0
        %v1446 = vand.u32 2147483647, %v1424
        %v1447 = vand.u32 2147483647, %v1426
        %v1448 = vand.u32 2147483647, %v1430
        %v1449 = vand.u32 2147483647, %v1432
        %v1450 = vsub.f32 0.0, %v1446
        %v1451 = vsub.f32 0.0, %v1447
        %v1452 = vsub.f32 0.0, %v1448
        %v1453 = vsub.f32 0.0, %v1449
        %v1454 = vmul.f32 %v1450, 1.442695
        %v1455 = vpow.pop %v1454
        %v1456 = vmul.f32 %v1451, 1.442695
        %v1457 = vpow.pop %v1456
        %v1458 = vmul.f32 %v1452, 1.442695
        %v1459 = vpow.pop %v1458
        %v1460 = vmul.f32 %v1453, 1.442695
        %v1461 = vpow.pop %v1460
        %v1462 = vadd.f32 %v1455, 1.0
        %v1463 = vlog2.pop %v1462
        %v1464 = vmul.f32 %v1463, 0.6931472
        %v1465 = vmul.f32 -0.5, %v1455
        %v1466 = vadd.f32 %v1465, 1.0
        %v1467 = vmul.f32 %v1466, %v1455
        %v1468 = vand.u32 2147483647, %v1455
        %vm1469 = vcmp.lt.f32.partialorder %v1468, 0.0004427343
        %v1470 = vsel %vm1469, %v1467, %v1464
        %v1471 = vadd.f32 %v1457, 1.0
        %v1472 = vlog2.pop %v1471
        %v1473 = vmul.f32 %v1472, 0.6931472
        %v1474 = vmul.f32 -0.5, %v1457
        %v1475 = vadd.f32 %v1474, 1.0
        %v1476 = vmul.f32 %v1475, %v1457
        %v1477 = vand.u32 2147483647, %v1457
        %vm1478 = vcmp.lt.f32.partialorder %v1477, 0.0004427343
        %v1479 = vsel %vm1478, %v1476, %v1473
        %v1480 = vadd.f32 %v1459, 1.0
        %v1481 = vlog2.pop %v1480
        %v1482 = vmul.f32 %v1481, 0.6931472
        %v1483 = vmul.f32 -0.5, %v1459
        %v1484 = vadd.f32 %v1483, 1.0
        %v1485 = vmul.f32 %v1484, %v1459
        %v1486 = vand.u32 2147483647, %v1459
        %vm1487 = vcmp.lt.f32.partialorder %v1486, 0.0004427343
        %v1488 = vsel %vm1487, %v1485, %v1482
        %v1489 = vadd.f32 %v1461, 1.0
        %v1490 = vlog2.pop %v1489
        %v1491 = vmul.f32 %v1490, 0.6931472
        %v1492 = vmul.f32 -0.5, %v1461
        %v1493 = vadd.f32 %v1492, 1.0
        %v1494 = vmul.f32 %v1493, %v1461
        %v1495 = vand.u32 2147483647, %v1461
        %vm1496 = vcmp.lt.f32.partialorder %v1495, 0.0004427343
        %v1497 = vsel %vm1496, %v1494, %v1491
        %v1498 = vadd.f32 %v1434, %v1470
        %v1499 = vadd.f32 %v1435, %v1479
        %v1500 = vadd.f32 %v1436, %v1488
        %v1501 = vadd.f32 %v1437, %v1497
        %v1502 = vsel %vm1438, %v1442, %v1498
        %v1503 = vsel %vm1439, %v1443, %v1499
        %v1504 = vsel %vm1440, %v1444, %v1500
        %v1505 = vsel %vm1441, %v1445, %v1501
        %v1506 = vld [vmem:[%s6] sm:$0xff]
        %v1507 = vld [vmem:[%s6 + $0x8] sm:$0xff]
        %v1508 = vld [vmem:[%s6 + $0x10] sm:$0xff]
        %v1509 = vld [vmem:[%s6 + $0x18] sm:$0xff]
        %v1510 = vld [vmem:[%s6 + $0x20] sm:$0xff]
        %v1511 = vld [vmem:[%s6 + $0x28] sm:$0xff]
        %v1512 = vld [vmem:[%s6 + $0x30] sm:$0xff]
        %v1513 = vld [vmem:[%s6 + $0x38] sm:$0xff]
        %v1514 = vld [vmem:[%s6 + $0x40] sm:$0xff]
        %v1515 = vld [vmem:[%s6 + $0x48] sm:$0xff]
        %v1516 = vld [vmem:[%s6 + $0x50] sm:$0xff]
        %v1517 = vld [vmem:[%s6 + $0x58] sm:$0xff]
        %v1518 = vld [vmem:[%s6 + $0x60] sm:$0xff]
        %v1519 = vld [vmem:[%s6 + $0x68] sm:$0xff]
        %v1520 = vld [vmem:[%s6 + $0x70] sm:$0xff]
        %v1521 = vld [vmem:[%s6 + $0x78] sm:$0xff]
        %v1522 = vld [vmem:[%s6 + $0x80] sm:$0xff]
        %v1523 = vld [vmem:[%s6 + $0x88] sm:$0xff]
        %v1524 = vld [vmem:[%s6 + $0x90] sm:$0xff]
        %v1525 = vld [vmem:[%s6 + $0x98] sm:$0xff]
        %v1526 = vld [vmem:[%s6 + $0xa0] sm:$0xff]
        %v1527 = vld [vmem:[%s6 + $0xa8] sm:$0xff]
        %v1528 = vld [vmem:[%s6 + $0xb0] sm:$0xff]
        %v1529 = vld [vmem:[%s6 + $0xb8] sm:$0xff]
        %v1530 = vld [vmem:[%s6 + $0xc0] sm:$0xff]
        %v1531 = vld [vmem:[%s6 + $0xc8] sm:$0xff]
        %v1532 = vld [vmem:[%s6 + $0xd0] sm:$0xff]
        %v1533 = vld [vmem:[%s6 + $0xd8] sm:$0xff]
        %v1534 = vld [vmem:[%s6 + $0xe0] sm:$0xff]
        %v1535 = vld [vmem:[%s6 + $0xe8] sm:$0xff]
        %v1536 = vld [vmem:[%s6 + $0xf0] sm:$0xff]
        %v1537 = vld [vmem:[%s6 + $0xf8] sm:$0xff]
        %1538 = vmatprep.subr.mxu0 0.0
        %1539 = vmatpush1.msra.mxu0 %v1521
        %1540 = vmatprep.subr.mxu0 0.0
        %1541 = vmatpush1.msra.mxu0 %v1520
        %1542 = vmatprep.subr.mxu0 0.0
        %1543 = vmatpush1.msra.mxu0 %v1519
        %1544 = vmatprep.subr.mxu0 0.0
        %1545 = vmatpush1.msra.mxu0 %v1518
        %1546 = vmatprep.subr.mxu0 0.0
        %1547 = vmatpush1.msra.mxu0 %v1517
        %1548 = vmatprep.subr.mxu0 0.0
        %1549 = vmatpush1.msra.mxu0 %v1516
        %1550 = vmatprep.subr.mxu0 0.0
        %1551 = vmatpush1.msra.mxu0 %v1515
        %1552 = vmatprep.subr.mxu0 0.0
        %1553 = vmatpush1.msra.mxu0 %v1514
        %1554 = vmatprep.subr.mxu0 0.0
        %1555 = vmatpush1.msra.mxu0 %v1513
        %1556 = vmatprep.subr.mxu0 0.0
        %1557 = vmatpush1.msra.mxu0 %v1512
        %1558 = vmatprep.subr.mxu0 0.0
        %1559 = vmatpush1.msra.mxu0 %v1511
        %1560 = vmatprep.subr.mxu0 0.0
        %1561 = vmatpush1.msra.mxu0 %v1510
        %1562 = vmatprep.subr.mxu0 0.0
        %1563 = vmatpush1.msra.mxu0 %v1509
        %1564 = vmatprep.subr.mxu0 0.0
        %1565 = vmatpush1.msra.mxu0 %v1508
        %1566 = vmatprep.subr.mxu0 0.0
        %1567 = vmatpush1.msra.mxu0 %v1507
        %1568 = vmatprep.subr.mxu0 0.0
        %1569 = vmatpush1.msra.mxu0 %v1506
        %1570 = vmatprep.subr.mxu0 0.0
        %1571 = vmatpush2.msra.mxu0 %v1537
        %1572 = vmatprep.subr.mxu0 0.0
        %1573 = vmatpush2.msra.mxu0 %v1536
        %1574 = vmatprep.subr.mxu0 0.0
        %1575 = vmatpush2.msra.mxu0 %v1535
        %1576 = vmatprep.subr.mxu0 0.0
        %1577 = vmatpush2.msra.mxu0 %v1534
        %1578 = vmatprep.subr.mxu0 0.0
        %1579 = vmatpush2.msra.mxu0 %v1533
        %1580 = vmatprep.subr.mxu0 0.0
        %1581 = vmatpush2.msra.mxu0 %v1532
        %1582 = vmatprep.subr.mxu0 0.0
        %1583 = vmatpush2.msra.mxu0 %v1531
        %1584 = vmatprep.subr.mxu0 0.0
        %1585 = vmatpush2.msra.mxu0 %v1530
        %1586 = vmatprep.subr.mxu0 0.0
        %1587 = vmatpush2.msra.mxu0 %v1529
        %1588 = vmatprep.subr.mxu0 0.0
        %1589 = vmatpush2.msra.mxu0 %v1528
        %1590 = vmatprep.subr.mxu0 0.0
        %1591 = vmatpush2.msra.mxu0 %v1527
        %1592 = vmatprep.subr.mxu0 0.0
        %1593 = vmatpush2.msra.mxu0 %v1526
        %1594 = vmatprep.subr.mxu0 0.0
        %1595 = vmatpush2.msra.mxu0 %v1525
        %1596 = vmatprep.subr.mxu0 0.0
        %1597 = vmatpush2.msra.mxu0 %v1524
        %1598 = vmatprep.subr.mxu0 0.0
        %1599 = vmatpush2.msra.mxu0 %v1523
        %1600 = vmatprep.subr.mxu0 0.0
        %1601 = vmatpush2.msra.mxu0 %v1522
        %1602 = vmatprep.mubr.f32.mxu0 %v1278
        %1603 = vmatmul.mubr.f32.gmra.mxu0 %v1277
        %v1604 = vpop.f32.mrf.mxu0
        %v1605 = vadd.f32 0.0, %v1604
        %v1606 = vpop.f32.mrf.mxu0
        %1607 = vmatprep.mubr.f32.mxu0 %v1280
        %1608 = vmatmul.mubr.f32.gmra.mxu0 %v1279
        %v1609 = vpop.f32.mrf.mxu0
        %v1610 = vadd.f32 0.0, %v1609
        %v1611 = vpop.f32.mrf.mxu0
        %1612 = vdwg.mxu0
        %v1613 = vmul.f32 %v1502, %v1277
        %v1614 = vmul.f32 %v1503, %v1278
        %v1615 = vmul.f32 %v1504, %v1279
        %v1616 = vmul.f32 %v1505, %v1280
        %v1621 = vcombine.low %v1502, %v1503
        %v1622 = vcombine.high %v1502, %v1503
        %v1624 = vunpack.c.l.s4 1966171168
        %v1625 = vunpack.c.0.s8 %v1624
        %v1626 = vlaneseq
        %v1627 = vshrl.u32 %v1626, 7
        %v1628 = vsub.s32 %v1625, %v1627
        %v1629 = vrot.slane %v1621, %v1628
        %v1631 = vunpack.c.l.s4 1966171168
        %v1632 = vunpack.c.0.s8 %v1631
        %v1633 = vlaneseq
        %v1634 = vshrl.u32 %v1633, 7
        %v1635 = vsub.s32 %v1632, %v1634
        %v1636 = vrot.slane %v1622, %v1635
        %v1637 = vcombine.high %v1629, %v1629
        %v1638 = vcombine.high %v1636, %v1636
        %v1640 = vunpack.c.l.s4 1966171168
        %v1641 = vunpack.c.0.s8 %v1640
        %v1642 = vlaneseq
        %v1643 = vshrl.u32 %v1642, 7
        %v1644 = vsub.s32 %v1641, %v1643
        %v1645 = vrot.slane %v1629, %v1644
        %v1647 = vunpack.c.l.s4 1966171168
        %v1648 = vunpack.c.0.s8 %v1647
        %v1649 = vlaneseq
        %v1650 = vshrl.u32 %v1649, 7
        %v1651 = vsub.s32 %v1648, %v1650
        %v1652 = vrot.slane %v1636, %v1651
        %v1654 = vunpack.c.l.s4 1966171168
        %v1655 = vunpack.c.0.s8 %v1654
        %v1656 = vlaneseq
        %v1657 = vshrl.u32 %v1656, 7
        %v1658 = vsub.s32 %v1655, %v1657
        %v1659 = vrot.slane %v1637, %v1658
        %v1661 = vunpack.c.l.s4 1966171168
        %v1662 = vunpack.c.0.s8 %v1661
        %v1663 = vlaneseq
        %v1664 = vshrl.u32 %v1663, 7
        %v1665 = vsub.s32 %v1662, %v1664
        %v1666 = vrot.slane %v1638, %v1665
        %v1667 = vcombine.high %v1645, %v1645
        %v1668 = vcombine.high %v1652, %v1652
        %v1669 = vcombine.high %v1659, %v1659
        %v1670 = vcombine.high %v1666, %v1666
        %v1671 = vcombine.low %v1504, %v1505
        %v1672 = vcombine.high %v1504, %v1505
        %v1674 = vunpack.c.l.s4 1966171168
        %v1675 = vunpack.c.0.s8 %v1674
        %v1676 = vlaneseq
        %v1677 = vshrl.u32 %v1676, 7
        %v1678 = vsub.s32 %v1675, %v1677
        %v1679 = vrot.slane %v1671, %v1678
        %v1681 = vunpack.c.l.s4 1966171168
        %v1682 = vunpack.c.0.s8 %v1681
        %v1683 = vlaneseq
        %v1684 = vshrl.u32 %v1683, 7
        %v1685 = vsub.s32 %v1682, %v1684
        %v1686 = vrot.slane %v1672, %v1685
        %v1687 = vcombine.high %v1679, %v1679
        %v1688 = vcombine.high %v1686, %v1686
        %v1690 = vunpack.c.l.s4 1966171168
        %v1691 = vunpack.c.0.s8 %v1690
        %v1692 = vlaneseq
        %v1693 = vshrl.u32 %v1692, 7
        %v1694 = vsub.s32 %v1691, %v1693
        %v1695 = vrot.slane %v1679, %v1694
        %v1697 = vunpack.c.l.s4 1966171168
        %v1698 = vunpack.c.0.s8 %v1697
        %v1699 = vlaneseq
        %v1700 = vshrl.u32 %v1699, 7
        %v1701 = vsub.s32 %v1698, %v1700
        %v1702 = vrot.slane %v1686, %v1701
        %v1704 = vunpack.c.l.s4 1966171168
        %v1705 = vunpack.c.0.s8 %v1704
        %v1706 = vlaneseq
        %v1707 = vshrl.u32 %v1706, 7
        %v1708 = vsub.s32 %v1705, %v1707
        %v1709 = vrot.slane %v1687, %v1708
        %v1711 = vunpack.c.l.s4 1966171168
        %v1712 = vunpack.c.0.s8 %v1711
        %v1713 = vlaneseq
        %v1714 = vshrl.u32 %v1713, 7
        %v1715 = vsub.s32 %v1712, %v1714
        %v1716 = vrot.slane %v1688, %v1715
        %v1717 = vcombine.high %v1695, %v1695
        %v1718 = vcombine.high %v1702, %v1702
        %v1719 = vcombine.high %v1709, %v1709
        %v1720 = vcombine.high %v1716, %v1716
        %v1721 = vld [vmem:[#allocation10] sm:$0xff]
        %v1722 = vld [vmem:[#allocation10 + $0x8] sm:$0xff]
        %v1723 = vld [vmem:[#allocation10 + $0x10] sm:$0xff]
        %v1724 = vld [vmem:[#allocation10 + $0x18] sm:$0xff]
        %v1725 = vlaneseq
        %v1726 = vshrl.u32 %v1725, 7
        %v1727 = vsub.s32 0, %v1726
        %v1728 = vrot.slane %v1645, %v1727
        %v1729 = vlaneseq
        %v1730 = vshrl.u32 %v1729, 7
        %v1731 = vsub.s32 1, %v1730
        %v1732 = vrot.slane %v1645, %v1731
        %v1733 = vlaneseq
        %v1734 = vshrl.u32 %v1733, 7
        %v1735 = vsub.s32 0, %v1734
        %v1736 = vrot.slane %v1659, %v1735
        %v1737 = vlaneseq
        %v1738 = vshrl.u32 %v1737, 7
        %v1739 = vsub.s32 1, %v1738
        %v1740 = vrot.slane %v1659, %v1739
        %v1741 = vlaneseq
        %v1742 = vshrl.u32 %v1741, 7
        %v1743 = vsub.s32 0, %v1742
        %v1744 = vrot.slane %v1667, %v1743
        %v1745 = vlaneseq
        %v1746 = vshrl.u32 %v1745, 7
        %v1747 = vsub.s32 1, %v1746
        %v1748 = vrot.slane %v1667, %v1747
        %v1749 = vlaneseq
        %v1750 = vshrl.u32 %v1749, 7
        %v1751 = vsub.s32 0, %v1750
        %v1752 = vrot.slane %v1669, %v1751
        %v1753 = vlaneseq
        %v1754 = vshrl.u32 %v1753, 7
        %v1755 = vsub.s32 1, %v1754
        %v1756 = vrot.slane %v1669, %v1755
        %v1757 = vlaneseq
        %v1758 = vshrl.u32 %v1757, 7
        %v1759 = vsub.s32 0, %v1758
        %v1760 = vrot.slane %v1652, %v1759
        %v1761 = vlaneseq
        %v1762 = vshrl.u32 %v1761, 7
        %v1763 = vsub.s32 1, %v1762
        %v1764 = vrot.slane %v1652, %v1763
        %v1765 = vlaneseq
        %v1766 = vshrl.u32 %v1765, 7
        %v1767 = vsub.s32 0, %v1766
        %v1768 = vrot.slane %v1666, %v1767
        %v1769 = vlaneseq
        %v1770 = vshrl.u32 %v1769, 7
        %v1771 = vsub.s32 1, %v1770
        %v1772 = vrot.slane %v1666, %v1771
        %v1773 = vlaneseq
        %v1774 = vshrl.u32 %v1773, 7
        %v1775 = vsub.s32 0, %v1774
        %v1776 = vrot.slane %v1668, %v1775
        %v1777 = vlaneseq
        %v1778 = vshrl.u32 %v1777, 7
        %v1779 = vsub.s32 1, %v1778
        %v1780 = vrot.slane %v1668, %v1779
        %v1781 = vlaneseq
        %v1782 = vshrl.u32 %v1781, 7
        %v1783 = vsub.s32 0, %v1782
        %v1784 = vrot.slane %v1670, %v1783
        %v1785 = vlaneseq
        %v1786 = vshrl.u32 %v1785, 7
        %v1787 = vsub.s32 1, %v1786
        %v1788 = vrot.slane %v1670, %v1787
        %v1789 = vlaneseq
        %v1790 = vshrl.u32 %v1789, 7
        %v1791 = vsub.s32 0, %v1790
        %v1792 = vrot.slane %v1695, %v1791
        %v1793 = vlaneseq
        %v1794 = vshrl.u32 %v1793, 7
        %v1795 = vsub.s32 1, %v1794
        %v1796 = vrot.slane %v1695, %v1795
        %v1797 = vlaneseq
        %v1798 = vshrl.u32 %v1797, 7
        %v1799 = vsub.s32 0, %v1798
        %v1800 = vrot.slane %v1709, %v1799
        %v1801 = vlaneseq
        %v1802 = vshrl.u32 %v1801, 7
        %v1803 = vsub.s32 1, %v1802
        %v1804 = vrot.slane %v1709, %v1803
        %v1805 = vlaneseq
        %v1806 = vshrl.u32 %v1805, 7
        %v1807 = vsub.s32 0, %v1806
        %v1808 = vrot.slane %v1717, %v1807
        %v1809 = vlaneseq
        %v1810 = vshrl.u32 %v1809, 7
        %v1811 = vsub.s32 1, %v1810
        %v1812 = vrot.slane %v1717, %v1811
        %v1813 = vlaneseq
        %v1814 = vshrl.u32 %v1813, 7
        %v1815 = vsub.s32 0, %v1814
        %v1816 = vrot.slane %v1719, %v1815
        %v1817 = vlaneseq
        %v1818 = vshrl.u32 %v1817, 7
        %v1819 = vsub.s32 1, %v1818
        %v1820 = vrot.slane %v1719, %v1819
        %v1821 = vlaneseq
        %v1822 = vshrl.u32 %v1821, 7
        %v1823 = vsub.s32 0, %v1822
        %v1824 = vrot.slane %v1702, %v1823
        %v1825 = vlaneseq
        %v1826 = vshrl.u32 %v1825, 7
        %v1827 = vsub.s32 1, %v1826
        %v1828 = vrot.slane %v1702, %v1827
        %v1829 = vlaneseq
        %v1830 = vshrl.u32 %v1829, 7
        %v1831 = vsub.s32 0, %v1830
        %v1832 = vrot.slane %v1716, %v1831
        %v1833 = vlaneseq
        %v1834 = vshrl.u32 %v1833, 7
        %v1835 = vsub.s32 1, %v1834
        %v1836 = vrot.slane %v1716, %v1835
        %v1837 = vlaneseq
        %v1838 = vshrl.u32 %v1837, 7
        %v1839 = vsub.s32 0, %v1838
        %v1840 = vrot.slane %v1718, %v1839
        %v1841 = vlaneseq
        %v1842 = vshrl.u32 %v1841, 7
        %v1843 = vsub.s32 1, %v1842
        %v1844 = vrot.slane %v1718, %v1843
        %v1845 = vlaneseq
        %v1846 = vshrl.u32 %v1845, 7
        %v1847 = vsub.s32 0, %v1846
        %v1848 = vrot.slane %v1720, %v1847
        %v1849 = vlaneseq
        %v1850 = vshrl.u32 %v1849, 7
        %v1851 = vsub.s32 1, %v1850
        %v1852 = vrot.slane %v1720, %v1851
        %v1885 = vmul.f32 %v1728, %v1721
        %v1886 = vmul.f32 %v1732, %v1722
        %v1887 = vmul.f32 %v1728, %v1723
        %v1888 = vmul.f32 %v1732, %v1724
        %v1889 = vmul.f32 %v1736, %v1721
        %v1890 = vmul.f32 %v1740, %v1722
        %v1891 = vmul.f32 %v1736, %v1723
        %v1892 = vmul.f32 %v1740, %v1724
        %v1893 = vmul.f32 %v1744, %v1721
        %v1894 = vmul.f32 %v1748, %v1722
        %v1895 = vmul.f32 %v1744, %v1723
        %v1896 = vmul.f32 %v1748, %v1724
        %v1897 = vmul.f32 %v1752, %v1721
        %v1898 = vmul.f32 %v1756, %v1722
        %v1899 = vmul.f32 %v1752, %v1723
        %v1900 = vmul.f32 %v1756, %v1724
        %v1901 = vmul.f32 %v1760, %v1721
        %v1902 = vmul.f32 %v1764, %v1722
        %v1903 = vmul.f32 %v1760, %v1723
        %v1904 = vmul.f32 %v1764, %v1724
        %v1905 = vmul.f32 %v1768, %v1721
        %v1906 = vmul.f32 %v1772, %v1722
        %v1907 = vmul.f32 %v1768, %v1723
        %v1908 = vmul.f32 %v1772, %v1724
        %v1909 = vmul.f32 %v1776, %v1721
        %v1910 = vmul.f32 %v1780, %v1722
        %v1911 = vmul.f32 %v1776, %v1723
        %v1912 = vmul.f32 %v1780, %v1724
        %v1913 = vmul.f32 %v1784, %v1721
        %v1914 = vmul.f32 %v1788, %v1722
        %v1915 = vmul.f32 %v1784, %v1723
        %v1916 = vmul.f32 %v1788, %v1724
        %v1917 = vmul.f32 %v1792, %v1721
        %v1918 = vmul.f32 %v1796, %v1722
        %v1919 = vmul.f32 %v1792, %v1723
        %v1920 = vmul.f32 %v1796, %v1724
        %v1921 = vmul.f32 %v1800, %v1721
        %v1922 = vmul.f32 %v1804, %v1722
        %v1923 = vmul.f32 %v1800, %v1723
        %v1924 = vmul.f32 %v1804, %v1724
        %v1925 = vmul.f32 %v1808, %v1721
        %v1926 = vmul.f32 %v1812, %v1722
        %v1927 = vmul.f32 %v1808, %v1723
        %v1928 = vmul.f32 %v1812, %v1724
        %v1929 = vmul.f32 %v1816, %v1721
        %v1930 = vmul.f32 %v1820, %v1722
        %v1931 = vmul.f32 %v1816, %v1723
        %v1932 = vmul.f32 %v1820, %v1724
        %v1933 = vmul.f32 %v1824, %v1721
        %v1934 = vmul.f32 %v1828, %v1722
        %v1935 = vmul.f32 %v1824, %v1723
        %v1936 = vmul.f32 %v1828, %v1724
        %v1937 = vmul.f32 %v1832, %v1721
        %v1938 = vmul.f32 %v1836, %v1722
        %v1939 = vmul.f32 %v1832, %v1723
        %v1940 = vmul.f32 %v1836, %v1724
        %v1941 = vmul.f32 %v1840, %v1721
        %v1942 = vmul.f32 %v1844, %v1722
        %v1943 = vmul.f32 %v1840, %v1723
        %v1944 = vmul.f32 %v1844, %v1724
        %v1945 = vmul.f32 %v1848, %v1721
        %v1946 = vmul.f32 %v1852, %v1722
        %v1947 = vmul.f32 %v1848, %v1723
        %v1948 = vmul.f32 %v1852, %v1724
        %v1949 = vmul.f32 %v1885, 1.442695
        %v1950 = vpow.pop %v1949
        %v1951 = vmul.f32 %v1886, 1.442695
        %v1952 = vpow.pop %v1951
        %v1953 = vmul.f32 %v1887, 1.442695
        %v1954 = vpow.pop %v1953
        %v1955 = vmul.f32 %v1888, 1.442695
        %v1956 = vpow.pop %v1955
        %v1957 = vmul.f32 %v1889, 1.442695
        %v1958 = vpow.pop %v1957
        %v1959 = vmul.f32 %v1890, 1.442695
        %v1960 = vpow.pop %v1959
        %v1961 = vmul.f32 %v1891, 1.442695
        %v1962 = vpow.pop %v1961
        %v1963 = vmul.f32 %v1892, 1.442695
        %v1964 = vpow.pop %v1963
        %v1965 = vmul.f32 %v1893, 1.442695
        %v1966 = vpow.pop %v1965
        %v1967 = vmul.f32 %v1894, 1.442695
        %v1968 = vpow.pop %v1967
        %v1969 = vmul.f32 %v1895, 1.442695
        %v1970 = vpow.pop %v1969
        %v1971 = vmul.f32 %v1896, 1.442695
        %v1972 = vpow.pop %v1971
        %v1973 = vmul.f32 %v1897, 1.442695
        %v1974 = vpow.pop %v1973
        %v1975 = vmul.f32 %v1898, 1.442695
        %v1976 = vpow.pop %v1975
        %v1977 = vmul.f32 %v1899, 1.442695
        %v1978 = vpow.pop %v1977
        %v1979 = vmul.f32 %v1900, 1.442695
        %v1980 = vpow.pop %v1979
        %v1981 = vmul.f32 %v1901, 1.442695
        %v1982 = vpow.pop %v1981
        %v1983 = vmul.f32 %v1902, 1.442695
        %v1984 = vpow.pop %v1983
        %v1985 = vmul.f32 %v1903, 1.442695
        %v1986 = vpow.pop %v1985
        %v1987 = vmul.f32 %v1904, 1.442695
        %v1988 = vpow.pop %v1987
        %v1989 = vmul.f32 %v1905, 1.442695
        %v1990 = vpow.pop %v1989
        %v1991 = vmul.f32 %v1906, 1.442695
        %v1992 = vpow.pop %v1991
        %v1993 = vmul.f32 %v1907, 1.442695
        %v1994 = vpow.pop %v1993
        %v1995 = vmul.f32 %v1908, 1.442695
        %v1996 = vpow.pop %v1995
        %v1997 = vmul.f32 %v1909, 1.442695
        %v1998 = vpow.pop %v1997
        %v1999 = vmul.f32 %v1910, 1.442695
        %v2000 = vpow.pop %v1999
        %v2001 = vmul.f32 %v1911, 1.442695
        %v2002 = vpow.pop %v2001
        %v2003 = vmul.f32 %v1912, 1.442695
        %v2004 = vpow.pop %v2003
        %v2005 = vmul.f32 %v1913, 1.442695
        %v2006 = vpow.pop %v2005
        %v2007 = vmul.f32 %v1914, 1.442695
        %v2008 = vpow.pop %v2007
        %v2009 = vmul.f32 %v1915, 1.442695
        %v2010 = vpow.pop %v2009
        %v2011 = vmul.f32 %v1916, 1.442695
        %v2012 = vpow.pop %v2011
        %v2013 = vmul.f32 %v1917, 1.442695
        %v2014 = vpow.pop %v2013
        %v2015 = vmul.f32 %v1918, 1.442695
        %v2016 = vpow.pop %v2015
        %v2017 = vmul.f32 %v1919, 1.442695
        %v2018 = vpow.pop %v2017
        %v2019 = vmul.f32 %v1920, 1.442695
        %v2020 = vpow.pop %v2019
        %v2021 = vmul.f32 %v1921, 1.442695
        %v2022 = vpow.pop %v2021
        %v2023 = vmul.f32 %v1922, 1.442695
        %v2024 = vpow.pop %v2023
        %v2025 = vmul.f32 %v1923, 1.442695
        %v2026 = vpow.pop %v2025
        %v2027 = vmul.f32 %v1924, 1.442695
        %v2028 = vpow.pop %v2027
        %v2029 = vmul.f32 %v1925, 1.442695
        %v2030 = vpow.pop %v2029
        %v2031 = vmul.f32 %v1926, 1.442695
        %v2032 = vpow.pop %v2031
        %v2033 = vmul.f32 %v1927, 1.442695
        %v2034 = vpow.pop %v2033
        %v2035 = vmul.f32 %v1928, 1.442695
        %v2036 = vpow.pop %v2035
        %v2037 = vmul.f32 %v1929, 1.442695
        %v2038 = vpow.pop %v2037
        %v2039 = vmul.f32 %v1930, 1.442695
        %v2040 = vpow.pop %v2039
        %v2041 = vmul.f32 %v1931, 1.442695
        %v2042 = vpow.pop %v2041
        %v2043 = vmul.f32 %v1932, 1.442695
        %v2044 = vpow.pop %v2043
        %v2045 = vmul.f32 %v1933, 1.442695
        %v2046 = vpow.pop %v2045
        %v2047 = vmul.f32 %v1934, 1.442695
        %v2048 = vpow.pop %v2047
        %v2049 = vmul.f32 %v1935, 1.442695
        %v2050 = vpow.pop %v2049
        %v2051 = vmul.f32 %v1936, 1.442695
        %v2052 = vpow.pop %v2051
        %v2053 = vmul.f32 %v1937, 1.442695
        %v2054 = vpow.pop %v2053
        %v2055 = vmul.f32 %v1938, 1.442695
        %v2056 = vpow.pop %v2055
        %v2057 = vmul.f32 %v1939, 1.442695
        %v2058 = vpow.pop %v2057
        %v2059 = vmul.f32 %v1940, 1.442695
        %v2060 = vpow.pop %v2059
        %v2061 = vmul.f32 %v1941, 1.442695
        %v2062 = vpow.pop %v2061
        %v2063 = vmul.f32 %v1942, 1.442695
        %v2064 = vpow.pop %v2063
        %v2065 = vmul.f32 %v1943, 1.442695
        %v2066 = vpow.pop %v2065
        %v2067 = vmul.f32 %v1944, 1.442695
        %v2068 = vpow.pop %v2067
        %v2069 = vmul.f32 %v1945, 1.442695
        %v2070 = vpow.pop %v2069
        %v2071 = vmul.f32 %v1946, 1.442695
        %v2072 = vpow.pop %v2071
        %v2073 = vmul.f32 %v1947, 1.442695
        %v2074 = vpow.pop %v2073
        %v2075 = vmul.f32 %v1948, 1.442695
        %v2076 = vpow.pop %v2075
        %2077 = vst [vmem:[#allocation2] sm:$0xff] %v1950
        %2078 = vst [vmem:[#allocation2 + $0x8] sm:$0xff] %v1952
        %2079 = vst [vmem:[#allocation2 + $0x10] sm:$0xff] %v1954
        %2080 = vst [vmem:[#allocation2 + $0x18] sm:$0xff] %v1956
        %2081 = vst [vmem:[#allocation2 + $0x20] sm:$0xff] %v1958
        %2082 = vst [vmem:[#allocation2 + $0x28] sm:$0xff] %v1960
        %2083 = vst [vmem:[#allocation2 + $0x30] sm:$0xff] %v1962
        %2084 = vst [vmem:[#allocation2 + $0x38] sm:$0xff] %v1964
        %2085 = vst [vmem:[#allocation2 + $0x40] sm:$0xff] %v1966
        %2086 = vst [vmem:[#allocation2 + $0x48] sm:$0xff] %v1968
        %2087 = vst [vmem:[#allocation2 + $0x50] sm:$0xff] %v1970
        %2088 = vst [vmem:[#allocation2 + $0x58] sm:$0xff] %v1972
        %2089 = vst [vmem:[#allocation2 + $0x60] sm:$0xff] %v1974
        %2090 = vst [vmem:[#allocation2 + $0x68] sm:$0xff] %v1976
        %2091 = vst [vmem:[#allocation2 + $0x70] sm:$0xff] %v1978
        %2092 = vst [vmem:[#allocation2 + $0x78] sm:$0xff] %v1980
        %2093 = vst [vmem:[#allocation2 + $0x80] sm:$0xff] %v1982
        %2094 = vst [vmem:[#allocation2 + $0x88] sm:$0xff] %v1984
        %2095 = vst [vmem:[#allocation2 + $0x90] sm:$0xff] %v1986
        %2096 = vst [vmem:[#allocation2 + $0x98] sm:$0xff] %v1988
        %2097 = vst [vmem:[#allocation2 + $0xa0] sm:$0xff] %v1990
        %2098 = vst [vmem:[#allocation2 + $0xa8] sm:$0xff] %v1992
        %2099 = vst [vmem:[#allocation2 + $0xb0] sm:$0xff] %v1994
        %2100 = vst [vmem:[#allocation2 + $0xb8] sm:$0xff] %v1996
        %2101 = vst [vmem:[#allocation2 + $0xc0] sm:$0xff] %v1998
        %2102 = vst [vmem:[#allocation2 + $0xc8] sm:$0xff] %v2000
        %2103 = vst [vmem:[#allocation2 + $0xd0] sm:$0xff] %v2002
        %2104 = vst [vmem:[#allocation2 + $0xd8] sm:$0xff] %v2004
        %2105 = vst [vmem:[#allocation2 + $0xe0] sm:$0xff] %v2006
        %2106 = vst [vmem:[#allocation2 + $0xe8] sm:$0xff] %v2008
        %2107 = vst [vmem:[#allocation2 + $0xf0] sm:$0xff] %v2010
        %2108 = vst [vmem:[#allocation2 + $0xf8] sm:$0xff] %v2012
        %2109 = vst [vmem:[#allocation2 + $0x100] sm:$0xff] %v2014
        %2110 = vst [vmem:[#allocation2 + $0x108] sm:$0xff] %v2016
        %2111 = vst [vmem:[#allocation2 + $0x110] sm:$0xff] %v2018
        %2112 = vst [vmem:[#allocation2 + $0x118] sm:$0xff] %v2020
        %2113 = vst [vmem:[#allocation2 + $0x120] sm:$0xff] %v2022
        %2114 = vst [vmem:[#allocation2 + $0x128] sm:$0xff] %v2024
        %2115 = vst [vmem:[#allocation2 + $0x130] sm:$0xff] %v2026
        %2116 = vst [vmem:[#allocation2 + $0x138] sm:$0xff] %v2028
        %2117 = vst [vmem:[#allocation2 + $0x140] sm:$0xff] %v2030
        %2118 = vst [vmem:[#allocation2 + $0x148] sm:$0xff] %v2032
        %2119 = vst [vmem:[#allocation2 + $0x150] sm:$0xff] %v2034
        %2120 = vst [vmem:[#allocation2 + $0x158] sm:$0xff] %v2036
        %2121 = vst [vmem:[#allocation2 + $0x160] sm:$0xff] %v2038
        %2122 = vst [vmem:[#allocation2 + $0x168] sm:$0xff] %v2040
        %2123 = vst [vmem:[#allocation2 + $0x170] sm:$0xff] %v2042
        %2124 = vst [vmem:[#allocation2 + $0x178] sm:$0xff] %v2044
        %2125 = vst [vmem:[#allocation2 + $0x180] sm:$0xff] %v2046
        %2126 = vst [vmem:[#allocation2 + $0x188] sm:$0xff] %v2048
        %2127 = vst [vmem:[#allocation2 + $0x190] sm:$0xff] %v2050
        %2128 = vst [vmem:[#allocation2 + $0x198] sm:$0xff] %v2052
        %2129 = vst [vmem:[#allocation2 + $0x1a0] sm:$0xff] %v2054
        %2130 = vst [vmem:[#allocation2 + $0x1a8] sm:$0xff] %v2056
        %2131 = vst [vmem:[#allocation2 + $0x1b0] sm:$0xff] %v2058
        %2132 = vst [vmem:[#allocation2 + $0x1b8] sm:$0xff] %v2060
        %2133 = vst [vmem:[#allocation2 + $0x1c0] sm:$0xff] %v2062
        %2134 = vst [vmem:[#allocation2 + $0x1c8] sm:$0xff] %v2064
        %2135 = vst [vmem:[#allocation2 + $0x1d0] sm:$0xff] %v2066
        %2136 = vst [vmem:[#allocation2 + $0x1d8] sm:$0xff] %v2068
        %2137 = vst [vmem:[#allocation2 + $0x1e0] sm:$0xff] %v2070
        %2138 = vst [vmem:[#allocation2 + $0x1e8] sm:$0xff] %v2072
        %2139 = vst [vmem:[#allocation2 + $0x1f0] sm:$0xff] %v2074
        %2140 = vst [vmem:[#allocation2 + $0x1f8] sm:$0xff] %v2076
        %v2143 = vcombine.high %v1613, %v1613
        %v2145 = vunpack.c.l.s4 1966171168
        %v2146 = vunpack.c.0.s8 %v2145
        %v2147 = vlaneseq
        %v2148 = vshrl.u32 %v2147, 7
        %v2149 = vsub.s32 %v2146, %v2148
        %v2150 = vrot.slane %v1613, %v2149
        %v2152 = vunpack.c.l.s4 1966171168
        %v2153 = vunpack.c.0.s8 %v2152
        %v2154 = vlaneseq
        %v2155 = vshrl.u32 %v2154, 7
        %v2156 = vsub.s32 %v2153, %v2155
        %v2157 = vrot.slane %v2143, %v2156
        %v2158 = vcombine.high %v2150, %v2150
        %v2159 = vcombine.high %v2157, %v2157
        %v2161 = vunpack.c.l.s4 1966171168
        %v2162 = vunpack.c.0.s8 %v2161
        %v2163 = vlaneseq
        %v2164 = vshrl.u32 %v2163, 7
        %v2165 = vsub.s32 %v2162, %v2164
        %v2166 = vrot.slane %v2150, %v2165
        %v2168 = vunpack.c.l.s4 1966171168
        %v2169 = vunpack.c.0.s8 %v2168
        %v2170 = vlaneseq
        %v2171 = vshrl.u32 %v2170, 7
        %v2172 = vsub.s32 %v2169, %v2171
        %v2173 = vrot.slane %v2157, %v2172
        %v2175 = vunpack.c.l.s4 1966171168
        %v2176 = vunpack.c.0.s8 %v2175
        %v2177 = vlaneseq
        %v2178 = vshrl.u32 %v2177, 7
        %v2179 = vsub.s32 %v2176, %v2178
        %v2180 = vrot.slane %v2158, %v2179
        %v2182 = vunpack.c.l.s4 1966171168
        %v2183 = vunpack.c.0.s8 %v2182
        %v2184 = vlaneseq
        %v2185 = vshrl.u32 %v2184, 7
        %v2186 = vsub.s32 %v2183, %v2185
        %v2187 = vrot.slane %v2159, %v2186
        %v2188 = vcombine.high %v2166, %v2166
        %v2189 = vcombine.high %v2173, %v2173
        %v2190 = vcombine.high %v2180, %v2180
        %v2191 = vcombine.high %v2187, %v2187
        %v2192 = vcombine.high %v1615, %v1615
        %v2194 = vunpack.c.l.s4 1966171168
        %v2195 = vunpack.c.0.s8 %v2194
        %v2196 = vlaneseq
        %v2197 = vshrl.u32 %v2196, 7
        %v2198 = vsub.s32 %v2195, %v2197
        %v2199 = vrot.slane %v1615, %v2198
        %v2201 = vunpack.c.l.s4 1966171168
        %v2202 = vunpack.c.0.s8 %v2201
        %v2203 = vlaneseq
        %v2204 = vshrl.u32 %v2203, 7
        %v2205 = vsub.s32 %v2202, %v2204
        %v2206 = vrot.slane %v2192, %v2205
        %v2207 = vcombine.high %v2199, %v2199
        %v2208 = vcombine.high %v2206, %v2206
        %v2210 = vunpack.c.l.s4 1966171168
        %v2211 = vunpack.c.0.s8 %v2210
        %v2212 = vlaneseq
        %v2213 = vshrl.u32 %v2212, 7
        %v2214 = vsub.s32 %v2211, %v2213
        %v2215 = vrot.slane %v2199, %v2214
        %v2217 = vunpack.c.l.s4 1966171168
        %v2218 = vunpack.c.0.s8 %v2217
        %v2219 = vlaneseq
        %v2220 = vshrl.u32 %v2219, 7
        %v2221 = vsub.s32 %v2218, %v2220
        %v2222 = vrot.slane %v2206, %v2221
        %v2224 = vunpack.c.l.s4 1966171168
        %v2225 = vunpack.c.0.s8 %v2224
        %v2226 = vlaneseq
        %v2227 = vshrl.u32 %v2226, 7
        %v2228 = vsub.s32 %v2225, %v2227
        %v2229 = vrot.slane %v2207, %v2228
        %v2231 = vunpack.c.l.s4 1966171168
        %v2232 = vunpack.c.0.s8 %v2231
        %v2233 = vlaneseq
        %v2234 = vshrl.u32 %v2233, 7
        %v2235 = vsub.s32 %v2232, %v2234
        %v2236 = vrot.slane %v2208, %v2235
        %v2237 = vcombine.high %v2215, %v2215
        %v2238 = vcombine.high %v2222, %v2222
        %v2239 = vcombine.high %v2229, %v2229
        %v2240 = vcombine.high %v2236, %v2236
        %v2241 = vlaneseq
        %v2242 = vshrl.u32 %v2241, 7
        %v2243 = vsub.s32 0, %v2242
        %v2244 = vrot.slane %v1605, %v2243
        %2246 = vbcast.lane.b32.xlu0 %v2244, 256
        %v2247 = vpop.permute.xlu0 %2246
        %s2249 = sor.u32 256, 8
        %2250 = vbcast.lane.b32.xlu0 %v2244, %s2249
        %v2251 = vpop.permute.xlu0 %2250
        %v2252 = vlaneseq
        %v2253 = vshrl.u32 %v2252, 7
        %v2254 = vsub.s32 1, %v2253
        %v2255 = vrot.slane %v1605, %v2254
        %2257 = vbcast.lane.b32.xlu0 %v2255, 256
        %v2258 = vpop.permute.xlu0 %2257
        %s2260 = sor.u32 256, 8
        %2261 = vbcast.lane.b32.xlu0 %v2255, %s2260
        %v2262 = vpop.permute.xlu0 %2261
        %v2263 = vlaneseq
        %v2264 = vshrl.u32 %v2263, 7
        %v2265 = vsub.s32 2, %v2264
        %v2266 = vrot.slane %v1605, %v2265
        %2268 = vbcast.lane.b32.xlu0 %v2266, 256
        %v2269 = vpop.permute.xlu0 %2268
        %s2271 = sor.u32 256, 8
        %2272 = vbcast.lane.b32.xlu0 %v2266, %s2271
        %v2273 = vpop.permute.xlu0 %2272
        %v2274 = vlaneseq
        %v2275 = vshrl.u32 %v2274, 7
        %v2276 = vsub.s32 3, %v2275
        %v2277 = vrot.slane %v1605, %v2276
        %2279 = vbcast.lane.b32.xlu0 %v2277, 256
        %v2280 = vpop.permute.xlu0 %2279
        %s2282 = sor.u32 256, 8
        %2283 = vbcast.lane.b32.xlu0 %v2277, %s2282
        %v2284 = vpop.permute.xlu0 %2283
        %v2285 = vlaneseq
        %v2286 = vshrl.u32 %v2285, 7
        %v2287 = vsub.s32 4, %v2286
        %v2288 = vrot.slane %v1605, %v2287
        %2290 = vbcast.lane.b32.xlu0 %v2288, 256
        %v2291 = vpop.permute.xlu0 %2290
        %s2293 = sor.u32 256, 8
        %2294 = vbcast.lane.b32.xlu0 %v2288, %s2293
        %v2295 = vpop.permute.xlu0 %2294
        %v2296 = vlaneseq
        %v2297 = vshrl.u32 %v2296, 7
        %v2298 = vsub.s32 5, %v2297
        %v2299 = vrot.slane %v1605, %v2298
        %2301 = vbcast.lane.b32.xlu0 %v2299, 256
        %v2302 = vpop.permute.xlu0 %2301
        %s2304 = sor.u32 256, 8
        %2305 = vbcast.lane.b32.xlu0 %v2299, %s2304
        %v2306 = vpop.permute.xlu0 %2305
        %v2307 = vlaneseq
        %v2308 = vshrl.u32 %v2307, 7
        %v2309 = vsub.s32 6, %v2308
        %v2310 = vrot.slane %v1605, %v2309
        %2312 = vbcast.lane.b32.xlu0 %v2310, 256
        %v2313 = vpop.permute.xlu0 %2312
        %s2315 = sor.u32 256, 8
        %2316 = vbcast.lane.b32.xlu0 %v2310, %s2315
        %v2317 = vpop.permute.xlu0 %2316
        %v2318 = vlaneseq
        %v2319 = vshrl.u32 %v2318, 7
        %v2320 = vsub.s32 7, %v2319
        %v2321 = vrot.slane %v1605, %v2320
        %2323 = vbcast.lane.b32.xlu0 %v2321, 256
        %v2324 = vpop.permute.xlu0 %2323
        %s2326 = sor.u32 256, 8
        %2327 = vbcast.lane.b32.xlu0 %v2321, %s2326
        %v2328 = vpop.permute.xlu0 %2327
        %v2329 = vlaneseq
        %v2330 = vshrl.u32 %v2329, 7
        %v2331 = vsub.s32 0, %v2330
        %v2332 = vrot.slane %v1610, %v2331
        %2334 = vbcast.lane.b32.xlu0 %v2332, 256
        %v2335 = vpop.permute.xlu0 %2334
        %s2337 = sor.u32 256, 8
        %2338 = vbcast.lane.b32.xlu0 %v2332, %s2337
        %v2339 = vpop.permute.xlu0 %2338
        %v2340 = vlaneseq
        %v2341 = vshrl.u32 %v2340, 7
        %v2342 = vsub.s32 1, %v2341
        %v2343 = vrot.slane %v1610, %v2342
        %2345 = vbcast.lane.b32.xlu0 %v2343, 256
        %v2346 = vpop.permute.xlu0 %2345
        %s2348 = sor.u32 256, 8
        %2349 = vbcast.lane.b32.xlu0 %v2343, %s2348
        %v2350 = vpop.permute.xlu0 %2349
        %v2351 = vlaneseq
        %v2352 = vshrl.u32 %v2351, 7
        %v2353 = vsub.s32 2, %v2352
        %v2354 = vrot.slane %v1610, %v2353
        %2356 = vbcast.lane.b32.xlu0 %v2354, 256
        %v2357 = vpop.permute.xlu0 %2356
        %s2359 = sor.u32 256, 8
        %2360 = vbcast.lane.b32.xlu0 %v2354, %s2359
        %v2361 = vpop.permute.xlu0 %2360
        %v2362 = vlaneseq
        %v2363 = vshrl.u32 %v2362, 7
        %v2364 = vsub.s32 3, %v2363
        %v2365 = vrot.slane %v1610, %v2364
        %2367 = vbcast.lane.b32.xlu0 %v2365, 256
        %v2368 = vpop.permute.xlu0 %2367
        %s2370 = sor.u32 256, 8
        %2371 = vbcast.lane.b32.xlu0 %v2365, %s2370
        %v2372 = vpop.permute.xlu0 %2371
        %v2373 = vlaneseq
        %v2374 = vshrl.u32 %v2373, 7
        %v2375 = vsub.s32 4, %v2374
        %v2376 = vrot.slane %v1610, %v2375
        %2378 = vbcast.lane.b32.xlu0 %v2376, 256
        %v2379 = vpop.permute.xlu0 %2378
        %s2381 = sor.u32 256, 8
        %2382 = vbcast.lane.b32.xlu0 %v2376, %s2381
        %v2383 = vpop.permute.xlu0 %2382
        %v2384 = vlaneseq
        %v2385 = vshrl.u32 %v2384, 7
        %v2386 = vsub.s32 5, %v2385
        %v2387 = vrot.slane %v1610, %v2386
        %2389 = vbcast.lane.b32.xlu0 %v2387, 256
        %v2390 = vpop.permute.xlu0 %2389
        %s2392 = sor.u32 256, 8
        %2393 = vbcast.lane.b32.xlu0 %v2387, %s2392
        %v2394 = vpop.permute.xlu0 %2393
        %v2395 = vlaneseq
        %v2396 = vshrl.u32 %v2395, 7
        %v2397 = vsub.s32 6, %v2396
        %v2398 = vrot.slane %v1610, %v2397
        %2400 = vbcast.lane.b32.xlu0 %v2398, 256
        %v2401 = vpop.permute.xlu0 %2400
        %s2403 = sor.u32 256, 8
        %2404 = vbcast.lane.b32.xlu0 %v2398, %s2403
        %v2405 = vpop.permute.xlu0 %2404
        %v2406 = vlaneseq
        %v2407 = vshrl.u32 %v2406, 7
        %v2408 = vsub.s32 7, %v2407
        %v2409 = vrot.slane %v1610, %v2408
        %2411 = vbcast.lane.b32.xlu0 %v2409, 256
        %v2412 = vpop.permute.xlu0 %2411
        %s2414 = sor.u32 256, 8
        %2415 = vbcast.lane.b32.xlu0 %v2409, %s2414
        %v2416 = vpop.permute.xlu0 %2415
        %v2417 = vlaneseq
        %v2418 = vshrl.u32 %v2417, 7
        %v2419 = vsub.s32 0, %v2418
        %v2420 = vrot.slane %v2166, %v2419
        %v2421 = vlaneseq
        %v2422 = vshrl.u32 %v2421, 7
        %v2423 = vsub.s32 0, %v2422
        %v2424 = vrot.slane %v2180, %v2423
        %v2425 = vlaneseq
        %v2426 = vshrl.u32 %v2425, 7
        %v2427 = vsub.s32 0, %v2426
        %v2428 = vrot.slane %v2188, %v2427
        %v2429 = vlaneseq
        %v2430 = vshrl.u32 %v2429, 7
        %v2431 = vsub.s32 0, %v2430
        %v2432 = vrot.slane %v2190, %v2431
        %v2433 = vlaneseq
        %v2434 = vshrl.u32 %v2433, 7
        %v2435 = vsub.s32 0, %v2434
        %v2436 = vrot.slane %v2173, %v2435
        %v2437 = vlaneseq
        %v2438 = vshrl.u32 %v2437, 7
        %v2439 = vsub.s32 0, %v2438
        %v2440 = vrot.slane %v2187, %v2439
        %v2441 = vlaneseq
        %v2442 = vshrl.u32 %v2441, 7
        %v2443 = vsub.s32 0, %v2442
        %v2444 = vrot.slane %v2189, %v2443
        %v2445 = vlaneseq
        %v2446 = vshrl.u32 %v2445, 7
        %v2447 = vsub.s32 0, %v2446
        %v2448 = vrot.slane %v2191, %v2447
        %v2449 = vlaneseq
        %v2450 = vshrl.u32 %v2449, 7
        %v2451 = vsub.s32 0, %v2450
        %v2452 = vrot.slane %v2215, %v2451
        %v2453 = vlaneseq
        %v2454 = vshrl.u32 %v2453, 7
        %v2455 = vsub.s32 0, %v2454
        %v2456 = vrot.slane %v2229, %v2455
        %v2457 = vlaneseq
        %v2458 = vshrl.u32 %v2457, 7
        %v2459 = vsub.s32 0, %v2458
        %v2460 = vrot.slane %v2237, %v2459
        %v2461 = vlaneseq
        %v2462 = vshrl.u32 %v2461, 7
        %v2463 = vsub.s32 0, %v2462
        %v2464 = vrot.slane %v2239, %v2463
        %v2465 = vlaneseq
        %v2466 = vshrl.u32 %v2465, 7
        %v2467 = vsub.s32 0, %v2466
        %v2468 = vrot.slane %v2222, %v2467
        %v2469 = vlaneseq
        %v2470 = vshrl.u32 %v2469, 7
        %v2471 = vsub.s32 0, %v2470
        %v2472 = vrot.slane %v2236, %v2471
        %v2473 = vlaneseq
        %v2474 = vshrl.u32 %v2473, 7
        %v2475 = vsub.s32 0, %v2474
        %v2476 = vrot.slane %v2238, %v2475
        %v2477 = vlaneseq
        %v2478 = vshrl.u32 %v2477, 7
        %v2479 = vsub.s32 0, %v2478
        %v2480 = vrot.slane %v2240, %v2479
        %v2497 = vmul.f32 %v2420, %v2247
        %v2498 = vmul.f32 %v2420, %v2251
        %v2499 = vmul.f32 %v2424, %v2258
        %v2500 = vmul.f32 %v2424, %v2262
        %v2501 = vmul.f32 %v2428, %v2269
        %v2502 = vmul.f32 %v2428, %v2273
        %v2503 = vmul.f32 %v2432, %v2280
        %v2504 = vmul.f32 %v2432, %v2284
        %v2505 = vmul.f32 %v2436, %v2291
        %v2506 = vmul.f32 %v2436, %v2295
        %v2507 = vmul.f32 %v2440, %v2302
        %v2508 = vmul.f32 %v2440, %v2306
        %v2509 = vmul.f32 %v2444, %v2313
        %v2510 = vmul.f32 %v2444, %v2317
        %v2511 = vmul.f32 %v2448, %v2324
        %v2512 = vmul.f32 %v2448, %v2328
        %v2513 = vmul.f32 %v2452, %v2335
        %v2514 = vmul.f32 %v2452, %v2339
        %v2515 = vmul.f32 %v2456, %v2346
        %v2516 = vmul.f32 %v2456, %v2350
        %v2517 = vmul.f32 %v2460, %v2357
        %v2518 = vmul.f32 %v2460, %v2361
        %v2519 = vmul.f32 %v2464, %v2368
        %v2520 = vmul.f32 %v2464, %v2372
        %v2521 = vmul.f32 %v2468, %v2379
        %v2522 = vmul.f32 %v2468, %v2383
        %v2523 = vmul.f32 %v2472, %v2390
        %v2524 = vmul.f32 %v2472, %v2394
        %v2525 = vmul.f32 %v2476, %v2401
        %v2526 = vmul.f32 %v2476, %v2405
        %v2527 = vmul.f32 %v2480, %v2412
        %v2528 = vmul.f32 %v2480, %v2416
        %2529 = vst.msk [vmem:[#allocation3] sm:$0xff] %vm1232, %v2497
        %2530 = vst.msk [vmem:[#allocation3 + $0x10] sm:$0xff] %vm1232, %v2498
        %2531 = vst.msk [vmem:[#allocation3 + $0x20] sm:$0xff] %vm1232, %v2499
        %2532 = vst.msk [vmem:[#allocation3 + $0x30] sm:$0xff] %vm1232, %v2500
        %2533 = vst.msk [vmem:[#allocation3 + $0x40] sm:$0xff] %vm1232, %v2501
        %2534 = vst.msk [vmem:[#allocation3 + $0x50] sm:$0xff] %vm1232, %v2502
        %2535 = vst.msk [vmem:[#allocation3 + $0x60] sm:$0xff] %vm1232, %v2503
        %2536 = vst.msk [vmem:[#allocation3 + $0x70] sm:$0xff] %vm1232, %v2504
        %2537 = vst.msk [vmem:[#allocation3 + $0x80] sm:$0xff] %vm1232, %v2505
        %2538 = vst.msk [vmem:[#allocation3 + $0x90] sm:$0xff] %vm1232, %v2506
        %2539 = vst.msk [vmem:[#allocation3 + $0xa0] sm:$0xff] %vm1232, %v2507
        %2540 = vst.msk [vmem:[#allocation3 + $0xb0] sm:$0xff] %vm1232, %v2508
        %2541 = vst.msk [vmem:[#allocation3 + $0xc0] sm:$0xff] %vm1232, %v2509
        %2542 = vst.msk [vmem:[#allocation3 + $0xd0] sm:$0xff] %vm1232, %v2510
        %2543 = vst.msk [vmem:[#allocation3 + $0xe0] sm:$0xff] %vm1232, %v2511
        %2544 = vst.msk [vmem:[#allocation3 + $0xf0] sm:$0xff] %vm1232, %v2512
        %2545 = vst.msk [vmem:[#allocation3 + $0x100] sm:$0xff] %vm1232, %v2513
        %2546 = vst.msk [vmem:[#allocation3 + $0x110] sm:$0xff] %vm1232, %v2514
        %2547 = vst.msk [vmem:[#allocation3 + $0x120] sm:$0xff] %vm1232, %v2515
        %2548 = vst.msk [vmem:[#allocation3 + $0x130] sm:$0xff] %vm1232, %v2516
        %2549 = vst.msk [vmem:[#allocation3 + $0x140] sm:$0xff] %vm1232, %v2517
        %2550 = vst.msk [vmem:[#allocation3 + $0x150] sm:$0xff] %vm1232, %v2518
        %2551 = vst.msk [vmem:[#allocation3 + $0x160] sm:$0xff] %vm1232, %v2519
        %2552 = vst.msk [vmem:[#allocation3 + $0x170] sm:$0xff] %vm1232, %v2520
        %2553 = vst.msk [vmem:[#allocation3 + $0x180] sm:$0xff] %vm1232, %v2521
        %2554 = vst.msk [vmem:[#allocation3 + $0x190] sm:$0xff] %vm1232, %v2522
        %2555 = vst.msk [vmem:[#allocation3 + $0x1a0] sm:$0xff] %vm1232, %v2523
        %2556 = vst.msk [vmem:[#allocation3 + $0x1b0] sm:$0xff] %vm1232, %v2524
        %2557 = vst.msk [vmem:[#allocation3 + $0x1c0] sm:$0xff] %vm1232, %v2525
        %2558 = vst.msk [vmem:[#allocation3 + $0x1d0] sm:$0xff] %vm1232, %v2526
        %2559 = vst.msk [vmem:[#allocation3 + $0x1e0] sm:$0xff] %vm1232, %v2527
        %2560 = vst.msk [vmem:[#allocation3 + $0x1f0] sm:$0xff] %vm1232, %v2528
        %s2562 = sor.u32 256, 64
        %2563 = vbcast.lane.b32.xlu0 %v2244, %s2562
        %v2564 = vpop.permute.xlu0 %2563
        %s2566 = sor.u32 256, 72
        %2567 = vbcast.lane.b32.xlu0 %v2244, %s2566
        %v2568 = vpop.permute.xlu0 %2567
        %s2570 = sor.u32 256, 64
        %2571 = vbcast.lane.b32.xlu0 %v2255, %s2570
        %v2572 = vpop.permute.xlu0 %2571
        %s2574 = sor.u32 256, 72
        %2575 = vbcast.lane.b32.xlu0 %v2255, %s2574
        %v2576 = vpop.permute.xlu0 %2575
        %s2578 = sor.u32 256, 64
        %2579 = vbcast.lane.b32.xlu0 %v2266, %s2578
        %v2580 = vpop.permute.xlu0 %2579
        %s2582 = sor.u32 256, 72
        %2583 = vbcast.lane.b32.xlu0 %v2266, %s2582
        %v2584 = vpop.permute.xlu0 %2583
        %s2586 = sor.u32 256, 64
        %2587 = vbcast.lane.b32.xlu0 %v2277, %s2586
        %v2588 = vpop.permute.xlu0 %2587
        %s2590 = sor.u32 256, 72
        %2591 = vbcast.lane.b32.xlu0 %v2277, %s2590
        %v2592 = vpop.permute.xlu0 %2591
        %s2594 = sor.u32 256, 64
        %2595 = vbcast.lane.b32.xlu0 %v2288, %s2594
        %v2596 = vpop.permute.xlu0 %2595
        %s2598 = sor.u32 256, 72
        %2599 = vbcast.lane.b32.xlu0 %v2288, %s2598
        %v2600 = vpop.permute.xlu0 %2599
        %s2602 = sor.u32 256, 64
        %2603 = vbcast.lane.b32.xlu0 %v2299, %s2602
        %v2604 = vpop.permute.xlu0 %2603
        %s2606 = sor.u32 256, 72
        %2607 = vbcast.lane.b32.xlu0 %v2299, %s2606
        %v2608 = vpop.permute.xlu0 %2607
        %s2610 = sor.u32 256, 64
        %2611 = vbcast.lane.b32.xlu0 %v2310, %s2610
        %v2612 = vpop.permute.xlu0 %2611
        %s2614 = sor.u32 256, 72
        %2615 = vbcast.lane.b32.xlu0 %v2310, %s2614
        %v2616 = vpop.permute.xlu0 %2615
        %s2618 = sor.u32 256, 64
        %2619 = vbcast.lane.b32.xlu0 %v2321, %s2618
        %v2620 = vpop.permute.xlu0 %2619
        %s2622 = sor.u32 256, 72
        %2623 = vbcast.lane.b32.xlu0 %v2321, %s2622
        %v2624 = vpop.permute.xlu0 %2623
        %s2626 = sor.u32 256, 64
        %2627 = vbcast.lane.b32.xlu0 %v2332, %s2626
        %v2628 = vpop.permute.xlu0 %2627
        %s2630 = sor.u32 256, 72
        %2631 = vbcast.lane.b32.xlu0 %v2332, %s2630
        %v2632 = vpop.permute.xlu0 %2631
        %s2634 = sor.u32 256, 64
        %2635 = vbcast.lane.b32.xlu0 %v2343, %s2634
        %v2636 = vpop.permute.xlu0 %2635
        %s2638 = sor.u32 256, 72
        %2639 = vbcast.lane.b32.xlu0 %v2343, %s2638
        %v2640 = vpop.permute.xlu0 %2639
        %s2642 = sor.u32 256, 64
        %2643 = vbcast.lane.b32.xlu0 %v2354, %s2642
        %v2644 = vpop.permute.xlu0 %2643
        %s2646 = sor.u32 256, 72
        %2647 = vbcast.lane.b32.xlu0 %v2354, %s2646
        %v2648 = vpop.permute.xlu0 %2647
        %s2650 = sor.u32 256, 64
        %2651 = vbcast.lane.b32.xlu0 %v2365, %s2650
        %v2652 = vpop.permute.xlu0 %2651
        %s2654 = sor.u32 256, 72
        %2655 = vbcast.lane.b32.xlu0 %v2365, %s2654
        %v2656 = vpop.permute.xlu0 %2655
        %s2658 = sor.u32 256, 64
        %2659 = vbcast.lane.b32.xlu0 %v2376, %s2658
        %v2660 = vpop.permute.xlu0 %2659
        %s2662 = sor.u32 256, 72
        %2663 = vbcast.lane.b32.xlu0 %v2376, %s2662
        %v2664 = vpop.permute.xlu0 %2663
        %s2666 = sor.u32 256, 64
        %2667 = vbcast.lane.b32.xlu0 %v2387, %s2666
        %v2668 = vpop.permute.xlu0 %2667
        %s2670 = sor.u32 256, 72
        %2671 = vbcast.lane.b32.xlu0 %v2387, %s2670
        %v2672 = vpop.permute.xlu0 %2671
        %s2674 = sor.u32 256, 64
        %2675 = vbcast.lane.b32.xlu0 %v2398, %s2674
        %v2676 = vpop.permute.xlu0 %2675
        %s2678 = sor.u32 256, 72
        %2679 = vbcast.lane.b32.xlu0 %v2398, %s2678
        %v2680 = vpop.permute.xlu0 %2679
        %s2682 = sor.u32 256, 64
        %2683 = vbcast.lane.b32.xlu0 %v2409, %s2682
        %v2684 = vpop.permute.xlu0 %2683
        %s2686 = sor.u32 256, 72
        %2687 = vbcast.lane.b32.xlu0 %v2409, %s2686
        %v2688 = vpop.permute.xlu0 %2687
        %2689 = vst.msk [vmem:[#allocation4] sm:$0xff] %vm1232, %v2564
        %2690 = vst.msk [vmem:[#allocation4 + $0x10] sm:$0xff] %vm1232, %v2568
        %2691 = vst.msk [vmem:[#allocation4 + $0x20] sm:$0xff] %vm1232, %v2572
        %2692 = vst.msk [vmem:[#allocation4 + $0x30] sm:$0xff] %vm1232, %v2576
        %2693 = vst.msk [vmem:[#allocation4 + $0x40] sm:$0xff] %vm1232, %v2580
        %2694 = vst.msk [vmem:[#allocation4 + $0x50] sm:$0xff] %vm1232, %v2584
        %2695 = vst.msk [vmem:[#allocation4 + $0x60] sm:$0xff] %vm1232, %v2588
        %2696 = vst.msk [vmem:[#allocation4 + $0x70] sm:$0xff] %vm1232, %v2592
        %2697 = vst.msk [vmem:[#allocation4 + $0x80] sm:$0xff] %vm1232, %v2596
        %2698 = vst.msk [vmem:[#allocation4 + $0x90] sm:$0xff] %vm1232, %v2600
        %2699 = vst.msk [vmem:[#allocation4 + $0xa0] sm:$0xff] %vm1232, %v2604
        %2700 = vst.msk [vmem:[#allocation4 + $0xb0] sm:$0xff] %vm1232, %v2608
        %2701 = vst.msk [vmem:[#allocation4 + $0xc0] sm:$0xff] %vm1232, %v2612
        %2702 = vst.msk [vmem:[#allocation4 + $0xd0] sm:$0xff] %vm1232, %v2616
        %2703 = vst.msk [vmem:[#allocation4 + $0xe0] sm:$0xff] %vm1232, %v2620
        %2704 = vst.msk [vmem:[#allocation4 + $0xf0] sm:$0xff] %vm1232, %v2624
        %2705 = vst.msk [vmem:[#allocation4 + $0x100] sm:$0xff] %vm1232, %v2628
        %2706 = vst.msk [vmem:[#allocation4 + $0x110] sm:$0xff] %vm1232, %v2632
        %2707 = vst.msk [vmem:[#allocation4 + $0x120] sm:$0xff] %vm1232, %v2636
        %2708 = vst.msk [vmem:[#allocation4 + $0x130] sm:$0xff] %vm1232, %v2640
        %2709 = vst.msk [vmem:[#allocation4 + $0x140] sm:$0xff] %vm1232, %v2644
        %2710 = vst.msk [vmem:[#allocation4 + $0x150] sm:$0xff] %vm1232, %v2648
        %2711 = vst.msk [vmem:[#allocation4 + $0x160] sm:$0xff] %vm1232, %v2652
        %2712 = vst.msk [vmem:[#allocation4 + $0x170] sm:$0xff] %vm1232, %v2656
        %2713 = vst.msk [vmem:[#allocation4 + $0x180] sm:$0xff] %vm1232, %v2660
        %2714 = vst.msk [vmem:[#allocation4 + $0x190] sm:$0xff] %vm1232, %v2664
        %2715 = vst.msk [vmem:[#allocation4 + $0x1a0] sm:$0xff] %vm1232, %v2668
        %2716 = vst.msk [vmem:[#allocation4 + $0x1b0] sm:$0xff] %vm1232, %v2672
        %2717 = vst.msk [vmem:[#allocation4 + $0x1c0] sm:$0xff] %vm1232, %v2676
        %2718 = vst.msk [vmem:[#allocation4 + $0x1d0] sm:$0xff] %vm1232, %v2680
        %2719 = vst.msk [vmem:[#allocation4 + $0x1e0] sm:$0xff] %vm1232, %v2684
        %2720 = vst.msk [vmem:[#allocation4 + $0x1f0] sm:$0xff] %vm1232, %v2688
        %s2722 = sor.u32 256, 16
        %2723 = vbcast.lane.b32.xlu0 %v2244, %s2722
        %v2724 = vpop.permute.xlu0 %2723
        %s2726 = sor.u32 256, 24
        %2727 = vbcast.lane.b32.xlu0 %v2244, %s2726
        %v2728 = vpop.permute.xlu0 %2727
        %s2730 = sor.u32 256, 16
        %2731 = vbcast.lane.b32.xlu0 %v2255, %s2730
        %v2732 = vpop.permute.xlu0 %2731
        %s2734 = sor.u32 256, 24
        %2735 = vbcast.lane.b32.xlu0 %v2255, %s2734
        %v2736 = vpop.permute.xlu0 %2735
        %s2738 = sor.u32 256, 16
        %2739 = vbcast.lane.b32.xlu0 %v2266, %s2738
        %v2740 = vpop.permute.xlu0 %2739
        %s2742 = sor.u32 256, 24
        %2743 = vbcast.lane.b32.xlu0 %v2266, %s2742
        %v2744 = vpop.permute.xlu0 %2743
        %s2746 = sor.u32 256, 16
        %2747 = vbcast.lane.b32.xlu0 %v2277, %s2746
        %v2748 = vpop.permute.xlu0 %2747
        %s2750 = sor.u32 256, 24
        %2751 = vbcast.lane.b32.xlu0 %v2277, %s2750
        %v2752 = vpop.permute.xlu0 %2751
        %s2754 = sor.u32 256, 16
        %2755 = vbcast.lane.b32.xlu0 %v2288, %s2754
        %v2756 = vpop.permute.xlu0 %2755
        %s2758 = sor.u32 256, 24
        %2759 = vbcast.lane.b32.xlu0 %v2288, %s2758
        %v2760 = vpop.permute.xlu0 %2759
        %s2762 = sor.u32 256, 16
        %2763 = vbcast.lane.b32.xlu0 %v2299, %s2762
        %v2764 = vpop.permute.xlu0 %2763
        %s2766 = sor.u32 256, 24
        %2767 = vbcast.lane.b32.xlu0 %v2299, %s2766
        %v2768 = vpop.permute.xlu0 %2767
        %s2770 = sor.u32 256, 16
        %2771 = vbcast.lane.b32.xlu0 %v2310, %s2770
        %v2772 = vpop.permute.xlu0 %2771
        %s2774 = sor.u32 256, 24
        %2775 = vbcast.lane.b32.xlu0 %v2310, %s2774
        %v2776 = vpop.permute.xlu0 %2775
        %s2778 = sor.u32 256, 16
        %2779 = vbcast.lane.b32.xlu0 %v2321, %s2778
        %v2780 = vpop.permute.xlu0 %2779
        %s2782 = sor.u32 256, 24
        %2783 = vbcast.lane.b32.xlu0 %v2321, %s2782
        %v2784 = vpop.permute.xlu0 %2783
        %s2786 = sor.u32 256, 16
        %2787 = vbcast.lane.b32.xlu0 %v2332, %s2786
        %v2788 = vpop.permute.xlu0 %2787
        %s2790 = sor.u32 256, 24
        %2791 = vbcast.lane.b32.xlu0 %v2332, %s2790
        %v2792 = vpop.permute.xlu0 %2791
        %s2794 = sor.u32 256, 16
        %2795 = vbcast.lane.b32.xlu0 %v2343, %s2794
        %v2796 = vpop.permute.xlu0 %2795
        %s2798 = sor.u32 256, 24
        %2799 = vbcast.lane.b32.xlu0 %v2343, %s2798
        %v2800 = vpop.permute.xlu0 %2799
        %s2802 = sor.u32 256, 16
        %2803 = vbcast.lane.b32.xlu0 %v2354, %s2802
        %v2804 = vpop.permute.xlu0 %2803
        %s2806 = sor.u32 256, 24
        %2807 = vbcast.lane.b32.xlu0 %v2354, %s2806
        %v2808 = vpop.permute.xlu0 %2807
        %s2810 = sor.u32 256, 16
        %2811 = vbcast.lane.b32.xlu0 %v2365, %s2810
        %v2812 = vpop.permute.xlu0 %2811
        %s2814 = sor.u32 256, 24
        %2815 = vbcast.lane.b32.xlu0 %v2365, %s2814
        %v2816 = vpop.permute.xlu0 %2815
        %s2818 = sor.u32 256, 16
        %2819 = vbcast.lane.b32.xlu0 %v2376, %s2818
        %v2820 = vpop.permute.xlu0 %2819
        %s2822 = sor.u32 256, 24
        %2823 = vbcast.lane.b32.xlu0 %v2376, %s2822
        %v2824 = vpop.permute.xlu0 %2823
        %s2826 = sor.u32 256, 16
        %2827 = vbcast.lane.b32.xlu0 %v2387, %s2826
        %v2828 = vpop.permute.xlu0 %2827
        %s2830 = sor.u32 256, 24
        %2831 = vbcast.lane.b32.xlu0 %v2387, %s2830
        %v2832 = vpop.permute.xlu0 %2831
        %s2834 = sor.u32 256, 16
        %2835 = vbcast.lane.b32.xlu0 %v2398, %s2834
        %v2836 = vpop.permute.xlu0 %2835
        %s2838 = sor.u32 256, 24
        %2839 = vbcast.lane.b32.xlu0 %v2398, %s2838
        %v2840 = vpop.permute.xlu0 %2839
        %s2842 = sor.u32 256, 16
        %2843 = vbcast.lane.b32.xlu0 %v2409, %s2842
        %v2844 = vpop.permute.xlu0 %2843
        %s2846 = sor.u32 256, 24
        %2847 = vbcast.lane.b32.xlu0 %v2409, %s2846
        %v2848 = vpop.permute.xlu0 %2847
        %v2849 = vmul.f32 %v2420, %v2724
        %v2850 = vmul.f32 %v2420, %v2728
        %v2851 = vmul.f32 %v2424, %v2732
        %v2852 = vmul.f32 %v2424, %v2736
        %v2853 = vmul.f32 %v2428, %v2740
        %v2854 = vmul.f32 %v2428, %v2744
        %v2855 = vmul.f32 %v2432, %v2748
        %v2856 = vmul.f32 %v2432, %v2752
        %v2857 = vmul.f32 %v2436, %v2756
        %v2858 = vmul.f32 %v2436, %v2760
        %v2859 = vmul.f32 %v2440, %v2764
        %v2860 = vmul.f32 %v2440, %v2768
        %v2861 = vmul.f32 %v2444, %v2772
        %v2862 = vmul.f32 %v2444, %v2776
        %v2863 = vmul.f32 %v2448, %v2780
        %v2864 = vmul.f32 %v2448, %v2784
        %v2865 = vmul.f32 %v2452, %v2788
        %v2866 = vmul.f32 %v2452, %v2792
        %v2867 = vmul.f32 %v2456, %v2796
        %v2868 = vmul.f32 %v2456, %v2800
        %v2869 = vmul.f32 %v2460, %v2804
        %v2870 = vmul.f32 %v2460, %v2808
        %v2871 = vmul.f32 %v2464, %v2812
        %v2872 = vmul.f32 %v2464, %v2816
        %v2873 = vmul.f32 %v2468, %v2820
        %v2874 = vmul.f32 %v2468, %v2824
        %v2875 = vmul.f32 %v2472, %v2828
        %v2876 = vmul.f32 %v2472, %v2832
        %v2877 = vmul.f32 %v2476, %v2836
        %v2878 = vmul.f32 %v2476, %v2840
        %v2879 = vmul.f32 %v2480, %v2844
        %v2880 = vmul.f32 %v2480, %v2848
        %vm2881 = vcmask 1048064
        %2882 = vst.msk [vmem:[#allocation3] sm:$0xff] %vm2881, %v2849
        %2883 = vst.msk [vmem:[#allocation3 + $0x10] sm:$0xff] %vm2881, %v2850
        %2884 = vst.msk [vmem:[#allocation3 + $0x20] sm:$0xff] %vm2881, %v2851
        %2885 = vst.msk [vmem:[#allocation3 + $0x30] sm:$0xff] %vm2881, %v2852
        %2886 = vst.msk [vmem:[#allocation3 + $0x40] sm:$0xff] %vm2881, %v2853
        %2887 = vst.msk [vmem:[#allocation3 + $0x50] sm:$0xff] %vm2881, %v2854
        %2888 = vst.msk [vmem:[#allocation3 + $0x60] sm:$0xff] %vm2881, %v2855
        %2889 = vst.msk [vmem:[#allocation3 + $0x70] sm:$0xff] %vm2881, %v2856
        %2890 = vst.msk [vmem:[#allocation3 + $0x80] sm:$0xff] %vm2881, %v2857
        %2891 = vst.msk [vmem:[#allocation3 + $0x90] sm:$0xff] %vm2881, %v2858
        %2892 = vst.msk [vmem:[#allocation3 + $0xa0] sm:$0xff] %vm2881, %v2859
        %2893 = vst.msk [vmem:[#allocation3 + $0xb0] sm:$0xff] %vm2881, %v2860
        %2894 = vst.msk [vmem:[#allocation3 + $0xc0] sm:$0xff] %vm2881, %v2861
        %2895 = vst.msk [vmem:[#allocation3 + $0xd0] sm:$0xff] %vm2881, %v2862
        %2896 = vst.msk [vmem:[#allocation3 + $0xe0] sm:$0xff] %vm2881, %v2863
        %2897 = vst.msk [vmem:[#allocation3 + $0xf0] sm:$0xff] %vm2881, %v2864
        %2898 = vst.msk [vmem:[#allocation3 + $0x100] sm:$0xff] %vm2881, %v2865
        %2899 = vst.msk [vmem:[#allocation3 + $0x110] sm:$0xff] %vm2881, %v2866
        %2900 = vst.msk [vmem:[#allocation3 + $0x120] sm:$0xff] %vm2881, %v2867
        %2901 = vst.msk [vmem:[#allocation3 + $0x130] sm:$0xff] %vm2881, %v2868
        %2902 = vst.msk [vmem:[#allocation3 + $0x140] sm:$0xff] %vm2881, %v2869
        %2903 = vst.msk [vmem:[#allocation3 + $0x150] sm:$0xff] %vm2881, %v2870
        %2904 = vst.msk [vmem:[#allocation3 + $0x160] sm:$0xff] %vm2881, %v2871
        %2905 = vst.msk [vmem:[#allocation3 + $0x170] sm:$0xff] %vm2881, %v2872
        %2906 = vst.msk [vmem:[#allocation3 + $0x180] sm:$0xff] %vm2881, %v2873
        %2907 = vst.msk [vmem:[#allocation3 + $0x190] sm:$0xff] %vm2881, %v2874
        %2908 = vst.msk [vmem:[#allocation3 + $0x1a0] sm:$0xff] %vm2881, %v2875
        %2909 = vst.msk [vmem:[#allocation3 + $0x1b0] sm:$0xff] %vm2881, %v2876
        %2910 = vst.msk [vmem:[#allocation3 + $0x1c0] sm:$0xff] %vm2881, %v2877
        %2911 = vst.msk [vmem:[#allocation3 + $0x1d0] sm:$0xff] %vm2881, %v2878
        %2912 = vst.msk [vmem:[#allocation3 + $0x1e0] sm:$0xff] %vm2881, %v2879
        %2913 = vst.msk [vmem:[#allocation3 + $0x1f0] sm:$0xff] %vm2881, %v2880
        %s2915 = sor.u32 256, 80
        %2916 = vbcast.lane.b32.xlu0 %v2244, %s2915
        %v2917 = vpop.permute.xlu0 %2916
        %s2919 = sor.u32 256, 88
        %2920 = vbcast.lane.b32.xlu0 %v2244, %s2919
        %v2921 = vpop.permute.xlu0 %2920
        %s2923 = sor.u32 256, 80
        %2924 = vbcast.lane.b32.xlu0 %v2255, %s2923
        %v2925 = vpop.permute.xlu0 %2924
        %s2927 = sor.u32 256, 88
        %2928 = vbcast.lane.b32.xlu0 %v2255, %s2927
        %v2929 = vpop.permute.xlu0 %2928
        %s2931 = sor.u32 256, 80
        %2932 = vbcast.lane.b32.xlu0 %v2266, %s2931
        %v2933 = vpop.permute.xlu0 %2932
        %s2935 = sor.u32 256, 88
        %2936 = vbcast.lane.b32.xlu0 %v2266, %s2935
        %v2937 = vpop.permute.xlu0 %2936
        %s2939 = sor.u32 256, 80
        %2940 = vbcast.lane.b32.xlu0 %v2277, %s2939
        %v2941 = vpop.permute.xlu0 %2940
        %s2943 = sor.u32 256, 88
        %2944 = vbcast.lane.b32.xlu0 %v2277, %s2943
        %v2945 = vpop.permute.xlu0 %2944
        %s2947 = sor.u32 256, 80
        %2948 = vbcast.lane.b32.xlu0 %v2288, %s2947
        %v2949 = vpop.permute.xlu0 %2948
        %s2951 = sor.u32 256, 88
        %2952 = vbcast.lane.b32.xlu0 %v2288, %s2951
        %v2953 = vpop.permute.xlu0 %2952
        %s2955 = sor.u32 256, 80
        %2956 = vbcast.lane.b32.xlu0 %v2299, %s2955
        %v2957 = vpop.permute.xlu0 %2956
        %s2959 = sor.u32 256, 88
        %2960 = vbcast.lane.b32.xlu0 %v2299, %s2959
        %v2961 = vpop.permute.xlu0 %2960
        %s2963 = sor.u32 256, 80
        %2964 = vbcast.lane.b32.xlu0 %v2310, %s2963
        %v2965 = vpop.permute.xlu0 %2964
        %s2967 = sor.u32 256, 88
        %2968 = vbcast.lane.b32.xlu0 %v2310, %s2967
        %v2969 = vpop.permute.xlu0 %2968
        %s2971 = sor.u32 256, 80
        %2972 = vbcast.lane.b32.xlu0 %v2321, %s2971
        %v2973 = vpop.permute.xlu0 %2972
        %s2975 = sor.u32 256, 88
        %2976 = vbcast.lane.b32.xlu0 %v2321, %s2975
        %v2977 = vpop.permute.xlu0 %2976
        %s2979 = sor.u32 256, 80
        %2980 = vbcast.lane.b32.xlu0 %v2332, %s2979
        %v2981 = vpop.permute.xlu0 %2980
        %s2983 = sor.u32 256, 88
        %2984 = vbcast.lane.b32.xlu0 %v2332, %s2983
        %v2985 = vpop.permute.xlu0 %2984
        %s2987 = sor.u32 256, 80
        %2988 = vbcast.lane.b32.xlu0 %v2343, %s2987
        %v2989 = vpop.permute.xlu0 %2988
        %s2991 = sor.u32 256, 88
        %2992 = vbcast.lane.b32.xlu0 %v2343, %s2991
        %v2993 = vpop.permute.xlu0 %2992
        %s2995 = sor.u32 256, 80
        %2996 = vbcast.lane.b32.xlu0 %v2354, %s2995
        %v2997 = vpop.permute.xlu0 %2996
        %s2999 = sor.u32 256, 88
        %3000 = vbcast.lane.b32.xlu0 %v2354, %s2999
        %v3001 = vpop.permute.xlu0 %3000
        %s3003 = sor.u32 256, 80
        %3004 = vbcast.lane.b32.xlu0 %v2365, %s3003
        %v3005 = vpop.permute.xlu0 %3004
        %s3007 = sor.u32 256, 88
        %3008 = vbcast.lane.b32.xlu0 %v2365, %s3007
        %v3009 = vpop.permute.xlu0 %3008
        %s3011 = sor.u32 256, 80
        %3012 = vbcast.lane.b32.xlu0 %v2376, %s3011
        %v3013 = vpop.permute.xlu0 %3012
        %s3015 = sor.u32 256, 88
        %3016 = vbcast.lane.b32.xlu0 %v2376, %s3015
        %v3017 = vpop.permute.xlu0 %3016
        %s3019 = sor.u32 256, 80
        %3020 = vbcast.lane.b32.xlu0 %v2387, %s3019
        %v3021 = vpop.permute.xlu0 %3020
        %s3023 = sor.u32 256, 88
        %3024 = vbcast.lane.b32.xlu0 %v2387, %s3023
        %v3025 = vpop.permute.xlu0 %3024
        %s3027 = sor.u32 256, 80
        %3028 = vbcast.lane.b32.xlu0 %v2398, %s3027
        %v3029 = vpop.permute.xlu0 %3028
        %s3031 = sor.u32 256, 88
        %3032 = vbcast.lane.b32.xlu0 %v2398, %s3031
        %v3033 = vpop.permute.xlu0 %3032
        %s3035 = sor.u32 256, 80
        %3036 = vbcast.lane.b32.xlu0 %v2409, %s3035
        %v3037 = vpop.permute.xlu0 %3036
        %s3039 = sor.u32 256, 88
        %3040 = vbcast.lane.b32.xlu0 %v2409, %s3039
        %v3041 = vpop.permute.xlu0 %3040
        %3042 = vst.msk [vmem:[#allocation4] sm:$0xff] %vm2881, %v2917
        %3043 = vst.msk [vmem:[#allocation4 + $0x10] sm:$0xff] %vm2881, %v2921
        %3044 = vst.msk [vmem:[#allocation4 + $0x20] sm:$0xff] %vm2881, %v2925
        %3045 = vst.msk [vmem:[#allocation4 + $0x30] sm:$0xff] %vm2881, %v2929
        %3046 = vst.msk [vmem:[#allocation4 + $0x40] sm:$0xff] %vm2881, %v2933
        %3047 = vst.msk [vmem:[#allocation4 + $0x50] sm:$0xff] %vm2881, %v2937
        %3048 = vst.msk [vmem:[#allocation4 + $0x60] sm:$0xff] %vm2881, %v2941
        %3049 = vst.msk [vmem:[#allocation4 + $0x70] sm:$0xff] %vm2881, %v2945
        %3050 = vst.msk [vmem:[#allocation4 + $0x80] sm:$0xff] %vm2881, %v2949
        %3051 = vst.msk [vmem:[#allocation4 + $0x90] sm:$0xff] %vm2881, %v2953
        %3052 = vst.msk [vmem:[#allocation4 + $0xa0] sm:$0xff] %vm2881, %v2957
        %3053 = vst.msk [vmem:[#allocation4 + $0xb0] sm:$0xff] %vm2881, %v2961
        %3054 = vst.msk [vmem:[#allocation4 + $0xc0] sm:$0xff] %vm2881, %v2965
        %3055 = vst.msk [vmem:[#allocation4 + $0xd0] sm:$0xff] %vm2881, %v2969
        %3056 = vst.msk [vmem:[#allocation4 + $0xe0] sm:$0xff] %vm2881, %v2973
        %3057 = vst.msk [vmem:[#allocation4 + $0xf0] sm:$0xff] %vm2881, %v2977
        %3058 = vst.msk [vmem:[#allocation4 + $0x100] sm:$0xff] %vm2881, %v2981
        %3059 = vst.msk [vmem:[#allocation4 + $0x110] sm:$0xff] %vm2881, %v2985
        %3060 = vst.msk [vmem:[#allocation4 + $0x120] sm:$0xff] %vm2881, %v2989
        %3061 = vst.msk [vmem:[#allocation4 + $0x130] sm:$0xff] %vm2881, %v2993
        %3062 = vst.msk [vmem:[#allocation4 + $0x140] sm:$0xff] %vm2881, %v2997
        %3063 = vst.msk [vmem:[#allocation4 + $0x150] sm:$0xff] %vm2881, %v3001
        %3064 = vst.msk [vmem:[#allocation4 + $0x160] sm:$0xff] %vm2881, %v3005
        %3065 = vst.msk [vmem:[#allocation4 + $0x170] sm:$0xff] %vm2881, %v3009
        %3066 = vst.msk [vmem:[#allocation4 + $0x180] sm:$0xff] %vm2881, %v3013
        %3067 = vst.msk [vmem:[#allocation4 + $0x190] sm:$0xff] %vm2881, %v3017
        %3068 = vst.msk [vmem:[#allocation4 + $0x1a0] sm:$0xff] %vm2881, %v3021
        %3069 = vst.msk [vmem:[#allocation4 + $0x1b0] sm:$0xff] %vm2881, %v3025
        %3070 = vst.msk [vmem:[#allocation4 + $0x1c0] sm:$0xff] %vm2881, %v3029
        %3071 = vst.msk [vmem:[#allocation4 + $0x1d0] sm:$0xff] %vm2881, %v3033
        %3072 = vst.msk [vmem:[#allocation4 + $0x1e0] sm:$0xff] %vm2881, %v3037
        %3073 = vst.msk [vmem:[#allocation4 + $0x1f0] sm:$0xff] %vm2881, %v3041
        %v3076 = vcombine.high %v1614, %v1614
        %v3078 = vunpack.c.l.s4 1966171168
        %v3079 = vunpack.c.0.s8 %v3078
        %v3080 = vlaneseq
        %v3081 = vshrl.u32 %v3080, 7
        %v3082 = vsub.s32 %v3079, %v3081
        %v3083 = vrot.slane %v1614, %v3082
        %v3085 = vunpack.c.l.s4 1966171168
        %v3086 = vunpack.c.0.s8 %v3085
        %v3087 = vlaneseq
        %v3088 = vshrl.u32 %v3087, 7
        %v3089 = vsub.s32 %v3086, %v3088
        %v3090 = vrot.slane %v3076, %v3089
        %v3091 = vcombine.high %v3083, %v3083
        %v3092 = vcombine.high %v3090, %v3090
        %v3094 = vunpack.c.l.s4 1966171168
        %v3095 = vunpack.c.0.s8 %v3094
        %v3096 = vlaneseq
        %v3097 = vshrl.u32 %v3096, 7
        %v3098 = vsub.s32 %v3095, %v3097
        %v3099 = vrot.slane %v3083, %v3098
        %v3101 = vunpack.c.l.s4 1966171168
        %v3102 = vunpack.c.0.s8 %v3101
        %v3103 = vlaneseq
        %v3104 = vshrl.u32 %v3103, 7
        %v3105 = vsub.s32 %v3102, %v3104
        %v3106 = vrot.slane %v3090, %v3105
        %v3108 = vunpack.c.l.s4 1966171168
        %v3109 = vunpack.c.0.s8 %v3108
        %v3110 = vlaneseq
        %v3111 = vshrl.u32 %v3110, 7
        %v3112 = vsub.s32 %v3109, %v3111
        %v3113 = vrot.slane %v3091, %v3112
        %v3115 = vunpack.c.l.s4 1966171168
        %v3116 = vunpack.c.0.s8 %v3115
        %v3117 = vlaneseq
        %v3118 = vshrl.u32 %v3117, 7
        %v3119 = vsub.s32 %v3116, %v3118
        %v3120 = vrot.slane %v3092, %v3119
        %v3121 = vcombine.high %v3099, %v3099
        %v3122 = vcombine.high %v3106, %v3106
        %v3123 = vcombine.high %v3113, %v3113
        %v3124 = vcombine.high %v3120, %v3120
        %v3125 = vcombine.high %v1616, %v1616
        %v3127 = vunpack.c.l.s4 1966171168
        %v3128 = vunpack.c.0.s8 %v3127
        %v3129 = vlaneseq
        %v3130 = vshrl.u32 %v3129, 7
        %v3131 = vsub.s32 %v3128, %v3130
        %v3132 = vrot.slane %v1616, %v3131
        %v3134 = vunpack.c.l.s4 1966171168
        %v3135 = vunpack.c.0.s8 %v3134
        %v3136 = vlaneseq
        %v3137 = vshrl.u32 %v3136, 7
        %v3138 = vsub.s32 %v3135, %v3137
        %v3139 = vrot.slane %v3125, %v3138
        %v3140 = vcombine.high %v3132, %v3132
        %v3141 = vcombine.high %v3139, %v3139
        %v3143 = vunpack.c.l.s4 1966171168
        %v3144 = vunpack.c.0.s8 %v3143
        %v3145 = vlaneseq
        %v3146 = vshrl.u32 %v3145, 7
        %v3147 = vsub.s32 %v3144, %v3146
        %v3148 = vrot.slane %v3132, %v3147
        %v3150 = vunpack.c.l.s4 1966171168
        %v3151 = vunpack.c.0.s8 %v3150
        %v3152 = vlaneseq
        %v3153 = vshrl.u32 %v3152, 7
        %v3154 = vsub.s32 %v3151, %v3153
        %v3155 = vrot.slane %v3139, %v3154
        %v3157 = vunpack.c.l.s4 1966171168
        %v3158 = vunpack.c.0.s8 %v3157
        %v3159 = vlaneseq
        %v3160 = vshrl.u32 %v3159, 7
        %v3161 = vsub.s32 %v3158, %v3160
        %v3162 = vrot.slane %v3140, %v3161
        %v3164 = vunpack.c.l.s4 1966171168
        %v3165 = vunpack.c.0.s8 %v3164
        %v3166 = vlaneseq
        %v3167 = vshrl.u32 %v3166, 7
        %v3168 = vsub.s32 %v3165, %v3167
        %v3169 = vrot.slane %v3141, %v3168
        %v3170 = vcombine.high %v3148, %v3148
        %v3171 = vcombine.high %v3155, %v3155
        %v3172 = vcombine.high %v3162, %v3162
        %v3173 = vcombine.high %v3169, %v3169
        %s3175 = sor.u32 256, 32
        %3176 = vbcast.lane.b32.xlu0 %v2244, %s3175
        %v3177 = vpop.permute.xlu0 %3176
        %s3179 = sor.u32 256, 40
        %3180 = vbcast.lane.b32.xlu0 %v2244, %s3179
        %v3181 = vpop.permute.xlu0 %3180
        %s3183 = sor.u32 256, 32
        %3184 = vbcast.lane.b32.xlu0 %v2255, %s3183
        %v3185 = vpop.permute.xlu0 %3184
        %s3187 = sor.u32 256, 40
        %3188 = vbcast.lane.b32.xlu0 %v2255, %s3187
        %v3189 = vpop.permute.xlu0 %3188
        %s3191 = sor.u32 256, 32
        %3192 = vbcast.lane.b32.xlu0 %v2266, %s3191
        %v3193 = vpop.permute.xlu0 %3192
        %s3195 = sor.u32 256, 40
        %3196 = vbcast.lane.b32.xlu0 %v2266, %s3195
        %v3197 = vpop.permute.xlu0 %3196
        %s3199 = sor.u32 256, 32
        %3200 = vbcast.lane.b32.xlu0 %v2277, %s3199
        %v3201 = vpop.permute.xlu0 %3200
        %s3203 = sor.u32 256, 40
        %3204 = vbcast.lane.b32.xlu0 %v2277, %s3203
        %v3205 = vpop.permute.xlu0 %3204
        %s3207 = sor.u32 256, 32
        %3208 = vbcast.lane.b32.xlu0 %v2288, %s3207
        %v3209 = vpop.permute.xlu0 %3208
        %s3211 = sor.u32 256, 40
        %3212 = vbcast.lane.b32.xlu0 %v2288, %s3211
        %v3213 = vpop.permute.xlu0 %3212
        %s3215 = sor.u32 256, 32
        %3216 = vbcast.lane.b32.xlu0 %v2299, %s3215
        %v3217 = vpop.permute.xlu0 %3216
        %s3219 = sor.u32 256, 40
        %3220 = vbcast.lane.b32.xlu0 %v2299, %s3219
        %v3221 = vpop.permute.xlu0 %3220
        %s3223 = sor.u32 256, 32
        %3224 = vbcast.lane.b32.xlu0 %v2310, %s3223
        %v3225 = vpop.permute.xlu0 %3224
        %s3227 = sor.u32 256, 40
        %3228 = vbcast.lane.b32.xlu0 %v2310, %s3227
        %v3229 = vpop.permute.xlu0 %3228
        %s3231 = sor.u32 256, 32
        %3232 = vbcast.lane.b32.xlu0 %v2321, %s3231
        %v3233 = vpop.permute.xlu0 %3232
        %s3235 = sor.u32 256, 40
        %3236 = vbcast.lane.b32.xlu0 %v2321, %s3235
        %v3237 = vpop.permute.xlu0 %3236
        %s3239 = sor.u32 256, 32
        %3240 = vbcast.lane.b32.xlu0 %v2332, %s3239
        %v3241 = vpop.permute.xlu0 %3240
        %s3243 = sor.u32 256, 40
        %3244 = vbcast.lane.b32.xlu0 %v2332, %s3243
        %v3245 = vpop.permute.xlu0 %3244
        %s3247 = sor.u32 256, 32
        %3248 = vbcast.lane.b32.xlu0 %v2343, %s3247
        %v3249 = vpop.permute.xlu0 %3248
        %s3251 = sor.u32 256, 40
        %3252 = vbcast.lane.b32.xlu0 %v2343, %s3251
        %v3253 = vpop.permute.xlu0 %3252
        %s3255 = sor.u32 256, 32
        %3256 = vbcast.lane.b32.xlu0 %v2354, %s3255
        %v3257 = vpop.permute.xlu0 %3256
        %s3259 = sor.u32 256, 40
        %3260 = vbcast.lane.b32.xlu0 %v2354, %s3259
        %v3261 = vpop.permute.xlu0 %3260
        %s3263 = sor.u32 256, 32
        %3264 = vbcast.lane.b32.xlu0 %v2365, %s3263
        %v3265 = vpop.permute.xlu0 %3264
        %s3267 = sor.u32 256, 40
        %3268 = vbcast.lane.b32.xlu0 %v2365, %s3267
        %v3269 = vpop.permute.xlu0 %3268
        %s3271 = sor.u32 256, 32
        %3272 = vbcast.lane.b32.xlu0 %v2376, %s3271
        %v3273 = vpop.permute.xlu0 %3272
        %s3275 = sor.u32 256, 40
        %3276 = vbcast.lane.b32.xlu0 %v2376, %s3275
        %v3277 = vpop.permute.xlu0 %3276
        %s3279 = sor.u32 256, 32
        %3280 = vbcast.lane.b32.xlu0 %v2387, %s3279
        %v3281 = vpop.permute.xlu0 %3280
        %s3283 = sor.u32 256, 40
        %3284 = vbcast.lane.b32.xlu0 %v2387, %s3283
        %v3285 = vpop.permute.xlu0 %3284
        %s3287 = sor.u32 256, 32
        %3288 = vbcast.lane.b32.xlu0 %v2398, %s3287
        %v3289 = vpop.permute.xlu0 %3288
        %s3291 = sor.u32 256, 40
        %3292 = vbcast.lane.b32.xlu0 %v2398, %s3291
        %v3293 = vpop.permute.xlu0 %3292
        %s3295 = sor.u32 256, 32
        %3296 = vbcast.lane.b32.xlu0 %v2409, %s3295
        %v3297 = vpop.permute.xlu0 %3296
        %s3299 = sor.u32 256, 40
        %3300 = vbcast.lane.b32.xlu0 %v2409, %s3299
        %v3301 = vpop.permute.xlu0 %3300
        %v3302 = vlaneseq
        %v3303 = vshrl.u32 %v3302, 7
        %v3304 = vsub.s32 0, %v3303
        %v3305 = vrot.slane %v3099, %v3304
        %v3306 = vlaneseq
        %v3307 = vshrl.u32 %v3306, 7
        %v3308 = vsub.s32 0, %v3307
        %v3309 = vrot.slane %v3113, %v3308
        %v3310 = vlaneseq
        %v3311 = vshrl.u32 %v3310, 7
        %v3312 = vsub.s32 0, %v3311
        %v3313 = vrot.slane %v3121, %v3312
        %v3314 = vlaneseq
        %v3315 = vshrl.u32 %v3314, 7
        %v3316 = vsub.s32 0, %v3315
        %v3317 = vrot.slane %v3123, %v3316
        %v3318 = vlaneseq
        %v3319 = vshrl.u32 %v3318, 7
        %v3320 = vsub.s32 0, %v3319
        %v3321 = vrot.slane %v3106, %v3320
        %v3322 = vlaneseq
        %v3323 = vshrl.u32 %v3322, 7
        %v3324 = vsub.s32 0, %v3323
        %v3325 = vrot.slane %v3120, %v3324
        %v3326 = vlaneseq
        %v3327 = vshrl.u32 %v3326, 7
        %v3328 = vsub.s32 0, %v3327
        %v3329 = vrot.slane %v3122, %v3328
        %v3330 = vlaneseq
        %v3331 = vshrl.u32 %v3330, 7
        %v3332 = vsub.s32 0, %v3331
        %v3333 = vrot.slane %v3124, %v3332
        %v3334 = vlaneseq
        %v3335 = vshrl.u32 %v3334, 7
        %v3336 = vsub.s32 0, %v3335
        %v3337 = vrot.slane %v3148, %v3336
        %v3338 = vlaneseq
        %v3339 = vshrl.u32 %v3338, 7
        %v3340 = vsub.s32 0, %v3339
        %v3341 = vrot.slane %v3162, %v3340
        %v3342 = vlaneseq
        %v3343 = vshrl.u32 %v3342, 7
        %v3344 = vsub.s32 0, %v3343
        %v3345 = vrot.slane %v3170, %v3344
        %v3346 = vlaneseq
        %v3347 = vshrl.u32 %v3346, 7
        %v3348 = vsub.s32 0, %v3347
        %v3349 = vrot.slane %v3172, %v3348
        %v3350 = vlaneseq
        %v3351 = vshrl.u32 %v3350, 7
        %v3352 = vsub.s32 0, %v3351
        %v3353 = vrot.slane %v3155, %v3352
        %v3354 = vlaneseq
        %v3355 = vshrl.u32 %v3354, 7
        %v3356 = vsub.s32 0, %v3355
        %v3357 = vrot.slane %v3169, %v3356
        %v3358 = vlaneseq
        %v3359 = vshrl.u32 %v3358, 7
        %v3360 = vsub.s32 0, %v3359
        %v3361 = vrot.slane %v3171, %v3360
        %v3362 = vlaneseq
        %v3363 = vshrl.u32 %v3362, 7
        %v3364 = vsub.s32 0, %v3363
        %v3365 = vrot.slane %v3173, %v3364
        %v3382 = vmul.f32 %v3305, %v3177
        %v3383 = vmul.f32 %v3305, %v3181
        %v3384 = vmul.f32 %v3309, %v3185
        %v3385 = vmul.f32 %v3309, %v3189
        %v3386 = vmul.f32 %v3313, %v3193
        %v3387 = vmul.f32 %v3313, %v3197
        %v3388 = vmul.f32 %v3317, %v3201
        %v3389 = vmul.f32 %v3317, %v3205
        %v3390 = vmul.f32 %v3321, %v3209
        %v3391 = vmul.f32 %v3321, %v3213
        %v3392 = vmul.f32 %v3325, %v3217
        %v3393 = vmul.f32 %v3325, %v3221
        %v3394 = vmul.f32 %v3329, %v3225
        %v3395 = vmul.f32 %v3329, %v3229
        %v3396 = vmul.f32 %v3333, %v3233
        %v3397 = vmul.f32 %v3333, %v3237
        %v3398 = vmul.f32 %v3337, %v3241
        %v3399 = vmul.f32 %v3337, %v3245
        %v3400 = vmul.f32 %v3341, %v3249
        %v3401 = vmul.f32 %v3341, %v3253
        %v3402 = vmul.f32 %v3345, %v3257
        %v3403 = vmul.f32 %v3345, %v3261
        %v3404 = vmul.f32 %v3349, %v3265
        %v3405 = vmul.f32 %v3349, %v3269
        %v3406 = vmul.f32 %v3353, %v3273
        %v3407 = vmul.f32 %v3353, %v3277
        %v3408 = vmul.f32 %v3357, %v3281
        %v3409 = vmul.f32 %v3357, %v3285
        %v3410 = vmul.f32 %v3361, %v3289
        %v3411 = vmul.f32 %v3361, %v3293
        %v3412 = vmul.f32 %v3365, %v3297
        %v3413 = vmul.f32 %v3365, %v3301
        %3414 = vst.msk [vmem:[#allocation3 + $0x8] sm:$0xff] %vm1232, %v3382
        %3415 = vst.msk [vmem:[#allocation3 + $0x18] sm:$0xff] %vm1232, %v3383
        %3416 = vst.msk [vmem:[#allocation3 + $0x28] sm:$0xff] %vm1232, %v3384
        %3417 = vst.msk [vmem:[#allocation3 + $0x38] sm:$0xff] %vm1232, %v3385
        %3418 = vst.msk [vmem:[#allocation3 + $0x48] sm:$0xff] %vm1232, %v3386
        %3419 = vst.msk [vmem:[#allocation3 + $0x58] sm:$0xff] %vm1232, %v3387
        %3420 = vst.msk [vmem:[#allocation3 + $0x68] sm:$0xff] %vm1232, %v3388
        %3421 = vst.msk [vmem:[#allocation3 + $0x78] sm:$0xff] %vm1232, %v3389
        %3422 = vst.msk [vmem:[#allocation3 + $0x88] sm:$0xff] %vm1232, %v3390
        %3423 = vst.msk [vmem:[#allocation3 + $0x98] sm:$0xff] %vm1232, %v3391
        %3424 = vst.msk [vmem:[#allocation3 + $0xa8] sm:$0xff] %vm1232, %v3392
        %3425 = vst.msk [vmem:[#allocation3 + $0xb8] sm:$0xff] %vm1232, %v3393
        %3426 = vst.msk [vmem:[#allocation3 + $0xc8] sm:$0xff] %vm1232, %v3394
        %3427 = vst.msk [vmem:[#allocation3 + $0xd8] sm:$0xff] %vm1232, %v3395
        %3428 = vst.msk [vmem:[#allocation3 + $0xe8] sm:$0xff] %vm1232, %v3396
        %3429 = vst.msk [vmem:[#allocation3 + $0xf8] sm:$0xff] %vm1232, %v3397
        %3430 = vst.msk [vmem:[#allocation3 + $0x108] sm:$0xff] %vm1232, %v3398
        %3431 = vst.msk [vmem:[#allocation3 + $0x118] sm:$0xff] %vm1232, %v3399
        %3432 = vst.msk [vmem:[#allocation3 + $0x128] sm:$0xff] %vm1232, %v3400
        %3433 = vst.msk [vmem:[#allocation3 + $0x138] sm:$0xff] %vm1232, %v3401
        %3434 = vst.msk [vmem:[#allocation3 + $0x148] sm:$0xff] %vm1232, %v3402
        %3435 = vst.msk [vmem:[#allocation3 + $0x158] sm:$0xff] %vm1232, %v3403
        %3436 = vst.msk [vmem:[#allocation3 + $0x168] sm:$0xff] %vm1232, %v3404
        %3437 = vst.msk [vmem:[#allocation3 + $0x178] sm:$0xff] %vm1232, %v3405
        %3438 = vst.msk [vmem:[#allocation3 + $0x188] sm:$0xff] %vm1232, %v3406
        %3439 = vst.msk [vmem:[#allocation3 + $0x198] sm:$0xff] %vm1232, %v3407
        %3440 = vst.msk [vmem:[#allocation3 + $0x1a8] sm:$0xff] %vm1232, %v3408
        %3441 = vst.msk [vmem:[#allocation3 + $0x1b8] sm:$0xff] %vm1232, %v3409
        %3442 = vst.msk [vmem:[#allocation3 + $0x1c8] sm:$0xff] %vm1232, %v3410
        %3443 = vst.msk [vmem:[#allocation3 + $0x1d8] sm:$0xff] %vm1232, %v3411
        %3444 = vst.msk [vmem:[#allocation3 + $0x1e8] sm:$0xff] %vm1232, %v3412
        %3445 = vst.msk [vmem:[#allocation3 + $0x1f8] sm:$0xff] %vm1232, %v3413
        %s3447 = sor.u32 256, 96
        %3448 = vbcast.lane.b32.xlu0 %v2244, %s3447
        %v3449 = vpop.permute.xlu0 %3448
        %s3451 = sor.u32 256, 104
        %3452 = vbcast.lane.b32.xlu0 %v2244, %s3451
        %v3453 = vpop.permute.xlu0 %3452
        %s3455 = sor.u32 256, 96
        %3456 = vbcast.lane.b32.xlu0 %v2255, %s3455
        %v3457 = vpop.permute.xlu0 %3456
        %s3459 = sor.u32 256, 104
        %3460 = vbcast.lane.b32.xlu0 %v2255, %s3459
        %v3461 = vpop.permute.xlu0 %3460
        %s3463 = sor.u32 256, 96
        %3464 = vbcast.lane.b32.xlu0 %v2266, %s3463
        %v3465 = vpop.permute.xlu0 %3464
        %s3467 = sor.u32 256, 104
        %3468 = vbcast.lane.b32.xlu0 %v2266, %s3467
        %v3469 = vpop.permute.xlu0 %3468
        %s3471 = sor.u32 256, 96
        %3472 = vbcast.lane.b32.xlu0 %v2277, %s3471
        %v3473 = vpop.permute.xlu0 %3472
        %s3475 = sor.u32 256, 104
        %3476 = vbcast.lane.b32.xlu0 %v2277, %s3475
        %v3477 = vpop.permute.xlu0 %3476
        %s3479 = sor.u32 256, 96
        %3480 = vbcast.lane.b32.xlu0 %v2288, %s3479
        %v3481 = vpop.permute.xlu0 %3480
        %s3483 = sor.u32 256, 104
        %3484 = vbcast.lane.b32.xlu0 %v2288, %s3483
        %v3485 = vpop.permute.xlu0 %3484
        %s3487 = sor.u32 256, 96
        %3488 = vbcast.lane.b32.xlu0 %v2299, %s3487
        %v3489 = vpop.permute.xlu0 %3488
        %s3491 = sor.u32 256, 104
        %3492 = vbcast.lane.b32.xlu0 %v2299, %s3491
        %v3493 = vpop.permute.xlu0 %3492
        %s3495 = sor.u32 256, 96
        %3496 = vbcast.lane.b32.xlu0 %v2310, %s3495
        %v3497 = vpop.permute.xlu0 %3496
        %s3499 = sor.u32 256, 104
        %3500 = vbcast.lane.b32.xlu0 %v2310, %s3499
        %v3501 = vpop.permute.xlu0 %3500
        %s3503 = sor.u32 256, 96
        %3504 = vbcast.lane.b32.xlu0 %v2321, %s3503
        %v3505 = vpop.permute.xlu0 %3504
        %s3507 = sor.u32 256, 104
        %3508 = vbcast.lane.b32.xlu0 %v2321, %s3507
        %v3509 = vpop.permute.xlu0 %3508
        %s3511 = sor.u32 256, 96
        %3512 = vbcast.lane.b32.xlu0 %v2332, %s3511
        %v3513 = vpop.permute.xlu0 %3512
        %s3515 = sor.u32 256, 104
        %3516 = vbcast.lane.b32.xlu0 %v2332, %s3515
        %v3517 = vpop.permute.xlu0 %3516
        %s3519 = sor.u32 256, 96
        %3520 = vbcast.lane.b32.xlu0 %v2343, %s3519
        %v3521 = vpop.permute.xlu0 %3520
        %s3523 = sor.u32 256, 104
        %3524 = vbcast.lane.b32.xlu0 %v2343, %s3523
        %v3525 = vpop.permute.xlu0 %3524
        %s3527 = sor.u32 256, 96
        %3528 = vbcast.lane.b32.xlu0 %v2354, %s3527
        %v3529 = vpop.permute.xlu0 %3528
        %s3531 = sor.u32 256, 104
        %3532 = vbcast.lane.b32.xlu0 %v2354, %s3531
        %v3533 = vpop.permute.xlu0 %3532
        %s3535 = sor.u32 256, 96
        %3536 = vbcast.lane.b32.xlu0 %v2365, %s3535
        %v3537 = vpop.permute.xlu0 %3536
        %s3539 = sor.u32 256, 104
        %3540 = vbcast.lane.b32.xlu0 %v2365, %s3539
        %v3541 = vpop.permute.xlu0 %3540
        %s3543 = sor.u32 256, 96
        %3544 = vbcast.lane.b32.xlu0 %v2376, %s3543
        %v3545 = vpop.permute.xlu0 %3544
        %s3547 = sor.u32 256, 104
        %3548 = vbcast.lane.b32.xlu0 %v2376, %s3547
        %v3549 = vpop.permute.xlu0 %3548
        %s3551 = sor.u32 256, 96
        %3552 = vbcast.lane.b32.xlu0 %v2387, %s3551
        %v3553 = vpop.permute.xlu0 %3552
        %s3555 = sor.u32 256, 104
        %3556 = vbcast.lane.b32.xlu0 %v2387, %s3555
        %v3557 = vpop.permute.xlu0 %3556
        %s3559 = sor.u32 256, 96
        %3560 = vbcast.lane.b32.xlu0 %v2398, %s3559
        %v3561 = vpop.permute.xlu0 %3560
        %s3563 = sor.u32 256, 104
        %3564 = vbcast.lane.b32.xlu0 %v2398, %s3563
        %v3565 = vpop.permute.xlu0 %3564
        %s3567 = sor.u32 256, 96
        %3568 = vbcast.lane.b32.xlu0 %v2409, %s3567
        %v3569 = vpop.permute.xlu0 %3568
        %s3571 = sor.u32 256, 104
        %3572 = vbcast.lane.b32.xlu0 %v2409, %s3571
        %v3573 = vpop.permute.xlu0 %3572
        %3574 = vst.msk [vmem:[#allocation4 + $0x8] sm:$0xff] %vm1232, %v3449
        %3575 = vst.msk [vmem:[#allocation4 + $0x18] sm:$0xff] %vm1232, %v3453
        %3576 = vst.msk [vmem:[#allocation4 + $0x28] sm:$0xff] %vm1232, %v3457
        %3577 = vst.msk [vmem:[#allocation4 + $0x38] sm:$0xff] %vm1232, %v3461
        %3578 = vst.msk [vmem:[#allocation4 + $0x48] sm:$0xff] %vm1232, %v3465
        %3579 = vst.msk [vmem:[#allocation4 + $0x58] sm:$0xff] %vm1232, %v3469
        %3580 = vst.msk [vmem:[#allocation4 + $0x68] sm:$0xff] %vm1232, %v3473
        %3581 = vst.msk [vmem:[#allocation4 + $0x78] sm:$0xff] %vm1232, %v3477
        %3582 = vst.msk [vmem:[#allocation4 + $0x88] sm:$0xff] %vm1232, %v3481
        %3583 = vst.msk [vmem:[#allocation4 + $0x98] sm:$0xff] %vm1232, %v3485
        %3584 = vst.msk [vmem:[#allocation4 + $0xa8] sm:$0xff] %vm1232, %v3489
        %3585 = vst.msk [vmem:[#allocation4 + $0xb8] sm:$0xff] %vm1232, %v3493
        %3586 = vst.msk [vmem:[#allocation4 + $0xc8] sm:$0xff] %vm1232, %v3497
        %3587 = vst.msk [vmem:[#allocation4 + $0xd8] sm:$0xff] %vm1232, %v3501
        %3588 = vst.msk [vmem:[#allocation4 + $0xe8] sm:$0xff] %vm1232, %v3505
        %3589 = vst.msk [vmem:[#allocation4 + $0xf8] sm:$0xff] %vm1232, %v3509
        %3590 = vst.msk [vmem:[#allocation4 + $0x108] sm:$0xff] %vm1232, %v3513
        %3591 = vst.msk [vmem:[#allocation4 + $0x118] sm:$0xff] %vm1232, %v3517
        %3592 = vst.msk [vmem:[#allocation4 + $0x128] sm:$0xff] %vm1232, %v3521
        %3593 = vst.msk [vmem:[#allocation4 + $0x138] sm:$0xff] %vm1232, %v3525
        %3594 = vst.msk [vmem:[#allocation4 + $0x148] sm:$0xff] %vm1232, %v3529
        %3595 = vst.msk [vmem:[#allocation4 + $0x158] sm:$0xff] %vm1232, %v3533
        %3596 = vst.msk [vmem:[#allocation4 + $0x168] sm:$0xff] %vm1232, %v3537
        %3597 = vst.msk [vmem:[#allocation4 + $0x178] sm:$0xff] %vm1232, %v3541
        %3598 = vst.msk [vmem:[#allocation4 + $0x188] sm:$0xff] %vm1232, %v3545
        %3599 = vst.msk [vmem:[#allocation4 + $0x198] sm:$0xff] %vm1232, %v3549
        %3600 = vst.msk [vmem:[#allocation4 + $0x1a8] sm:$0xff] %vm1232, %v3553
        %3601 = vst.msk [vmem:[#allocation4 + $0x1b8] sm:$0xff] %vm1232, %v3557
        %3602 = vst.msk [vmem:[#allocation4 + $0x1c8] sm:$0xff] %vm1232, %v3561
        %3603 = vst.msk [vmem:[#allocation4 + $0x1d8] sm:$0xff] %vm1232, %v3565
        %3604 = vst.msk [vmem:[#allocation4 + $0x1e8] sm:$0xff] %vm1232, %v3569
        %3605 = vst.msk [vmem:[#allocation4 + $0x1f8] sm:$0xff] %vm1232, %v3573
        %s3607 = sor.u32 256, 48
        %3608 = vbcast.lane.b32.xlu0 %v2244, %s3607
        %v3609 = vpop.permute.xlu0 %3608
        %s3611 = sor.u32 256, 56
        %3612 = vbcast.lane.b32.xlu0 %v2244, %s3611
        %v3613 = vpop.permute.xlu0 %3612
        %s3615 = sor.u32 256, 48
        %3616 = vbcast.lane.b32.xlu0 %v2255, %s3615
        %v3617 = vpop.permute.xlu0 %3616
        %s3619 = sor.u32 256, 56
        %3620 = vbcast.lane.b32.xlu0 %v2255, %s3619
        %v3621 = vpop.permute.xlu0 %3620
        %s3623 = sor.u32 256, 48
        %3624 = vbcast.lane.b32.xlu0 %v2266, %s3623
        %v3625 = vpop.permute.xlu0 %3624
        %s3627 = sor.u32 256, 56
        %3628 = vbcast.lane.b32.xlu0 %v2266, %s3627
        %v3629 = vpop.permute.xlu0 %3628
        %s3631 = sor.u32 256, 48
        %3632 = vbcast.lane.b32.xlu0 %v2277, %s3631
        %v3633 = vpop.permute.xlu0 %3632
        %s3635 = sor.u32 256, 56
        %3636 = vbcast.lane.b32.xlu0 %v2277, %s3635
        %v3637 = vpop.permute.xlu0 %3636
        %s3639 = sor.u32 256, 48
        %3640 = vbcast.lane.b32.xlu0 %v2288, %s3639
        %v3641 = vpop.permute.xlu0 %3640
        %s3643 = sor.u32 256, 56
        %3644 = vbcast.lane.b32.xlu0 %v2288, %s3643
        %v3645 = vpop.permute.xlu0 %3644
        %s3647 = sor.u32 256, 48
        %3648 = vbcast.lane.b32.xlu0 %v2299, %s3647
        %v3649 = vpop.permute.xlu0 %3648
        %s3651 = sor.u32 256, 56
        %3652 = vbcast.lane.b32.xlu0 %v2299, %s3651
        %v3653 = vpop.permute.xlu0 %3652
        %s3655 = sor.u32 256, 48
        %3656 = vbcast.lane.b32.xlu0 %v2310, %s3655
        %v3657 = vpop.permute.xlu0 %3656
        %s3659 = sor.u32 256, 56
        %3660 = vbcast.lane.b32.xlu0 %v2310, %s3659
        %v3661 = vpop.permute.xlu0 %3660
        %s3663 = sor.u32 256, 48
        %3664 = vbcast.lane.b32.xlu0 %v2321, %s3663
        %v3665 = vpop.permute.xlu0 %3664
        %s3667 = sor.u32 256, 56
        %3668 = vbcast.lane.b32.xlu0 %v2321, %s3667
        %v3669 = vpop.permute.xlu0 %3668
        %s3671 = sor.u32 256, 48
        %3672 = vbcast.lane.b32.xlu0 %v2332, %s3671
        %v3673 = vpop.permute.xlu0 %3672
        %s3675 = sor.u32 256, 56
        %3676 = vbcast.lane.b32.xlu0 %v2332, %s3675
        %v3677 = vpop.permute.xlu0 %3676
        %s3679 = sor.u32 256, 48
        %3680 = vbcast.lane.b32.xlu0 %v2343, %s3679
        %v3681 = vpop.permute.xlu0 %3680
        %s3683 = sor.u32 256, 56
        %3684 = vbcast.lane.b32.xlu0 %v2343, %s3683
        %v3685 = vpop.permute.xlu0 %3684
        %s3687 = sor.u32 256, 48
        %3688 = vbcast.lane.b32.xlu0 %v2354, %s3687
        %v3689 = vpop.permute.xlu0 %3688
        %s3691 = sor.u32 256, 56
        %3692 = vbcast.lane.b32.xlu0 %v2354, %s3691
        %v3693 = vpop.permute.xlu0 %3692
        %s3695 = sor.u32 256, 48
        %3696 = vbcast.lane.b32.xlu0 %v2365, %s3695
        %v3697 = vpop.permute.xlu0 %3696
        %s3699 = sor.u32 256, 56
        %3700 = vbcast.lane.b32.xlu0 %v2365, %s3699
        %v3701 = vpop.permute.xlu0 %3700
        %s3703 = sor.u32 256, 48
        %3704 = vbcast.lane.b32.xlu0 %v2376, %s3703
        %v3705 = vpop.permute.xlu0 %3704
        %s3707 = sor.u32 256, 56
        %3708 = vbcast.lane.b32.xlu0 %v2376, %s3707
        %v3709 = vpop.permute.xlu0 %3708
        %s3711 = sor.u32 256, 48
        %3712 = vbcast.lane.b32.xlu0 %v2387, %s3711
        %v3713 = vpop.permute.xlu0 %3712
        %s3715 = sor.u32 256, 56
        %3716 = vbcast.lane.b32.xlu0 %v2387, %s3715
        %v3717 = vpop.permute.xlu0 %3716
        %s3719 = sor.u32 256, 48
        %3720 = vbcast.lane.b32.xlu0 %v2398, %s3719
        %v3721 = vpop.permute.xlu0 %3720
        %s3723 = sor.u32 256, 56
        %3724 = vbcast.lane.b32.xlu0 %v2398, %s3723
        %v3725 = vpop.permute.xlu0 %3724
        %s3727 = sor.u32 256, 48
        %3728 = vbcast.lane.b32.xlu0 %v2409, %s3727
        %v3729 = vpop.permute.xlu0 %3728
        %s3731 = sor.u32 256, 56
        %3732 = vbcast.lane.b32.xlu0 %v2409, %s3731
        %v3733 = vpop.permute.xlu0 %3732
        %v3734 = vmul.f32 %v3305, %v3609
        %v3735 = vmul.f32 %v3305, %v3613
        %v3736 = vmul.f32 %v3309, %v3617
        %v3737 = vmul.f32 %v3309, %v3621
        %v3738 = vmul.f32 %v3313, %v3625
        %v3739 = vmul.f32 %v3313, %v3629
        %v3740 = vmul.f32 %v3317, %v3633
        %v3741 = vmul.f32 %v3317, %v3637
        %v3742 = vmul.f32 %v3321, %v3641
        %v3743 = vmul.f32 %v3321, %v3645
        %v3744 = vmul.f32 %v3325, %v3649
        %v3745 = vmul.f32 %v3325, %v3653
        %v3746 = vmul.f32 %v3329, %v3657
        %v3747 = vmul.f32 %v3329, %v3661
        %v3748 = vmul.f32 %v3333, %v3665
        %v3749 = vmul.f32 %v3333, %v3669
        %v3750 = vmul.f32 %v3337, %v3673
        %v3751 = vmul.f32 %v3337, %v3677
        %v3752 = vmul.f32 %v3341, %v3681
        %v3753 = vmul.f32 %v3341, %v3685
        %v3754 = vmul.f32 %v3345, %v3689
        %v3755 = vmul.f32 %v3345, %v3693
        %v3756 = vmul.f32 %v3349, %v3697
        %v3757 = vmul.f32 %v3349, %v3701
        %v3758 = vmul.f32 %v3353, %v3705
        %v3759 = vmul.f32 %v3353, %v3709
        %v3760 = vmul.f32 %v3357, %v3713
        %v3761 = vmul.f32 %v3357, %v3717
        %v3762 = vmul.f32 %v3361, %v3721
        %v3763 = vmul.f32 %v3361, %v3725
        %v3764 = vmul.f32 %v3365, %v3729
        %v3765 = vmul.f32 %v3365, %v3733
        %3766 = vst.msk [vmem:[#allocation3 + $0x8] sm:$0xff] %vm2881, %v3734
        %3767 = vst.msk [vmem:[#allocation3 + $0x18] sm:$0xff] %vm2881, %v3735
        %3768 = vst.msk [vmem:[#allocation3 + $0x28] sm:$0xff] %vm2881, %v3736
        %3769 = vst.msk [vmem:[#allocation3 + $0x38] sm:$0xff] %vm2881, %v3737
        %3770 = vst.msk [vmem:[#allocation3 + $0x48] sm:$0xff] %vm2881, %v3738
        %3771 = vst.msk [vmem:[#allocation3 + $0x58] sm:$0xff] %vm2881, %v3739
        %3772 = vst.msk [vmem:[#allocation3 + $0x68] sm:$0xff] %vm2881, %v3740
        %3773 = vst.msk [vmem:[#allocation3 + $0x78] sm:$0xff] %vm2881, %v3741
        %3774 = vst.msk [vmem:[#allocation3 + $0x88] sm:$0xff] %vm2881, %v3742
        %3775 = vst.msk [vmem:[#allocation3 + $0x98] sm:$0xff] %vm2881, %v3743
        %3776 = vst.msk [vmem:[#allocation3 + $0xa8] sm:$0xff] %vm2881, %v3744
        %3777 = vst.msk [vmem:[#allocation3 + $0xb8] sm:$0xff] %vm2881, %v3745
        %3778 = vst.msk [vmem:[#allocation3 + $0xc8] sm:$0xff] %vm2881, %v3746
        %3779 = vst.msk [vmem:[#allocation3 + $0xd8] sm:$0xff] %vm2881, %v3747
        %3780 = vst.msk [vmem:[#allocation3 + $0xe8] sm:$0xff] %vm2881, %v3748
        %3781 = vst.msk [vmem:[#allocation3 + $0xf8] sm:$0xff] %vm2881, %v3749
        %3782 = vst.msk [vmem:[#allocation3 + $0x108] sm:$0xff] %vm2881, %v3750
        %3783 = vst.msk [vmem:[#allocation3 + $0x118] sm:$0xff] %vm2881, %v3751
        %3784 = vst.msk [vmem:[#allocation3 + $0x128] sm:$0xff] %vm2881, %v3752
        %3785 = vst.msk [vmem:[#allocation3 + $0x138] sm:$0xff] %vm2881, %v3753
        %3786 = vst.msk [vmem:[#allocation3 + $0x148] sm:$0xff] %vm2881, %v3754
        %3787 = vst.msk [vmem:[#allocation3 + $0x158] sm:$0xff] %vm2881, %v3755
        %3788 = vst.msk [vmem:[#allocation3 + $0x168] sm:$0xff] %vm2881, %v3756
        %3789 = vst.msk [vmem:[#allocation3 + $0x178] sm:$0xff] %vm2881, %v3757
        %3790 = vst.msk [vmem:[#allocation3 + $0x188] sm:$0xff] %vm2881, %v3758
        %3791 = vst.msk [vmem:[#allocation3 + $0x198] sm:$0xff] %vm2881, %v3759
        %3792 = vst.msk [vmem:[#allocation3 + $0x1a8] sm:$0xff] %vm2881, %v3760
        %3793 = vst.msk [vmem:[#allocation3 + $0x1b8] sm:$0xff] %vm2881, %v3761
        %3794 = vst.msk [vmem:[#allocation3 + $0x1c8] sm:$0xff] %vm2881, %v3762
        %3795 = vst.msk [vmem:[#allocation3 + $0x1d8] sm:$0xff] %vm2881, %v3763
        %3796 = vst.msk [vmem:[#allocation3 + $0x1e8] sm:$0xff] %vm2881, %v3764
        %3797 = vst.msk [vmem:[#allocation3 + $0x1f8] sm:$0xff] %vm2881, %v3765
        %s3799 = sor.u32 256, 112
        %3800 = vbcast.lane.b32.xlu0 %v2244, %s3799
        %v3801 = vpop.permute.xlu0 %3800
        %s3803 = sor.u32 256, 120
        %3804 = vbcast.lane.b32.xlu0 %v2244, %s3803
        %v3805 = vpop.permute.xlu0 %3804
        %s3807 = sor.u32 256, 112
        %3808 = vbcast.lane.b32.xlu0 %v2255, %s3807
        %v3809 = vpop.permute.xlu0 %3808
        %s3811 = sor.u32 256, 120
        %3812 = vbcast.lane.b32.xlu0 %v2255, %s3811
        %v3813 = vpop.permute.xlu0 %3812
        %s3815 = sor.u32 256, 112
        %3816 = vbcast.lane.b32.xlu0 %v2266, %s3815
        %v3817 = vpop.permute.xlu0 %3816
        %s3819 = sor.u32 256, 120
        %3820 = vbcast.lane.b32.xlu0 %v2266, %s3819
        %v3821 = vpop.permute.xlu0 %3820
        %s3823 = sor.u32 256, 112
        %3824 = vbcast.lane.b32.xlu0 %v2277, %s3823
        %v3825 = vpop.permute.xlu0 %3824
        %s3827 = sor.u32 256, 120
        %3828 = vbcast.lane.b32.xlu0 %v2277, %s3827
        %v3829 = vpop.permute.xlu0 %3828
        %s3831 = sor.u32 256, 112
        %3832 = vbcast.lane.b32.xlu0 %v2288, %s3831
        %v3833 = vpop.permute.xlu0 %3832
        %s3835 = sor.u32 256, 120
        %3836 = vbcast.lane.b32.xlu0 %v2288, %s3835
        %v3837 = vpop.permute.xlu0 %3836
        %s3839 = sor.u32 256, 112
        %3840 = vbcast.lane.b32.xlu0 %v2299, %s3839
        %v3841 = vpop.permute.xlu0 %3840
        %s3843 = sor.u32 256, 120
        %3844 = vbcast.lane.b32.xlu0 %v2299, %s3843
        %v3845 = vpop.permute.xlu0 %3844
        %s3847 = sor.u32 256, 112
        %3848 = vbcast.lane.b32.xlu0 %v2310, %s3847
        %v3849 = vpop.permute.xlu0 %3848
        %s3851 = sor.u32 256, 120
        %3852 = vbcast.lane.b32.xlu0 %v2310, %s3851
        %v3853 = vpop.permute.xlu0 %3852
        %s3855 = sor.u32 256, 112
        %3856 = vbcast.lane.b32.xlu0 %v2321, %s3855
        %v3857 = vpop.permute.xlu0 %3856
        %s3859 = sor.u32 256, 120
        %3860 = vbcast.lane.b32.xlu0 %v2321, %s3859
        %v3861 = vpop.permute.xlu0 %3860
        %s3863 = sor.u32 256, 112
        %3864 = vbcast.lane.b32.xlu0 %v2332, %s3863
        %v3865 = vpop.permute.xlu0 %3864
        %s3867 = sor.u32 256, 120
        %3868 = vbcast.lane.b32.xlu0 %v2332, %s3867
        %v3869 = vpop.permute.xlu0 %3868
        %s3871 = sor.u32 256, 112
        %3872 = vbcast.lane.b32.xlu0 %v2343, %s3871
        %v3873 = vpop.permute.xlu0 %3872
        %s3875 = sor.u32 256, 120
        %3876 = vbcast.lane.b32.xlu0 %v2343, %s3875
        %v3877 = vpop.permute.xlu0 %3876
        %s3879 = sor.u32 256, 112
        %3880 = vbcast.lane.b32.xlu0 %v2354, %s3879
        %v3881 = vpop.permute.xlu0 %3880
        %s3883 = sor.u32 256, 120
        %3884 = vbcast.lane.b32.xlu0 %v2354, %s3883
        %v3885 = vpop.permute.xlu0 %3884
        %s3887 = sor.u32 256, 112
        %3888 = vbcast.lane.b32.xlu0 %v2365, %s3887
        %v3889 = vpop.permute.xlu0 %3888
        %s3891 = sor.u32 256, 120
        %3892 = vbcast.lane.b32.xlu0 %v2365, %s3891
        %v3893 = vpop.permute.xlu0 %3892
        %s3895 = sor.u32 256, 112
        %3896 = vbcast.lane.b32.xlu0 %v2376, %s3895
        %v3897 = vpop.permute.xlu0 %3896
        %s3899 = sor.u32 256, 120
        %3900 = vbcast.lane.b32.xlu0 %v2376, %s3899
        %v3901 = vpop.permute.xlu0 %3900
        %s3903 = sor.u32 256, 112
        %3904 = vbcast.lane.b32.xlu0 %v2387, %s3903
        %v3905 = vpop.permute.xlu0 %3904
        %s3907 = sor.u32 256, 120
        %3908 = vbcast.lane.b32.xlu0 %v2387, %s3907
        %v3909 = vpop.permute.xlu0 %3908
        %s3911 = sor.u32 256, 112
        %3912 = vbcast.lane.b32.xlu0 %v2398, %s3911
        %v3913 = vpop.permute.xlu0 %3912
        %s3915 = sor.u32 256, 120
        %3916 = vbcast.lane.b32.xlu0 %v2398, %s3915
        %v3917 = vpop.permute.xlu0 %3916
        %s3919 = sor.u32 256, 112
        %3920 = vbcast.lane.b32.xlu0 %v2409, %s3919
        %v3921 = vpop.permute.xlu0 %3920
        %s3923 = sor.u32 256, 120
        %3924 = vbcast.lane.b32.xlu0 %v2409, %s3923
        %v3925 = vpop.permute.xlu0 %3924
        %3926 = vst.msk [vmem:[#allocation4 + $0x8] sm:$0xff] %vm2881, %v3801
        %3927 = vst.msk [vmem:[#allocation4 + $0x18] sm:$0xff] %vm2881, %v3805
        %3928 = vst.msk [vmem:[#allocation4 + $0x28] sm:$0xff] %vm2881, %v3809
        %3929 = vst.msk [vmem:[#allocation4 + $0x38] sm:$0xff] %vm2881, %v3813
        %3930 = vst.msk [vmem:[#allocation4 + $0x48] sm:$0xff] %vm2881, %v3817
        %3931 = vst.msk [vmem:[#allocation4 + $0x58] sm:$0xff] %vm2881, %v3821
        %3932 = vst.msk [vmem:[#allocation4 + $0x68] sm:$0xff] %vm2881, %v3825
        %3933 = vst.msk [vmem:[#allocation4 + $0x78] sm:$0xff] %vm2881, %v3829
        %3934 = vst.msk [vmem:[#allocation4 + $0x88] sm:$0xff] %vm2881, %v3833
        %3935 = vst.msk [vmem:[#allocation4 + $0x98] sm:$0xff] %vm2881, %v3837
        %3936 = vst.msk [vmem:[#allocation4 + $0xa8] sm:$0xff] %vm2881, %v3841
        %3937 = vst.msk [vmem:[#allocation4 + $0xb8] sm:$0xff] %vm2881, %v3845
        %3938 = vst.msk [vmem:[#allocation4 + $0xc8] sm:$0xff] %vm2881, %v3849
        %3939 = vst.msk [vmem:[#allocation4 + $0xd8] sm:$0xff] %vm2881, %v3853
        %3940 = vst.msk [vmem:[#allocation4 + $0xe8] sm:$0xff] %vm2881, %v3857
        %3941 = vst.msk [vmem:[#allocation4 + $0xf8] sm:$0xff] %vm2881, %v3861
        %3942 = vst.msk [vmem:[#allocation4 + $0x108] sm:$0xff] %vm2881, %v3865
        %3943 = vst.msk [vmem:[#allocation4 + $0x118] sm:$0xff] %vm2881, %v3869
        %3944 = vst.msk [vmem:[#allocation4 + $0x128] sm:$0xff] %vm2881, %v3873
        %3945 = vst.msk [vmem:[#allocation4 + $0x138] sm:$0xff] %vm2881, %v3877
        %3946 = vst.msk [vmem:[#allocation4 + $0x148] sm:$0xff] %vm2881, %v3881
        %3947 = vst.msk [vmem:[#allocation4 + $0x158] sm:$0xff] %vm2881, %v3885
        %3948 = vst.msk [vmem:[#allocation4 + $0x168] sm:$0xff] %vm2881, %v3889
        %3949 = vst.msk [vmem:[#allocation4 + $0x178] sm:$0xff] %vm2881, %v3893
        %3950 = vst.msk [vmem:[#allocation4 + $0x188] sm:$0xff] %vm2881, %v3897
        %3951 = vst.msk [vmem:[#allocation4 + $0x198] sm:$0xff] %vm2881, %v3901
        %3952 = vst.msk [vmem:[#allocation4 + $0x1a8] sm:$0xff] %vm2881, %v3905
        %3953 = vst.msk [vmem:[#allocation4 + $0x1b8] sm:$0xff] %vm2881, %v3909
        %3954 = vst.msk [vmem:[#allocation4 + $0x1c8] sm:$0xff] %vm2881, %v3913
        %3955 = vst.msk [vmem:[#allocation4 + $0x1d8] sm:$0xff] %vm2881, %v3917
        %3956 = vst.msk [vmem:[#allocation4 + $0x1e8] sm:$0xff] %vm2881, %v3921
        %3957 = vst.msk [vmem:[#allocation4 + $0x1f8] sm:$0xff] %vm2881, %v3925
        %v3958 = vld [vmem:[#allocation2] sm:$0xff]
        %v3959 = vld [vmem:[#allocation2 + $0x8] sm:$0xff]
        %v3960 = vld [vmem:[#allocation2 + $0x10] sm:$0xff]
        %v3961 = vld [vmem:[#allocation2 + $0x18] sm:$0xff]
        %v3962 = vmul.f32 %v3958, 0.0
        %v3963 = vmul.f32 %v3959, 0.0
        %v3964 = vmul.f32 %v3960, 0.0
        %v3965 = vmul.f32 %v3961, 0.0
        %v3966 = vld [vmem:[#allocation3] sm:$0xff]
        %v3967 = vld [vmem:[#allocation3 + $0x8] sm:$0xff]
        %v3968 = vld [vmem:[#allocation3 + $0x10] sm:$0xff]
        %v3969 = vld [vmem:[#allocation3 + $0x18] sm:$0xff]
        %v3970 = vadd.f32 %v3962, %v3966
        %v3971 = vadd.f32 %v3963, %v3967
        %v3972 = vadd.f32 %v3964, %v3968
        %v3973 = vadd.f32 %v3965, %v3969
        %v3974 = vld [vmem:[#allocation4] sm:$0xff]
        %v3975 = vld [vmem:[#allocation4 + $0x8] sm:$0xff]
        %v3976 = vld [vmem:[#allocation4 + $0x10] sm:$0xff]
        %v3977 = vld [vmem:[#allocation4 + $0x18] sm:$0xff]
        %v3978 = vmul.f32 %v3974, %v3970
        %v3979 = vmul.f32 %v3975, %v3971
        %v3980 = vmul.f32 %v3976, %v3972
        %v3981 = vmul.f32 %v3977, %v3973
        %v3982 = vadd.f32 %v3978, %v3980
        %v3983 = vrot.slane %v3982, 4
        %v3984 = vadd.f32 %v3982, %v3983
        %v3985 = vrot.slane %v3984, 2
        %v3986 = vadd.f32 %v3984, %v3985
        %v3987 = vrot.slane %v3986, 1
        %v3988 = vadd.f32 %v3986, %v3987
        %v3989 = vadd.f32 %v3979, %v3981
        %v3990 = vrot.slane %v3989, 4
        %v3991 = vadd.f32 %v3989, %v3990
        %v3992 = vrot.slane %v3991, 2
        %v3993 = vadd.f32 %v3991, %v3992
        %v3994 = vrot.slane %v3993, 1
        %v3995 = vadd.f32 %v3993, %v3994
        %s3996 = scalar_lea.vmem [#allocation2], 32
        %v3997 = vld [vmem:[%s3996] sm:$0xff]
        %v3998 = vld [vmem:[%s3996 + $0x8] sm:$0xff]
        %v3999 = vld [vmem:[%s3996 + $0x10] sm:$0xff]
        %v4000 = vld [vmem:[%s3996 + $0x18] sm:$0xff]
        %v4001 = vmul.f32 %v3997, %v3970
        %v4002 = vmul.f32 %v3998, %v3971
        %v4003 = vmul.f32 %v3999, %v3972
        %v4004 = vmul.f32 %v4000, %v3973
        %s4005 = scalar_lea.vmem [#allocation3], 32
        %v4006 = vld [vmem:[%s4005] sm:$0xff]
        %v4007 = vld [vmem:[%s4005 + $0x8] sm:$0xff]
        %v4008 = vld [vmem:[%s4005 + $0x10] sm:$0xff]
        %v4009 = vld [vmem:[%s4005 + $0x18] sm:$0xff]
        %v4010 = vadd.f32 %v4001, %v4006
        %v4011 = vadd.f32 %v4002, %v4007
        %v4012 = vadd.f32 %v4003, %v4008
        %v4013 = vadd.f32 %v4004, %v4009
        %s4014 = scalar_lea.vmem [#allocation4], 32
        %v4015 = vld [vmem:[%s4014] sm:$0xff]
        %v4016 = vld [vmem:[%s4014 + $0x8] sm:$0xff]
        %v4017 = vld [vmem:[%s4014 + $0x10] sm:$0xff]
        %v4018 = vld [vmem:[%s4014 + $0x18] sm:$0xff]
        %v4019 = vmul.f32 %v4015, %v4010
        %v4020 = vmul.f32 %v4016, %v4011
        %v4021 = vmul.f32 %v4017, %v4012
        %v4022 = vmul.f32 %v4018, %v4013
        %v4023 = vadd.f32 %v4019, %v4021
        %v4024 = vrot.slane %v4023, 4
        %v4025 = vadd.f32 %v4023, %v4024
        %v4026 = vrot.slane %v4025, 2
        %v4027 = vadd.f32 %v4025, %v4026
        %v4028 = vrot.slane %v4027, 1
        %v4029 = vadd.f32 %v4027, %v4028
        %v4030 = vadd.f32 %v4020, %v4022
        %v4031 = vrot.slane %v4030, 4
        %v4032 = vadd.f32 %v4030, %v4031
        %v4033 = vrot.slane %v4032, 2
        %v4034 = vadd.f32 %v4032, %v4033
        %v4035 = vrot.slane %v4034, 1
        %v4036 = vadd.f32 %v4034, %v4035
        %s4037 = scalar_lea.vmem [#allocation2], 64
        %v4038 = vld [vmem:[%s4037] sm:$0xff]
        %v4039 = vld [vmem:[%s4037 + $0x8] sm:$0xff]
        %v4040 = vld [vmem:[%s4037 + $0x10] sm:$0xff]
        %v4041 = vld [vmem:[%s4037 + $0x18] sm:$0xff]
        %v4042 = vmul.f32 %v4038, %v4010
        %v4043 = vmul.f32 %v4039, %v4011
        %v4044 = vmul.f32 %v4040, %v4012
        %v4045 = vmul.f32 %v4041, %v4013
        %s4046 = scalar_lea.vmem [#allocation3], 64
        %v4047 = vld [vmem:[%s4046] sm:$0xff]
        %v4048 = vld [vmem:[%s4046 + $0x8] sm:$0xff]
        %v4049 = vld [vmem:[%s4046 + $0x10] sm:$0xff]
        %v4050 = vld [vmem:[%s4046 + $0x18] sm:$0xff]
        %v4051 = vadd.f32 %v4042, %v4047
        %v4052 = vadd.f32 %v4043, %v4048
        %v4053 = vadd.f32 %v4044, %v4049
        %v4054 = vadd.f32 %v4045, %v4050
        %s4055 = scalar_lea.vmem [#allocation4], 64
        %v4056 = vld [vmem:[%s4055] sm:$0xff]
        %v4057 = vld [vmem:[%s4055 + $0x8] sm:$0xff]
        %v4058 = vld [vmem:[%s4055 + $0x10] sm:$0xff]
        %v4059 = vld [vmem:[%s4055 + $0x18] sm:$0xff]
        %v4060 = vmul.f32 %v4056, %v4051
        %v4061 = vmul.f32 %v4057, %v4052
        %v4062 = vmul.f32 %v4058, %v4053
        %v4063 = vmul.f32 %v4059, %v4054
        %v4064 = vadd.f32 %v4060, %v4062
        %v4065 = vrot.slane %v4064, 4
        %v4066 = vadd.f32 %v4064, %v4065
        %v4067 = vrot.slane %v4066, 2
        %v4068 = vadd.f32 %v4066, %v4067
        %v4069 = vrot.slane %v4068, 1
        %v4070 = vadd.f32 %v4068, %v4069
        %v4071 = vadd.f32 %v4061, %v4063
        %v4072 = vrot.slane %v4071, 4
        %v4073 = vadd.f32 %v4071, %v4072
        %v4074 = vrot.slane %v4073, 2
        %v4075 = vadd.f32 %v4073, %v4074
        %v4076 = vrot.slane %v4075, 1
        %v4077 = vadd.f32 %v4075, %v4076
        %s4078 = scalar_lea.vmem [#allocation2], 96
        %v4079 = vld [vmem:[%s4078] sm:$0xff]
        %v4080 = vld [vmem:[%s4078 + $0x8] sm:$0xff]
        %v4081 = vld [vmem:[%s4078 + $0x10] sm:$0xff]
        %v4082 = vld [vmem:[%s4078 + $0x18] sm:$0xff]
        %v4083 = vmul.f32 %v4079, %v4051
        %v4084 = vmul.f32 %v4080, %v4052
        %v4085 = vmul.f32 %v4081, %v4053
        %v4086 = vmul.f32 %v4082, %v4054
        %s4087 = scalar_lea.vmem [#allocation3], 96
        %v4088 = vld [vmem:[%s4087] sm:$0xff]
        %v4089 = vld [vmem:[%s4087 + $0x8] sm:$0xff]
        %v4090 = vld [vmem:[%s4087 + $0x10] sm:$0xff]
        %v4091 = vld [vmem:[%s4087 + $0x18] sm:$0xff]
        %v4092 = vadd.f32 %v4083, %v4088
        %v4093 = vadd.f32 %v4084, %v4089
        %v4094 = vadd.f32 %v4085, %v4090
        %v4095 = vadd.f32 %v4086, %v4091
        %s4096 = scalar_lea.vmem [#allocation4], 96
        %v4097 = vld [vmem:[%s4096] sm:$0xff]
        %v4098 = vld [vmem:[%s4096 + $0x8] sm:$0xff]
        %v4099 = vld [vmem:[%s4096 + $0x10] sm:$0xff]
        %v4100 = vld [vmem:[%s4096 + $0x18] sm:$0xff]
        %v4101 = vmul.f32 %v4097, %v4092
        %v4102 = vmul.f32 %v4098, %v4093
        %v4103 = vmul.f32 %v4099, %v4094
        %v4104 = vmul.f32 %v4100, %v4095
        %v4105 = vadd.f32 %v4101, %v4103
        %v4106 = vrot.slane %v4105, 4
        %v4107 = vadd.f32 %v4105, %v4106
        %v4108 = vrot.slane %v4107, 2
        %v4109 = vadd.f32 %v4107, %v4108
        %v4110 = vrot.slane %v4109, 1
        %v4111 = vadd.f32 %v4109, %v4110
        %v4112 = vadd.f32 %v4102, %v4104
        %v4113 = vrot.slane %v4112, 4
        %v4114 = vadd.f32 %v4112, %v4113
        %v4115 = vrot.slane %v4114, 2
        %v4116 = vadd.f32 %v4114, %v4115
        %v4117 = vrot.slane %v4116, 1
        %v4118 = vadd.f32 %v4116, %v4117
        %s4119 = scalar_lea.vmem [#allocation2], 128
        %v4120 = vld [vmem:[%s4119] sm:$0xff]
        %v4121 = vld [vmem:[%s4119 + $0x8] sm:$0xff]
        %v4122 = vld [vmem:[%s4119 + $0x10] sm:$0xff]
        %v4123 = vld [vmem:[%s4119 + $0x18] sm:$0xff]
        %v4124 = vmul.f32 %v4120, %v4092
        %v4125 = vmul.f32 %v4121, %v4093
        %v4126 = vmul.f32 %v4122, %v4094
        %v4127 = vmul.f32 %v4123, %v4095
        %s4128 = scalar_lea.vmem [#allocation3], 128
        %v4129 = vld [vmem:[%s4128] sm:$0xff]
        %v4130 = vld [vmem:[%s4128 + $0x8] sm:$0xff]
        %v4131 = vld [vmem:[%s4128 + $0x10] sm:$0xff]
        %v4132 = vld [vmem:[%s4128 + $0x18] sm:$0xff]
        %v4133 = vadd.f32 %v4124, %v4129
        %v4134 = vadd.f32 %v4125, %v4130
        %v4135 = vadd.f32 %v4126, %v4131
        %v4136 = vadd.f32 %v4127, %v4132
        %s4137 = scalar_lea.vmem [#allocation4], 128
        %v4138 = vld [vmem:[%s4137] sm:$0xff]
        %v4139 = vld [vmem:[%s4137 + $0x8] sm:$0xff]
        %v4140 = vld [vmem:[%s4137 + $0x10] sm:$0xff]
        %v4141 = vld [vmem:[%s4137 + $0x18] sm:$0xff]
        %v4142 = vmul.f32 %v4138, %v4133
        %v4143 = vmul.f32 %v4139, %v4134
        %v4144 = vmul.f32 %v4140, %v4135
        %v4145 = vmul.f32 %v4141, %v4136
        %v4146 = vadd.f32 %v4142, %v4144
        %v4147 = vrot.slane %v4146, 4
        %v4148 = vadd.f32 %v4146, %v4147
        %v4149 = vrot.slane %v4148, 2
        %v4150 = vadd.f32 %v4148, %v4149
        %v4151 = vrot.slane %v4150, 1
        %v4152 = vadd.f32 %v4150, %v4151
        %v4153 = vadd.f32 %v4143, %v4145
        %v4154 = vrot.slane %v4153, 4
        %v4155 = vadd.f32 %v4153, %v4154
        %v4156 = vrot.slane %v4155, 2
        %v4157 = vadd.f32 %v4155, %v4156
        %v4158 = vrot.slane %v4157, 1
        %v4159 = vadd.f32 %v4157, %v4158
        %s4160 = scalar_lea.vmem [#allocation2], 160
        %v4161 = vld [vmem:[%s4160] sm:$0xff]
        %v4162 = vld [vmem:[%s4160 + $0x8] sm:$0xff]
        %v4163 = vld [vmem:[%s4160 + $0x10] sm:$0xff]
        %v4164 = vld [vmem:[%s4160 + $0x18] sm:$0xff]
        %v4165 = vmul.f32 %v4161, %v4133
        %v4166 = vmul.f32 %v4162, %v4134
        %v4167 = vmul.f32 %v4163, %v4135
        %v4168 = vmul.f32 %v4164, %v4136
        %s4169 = scalar_lea.vmem [#allocation3], 160
        %v4170 = vld [vmem:[%s4169] sm:$0xff]
        %v4171 = vld [vmem:[%s4169 + $0x8] sm:$0xff]
        %v4172 = vld [vmem:[%s4169 + $0x10] sm:$0xff]
        %v4173 = vld [vmem:[%s4169 + $0x18] sm:$0xff]
        %v4174 = vadd.f32 %v4165, %v4170
        %v4175 = vadd.f32 %v4166, %v4171
        %v4176 = vadd.f32 %v4167, %v4172
        %v4177 = vadd.f32 %v4168, %v4173
        %s4178 = scalar_lea.vmem [#allocation4], 160
        %v4179 = vld [vmem:[%s4178] sm:$0xff]
        %v4180 = vld [vmem:[%s4178 + $0x8] sm:$0xff]
        %v4181 = vld [vmem:[%s4178 + $0x10] sm:$0xff]
        %v4182 = vld [vmem:[%s4178 + $0x18] sm:$0xff]
        %v4183 = vmul.f32 %v4179, %v4174
        %v4184 = vmul.f32 %v4180, %v4175
        %v4185 = vmul.f32 %v4181, %v4176
        %v4186 = vmul.f32 %v4182, %v4177
        %v4187 = vadd.f32 %v4183, %v4185
        %v4188 = vrot.slane %v4187, 4
        %v4189 = vadd.f32 %v4187, %v4188
        %v4190 = vrot.slane %v4189, 2
        %v4191 = vadd.f32 %v4189, %v4190
        %v4192 = vrot.slane %v4191, 1
        %v4193 = vadd.f32 %v4191, %v4192
        %v4194 = vadd.f32 %v4184, %v4186
        %v4195 = vrot.slane %v4194, 4
        %v4196 = vadd.f32 %v4194, %v4195
        %v4197 = vrot.slane %v4196, 2
        %v4198 = vadd.f32 %v4196, %v4197
        %v4199 = vrot.slane %v4198, 1
        %v4200 = vadd.f32 %v4198, %v4199
        %s4201 = scalar_lea.vmem [#allocation2], 192
        %v4202 = vld [vmem:[%s4201] sm:$0xff]
        %v4203 = vld [vmem:[%s4201 + $0x8] sm:$0xff]
        %v4204 = vld [vmem:[%s4201 + $0x10] sm:$0xff]
        %v4205 = vld [vmem:[%s4201 + $0x18] sm:$0xff]
        %v4206 = vmul.f32 %v4202, %v4174
        %v4207 = vmul.f32 %v4203, %v4175
        %v4208 = vmul.f32 %v4204, %v4176
        %v4209 = vmul.f32 %v4205, %v4177
        %s4210 = scalar_lea.vmem [#allocation3], 192
        %v4211 = vld [vmem:[%s4210] sm:$0xff]
        %v4212 = vld [vmem:[%s4210 + $0x8] sm:$0xff]
        %v4213 = vld [vmem:[%s4210 + $0x10] sm:$0xff]
        %v4214 = vld [vmem:[%s4210 + $0x18] sm:$0xff]
        %v4215 = vadd.f32 %v4206, %v4211
        %v4216 = vadd.f32 %v4207, %v4212
        %v4217 = vadd.f32 %v4208, %v4213
        %v4218 = vadd.f32 %v4209, %v4214
        %s4219 = scalar_lea.vmem [#allocation4], 192
        %v4220 = vld [vmem:[%s4219] sm:$0xff]
        %v4221 = vld [vmem:[%s4219 + $0x8] sm:$0xff]
        %v4222 = vld [vmem:[%s4219 + $0x10] sm:$0xff]
        %v4223 = vld [vmem:[%s4219 + $0x18] sm:$0xff]
        %v4224 = vmul.f32 %v4220, %v4215
        %v4225 = vmul.f32 %v4221, %v4216
        %v4226 = vmul.f32 %v4222, %v4217
        %v4227 = vmul.f32 %v4223, %v4218
        %v4228 = vadd.f32 %v4224, %v4226
        %v4229 = vrot.slane %v4228, 4
        %v4230 = vadd.f32 %v4228, %v4229
        %v4231 = vrot.slane %v4230, 2
        %v4232 = vadd.f32 %v4230, %v4231
        %v4233 = vrot.slane %v4232, 1
        %v4234 = vadd.f32 %v4232, %v4233
        %v4235 = vadd.f32 %v4225, %v4227
        %v4236 = vrot.slane %v4235, 4
        %v4237 = vadd.f32 %v4235, %v4236
        %v4238 = vrot.slane %v4237, 2
        %v4239 = vadd.f32 %v4237, %v4238
        %v4240 = vrot.slane %v4239, 1
        %v4241 = vadd.f32 %v4239, %v4240
        %s4242 = scalar_lea.vmem [#allocation2], 224
        %v4243 = vld [vmem:[%s4242] sm:$0xff]
        %v4244 = vld [vmem:[%s4242 + $0x8] sm:$0xff]
        %v4245 = vld [vmem:[%s4242 + $0x10] sm:$0xff]
        %v4246 = vld [vmem:[%s4242 + $0x18] sm:$0xff]
        %v4247 = vmul.f32 %v4243, %v4215
        %v4248 = vmul.f32 %v4244, %v4216
        %v4249 = vmul.f32 %v4245, %v4217
        %v4250 = vmul.f32 %v4246, %v4218
        %s4251 = scalar_lea.vmem [#allocation3], 224
        %v4252 = vld [vmem:[%s4251] sm:$0xff]
        %v4253 = vld [vmem:[%s4251 + $0x8] sm:$0xff]
        %v4254 = vld [vmem:[%s4251 + $0x10] sm:$0xff]
        %v4255 = vld [vmem:[%s4251 + $0x18] sm:$0xff]
        %v4256 = vadd.f32 %v4247, %v4252
        %v4257 = vadd.f32 %v4248, %v4253
        %v4258 = vadd.f32 %v4249, %v4254
        %v4259 = vadd.f32 %v4250, %v4255
        %s4260 = scalar_lea.vmem [#allocation4], 224
        %v4261 = vld [vmem:[%s4260] sm:$0xff]
        %v4262 = vld [vmem:[%s4260 + $0x8] sm:$0xff]
        %v4263 = vld [vmem:[%s4260 + $0x10] sm:$0xff]
        %v4264 = vld [vmem:[%s4260 + $0x18] sm:$0xff]
        %v4265 = vmul.f32 %v4261, %v4256
        %v4266 = vmul.f32 %v4262, %v4257
        %v4267 = vmul.f32 %v4263, %v4258
        %v4268 = vmul.f32 %v4264, %v4259
        %v4269 = vadd.f32 %v4265, %v4267
        %v4270 = vrot.slane %v4269, 4
        %v4271 = vadd.f32 %v4269, %v4270
        %v4272 = vrot.slane %v4271, 2
        %v4273 = vadd.f32 %v4271, %v4272
        %v4274 = vrot.slane %v4273, 1
        %v4275 = vadd.f32 %v4273, %v4274
        %v4276 = vadd.f32 %v4266, %v4268
        %v4277 = vrot.slane %v4276, 4
        %v4278 = vadd.f32 %v4276, %v4277
        %v4279 = vrot.slane %v4278, 2
        %v4280 = vadd.f32 %v4278, %v4279
        %v4281 = vrot.slane %v4280, 1
        %v4282 = vadd.f32 %v4280, %v4281
        %s4283 = scalar_lea.vmem [#allocation2], 256
        %v4284 = vld [vmem:[%s4283] sm:$0xff]
        %v4285 = vld [vmem:[%s4283 + $0x8] sm:$0xff]
        %v4286 = vld [vmem:[%s4283 + $0x10] sm:$0xff]
        %v4287 = vld [vmem:[%s4283 + $0x18] sm:$0xff]
        %v4288 = vmul.f32 %v4284, %v4256
        %v4289 = vmul.f32 %v4285, %v4257
        %v4290 = vmul.f32 %v4286, %v4258
        %v4291 = vmul.f32 %v4287, %v4259
        %s4292 = scalar_lea.vmem [#allocation3], 256
        %v4293 = vld [vmem:[%s4292] sm:$0xff]
        %v4294 = vld [vmem:[%s4292 + $0x8] sm:$0xff]
        %v4295 = vld [vmem:[%s4292 + $0x10] sm:$0xff]
        %v4296 = vld [vmem:[%s4292 + $0x18] sm:$0xff]
        %v4297 = vadd.f32 %v4288, %v4293
        %v4298 = vadd.f32 %v4289, %v4294
        %v4299 = vadd.f32 %v4290, %v4295
        %v4300 = vadd.f32 %v4291, %v4296
        %s4301 = scalar_lea.vmem [#allocation4], 256
        %v4302 = vld [vmem:[%s4301] sm:$0xff]
        %v4303 = vld [vmem:[%s4301 + $0x8] sm:$0xff]
        %v4304 = vld [vmem:[%s4301 + $0x10] sm:$0xff]
        %v4305 = vld [vmem:[%s4301 + $0x18] sm:$0xff]
        %v4306 = vmul.f32 %v4302, %v4297
        %v4307 = vmul.f32 %v4303, %v4298
        %v4308 = vmul.f32 %v4304, %v4299
        %v4309 = vmul.f32 %v4305, %v4300
        %v4310 = vadd.f32 %v4306, %v4308
        %v4311 = vrot.slane %v4310, 4
        %v4312 = vadd.f32 %v4310, %v4311
        %v4313 = vrot.slane %v4312, 2
        %v4314 = vadd.f32 %v4312, %v4313
        %v4315 = vrot.slane %v4314, 1
        %v4316 = vadd.f32 %v4314, %v4315
        %v4317 = vadd.f32 %v4307, %v4309
        %v4318 = vrot.slane %v4317, 4
        %v4319 = vadd.f32 %v4317, %v4318
        %v4320 = vrot.slane %v4319, 2
        %v4321 = vadd.f32 %v4319, %v4320
        %v4322 = vrot.slane %v4321, 1
        %v4323 = vadd.f32 %v4321, %v4322
        %s4324 = scalar_lea.vmem [#allocation2], 288
        %v4325 = vld [vmem:[%s4324] sm:$0xff]
        %v4326 = vld [vmem:[%s4324 + $0x8] sm:$0xff]
        %v4327 = vld [vmem:[%s4324 + $0x10] sm:$0xff]
        %v4328 = vld [vmem:[%s4324 + $0x18] sm:$0xff]
        %v4329 = vmul.f32 %v4325, %v4297
        %v4330 = vmul.f32 %v4326, %v4298
        %v4331 = vmul.f32 %v4327, %v4299
        %v4332 = vmul.f32 %v4328, %v4300
        %s4333 = scalar_lea.vmem [#allocation3], 288
        %v4334 = vld [vmem:[%s4333] sm:$0xff]
        %v4335 = vld [vmem:[%s4333 + $0x8] sm:$0xff]
        %v4336 = vld [vmem:[%s4333 + $0x10] sm:$0xff]
        %v4337 = vld [vmem:[%s4333 + $0x18] sm:$0xff]
        %v4338 = vadd.f32 %v4329, %v4334
        %v4339 = vadd.f32 %v4330, %v4335
        %v4340 = vadd.f32 %v4331, %v4336
        %v4341 = vadd.f32 %v4332, %v4337
        %s4342 = scalar_lea.vmem [#allocation4], 288
        %v4343 = vld [vmem:[%s4342] sm:$0xff]
        %v4344 = vld [vmem:[%s4342 + $0x8] sm:$0xff]
        %v4345 = vld [vmem:[%s4342 + $0x10] sm:$0xff]
        %v4346 = vld [vmem:[%s4342 + $0x18] sm:$0xff]
        %v4347 = vmul.f32 %v4343, %v4338
        %v4348 = vmul.f32 %v4344, %v4339
        %v4349 = vmul.f32 %v4345, %v4340
        %v4350 = vmul.f32 %v4346, %v4341
        %v4351 = vadd.f32 %v4347, %v4349
        %v4352 = vrot.slane %v4351, 4
        %v4353 = vadd.f32 %v4351, %v4352
        %v4354 = vrot.slane %v4353, 2
        %v4355 = vadd.f32 %v4353, %v4354
        %v4356 = vrot.slane %v4355, 1
        %v4357 = vadd.f32 %v4355, %v4356
        %v4358 = vadd.f32 %v4348, %v4350
        %v4359 = vrot.slane %v4358, 4
        %v4360 = vadd.f32 %v4358, %v4359
        %v4361 = vrot.slane %v4360, 2
        %v4362 = vadd.f32 %v4360, %v4361
        %v4363 = vrot.slane %v4362, 1
        %v4364 = vadd.f32 %v4362, %v4363
        %s4365 = scalar_lea.vmem [#allocation2], 320
        %v4366 = vld [vmem:[%s4365] sm:$0xff]
        %v4367 = vld [vmem:[%s4365 + $0x8] sm:$0xff]
        %v4368 = vld [vmem:[%s4365 + $0x10] sm:$0xff]
        %v4369 = vld [vmem:[%s4365 + $0x18] sm:$0xff]
        %v4370 = vmul.f32 %v4366, %v4338
        %v4371 = vmul.f32 %v4367, %v4339
        %v4372 = vmul.f32 %v4368, %v4340
        %v4373 = vmul.f32 %v4369, %v4341
        %s4374 = scalar_lea.vmem [#allocation3], 320
        %v4375 = vld [vmem:[%s4374] sm:$0xff]
        %v4376 = vld [vmem:[%s4374 + $0x8] sm:$0xff]
        %v4377 = vld [vmem:[%s4374 + $0x10] sm:$0xff]
        %v4378 = vld [vmem:[%s4374 + $0x18] sm:$0xff]
        %v4379 = vadd.f32 %v4370, %v4375
        %v4380 = vadd.f32 %v4371, %v4376
        %v4381 = vadd.f32 %v4372, %v4377
        %v4382 = vadd.f32 %v4373, %v4378
        %s4383 = scalar_lea.vmem [#allocation4], 320
        %v4384 = vld [vmem:[%s4383] sm:$0xff]
        %v4385 = vld [vmem:[%s4383 + $0x8] sm:$0xff]
        %v4386 = vld [vmem:[%s4383 + $0x10] sm:$0xff]
        %v4387 = vld [vmem:[%s4383 + $0x18] sm:$0xff]
        %v4388 = vmul.f32 %v4384, %v4379
        %v4389 = vmul.f32 %v4385, %v4380
        %v4390 = vmul.f32 %v4386, %v4381
        %v4391 = vmul.f32 %v4387, %v4382
        %v4392 = vadd.f32 %v4388, %v4390
        %v4393 = vrot.slane %v4392, 4
        %v4394 = vadd.f32 %v4392, %v4393
        %v4395 = vrot.slane %v4394, 2
        %v4396 = vadd.f32 %v4394, %v4395
        %v4397 = vrot.slane %v4396, 1
        %v4398 = vadd.f32 %v4396, %v4397
        %v4399 = vadd.f32 %v4389, %v4391
        %v4400 = vrot.slane %v4399, 4
        %v4401 = vadd.f32 %v4399, %v4400
        %v4402 = vrot.slane %v4401, 2
        %v4403 = vadd.f32 %v4401, %v4402
        %v4404 = vrot.slane %v4403, 1
        %v4405 = vadd.f32 %v4403, %v4404
        %s4406 = scalar_lea.vmem [#allocation2], 352
        %v4407 = vld [vmem:[%s4406] sm:$0xff]
        %v4408 = vld [vmem:[%s4406 + $0x8] sm:$0xff]
        %v4409 = vld [vmem:[%s4406 + $0x10] sm:$0xff]
        %v4410 = vld [vmem:[%s4406 + $0x18] sm:$0xff]
        %v4411 = vmul.f32 %v4407, %v4379
        %v4412 = vmul.f32 %v4408, %v4380
        %v4413 = vmul.f32 %v4409, %v4381
        %v4414 = vmul.f32 %v4410, %v4382
        %s4415 = scalar_lea.vmem [#allocation3], 352
        %v4416 = vld [vmem:[%s4415] sm:$0xff]
        %v4417 = vld [vmem:[%s4415 + $0x8] sm:$0xff]
        %v4418 = vld [vmem:[%s4415 + $0x10] sm:$0xff]
        %v4419 = vld [vmem:[%s4415 + $0x18] sm:$0xff]
        %v4420 = vadd.f32 %v4411, %v4416
        %v4421 = vadd.f32 %v4412, %v4417
        %v4422 = vadd.f32 %v4413, %v4418
        %v4423 = vadd.f32 %v4414, %v4419
        %s4424 = scalar_lea.vmem [#allocation4], 352
        %v4425 = vld [vmem:[%s4424] sm:$0xff]
        %v4426 = vld [vmem:[%s4424 + $0x8] sm:$0xff]
        %v4427 = vld [vmem:[%s4424 + $0x10] sm:$0xff]
        %v4428 = vld [vmem:[%s4424 + $0x18] sm:$0xff]
        %v4429 = vmul.f32 %v4425, %v4420
        %v4430 = vmul.f32 %v4426, %v4421
        %v4431 = vmul.f32 %v4427, %v4422
        %v4432 = vmul.f32 %v4428, %v4423
        %v4433 = vadd.f32 %v4429, %v4431
        %v4434 = vrot.slane %v4433, 4
        %v4435 = vadd.f32 %v4433, %v4434
        %v4436 = vrot.slane %v4435, 2
        %v4437 = vadd.f32 %v4435, %v4436
        %v4438 = vrot.slane %v4437, 1
        %v4439 = vadd.f32 %v4437, %v4438
        %v4440 = vadd.f32 %v4430, %v4432
        %v4441 = vrot.slane %v4440, 4
        %v4442 = vadd.f32 %v4440, %v4441
        %v4443 = vrot.slane %v4442, 2
        %v4444 = vadd.f32 %v4442, %v4443
        %v4445 = vrot.slane %v4444, 1
        %v4446 = vadd.f32 %v4444, %v4445
        %s4447 = scalar_lea.vmem [#allocation2], 384
        %v4448 = vld [vmem:[%s4447] sm:$0xff]
        %v4449 = vld [vmem:[%s4447 + $0x8] sm:$0xff]
        %v4450 = vld [vmem:[%s4447 + $0x10] sm:$0xff]
        %v4451 = vld [vmem:[%s4447 + $0x18] sm:$0xff]
        %v4452 = vmul.f32 %v4448, %v4420
        %v4453 = vmul.f32 %v4449, %v4421
        %v4454 = vmul.f32 %v4450, %v4422
        %v4455 = vmul.f32 %v4451, %v4423
        %s4456 = scalar_lea.vmem [#allocation3], 384
        %v4457 = vld [vmem:[%s4456] sm:$0xff]
        %v4458 = vld [vmem:[%s4456 + $0x8] sm:$0xff]
        %v4459 = vld [vmem:[%s4456 + $0x10] sm:$0xff]
        %v4460 = vld [vmem:[%s4456 + $0x18] sm:$0xff]
        %v4461 = vadd.f32 %v4452, %v4457
        %v4462 = vadd.f32 %v4453, %v4458
        %v4463 = vadd.f32 %v4454, %v4459
        %v4464 = vadd.f32 %v4455, %v4460
        %s4465 = scalar_lea.vmem [#allocation4], 384
        %v4466 = vld [vmem:[%s4465] sm:$0xff]
        %v4467 = vld [vmem:[%s4465 + $0x8] sm:$0xff]
        %v4468 = vld [vmem:[%s4465 + $0x10] sm:$0xff]
        %v4469 = vld [vmem:[%s4465 + $0x18] sm:$0xff]
        %v4470 = vmul.f32 %v4466, %v4461
        %v4471 = vmul.f32 %v4467, %v4462
        %v4472 = vmul.f32 %v4468, %v4463
        %v4473 = vmul.f32 %v4469, %v4464
        %v4474 = vadd.f32 %v4470, %v4472
        %v4475 = vrot.slane %v4474, 4
        %v4476 = vadd.f32 %v4474, %v4475
        %v4477 = vrot.slane %v4476, 2
        %v4478 = vadd.f32 %v4476, %v4477
        %v4479 = vrot.slane %v4478, 1
        %v4480 = vadd.f32 %v4478, %v4479
        %v4481 = vadd.f32 %v4471, %v4473
        %v4482 = vrot.slane %v4481, 4
        %v4483 = vadd.f32 %v4481, %v4482
        %v4484 = vrot.slane %v4483, 2
        %v4485 = vadd.f32 %v4483, %v4484
        %v4486 = vrot.slane %v4485, 1
        %v4487 = vadd.f32 %v4485, %v4486
        %s4488 = scalar_lea.vmem [#allocation2], 416
        %v4489 = vld [vmem:[%s4488] sm:$0xff]
        %v4490 = vld [vmem:[%s4488 + $0x8] sm:$0xff]
        %v4491 = vld [vmem:[%s4488 + $0x10] sm:$0xff]
        %v4492 = vld [vmem:[%s4488 + $0x18] sm:$0xff]
        %v4493 = vmul.f32 %v4489, %v4461
        %v4494 = vmul.f32 %v4490, %v4462
        %v4495 = vmul.f32 %v4491, %v4463
        %v4496 = vmul.f32 %v4492, %v4464
        %s4497 = scalar_lea.vmem [#allocation3], 416
        %v4498 = vld [vmem:[%s4497] sm:$0xff]
        %v4499 = vld [vmem:[%s4497 + $0x8] sm:$0xff]
        %v4500 = vld [vmem:[%s4497 + $0x10] sm:$0xff]
        %v4501 = vld [vmem:[%s4497 + $0x18] sm:$0xff]
        %v4502 = vadd.f32 %v4493, %v4498
        %v4503 = vadd.f32 %v4494, %v4499
        %v4504 = vadd.f32 %v4495, %v4500
        %v4505 = vadd.f32 %v4496, %v4501
        %s4506 = scalar_lea.vmem [#allocation4], 416
        %v4507 = vld [vmem:[%s4506] sm:$0xff]
        %v4508 = vld [vmem:[%s4506 + $0x8] sm:$0xff]
        %v4509 = vld [vmem:[%s4506 + $0x10] sm:$0xff]
        %v4510 = vld [vmem:[%s4506 + $0x18] sm:$0xff]
        %v4511 = vmul.f32 %v4507, %v4502
        %v4512 = vmul.f32 %v4508, %v4503
        %v4513 = vmul.f32 %v4509, %v4504
        %v4514 = vmul.f32 %v4510, %v4505
        %v4515 = vadd.f32 %v4511, %v4513
        %v4516 = vrot.slane %v4515, 4
        %v4517 = vadd.f32 %v4515, %v4516
        %v4518 = vrot.slane %v4517, 2
        %v4519 = vadd.f32 %v4517, %v4518
        %v4520 = vrot.slane %v4519, 1
        %v4521 = vadd.f32 %v4519, %v4520
        %v4522 = vadd.f32 %v4512, %v4514
        %v4523 = vrot.slane %v4522, 4
        %v4524 = vadd.f32 %v4522, %v4523
        %v4525 = vrot.slane %v4524, 2
        %v4526 = vadd.f32 %v4524, %v4525
        %v4527 = vrot.slane %v4526, 1
        %v4528 = vadd.f32 %v4526, %v4527
        %s4529 = scalar_lea.vmem [#allocation2], 448
        %v4530 = vld [vmem:[%s4529] sm:$0xff]
        %v4531 = vld [vmem:[%s4529 + $0x8] sm:$0xff]
        %v4532 = vld [vmem:[%s4529 + $0x10] sm:$0xff]
        %v4533 = vld [vmem:[%s4529 + $0x18] sm:$0xff]
        %v4534 = vmul.f32 %v4530, %v4502
        %v4535 = vmul.f32 %v4531, %v4503
        %v4536 = vmul.f32 %v4532, %v4504
        %v4537 = vmul.f32 %v4533, %v4505
        %s4538 = scalar_lea.vmem [#allocation3], 448
        %v4539 = vld [vmem:[%s4538] sm:$0xff]
        %v4540 = vld [vmem:[%s4538 + $0x8] sm:$0xff]
        %v4541 = vld [vmem:[%s4538 + $0x10] sm:$0xff]
        %v4542 = vld [vmem:[%s4538 + $0x18] sm:$0xff]
        %v4543 = vadd.f32 %v4534, %v4539
        %v4544 = vadd.f32 %v4535, %v4540
        %v4545 = vadd.f32 %v4536, %v4541
        %v4546 = vadd.f32 %v4537, %v4542
        %s4547 = scalar_lea.vmem [#allocation4], 448
        %v4548 = vld [vmem:[%s4547] sm:$0xff]
        %v4549 = vld [vmem:[%s4547 + $0x8] sm:$0xff]
        %v4550 = vld [vmem:[%s4547 + $0x10] sm:$0xff]
        %v4551 = vld [vmem:[%s4547 + $0x18] sm:$0xff]
        %v4552 = vmul.f32 %v4548, %v4543
        %v4553 = vmul.f32 %v4549, %v4544
        %v4554 = vmul.f32 %v4550, %v4545
        %v4555 = vmul.f32 %v4551, %v4546
        %v4556 = vadd.f32 %v4552, %v4554
        %v4557 = vrot.slane %v4556, 4
        %v4558 = vadd.f32 %v4556, %v4557
        %v4559 = vrot.slane %v4558, 2
        %v4560 = vadd.f32 %v4558, %v4559
        %v4561 = vrot.slane %v4560, 1
        %v4562 = vadd.f32 %v4560, %v4561
        %v4563 = vadd.f32 %v4553, %v4555
        %v4564 = vrot.slane %v4563, 4
        %v4565 = vadd.f32 %v4563, %v4564
        %v4566 = vrot.slane %v4565, 2
        %v4567 = vadd.f32 %v4565, %v4566
        %v4568 = vrot.slane %v4567, 1
        %v4569 = vadd.f32 %v4567, %v4568
        %s4570 = scalar_lea.vmem [#allocation2], 480
        %v4571 = vld [vmem:[%s4570] sm:$0xff]
        %v4572 = vld [vmem:[%s4570 + $0x8] sm:$0xff]
        %v4573 = vld [vmem:[%s4570 + $0x10] sm:$0xff]
        %v4574 = vld [vmem:[%s4570 + $0x18] sm:$0xff]
        %v4575 = vmul.f32 %v4571, %v4543
        %v4576 = vmul.f32 %v4572, %v4544
        %v4577 = vmul.f32 %v4573, %v4545
        %v4578 = vmul.f32 %v4574, %v4546
        %s4579 = scalar_lea.vmem [#allocation3], 480
        %v4580 = vld [vmem:[%s4579] sm:$0xff]
        %v4581 = vld [vmem:[%s4579 + $0x8] sm:$0xff]
        %v4582 = vld [vmem:[%s4579 + $0x10] sm:$0xff]
        %v4583 = vld [vmem:[%s4579 + $0x18] sm:$0xff]
        %v4584 = vadd.f32 %v4575, %v4580
        %v4585 = vadd.f32 %v4576, %v4581
        %v4586 = vadd.f32 %v4577, %v4582
        %v4587 = vadd.f32 %v4578, %v4583
        %s4588 = scalar_lea.vmem [#allocation4], 480
        %v4589 = vld [vmem:[%s4588] sm:$0xff]
        %v4590 = vld [vmem:[%s4588 + $0x8] sm:$0xff]
        %v4591 = vld [vmem:[%s4588 + $0x10] sm:$0xff]
        %v4592 = vld [vmem:[%s4588 + $0x18] sm:$0xff]
        %v4593 = vmul.f32 %v4589, %v4584
        %v4594 = vmul.f32 %v4590, %v4585
        %v4595 = vmul.f32 %v4591, %v4586
        %v4596 = vmul.f32 %v4592, %v4587
        %v4597 = vadd.f32 %v4593, %v4595
        %v4598 = vrot.slane %v4597, 4
        %v4599 = vadd.f32 %v4597, %v4598
        %v4600 = vrot.slane %v4599, 2
        %v4601 = vadd.f32 %v4599, %v4600
        %v4602 = vrot.slane %v4601, 1
        %v4603 = vadd.f32 %v4601, %v4602
        %v4604 = vadd.f32 %v4594, %v4596
        %v4605 = vrot.slane %v4604, 4
        %v4606 = vadd.f32 %v4604, %v4605
        %v4607 = vrot.slane %v4606, 2
        %v4608 = vadd.f32 %v4606, %v4607
        %v4609 = vrot.slane %v4608, 1
        %v4610 = vadd.f32 %v4608, %v4609
        %vm4611 = vcmask 1040384
        %v4612 = vsel %vm4611, %v3988, %v4029
        %v4613 = vsel %vm4611, %v3995, %v4036
        %vm4614 = vcmask 1041408
        %v4615 = vsel %vm4614, %v4612, %v4070
        %v4616 = vsel %vm4614, %v4613, %v4077
        %vm4617 = vcmask 1042432
        %v4618 = vsel %vm4617, %v4615, %v4111
        %v4619 = vsel %vm4617, %v4616, %v4118
        %vm4620 = vcmask 1043456
        %v4621 = vsel %vm4620, %v4618, %v4152
        %v4622 = vsel %vm4620, %v4619, %v4159
        %vm4623 = vcmask 1044480
        %v4624 = vsel %vm4623, %v4621, %v4193
        %v4625 = vsel %vm4623, %v4622, %v4200
        %vm4626 = vcmask 1045504
        %v4627 = vsel %vm4626, %v4624, %v4234
        %v4628 = vsel %vm4626, %v4625, %v4241
        %vm4629 = vcmask 1046528
        %v4630 = vsel %vm4629, %v4627, %v4275
        %v4631 = vsel %vm4629, %v4628, %v4282
        %v4632 = vsel %vm4611, %v4316, %v4357
        %v4633 = vsel %vm4611, %v4323, %v4364
        %v4634 = vsel %vm4614, %v4632, %v4398
        %v4635 = vsel %vm4614, %v4633, %v4405
        %v4636 = vsel %vm4617, %v4634, %v4439
        %v4637 = vsel %vm4617, %v4635, %v4446
        %v4638 = vsel %vm4620, %v4636, %v4480
        %v4639 = vsel %vm4620, %v4637, %v4487
        %v4640 = vsel %vm4623, %v4638, %v4521
        %v4641 = vsel %vm4623, %v4639, %v4528
        %v4642 = vsel %vm4626, %v4640, %v4562
        %v4643 = vsel %vm4626, %v4641, %v4569
        %v4644 = vsel %vm4629, %v4642, %v4603
        %v4645 = vsel %vm4629, %v4643, %v4610
        %v4646 = vld [vmem:[#allocation11] sm:$0x3]
        %v4648 = vlaneseq
        %v4649 = vshrl.u32 %v4648, 7
        %v4650 = vsub.s32 0, %v4649
        %v4651 = vrot.slane %v4646, %v4650
        %v4652 = vlaneseq
        %v4653 = vshrl.u32 %v4652, 7
        %v4654 = vsub.s32 1, %v4653
        %v4655 = vrot.slane %v4646, %v4654
        %v4658 = vmul.f32 %v1277, %v4651
        %v4659 = vmul.f32 %v1278, %v4655
        %v4660 = vmul.f32 %v1279, %v4651
        %v4661 = vmul.f32 %v1280, %v4655
        %v4662 = vadd.f32 %v4630, %v4658
        %v4663 = vadd.f32 %v4631, %v4659
        %v4664 = vadd.f32 %v4644, %v4660
        %v4665 = vadd.f32 %v4645, %v4661
        %v4666 = vxor.u32 %v766, 2147483648
        %v4667 = vxor.u32 %v771, 2147483648
        %v4668 = vmul.f32 %v4666, 1.442695
        %v4669 = vpow.pop %v4668
        %v4670 = vmul.f32 %v4667, 1.442695
        %v4671 = vpow.pop %v4670
        %v4672 = vadd.f32 %v4669, 1.0
        %v4673 = vadd.f32 %v4671, 1.0
        %v4674 = vrcp.pop %v4672
        %v4675 = vmul.f32 1.0, %v4674
        %v4676 = vrcp.pop %v4673
        %v4677 = vmul.f32 1.0, %v4676
        %v4678 = vmul.f32 %v766, %v4675
        %v4679 = vmul.f32 %v771, %v4677
        %v4680 = vld [vmem:[%s10] sm:$0xff]
        %v4681 = vld [vmem:[%s10 + $0x8] sm:$0xff]
        %v4683 = vsel %vm806, %v4680, 0
        %v4686 = vsel %vm806, %v4681, 0
        %4688 = vmatprep.subr.mxu0 0.0
        %4689 = vmatpush1.msra.mxu0 0.0
        %4690 = vmatprep.subr.mxu0 0.0
        %4691 = vmatpush1.msra.mxu0 0.0
        %4692 = vmatprep.subr.mxu0 0.0
        %4693 = vmatpush1.msra.mxu0 0.0
        %4694 = vmatprep.subr.mxu0 0.0
        %4695 = vmatpush1.msra.mxu0 0.0
        %4696 = vmatprep.subr.mxu0 0.0
        %4697 = vmatpush1.msra.mxu0 0.0
        %4698 = vmatprep.subr.mxu0 0.0
        %4699 = vmatpush1.msra.mxu0 0.0
        %4700 = vmatprep.subr.mxu0 0.0
        %4701 = vmatpush1.msra.mxu0 0.0
        %4702 = vmatprep.subr.mxu0 0.0
        %4703 = vmatpush1.msra.mxu0 0.0
        %4704 = vmatprep.subr.mxu0 0.0
        %4705 = vmatpush1.msra.mxu0 0.0
        %4706 = vmatprep.subr.mxu0 0.0
        %4707 = vmatpush1.msra.mxu0 0.0
        %4708 = vmatprep.subr.mxu0 0.0
        %4709 = vmatpush1.msra.mxu0 0.0
        %4710 = vmatprep.subr.mxu0 0.0
        %4711 = vmatpush1.msra.mxu0 0.0
        %4712 = vmatprep.subr.mxu0 0.0
        %4713 = vmatpush1.msra.mxu0 0.0
        %4714 = vmatprep.subr.mxu0 0.0
        %4715 = vmatpush1.msra.mxu0 0.0
        %4716 = vmatprep.subr.mxu0 0.0
        %4717 = vmatpush1.msra.mxu0 %v4664
        %4718 = vmatprep.subr.mxu0 0.0
        %4719 = vmatpush1.msra.mxu0 %v4662
        %4720 = vmatprep.subr.mxu0 0.0
        %4721 = vmatpush2.msra.mxu0 0.0
        %4722 = vmatprep.subr.mxu0 0.0
        %4723 = vmatpush2.msra.mxu0 0.0
        %4724 = vmatprep.subr.mxu0 0.0
        %4725 = vmatpush2.msra.mxu0 0.0
        %4726 = vmatprep.subr.mxu0 0.0
        %4727 = vmatpush2.msra.mxu0 0.0
        %4728 = vmatprep.subr.mxu0 0.0
        %4729 = vmatpush2.msra.mxu0 0.0
        %4730 = vmatprep.subr.mxu0 0.0
        %4731 = vmatpush2.msra.mxu0 0.0
        %4732 = vmatprep.subr.mxu0 0.0
        %4733 = vmatpush2.msra.mxu0 0.0
        %4734 = vmatprep.subr.mxu0 0.0
        %4735 = vmatpush2.msra.mxu0 0.0
        %4736 = vmatprep.subr.mxu0 0.0
        %4737 = vmatpush2.msra.mxu0 0.0
        %4738 = vmatprep.subr.mxu0 0.0
        %4739 = vmatpush2.msra.mxu0 0.0
        %4740 = vmatprep.subr.mxu0 0.0
        %4741 = vmatpush2.msra.mxu0 0.0
        %4742 = vmatprep.subr.mxu0 0.0
        %4743 = vmatpush2.msra.mxu0 0.0
        %4744 = vmatprep.subr.mxu0 0.0
        %4745 = vmatpush2.msra.mxu0 0.0
        %4746 = vmatprep.subr.mxu0 0.0
        %4747 = vmatpush2.msra.mxu0 0.0
        %4748 = vmatprep.subr.mxu0 0.0
        %4749 = vmatpush2.msra.mxu0 0.0
        %4750 = vmatprep.subr.mxu0 0.0
        %4751 = vmatpush2.msra.mxu0 0.0
        %4752 = vmatprep.mubr.f32.mxu0 0.0
        %4753 = vmatmul.mubr.f32.gmra.mxu0 %v4683
        %v4754 = vpop.f32.mrf.mxu0
        %v4755 = vadd.f32 0.0, %v4754
        %v4756 = vpop.f32.mrf.mxu0
        %4757 = vmatprep.mubr.f32.mxu0 0.0
        %4758 = vmatmul.mubr.f32.gmra.mxu0 %v4686
        %v4759 = vpop.f32.mrf.mxu0
        %v4760 = vadd.f32 0.0, %v4759
        %v4761 = vpop.f32.mrf.mxu0
        %4762 = vdwg.mxu0
        %4765 = vrot.lane.b32.xlu0 %v4678, 64
        %v4766 = vpop.permute.xlu0 %4765
        %4767 = vrot.lane.b32.xlu0 %v4679, 64
        %v4768 = vpop.permute.xlu0 %4767
        %v4771 = vmul.f32 %v4755, %v4766
        %v4772 = vmul.f32 %v4760, %v4768
        %v4773 = vsel %vm1232, %v4771, 0.0
        %4774 = vadd.xlane.f32.xlu0 %v4773
        %v4775 = vpop.xlane.xlu0 %4774
        %v4776 = vsel %vm1232, %v4772, 0.0
        %4777 = vadd.xlane.f32.xlu0 %v4776
        %v4778 = vpop.xlane.xlu0 %4777
        %v4779 = vrcp.pop 64.0
        %v4780 = vmul.f32 %v4775, %v4779
        %v4781 = vmul.f32 %v4778, %v4779
        %v4782 = vsub.f32 %v4771, %v4780
        %v4783 = vsub.f32 %v4772, %v4781
        %v4784 = vmul.f32 %v4782, %v4782
        %v4785 = vmul.f32 %v4783, %v4783
        %v4786 = vsel %vm1232, %v4784, 0.0
        %4787 = vadd.xlane.f32.xlu0 %v4786
        %v4788 = vpop.xlane.xlu0 %4787
        %v4789 = vsel %vm1232, %v4785, 0.0
        %4790 = vadd.xlane.f32.xlu0 %v4789
        %v4791 = vpop.xlane.xlu0 %4790
        %v4792 = vmul.f32 %v4788, %v4779
        %v4793 = vmul.f32 %v4791, %v4779
        %v4794 = vadd.f32 %v4792, 1e-05
        %v4795 = vadd.f32 %v4793, 1e-05
        %v4796 = vrsqrt.pop %v4794
        %v4797 = vrsqrt.pop %v4795
        %v4798 = vmul.f32 %v4782, %v4796
        %v4799 = vmul.f32 %v4783, %v4797
        %v4800 = vld [vmem:[%s11] sm:$0x1]
        %v4802 = vlaneseq
        %v4803 = vshrl.u32 %v4802, 7
        %v4804 = vsub.s32 0, %v4803
        %v4805 = vrot.slane %v4800, %v4804
        %v4807 = vmul.f32 %v4798, %v4805
        %v4808 = vmul.f32 %v4799, %v4805
        %v4809 = vld [vmem:[#allocation13] sm:$0x1]
        %v4811 = vlaneseq
        %v4812 = vshrl.u32 %v4811, 7
        %v4813 = vsub.s32 0, %v4812
        %v4814 = vrot.slane %v4809, %v4813
        %v4816 = vadd.f32 %v4807, %v4814
        %v4817 = vadd.f32 %v4808, %v4814
        %v4818 = vsel %vm1232, %v4816, 0.0
        %v4819 = vsel %vm1232, %v4817, 0.0
        %v4820 = vadd.f32 %v4818, %v4819
        %v4821 = vrot.slane %v4820, 4
        %v4822 = vadd.f32 %v4820, %v4821
        %v4823 = vrot.slane %v4822, 2
        %v4824 = vadd.f32 %v4822, %v4823
        %v4825 = vrot.slane %v4824, 1
        %v4826 = vadd.f32 %v4824, %v4825
        %v4827 = vrcp.pop 16.0
        %v4828 = vmul.f32 %v4826, %v4827
        %s4829 = scalar_lea.vmem %s10, 16
        %v4830 = vld [vmem:[%s4829] sm:$0xff]
        %v4831 = vld [vmem:[%s4829 + $0x8] sm:$0xff]
        %4834 = vrot.lane.b32.xlu0 %v4662, 64
        %v4835 = vpop.permute.xlu0 %4834
        %4836 = vrot.lane.b32.xlu0 %v4664, 64
        %v4837 = vpop.permute.xlu0 %4836
        %v4841 = vsel %vm806, %v4830, 0
        %v4844 = vsel %vm806, %v4831, 0
        %4846 = vmatprep.subr.mxu0 0.0
        %4847 = vmatpush1.msra.mxu0 0.0
        %4848 = vmatprep.subr.mxu0 0.0
        %4849 = vmatpush1.msra.mxu0 0.0
        %4850 = vmatprep.subr.mxu0 0.0
        %4851 = vmatpush1.msra.mxu0 0.0
        %4852 = vmatprep.subr.mxu0 0.0
        %4853 = vmatpush1.msra.mxu0 0.0
        %4854 = vmatprep.subr.mxu0 0.0
        %4855 = vmatpush1.msra.mxu0 0.0
        %4856 = vmatprep.subr.mxu0 0.0
        %4857 = vmatpush1.msra.mxu0 0.0
        %4858 = vmatprep.subr.mxu0 0.0
        %4859 = vmatpush1.msra.mxu0 0.0
        %4860 = vmatprep.subr.mxu0 0.0
        %4861 = vmatpush1.msra.mxu0 0.0
        %4862 = vmatprep.subr.mxu0 0.0
        %4863 = vmatpush1.msra.mxu0 0.0
        %4864 = vmatprep.subr.mxu0 0.0
        %4865 = vmatpush1.msra.mxu0 0.0
        %4866 = vmatprep.subr.mxu0 0.0
        %4867 = vmatpush1.msra.mxu0 0.0
        %4868 = vmatprep.subr.mxu0 0.0
        %4869 = vmatpush1.msra.mxu0 0.0
        %4870 = vmatprep.subr.mxu0 0.0
        %4871 = vmatpush1.msra.mxu0 0.0
        %4872 = vmatprep.subr.mxu0 0.0
        %4873 = vmatpush1.msra.mxu0 0.0
        %4874 = vmatprep.subr.mxu0 0.0
        %4875 = vmatpush1.msra.mxu0 %v4837
        %4876 = vmatprep.subr.mxu0 0.0
        %4877 = vmatpush1.msra.mxu0 %v4835
        %4878 = vmatprep.subr.mxu0 0.0
        %4879 = vmatpush2.msra.mxu0 0.0
        %4880 = vmatprep.subr.mxu0 0.0
        %4881 = vmatpush2.msra.mxu0 0.0
        %4882 = vmatprep.subr.mxu0 0.0
        %4883 = vmatpush2.msra.mxu0 0.0
        %4884 = vmatprep.subr.mxu0 0.0
        %4885 = vmatpush2.msra.mxu0 0.0
        %4886 = vmatprep.subr.mxu0 0.0
        %4887 = vmatpush2.msra.mxu0 0.0
        %4888 = vmatprep.subr.mxu0 0.0
        %4889 = vmatpush2.msra.mxu0 0.0
        %4890 = vmatprep.subr.mxu0 0.0
        %4891 = vmatpush2.msra.mxu0 0.0
        %4892 = vmatprep.subr.mxu0 0.0
        %4893 = vmatpush2.msra.mxu0 0.0
        %4894 = vmatprep.subr.mxu0 0.0
        %4895 = vmatpush2.msra.mxu0 0.0
        %4896 = vmatprep.subr.mxu0 0.0
        %4897 = vmatpush2.msra.mxu0 0.0
        %4898 = vmatprep.subr.mxu0 0.0
        %4899 = vmatpush2.msra.mxu0 0.0
        %4900 = vmatprep.subr.mxu0 0.0
        %4901 = vmatpush2.msra.mxu0 0.0
        %4902 = vmatprep.subr.mxu0 0.0
        %4903 = vmatpush2.msra.mxu0 0.0
        %4904 = vmatprep.subr.mxu0 0.0
        %4905 = vmatpush2.msra.mxu0 0.0
        %4906 = vmatprep.subr.mxu0 0.0
        %4907 = vmatpush2.msra.mxu0 0.0
        %4908 = vmatprep.subr.mxu0 0.0
        %4909 = vmatpush2.msra.mxu0 0.0
        %4910 = vmatprep.mubr.f32.mxu0 0.0
        %4911 = vmatmul.mubr.f32.gmra.mxu0 %v4841
        %v4912 = vpop.f32.mrf.mxu0
        %v4913 = vadd.f32 0.0, %v4912
        %v4914 = vpop.f32.mrf.mxu0
        %4915 = vmatprep.mubr.f32.mxu0 0.0
        %4916 = vmatmul.mubr.f32.gmra.mxu0 %v4844
        %v4917 = vpop.f32.mrf.mxu0
        %v4918 = vadd.f32 0.0, %v4917
        %v4919 = vpop.f32.mrf.mxu0
        %4920 = vdwg.mxu0
        %v4921 = vmul.f32 %v4913, %v4766
        %v4922 = vmul.f32 %v4918, %v4768
        %v4923 = vsel %vm1232, %v4921, 0.0
        %4924 = vadd.xlane.f32.xlu0 %v4923
        %v4925 = vpop.xlane.xlu0 %4924
        %v4926 = vsel %vm1232, %v4922, 0.0
        %4927 = vadd.xlane.f32.xlu0 %v4926
        %v4928 = vpop.xlane.xlu0 %4927
        %v4929 = vmul.f32 %v4925, %v4779
        %v4930 = vmul.f32 %v4928, %v4779
        %v4931 = vsub.f32 %v4921, %v4929
        %v4932 = vsub.f32 %v4922, %v4930
        %v4933 = vmul.f32 %v4931, %v4931
        %v4934 = vmul.f32 %v4932, %v4932
        %v4935 = vsel %vm1232, %v4933, 0.0
        %4936 = vadd.xlane.f32.xlu0 %v4935
        %v4937 = vpop.xlane.xlu0 %4936
        %v4938 = vsel %vm1232, %v4934, 0.0
        %4939 = vadd.xlane.f32.xlu0 %v4938
        %v4940 = vpop.xlane.xlu0 %4939
        %v4941 = vmul.f32 %v4937, %v4779
        %v4942 = vmul.f32 %v4940, %v4779
        %v4943 = vadd.f32 %v4941, 1e-05
        %v4944 = vadd.f32 %v4942, 1e-05
        %v4945 = vrsqrt.pop %v4943
        %v4946 = vrsqrt.pop %v4944
        %v4947 = vmul.f32 %v4931, %v4945
        %v4948 = vmul.f32 %v4932, %v4946
        %v4949 = vmul.f32 %v4947, %v4805
        %v4950 = vmul.f32 %v4948, %v4805
        %v4951 = vadd.f32 %v4949, %v4814
        %v4952 = vadd.f32 %v4950, %v4814
        %v4953 = vsel %vm1232, %v4951, 0.0
        %v4954 = vsel %vm1232, %v4952, 0.0
        %v4955 = vadd.f32 %v4953, %v4954
        %v4956 = vrot.slane %v4955, 4
        %v4957 = vadd.f32 %v4955, %v4956
        %v4958 = vrot.slane %v4957, 2
        %v4959 = vadd.f32 %v4957, %v4958
        %v4960 = vrot.slane %v4959, 1
        %v4961 = vadd.f32 %v4959, %v4960
        %v4962 = vmul.f32 %v4961, %v4827
        %s4963 = scalar_lea.vmem %s10, 32
        %v4964 = vld [vmem:[%s4963] sm:$0xff]
        %v4965 = vld [vmem:[%s4963 + $0x8] sm:$0xff]
        %v4967 = vsel %vm806, %v4964, 0
        %v4970 = vsel %vm806, %v4965, 0
        %4972 = vmatprep.subr.mxu0 0.0
        %4973 = vmatpush1.msra.mxu0 0.0
        %4974 = vmatprep.subr.mxu0 0.0
        %4975 = vmatpush1.msra.mxu0 0.0
        %4976 = vmatprep.subr.mxu0 0.0
        %4977 = vmatpush1.msra.mxu0 0.0
        %4978 = vmatprep.subr.mxu0 0.0
        %4979 = vmatpush1.msra.mxu0 0.0
        %4980 = vmatprep.subr.mxu0 0.0
        %4981 = vmatpush1.msra.mxu0 0.0
        %4982 = vmatprep.subr.mxu0 0.0
        %4983 = vmatpush1.msra.mxu0 0.0
        %4984 = vmatprep.subr.mxu0 0.0
        %4985 = vmatpush1.msra.mxu0 0.0
        %4986 = vmatprep.subr.mxu0 0.0
        %4987 = vmatpush1.msra.mxu0 0.0
        %4988 = vmatprep.subr.mxu0 0.0
        %4989 = vmatpush1.msra.mxu0 0.0
        %4990 = vmatprep.subr.mxu0 0.0
        %4991 = vmatpush1.msra.mxu0 0.0
        %4992 = vmatprep.subr.mxu0 0.0
        %4993 = vmatpush1.msra.mxu0 0.0
        %4994 = vmatprep.subr.mxu0 0.0
        %4995 = vmatpush1.msra.mxu0 0.0
        %4996 = vmatprep.subr.mxu0 0.0
        %4997 = vmatpush1.msra.mxu0 0.0
        %4998 = vmatprep.subr.mxu0 0.0
        %4999 = vmatpush1.msra.mxu0 0.0
        %5000 = vmatprep.subr.mxu0 0.0
        %5001 = vmatpush1.msra.mxu0 %v4665
        %5002 = vmatprep.subr.mxu0 0.0
        %5003 = vmatpush1.msra.mxu0 %v4663
        %5004 = vmatprep.subr.mxu0 0.0
        %5005 = vmatpush2.msra.mxu0 0.0
        %5006 = vmatprep.subr.mxu0 0.0
        %5007 = vmatpush2.msra.mxu0 0.0
        %5008 = vmatprep.subr.mxu0 0.0
        %5009 = vmatpush2.msra.mxu0 0.0
        %5010 = vmatprep.subr.mxu0 0.0
        %5011 = vmatpush2.msra.mxu0 0.0
        %5012 = vmatprep.subr.mxu0 0.0
        %5013 = vmatpush2.msra.mxu0 0.0
        %5014 = vmatprep.subr.mxu0 0.0
        %5015 = vmatpush2.msra.mxu0 0.0
        %5016 = vmatprep.subr.mxu0 0.0
        %5017 = vmatpush2.msra.mxu0 0.0
        %5018 = vmatprep.subr.mxu0 0.0
        %5019 = vmatpush2.msra.mxu0 0.0
        %5020 = vmatprep.subr.mxu0 0.0
        %5021 = vmatpush2.msra.mxu0 0.0
        %5022 = vmatprep.subr.mxu0 0.0
        %5023 = vmatpush2.msra.mxu0 0.0
        %5024 = vmatprep.subr.mxu0 0.0
        %5025 = vmatpush2.msra.mxu0 0.0
        %5026 = vmatprep.subr.mxu0 0.0
        %5027 = vmatpush2.msra.mxu0 0.0
        %5028 = vmatprep.subr.mxu0 0.0
        %5029 = vmatpush2.msra.mxu0 0.0
        %5030 = vmatprep.subr.mxu0 0.0
        %5031 = vmatpush2.msra.mxu0 0.0
        %5032 = vmatprep.subr.mxu0 0.0
        %5033 = vmatpush2.msra.mxu0 0.0
        %5034 = vmatprep.subr.mxu0 0.0
        %5035 = vmatpush2.msra.mxu0 0.0
        %5036 = vmatprep.mubr.f32.mxu0 0.0
        %5037 = vmatmul.mubr.f32.gmra.mxu0 %v4967
        %v5038 = vpop.f32.mrf.mxu0
        %v5039 = vadd.f32 0.0, %v5038
        %v5040 = vpop.f32.mrf.mxu0
        %5041 = vmatprep.mubr.f32.mxu0 0.0
        %5042 = vmatmul.mubr.f32.gmra.mxu0 %v4970
        %v5043 = vpop.f32.mrf.mxu0
        %v5044 = vadd.f32 0.0, %v5043
        %v5045 = vpop.f32.mrf.mxu0
        %5046 = vdwg.mxu0
        %v5047 = vmul.f32 %v5039, %v4766
        %v5048 = vmul.f32 %v5044, %v4768
        %v5049 = vsel %vm1232, %v5047, 0.0
        %5050 = vadd.xlane.f32.xlu0 %v5049
        %v5051 = vpop.xlane.xlu0 %5050
        %v5052 = vsel %vm1232, %v5048, 0.0
        %5053 = vadd.xlane.f32.xlu0 %v5052
        %v5054 = vpop.xlane.xlu0 %5053
        %v5055 = vmul.f32 %v5051, %v4779
        %v5056 = vmul.f32 %v5054, %v4779
        %v5057 = vsub.f32 %v5047, %v5055
        %v5058 = vsub.f32 %v5048, %v5056
        %v5059 = vmul.f32 %v5057, %v5057
        %v5060 = vmul.f32 %v5058, %v5058
        %v5061 = vsel %vm1232, %v5059, 0.0
        %5062 = vadd.xlane.f32.xlu0 %v5061
        %v5063 = vpop.xlane.xlu0 %5062
        %v5064 = vsel %vm1232, %v5060, 0.0
        %5065 = vadd.xlane.f32.xlu0 %v5064
        %v5066 = vpop.xlane.xlu0 %5065
        %v5067 = vmul.f32 %v5063, %v4779
        %v5068 = vmul.f32 %v5066, %v4779
        %v5069 = vadd.f32 %v5067, 1e-05
        %v5070 = vadd.f32 %v5068, 1e-05
        %v5071 = vrsqrt.pop %v5069
        %v5072 = vrsqrt.pop %v5070
        %v5073 = vmul.f32 %v5057, %v5071
        %v5074 = vmul.f32 %v5058, %v5072
        %v5075 = vmul.f32 %v5073, %v4805
        %v5076 = vmul.f32 %v5074, %v4805
        %v5077 = vadd.f32 %v5075, %v4814
        %v5078 = vadd.f32 %v5076, %v4814
        %v5079 = vsel %vm1232, %v5077, 0.0
        %v5080 = vsel %vm1232, %v5078, 0.0
        %v5081 = vadd.f32 %v5079, %v5080
        %v5082 = vrot.slane %v5081, 4
        %v5083 = vadd.f32 %v5081, %v5082
        %v5084 = vrot.slane %v5083, 2
        %v5085 = vadd.f32 %v5083, %v5084
        %v5086 = vrot.slane %v5085, 1
        %v5087 = vadd.f32 %v5085, %v5086
        %v5088 = vmul.f32 %v5087, %v4827
        %s5089 = scalar_lea.vmem %s10, 48
        %v5090 = vld [vmem:[%s5089] sm:$0xff]
        %v5091 = vld [vmem:[%s5089 + $0x8] sm:$0xff]
        %5094 = vrot.lane.b32.xlu0 %v4663, 64
        %v5095 = vpop.permute.xlu0 %5094
        %5096 = vrot.lane.b32.xlu0 %v4665, 64
        %v5097 = vpop.permute.xlu0 %5096
        %v5101 = vsel %vm806, %v5090, 0
        %v5104 = vsel %vm806, %v5091, 0
        %5106 = vmatprep.subr.mxu0 0.0
        %5107 = vmatpush1.msra.mxu0 0.0
        %5108 = vmatprep.subr.mxu0 0.0
        %5109 = vmatpush1.msra.mxu0 0.0
        %5110 = vmatprep.subr.mxu0 0.0
        %5111 = vmatpush1.msra.mxu0 0.0
        %5112 = vmatprep.subr.mxu0 0.0
        %5113 = vmatpush1.msra.mxu0 0.0
        %5114 = vmatprep.subr.mxu0 0.0
        %5115 = vmatpush1.msra.mxu0 0.0
        %5116 = vmatprep.subr.mxu0 0.0
        %5117 = vmatpush1.msra.mxu0 0.0
        %5118 = vmatprep.subr.mxu0 0.0
        %5119 = vmatpush1.msra.mxu0 0.0
        %5120 = vmatprep.subr.mxu0 0.0
        %5121 = vmatpush1.msra.mxu0 0.0
        %5122 = vmatprep.subr.mxu0 0.0
        %5123 = vmatpush1.msra.mxu0 0.0
        %5124 = vmatprep.subr.mxu0 0.0
        %5125 = vmatpush1.msra.mxu0 0.0
        %5126 = vmatprep.subr.mxu0 0.0
        %5127 = vmatpush1.msra.mxu0 0.0
        %5128 = vmatprep.subr.mxu0 0.0
        %5129 = vmatpush1.msra.mxu0 0.0
        %5130 = vmatprep.subr.mxu0 0.0
        %5131 = vmatpush1.msra.mxu0 0.0
        %5132 = vmatprep.subr.mxu0 0.0
        %5133 = vmatpush1.msra.mxu0 0.0
        %5134 = vmatprep.subr.mxu0 0.0
        %5135 = vmatpush1.msra.mxu0 %v5097
        %5136 = vmatprep.subr.mxu0 0.0
        %5137 = vmatpush1.msra.mxu0 %v5095
        %5138 = vmatprep.subr.mxu0 0.0
        %5139 = vmatpush2.msra.mxu0 0.0
        %5140 = vmatprep.subr.mxu0 0.0
        %5141 = vmatpush2.msra.mxu0 0.0
        %5142 = vmatprep.subr.mxu0 0.0
        %5143 = vmatpush2.msra.mxu0 0.0
        %5144 = vmatprep.subr.mxu0 0.0
        %5145 = vmatpush2.msra.mxu0 0.0
        %5146 = vmatprep.subr.mxu0 0.0
        %5147 = vmatpush2.msra.mxu0 0.0
        %5148 = vmatprep.subr.mxu0 0.0
        %5149 = vmatpush2.msra.mxu0 0.0
        %5150 = vmatprep.subr.mxu0 0.0
        %5151 = vmatpush2.msra.mxu0 0.0
        %5152 = vmatprep.subr.mxu0 0.0
        %5153 = vmatpush2.msra.mxu0 0.0
        %5154 = vmatprep.subr.mxu0 0.0
        %5155 = vmatpush2.msra.mxu0 0.0
        %5156 = vmatprep.subr.mxu0 0.0
        %5157 = vmatpush2.msra.mxu0 0.0
        %5158 = vmatprep.subr.mxu0 0.0
        %5159 = vmatpush2.msra.mxu0 0.0
        %5160 = vmatprep.subr.mxu0 0.0
        %5161 = vmatpush2.msra.mxu0 0.0
        %5162 = vmatprep.subr.mxu0 0.0
        %5163 = vmatpush2.msra.mxu0 0.0
        %5164 = vmatprep.subr.mxu0 0.0
        %5165 = vmatpush2.msra.mxu0 0.0
        %5166 = vmatprep.subr.mxu0 0.0
        %5167 = vmatpush2.msra.mxu0 0.0
        %5168 = vmatprep.subr.mxu0 0.0
        %5169 = vmatpush2.msra.mxu0 0.0
        %5170 = vmatprep.mubr.f32.mxu0 0.0
        %5171 = vmatmul.mubr.f32.gmra.mxu0 %v5101
        %v5172 = vpop.f32.mrf.mxu0
        %v5173 = vadd.f32 0.0, %v5172
        %v5174 = vpop.f32.mrf.mxu0
        %5175 = vmatprep.mubr.f32.mxu0 0.0
        %5176 = vmatmul.mubr.f32.gmra.mxu0 %v5104
        %v5177 = vpop.f32.mrf.mxu0
        %v5178 = vadd.f32 0.0, %v5177
        %v5179 = vpop.f32.mrf.mxu0
        %5180 = vdwg.mxu0
        %v5181 = vmul.f32 %v5173, %v4766
        %v5182 = vmul.f32 %v5178, %v4768
        %v5183 = vsel %vm1232, %v5181, 0.0
        %5184 = vadd.xlane.f32.xlu0 %v5183
        %v5185 = vpop.xlane.xlu0 %5184
        %v5186 = vsel %vm1232, %v5182, 0.0
        %5187 = vadd.xlane.f32.xlu0 %v5186
        %v5188 = vpop.xlane.xlu0 %5187
        %v5189 = vmul.f32 %v5185, %v4779
        %v5190 = vmul.f32 %v5188, %v4779
        %v5191 = vsub.f32 %v5181, %v5189
        %v5192 = vsub.f32 %v5182, %v5190
        %v5193 = vmul.f32 %v5191, %v5191
        %v5194 = vmul.f32 %v5192, %v5192
        %v5195 = vsel %vm1232, %v5193, 0.0
        %5196 = vadd.xlane.f32.xlu0 %v5195
        %v5197 = vpop.xlane.xlu0 %5196
        %v5198 = vsel %vm1232, %v5194, 0.0
        %5199 = vadd.xlane.f32.xlu0 %v5198
        %v5200 = vpop.xlane.xlu0 %5199
        %v5201 = vmul.f32 %v5197, %v4779
        %v5202 = vmul.f32 %v5200, %v4779
        %v5203 = vadd.f32 %v5201, 1e-05
        %v5204 = vadd.f32 %v5202, 1e-05
        %v5205 = vrsqrt.pop %v5203
        %v5206 = vrsqrt.pop %v5204
        %v5207 = vmul.f32 %v5191, %v5205
        %v5208 = vmul.f32 %v5192, %v5206
        %v5209 = vmul.f32 %v5207, %v4805
        %v5210 = vmul.f32 %v5208, %v4805
        %v5211 = vadd.f32 %v5209, %v4814
        %v5212 = vadd.f32 %v5210, %v4814
        %v5213 = vsel %vm1232, %v5211, 0.0
        %v5214 = vsel %vm1232, %v5212, 0.0
        %v5215 = vadd.f32 %v5213, %v5214
        %v5216 = vrot.slane %v5215, 4
        %v5217 = vadd.f32 %v5215, %v5216
        %v5218 = vrot.slane %v5217, 2
        %v5219 = vadd.f32 %v5217, %v5218
        %v5220 = vrot.slane %v5219, 1
        %v5221 = vadd.f32 %v5219, %v5220
        %v5222 = vmul.f32 %v5221, %v4827
        %v5223 = vsel %vm4611, %v4828, %v4962
        %v5224 = vsel %vm4614, %v5223, %v5088
        %v5225 = vsel %vm4617, %v5224, %v5222
        %v5226 = vld [vmem:[%s13] sm:$0xff]
        %v5227 = vld [vmem:[%s13 + $0x8] sm:$0xff]
        %v5228 = vld [vmem:[%s13 + $0x10] sm:$0xff]
        %v5229 = vld [vmem:[%s13 + $0x18] sm:$0xff]
        %v5230 = vld [vmem:[%s13 + $0x20] sm:$0xff]
        %v5231 = vld [vmem:[%s13 + $0x28] sm:$0xff]
        %v5232 = vld [vmem:[%s13 + $0x30] sm:$0xff]
        %v5233 = vld [vmem:[%s13 + $0x38] sm:$0xff]
        %v5234 = vld [vmem:[#allocation14] sm:$0x1]
        %v5236 = vlaneseq
        %v5237 = vshrl.u32 %v5236, 7
        %v5238 = vsub.s32 0, %v5237
        %v5239 = vrot.slane %v5234, %v5238
        %v5242 = vsel %vm1232, %v5225, 0
        %5244 = vmatprep.subr.mxu0 0.0
        %5245 = vmatpush1.msra.mxu0 0.0
        %5246 = vmatprep.subr.mxu0 0.0
        %5247 = vmatpush1.msra.mxu0 0.0
        %5248 = vmatprep.subr.mxu0 0.0
        %5249 = vmatpush1.msra.mxu0 0.0
        %5250 = vmatprep.subr.mxu0 0.0
        %5251 = vmatpush1.msra.mxu0 0.0
        %5252 = vmatprep.subr.mxu0 0.0
        %5253 = vmatpush1.msra.mxu0 0.0
        %5254 = vmatprep.subr.mxu0 0.0
        %5255 = vmatpush1.msra.mxu0 0.0
        %5256 = vmatprep.subr.mxu0 0.0
        %5257 = vmatpush1.msra.mxu0 0.0
        %5258 = vmatprep.subr.mxu0 0.0
        %5259 = vmatpush1.msra.mxu0 0.0
        %5260 = vmatprep.subr.mxu0 0.0
        %5261 = vmatpush1.msra.mxu0 %v5233
        %5262 = vmatprep.subr.mxu0 0.0
        %5263 = vmatpush1.msra.mxu0 %v5232
        %5264 = vmatprep.subr.mxu0 0.0
        %5265 = vmatpush1.msra.mxu0 %v5231
        %5266 = vmatprep.subr.mxu0 0.0
        %5267 = vmatpush1.msra.mxu0 %v5230
        %5268 = vmatprep.subr.mxu0 0.0
        %5269 = vmatpush1.msra.mxu0 %v5229
        %5270 = vmatprep.subr.mxu0 0.0
        %5271 = vmatpush1.msra.mxu0 %v5228
        %5272 = vmatprep.subr.mxu0 0.0
        %5273 = vmatpush1.msra.mxu0 %v5227
        %5274 = vmatprep.subr.mxu0 0.0
        %5275 = vmatpush1.msra.mxu0 %v5226
        %5276 = vmatprep.subr.mxu0 0.0
        %5277 = vmatpush2.msra.mxu0 0.0
        %5278 = vmatprep.subr.mxu0 0.0
        %5279 = vmatpush2.msra.mxu0 0.0
        %5280 = vmatprep.subr.mxu0 0.0
        %5281 = vmatpush2.msra.mxu0 0.0
        %5282 = vmatprep.subr.mxu0 0.0
        %5283 = vmatpush2.msra.mxu0 0.0
        %5284 = vmatprep.subr.mxu0 0.0
        %5285 = vmatpush2.msra.mxu0 0.0
        %5286 = vmatprep.subr.mxu0 0.0
        %5287 = vmatpush2.msra.mxu0 0.0
        %5288 = vmatprep.subr.mxu0 0.0
        %5289 = vmatpush2.msra.mxu0 0.0
        %5290 = vmatprep.subr.mxu0 0.0
        %5291 = vmatpush2.msra.mxu0 0.0
        %5292 = vmatprep.subr.mxu0 0.0
        %5293 = vmatpush2.msra.mxu0 0.0
        %5294 = vmatprep.subr.mxu0 0.0
        %5295 = vmatpush2.msra.mxu0 0.0
        %5296 = vmatprep.subr.mxu0 0.0
        %5297 = vmatpush2.msra.mxu0 0.0
        %5298 = vmatprep.subr.mxu0 0.0
        %5299 = vmatpush2.msra.mxu0 0.0
        %5300 = vmatprep.subr.mxu0 0.0
        %5301 = vmatpush2.msra.mxu0 0.0
        %5302 = vmatprep.subr.mxu0 0.0
        %5303 = vmatpush2.msra.mxu0 0.0
        %5304 = vmatprep.subr.mxu0 0.0
        %5305 = vmatpush2.msra.mxu0 0.0
        %5306 = vmatprep.subr.mxu0 0.0
        %5307 = vmatpush2.msra.mxu0 0.0
        %5308 = vmatprep.mubr.f32.mxu0 0.0
        %5309 = vmatmul.mubr.f32.gmra.mxu0 %v5242
        %v5310 = vpop.f32.mrf.mxu0
        %v5311 = vadd.f32 %v5239, %v5310
        %v5312 = vpop.f32.mrf.mxu0
        %5313 = vdwg.mxu0
        %v5314 = vmul.f32 %v5311, 0.5
        %v5315 = vmul.f32 %v5311, 0.70710677
        %v5316 = vand.u32 2147483647, %v5315
        %v5317 = vmul.f32 %v5316, 0.3275911
        %v5318 = vadd.f32 %v5317, 1.0
        %v5319 = vrcp.pop %v5318
        %v5320 = vmul.f32 1.0, %v5319
        %v5321 = vmul.f32 %v5320, 1.0614054
        %v5322 = vadd.f32 %v5321, -1.4531521
        %v5323 = vmul.f32 %v5322, %v5320
        %v5324 = vadd.f32 %v5323, 1.4214138
        %v5325 = vmul.f32 %v5324, %v5320
        %v5326 = vadd.f32 %v5325, -0.28449672
        %v5327 = vmul.f32 %v5326, %v5320
        %v5328 = vadd.f32 %v5327, 0.2548296
        %v5329 = vmul.f32 %v5328, %v5320
        %v5330 = vsub.f32 0.0, %v5316
        %v5331 = vmul.f32 %v5330, %v5316
        %v5332 = vmul.f32 %v5331, 1.442695
        %v5333 = vpow.pop %v5332
        %v5334 = vmul.f32 %v5329, %v5333
        %v5335 = vsub.f32 1.0, %v5334
        %vm5336 = vcmp.ge.f32.partialorder %v5315, 0.0
        %v5337 = vsub.f32 0.0, %v5335
        %v5338 = vsel %vm5336, %v5335, %v5337
        %v5339 = vadd.f32 %v5338, 1.0
        %v5340 = vmul.f32 %v5314, %v5339
        %v5341 = vld [vmem:[#allocation16] sm:$0xff]
        %v5342 = vld [vmem:[#allocation17] sm:$0x1]
        %v5344 = vlaneseq
        %v5345 = vshrl.u32 %v5344, 7
        %v5346 = vsub.s32 0, %v5345
        %v5347 = vrot.slane %v5342, %v5346
        %vm5349 = vcmask 64512
        %v5351 = vsel %vm5349, %v5340, 0
        %5353 = vmatprep.subr.mxu0 0.0
        %5354 = vmatpush1.msra.mxu0 0.0
        %5355 = vmatprep.subr.mxu0 0.0
        %5356 = vmatpush1.msra.mxu0 0.0
        %5357 = vmatprep.subr.mxu0 0.0
        %5358 = vmatpush1.msra.mxu0 0.0
        %5359 = vmatprep.subr.mxu0 0.0
        %5360 = vmatpush1.msra.mxu0 0.0
        %5361 = vmatprep.subr.mxu0 0.0
        %5362 = vmatpush1.msra.mxu0 0.0
        %5363 = vmatprep.subr.mxu0 0.0
        %5364 = vmatpush1.msra.mxu0 0.0
        %5365 = vmatprep.subr.mxu0 0.0
        %5366 = vmatpush1.msra.mxu0 0.0
        %5367 = vmatprep.subr.mxu0 0.0
        %5368 = vmatpush1.msra.mxu0 0.0
        %5369 = vmatprep.subr.mxu0 0.0
        %5370 = vmatpush1.msra.mxu0 0.0
        %5371 = vmatprep.subr.mxu0 0.0
        %5372 = vmatpush1.msra.mxu0 0.0
        %5373 = vmatprep.subr.mxu0 0.0
        %5374 = vmatpush1.msra.mxu0 0.0
        %5375 = vmatprep.subr.mxu0 0.0
        %5376 = vmatpush1.msra.mxu0 0.0
        %5377 = vmatprep.subr.mxu0 0.0
        %5378 = vmatpush1.msra.mxu0 0.0
        %5379 = vmatprep.subr.mxu0 0.0
        %5380 = vmatpush1.msra.mxu0 0.0
        %5381 = vmatprep.subr.mxu0 0.0
        %5382 = vmatpush1.msra.mxu0 0.0
        %5383 = vmatprep.subr.mxu0 0.0
        %5384 = vmatpush1.msra.mxu0 %v5341
        %5385 = vmatprep.subr.mxu0 0.0
        %5386 = vmatpush2.msra.mxu0 0.0
        %5387 = vmatprep.subr.mxu0 0.0
        %5388 = vmatpush2.msra.mxu0 0.0
        %5389 = vmatprep.subr.mxu0 0.0
        %5390 = vmatpush2.msra.mxu0 0.0
        %5391 = vmatprep.subr.mxu0 0.0
        %5392 = vmatpush2.msra.mxu0 0.0
        %5393 = vmatprep.subr.mxu0 0.0
        %5394 = vmatpush2.msra.mxu0 0.0
        %5395 = vmatprep.subr.mxu0 0.0
        %5396 = vmatpush2.msra.mxu0 0.0
        %5397 = vmatprep.subr.mxu0 0.0
        %5398 = vmatpush2.msra.mxu0 0.0
        %5399 = vmatprep.subr.mxu0 0.0
        %5400 = vmatpush2.msra.mxu0 0.0
        %5401 = vmatprep.subr.mxu0 0.0
        %5402 = vmatpush2.msra.mxu0 0.0
        %5403 = vmatprep.subr.mxu0 0.0
        %5404 = vmatpush2.msra.mxu0 0.0
        %5405 = vmatprep.subr.mxu0 0.0
        %5406 = vmatpush2.msra.mxu0 0.0
        %5407 = vmatprep.subr.mxu0 0.0
        %5408 = vmatpush2.msra.mxu0 0.0
        %5409 = vmatprep.subr.mxu0 0.0
        %5410 = vmatpush2.msra.mxu0 0.0
        %5411 = vmatprep.subr.mxu0 0.0
        %5412 = vmatpush2.msra.mxu0 0.0
        %5413 = vmatprep.subr.mxu0 0.0
        %5414 = vmatpush2.msra.mxu0 0.0
        %5415 = vmatprep.subr.mxu0 0.0
        %5416 = vmatpush2.msra.mxu0 0.0
        %5417 = vmatprep.mubr.f32.mxu0 0.0
        %5418 = vmatmul.mubr.f32.gmra.mxu0 %v5351
        %v5419 = vpop.f32.mrf.mxu0
        %v5420 = vadd.f32 %v5347, %v5419
        %v5421 = vpop.f32.mrf.mxu0
        %5422 = vdwg.mxu0
        %v5423 = vxor.u32 %v5420, 2147483648
        %v5424 = vmul.f32 %v5423, 1.442695
        %v5425 = vpow.pop %v5424
        %v5426 = vadd.f32 %v5425, 1.0
        %v5427 = vrcp.pop %v5426
        %v5428 = vmul.f32 1.0, %v5427
        %v5429 = vlaneseq
        %v5430 = vshrl.u32 %v5429, 7
        %v5431 = vsub.s32 0, %v5430
        %v5432 = vrot.slane %v5428, %v5431
        %v5433 = vmul.f32 %v4771, %v5432
        %v5434 = vmul.f32 %v4772, %v5432
        %v5435 = vlaneseq
        %v5436 = vshrl.u32 %v5435, 7
        %v5437 = vsub.s32 1, %v5436
        %v5438 = vrot.slane %v5428, %v5437
        %v5439 = vmul.f32 %v4921, %v5438
        %v5440 = vmul.f32 %v4922, %v5438
        %v5441 = vadd.f32 %v5433, %v5439
        %v5442 = vadd.f32 %v5434, %v5440
        %v5443 = vlaneseq
        %v5444 = vshrl.u32 %v5443, 7
        %v5445 = vsub.s32 2, %v5444
        %v5446 = vrot.slane %v5428, %v5445
        %v5447 = vmul.f32 %v5047, %v5446
        %v5448 = vmul.f32 %v5048, %v5446
        %v5449 = vadd.f32 %v5441, %v5447
        %v5450 = vadd.f32 %v5442, %v5448
        %v5451 = vlaneseq
        %v5452 = vshrl.u32 %v5451, 7
        %v5453 = vsub.s32 3, %v5452
        %v5454 = vrot.slane %v5428, %v5453
        %v5455 = vmul.f32 %v5181, %v5454
        %v5456 = vmul.f32 %v5182, %v5454
        %v5457 = vadd.f32 %v5449, %v5455
        %v5458 = vadd.f32 %v5450, %v5456
        %v5459 = vld [vmem:[%s17] sm:$0xff]
        %v5460 = vld [vmem:[%s17 + $0x8] sm:$0xff]
        %v5461 = vld [vmem:[%s17 + $0x10] sm:$0xff]
        %v5462 = vld [vmem:[%s17 + $0x18] sm:$0xff]
        %v5463 = vld [vmem:[%s17 + $0x20] sm:$0xff]
        %v5464 = vld [vmem:[%s17 + $0x28] sm:$0xff]
        %v5465 = vld [vmem:[%s17 + $0x30] sm:$0xff]
        %v5466 = vld [vmem:[%s17 + $0x38] sm:$0xff]
        %v5468 = vsel %vm1232, %v5457, 0
        %v5471 = vsel %vm1232, %v5458, 0
        %5473 = vmatprep.subr.mxu0 0.0
        %5474 = vmatpush1.msra.mxu0 0.0
        %5475 = vmatprep.subr.mxu0 0.0
        %5476 = vmatpush1.msra.mxu0 0.0
        %5477 = vmatprep.subr.mxu0 0.0
        %5478 = vmatpush1.msra.mxu0 0.0
        %5479 = vmatprep.subr.mxu0 0.0
        %5480 = vmatpush1.msra.mxu0 0.0
        %5481 = vmatprep.subr.mxu0 0.0
        %5482 = vmatpush1.msra.mxu0 0.0
        %5483 = vmatprep.subr.mxu0 0.0
        %5484 = vmatpush1.msra.mxu0 0.0
        %5485 = vmatprep.subr.mxu0 0.0
        %5486 = vmatpush1.msra.mxu0 0.0
        %5487 = vmatprep.subr.mxu0 0.0
        %5488 = vmatpush1.msra.mxu0 0.0
        %5489 = vmatprep.subr.mxu0 0.0
        %5490 = vmatpush1.msra.mxu0 %v5466
        %5491 = vmatprep.subr.mxu0 0.0
        %5492 = vmatpush1.msra.mxu0 %v5465
        %5493 = vmatprep.subr.mxu0 0.0
        %5494 = vmatpush1.msra.mxu0 %v5464
        %5495 = vmatprep.subr.mxu0 0.0
        %5496 = vmatpush1.msra.mxu0 %v5463
        %5497 = vmatprep.subr.mxu0 0.0
        %5498 = vmatpush1.msra.mxu0 %v5462
        %5499 = vmatprep.subr.mxu0 0.0
        %5500 = vmatpush1.msra.mxu0 %v5461
        %5501 = vmatprep.subr.mxu0 0.0
        %5502 = vmatpush1.msra.mxu0 %v5460
        %5503 = vmatprep.subr.mxu0 0.0
        %5504 = vmatpush1.msra.mxu0 %v5459
        %5505 = vmatprep.subr.mxu0 0.0
        %5506 = vmatpush2.msra.mxu0 0.0
        %5507 = vmatprep.subr.mxu0 0.0
        %5508 = vmatpush2.msra.mxu0 0.0
        %5509 = vmatprep.subr.mxu0 0.0
        %5510 = vmatpush2.msra.mxu0 0.0
        %5511 = vmatprep.subr.mxu0 0.0
        %5512 = vmatpush2.msra.mxu0 0.0
        %5513 = vmatprep.subr.mxu0 0.0
        %5514 = vmatpush2.msra.mxu0 0.0
        %5515 = vmatprep.subr.mxu0 0.0
        %5516 = vmatpush2.msra.mxu0 0.0
        %5517 = vmatprep.subr.mxu0 0.0
        %5518 = vmatpush2.msra.mxu0 0.0
        %5519 = vmatprep.subr.mxu0 0.0
        %5520 = vmatpush2.msra.mxu0 0.0
        %5521 = vmatprep.subr.mxu0 0.0
        %5522 = vmatpush2.msra.mxu0 0.0
        %5523 = vmatprep.subr.mxu0 0.0
        %5524 = vmatpush2.msra.mxu0 0.0
        %5525 = vmatprep.subr.mxu0 0.0
        %5526 = vmatpush2.msra.mxu0 0.0
        %5527 = vmatprep.subr.mxu0 0.0
        %5528 = vmatpush2.msra.mxu0 0.0
        %5529 = vmatprep.subr.mxu0 0.0
        %5530 = vmatpush2.msra.mxu0 0.0
        %5531 = vmatprep.subr.mxu0 0.0
        %5532 = vmatpush2.msra.mxu0 0.0
        %5533 = vmatprep.subr.mxu0 0.0
        %5534 = vmatpush2.msra.mxu0 0.0
        %5535 = vmatprep.subr.mxu0 0.0
        %5536 = vmatpush2.msra.mxu0 0.0
        %5537 = vmatprep.mubr.f32.mxu0 0.0
        %5538 = vmatmul.mubr.f32.gmra.mxu0 %v5468
        %v5539 = vpop.f32.mrf.mxu0
        %v5540 = vadd.f32 0.0, %v5539
        %v5541 = vpop.f32.mrf.mxu0
        %5542 = vmatprep.mubr.f32.mxu0 0.0
        %5543 = vmatmul.mubr.f32.gmra.mxu0 %v5471
        %v5544 = vpop.f32.mrf.mxu0
        %v5545 = vadd.f32 0.0, %v5544
        %v5546 = vpop.f32.mrf.mxu0
        %5547 = vdwg.mxu0
        %5548 = vst.msk [vmem:[%s685] sm:$0xff] %vm692, %v5540
        %5549 = vst.msk [vmem:[%s685 + $0x8] sm:$0xff] %vm692, %v5545
        %s5550 = sand.u32 %s430, 1
        %s5551 = scalar_lea.sflag [#allocation7], %s5550
        %s5552 = sand.u32 %s430, 1
        %s5553 = smul.addr %s5552, 16
        %s5554 = scalar_lea.vmem [#allocation19], %s5553
        // Predicated region
        $region125: #{multi_mamba_forward.1} parent=91 // pred_check
          %p5555 = pneg %p440
        $region126: #{multi_mamba_forward.1} parent=91 // pred_check_branch
          %5557 = sbr.rel (%p5555) target = $region128
        $region127: #{multi_mamba_forward.1} parent=91 // pred_region
          %s5559 = ssub.s32 256, 256
          %5560 = vsyncadd %s5551, %s5559
          %s5561 = smul.addr %s39, 2
          %s5562 = smul.addr %s5561, 128
          %s5563 = scalar_lea.hbm %s18, %s5562
          %s5564 = sshll.u32 %s5554, 4
          %s5565 = int_to_ptr.vmem [resolvable:$true] %s5564
          %5570 = dma.vmem_to_hbm [thread:$0]  %s5565, 256, %s5563, %s5551, 128, 128, 8
        $region128: #{multi_mamba_forward.1} parent=91 // pred_fallthru
          _
      $region92: #{multi_mamba_forward.1} parent=5 // pred_fallthru
        _
      %p5571 = scmp.le.s32.totalorder 2, %s34
      // Predicated region
      $region129: #{multi_mamba_forward.1} parent=5 // pred_check
        %p5572 = pneg %p5571
      $region130: #{multi_mamba_forward.1} parent=5 // pred_check_branch
        %5574 = sbr.rel (%p5572) target = $region132
      $region131: #{multi_mamba_forward.1} parent=5 // pred_region
        %s5575 = ssub.s32 %s34, 2
        // Predicated region
        $region133: #{multi_mamba_forward.1} parent=131 // pred_check
          %p5576 = pneg %p446
        $region134: #{multi_mamba_forward.1} parent=131 // pred_check_branch
          %5578 = sbr.rel (%p5576) target = $region136
        $region135: #{multi_mamba_forward.1} parent=131 // pred_region
          %s5579 = sand.u32 %s431, 1
          %s5580 = scalar_lea.sflag [#allocation7], %s5579
          %s5581 = sand.u32 %s431, 1
          %s5582 = smul.addr %s5581, 16
          %s5583 = scalar_lea.vmem [#allocation19], %s5582
          %5584 = dma.done %s5580, 256
        $region136: #{multi_mamba_forward.1} parent=131 // pred_fallthru
          _
      $region132: #{multi_mamba_forward.1} parent=5 // pred_fallthru
        _
    $region6: #{multi_mamba_forward.1} parent=1 // loop_footer
      %s38 = sadd.s32 1, %s34
    $region7: #{multi_mamba_forward.1} parent=1 // loop_footer_branch
      %33 = sbr.rel target = $region3
    $region8: #{multi_mamba_forward.1} parent=1 // loop_exit
      _
    %5585 = vsyncpa [#allocation6], 1
    %s5586 = scalar_lea.sflag [#allocation6], 1
    %5587 = vsyncpa %s5586, 1
    %5588 = vsyncpa [#allocation9], 1
    %5589 = vsyncpa [#allocation12], 1
    %5590 = vsyncpa [#allocation15], 1
    %5591 = vsyncpa [#allocation18], 1
    %5592 = vsyncpa [#allocation7], 1
    %s5593 = scalar_lea.sflag [#allocation7], 1
    %5594 = vsyncpa %s5593, 1

</llo_original>
